<compile_context>
chip_gen: v7x
topology: tpu7x:2x2x1
jax: 0.10.0
libtpu: 0.0.40
codegen_flags: <defaults>
</compile_context>

<pallas_src>
import functools

import jax
import jax.numpy as jnp
from jax.experimental import pallas as pl
from jax.experimental.pallas import tpu as pltpu

_EPS = 1e-5


# --------------------------- in-kernel BN helper ---------------------------

def _cols_scale_shift(st, g, s, count, eps):
    """Per-column BN scale/shift from per-column (sum, sumsq) batch stats.

    st: (N, 2, WC) f32 raw stats; g: (WC, C) 0/1 gather; s: (C, WC_out) 0/1
    scatter.  Uses MXU matmuls (idle otherwise) + EUP rsqrt, all on-chip."""
    tot = jnp.sum(st, axis=0)                                  # (2, WC)
    ch_s = jnp.dot(tot[0:1, :], g, preferred_element_type=jnp.float32)
    ch_q = jnp.dot(tot[1:2, :], g, preferred_element_type=jnp.float32)
    mean = ch_s / count
    var = jnp.maximum(ch_q / count - mean * mean, 0.0)
    inv = jax.lax.rsqrt(var + eps)
    sc = jnp.dot(inv, s, preferred_element_type=jnp.float32)
    sh = jnp.dot(-mean * inv, s, preferred_element_type=jnp.float32)
    return sc, sh


# ----------------------------- Pallas kernels -----------------------------

def _conv_kernel(x_ref, st_ref, g_ref, s_ref, b0_ref, b1_ref, b2_ref, bias_ref,
                 *out_and_scratch, h, apply_in_bn, emit_stats, count_in, eps):
    """Direct 3x3 'same' conv on one image slab (rows=H, cols=W*Cin).

    H-padding is done in a VMEM scratch.  Optionally applies the producer's
    BN+ReLU (from its raw per-column stats) as a prologue, and emits
    per-column sum / sum-of-squares of the conv output for the next BN."""
    if emit_stats:
        y_ref, stat_ref, pad_ref = out_and_scratch
    else:
        y_ref, pad_ref = out_and_scratch
        stat_ref = None
    x = x_ref[0].astype(jnp.float32)                           # (H, W*Cin)
    if apply_in_bn:
        sc, sh = _cols_scale_shift(st_ref[...], g_ref[...], s_ref[...],
                                   count_in, eps)
        x = jnp.maximum(x * sc + sh, 0.0)
    wcin = x.shape[1]
    pad_ref[0:1, :] = jnp.zeros((1, wcin), jnp.float32)        # top pad row
    pad_ref[h + 1:h + 2, :] = jnp.zeros((1, wcin), jnp.float32)  # bottom pad row
    pad_ref[1:h + 1, :] = x
    acc = (jnp.dot(pad_ref[0:h, :].astype(jnp.bfloat16), b0_ref[...],
                   preferred_element_type=jnp.float32)
           + jnp.dot(pad_ref[1:h + 1, :].astype(jnp.bfloat16), b1_ref[...],
                     preferred_element_type=jnp.float32)
           + jnp.dot(pad_ref[2:h + 2, :].astype(jnp.bfloat16), b2_ref[...],
                     preferred_element_type=jnp.float32)
           + bias_ref[...])
    y_ref[0] = acc
    if emit_stats:
        stat_ref[0, 0:1, :] = jnp.sum(acc, axis=0, keepdims=True)
        stat_ref[0, 1:2, :] = jnp.sum(acc * acc, axis=0, keepdims=True)


def _tconv_kernel(x_ref, st_ref, g_ref, s_ref, ge_ref, go0_ref, go1_ref,
                  bias_ref, re_ref, ro_ref, y_ref, stat_ref, pad_ref,
                  *, h, apply_in_bn, count_in, eps):
    """Stride-2 transposed 3x3 conv (pad=1, output_padding=1) via the 4-phase
    decomposition; previous layer's BN+ReLU fused as a prologue (from raw
    stats) and this layer's BN stats emitted."""
    x = x_ref[0].astype(jnp.float32)                           # (H, W*Cin)
    if apply_in_bn:
        sc, sh = _cols_scale_shift(st_ref[...], g_ref[...], s_ref[...],
                                   count_in, eps)
        x = jnp.maximum(x * sc + sh, 0.0)
    wcin = x.shape[1]
    pad_ref[0:h, :] = x
    pad_ref[h:h + 1, :] = jnp.zeros((1, wcin), jnp.float32)    # bottom pad row
    x0 = pad_ref[0:h, :].astype(jnp.bfloat16)
    x1 = pad_ref[1:h + 1, :].astype(jnp.bfloat16)
    row_e = jnp.dot(x0, ge_ref[...], preferred_element_type=jnp.float32) + bias_ref[...]
    row_o = (jnp.dot(x0, go0_ref[...], preferred_element_type=jnp.float32)
             + jnp.dot(x1, go1_ref[...], preferred_element_type=jnp.float32)
             + bias_ref[...])
    # interleave even/odd output rows with 0/1 selection matmuls (MXU is idle)
    out = (jnp.dot(re_ref[...], row_e, preferred_element_type=jnp.float32)
           + jnp.dot(ro_ref[...], row_o, preferred_element_type=jnp.float32))
    y_ref[0] = out                                             # (2H, 2W*Cout)
    stat_ref[0, 0:1, :] = jnp.sum(out, axis=0, keepdims=True)
    stat_ref[0, 1:2, :] = jnp.sum(out * out, axis=0, keepdims=True)


def _pool_bn_relu_kernel(y_ref, st_ref, g_ref, s_ref, pe_ref, po_ref,
                         se_ref, so_ref, o_ref, *, count, eps):
    """Fused 2x2 max-pool (row/column 0-1 selection matmuls) + BN + ReLU; the
    per-channel BN params are derived in-kernel from the conv's raw stats.

    Pool-before-affine is valid because x -> scale*x+shift with scale>0 and
    ReLU are monotone, so they commute with max."""
    y = y_ref[0]                                               # (H, W*C) f32
    sc, sh = _cols_scale_shift(st_ref[...], g_ref[...], s_ref[...], count, eps)
    r = jnp.maximum(jnp.dot(pe_ref[...], y, preferred_element_type=jnp.float32),
                    jnp.dot(po_ref[...], y, preferred_element_type=jnp.float32))
    p = jnp.maximum(jnp.dot(r, se_ref[...], preferred_element_type=jnp.float32),
                    jnp.dot(r, so_ref[...], preferred_element_type=jnp.float32))
    o_ref[0] = jnp.maximum(p * sc + sh, 0.0)


def _mlp_kernel(x_ref, w1_ref, b1_ref, w2_ref, b2_ref, w3_ref, b3_ref,
                w4_ref, b4_ref, tg_ref, ts_ref, o_ref, *, n, count4, eps):
    """Single fused kernel for the whole bottleneck MLP:
       enc: Linear->BN1d->ReLU, Linear->BN1d->ReLU
       dec: Linear->BN1d->ReLU, Linear->Unflatten->BN2d->ReLU
    (training-mode batch statistics; unflatten ordering folded into W4)."""
    def lin(hh, w_ref, b_ref):
        return (jnp.dot(hh.astype(jnp.bfloat16), w_ref[...],
                        preferred_element_type=jnp.float32) + b_ref[...])

    def bn1d_relu(y):
        mean = jnp.sum(y, axis=0, keepdims=True) / n
        var = jnp.maximum(jnp.sum(y * y, axis=0, keepdims=True) / n - mean * mean, 0.0)
        inv = jax.lax.rsqrt(var + eps)
        return jnp.maximum((y - mean) * inv, 0.0)

    h = x_ref[...].astype(jnp.float32)
    h = bn1d_relu(lin(h, w1_ref, b1_ref))
    h = bn1d_relu(lin(h, w2_ref, b2_ref))
    h = bn1d_relu(lin(h, w3_ref, b3_ref))
    y = lin(h, w4_ref, b4_ref)
    # BN2d after unflatten: per-channel stats via 0/1 gather/scatter matmuls
    s1 = jnp.sum(y, axis=0, keepdims=True)
    q1 = jnp.sum(y * y, axis=0, keepdims=True)
    ch_s = jnp.dot(s1, tg_ref[...], preferred_element_type=jnp.float32)
    ch_q = jnp.dot(q1, tg_ref[...], preferred_element_type=jnp.float32)
    mean = ch_s / count4
    var = jnp.maximum(ch_q / count4 - mean * mean, 0.0)
    inv = jax.lax.rsqrt(var + eps)
    sc = jnp.dot(inv, ts_ref[...], preferred_element_type=jnp.float32)
    sh = jnp.dot(-mean * inv, ts_ref[...], preferred_element_type=jnp.float32)
    o_ref[...] = jnp.maximum(y * sc + sh, 0.0)


# ----------------------------- kernel wrappers -----------------------------

def _full_spec(a):
    return pl.BlockSpec(a.shape, lambda i, _nd=a.ndim: (0,) * _nd)


def conv_unit(x, u, *, prev_stats=None, prev_g=None, prev_s=None, count_in=1,
              emit_stats=True):
    n, h, wcin = x.shape
    wcout = u['bias_cols'].shape[-1]
    apply_in_bn = prev_stats is not None
    if not apply_in_bn:
        prev_stats = jnp.zeros((1, 2, 1), jnp.float32)
        prev_g = jnp.zeros((1, 1), jnp.float32)
        prev_s = jnp.zeros((1, 1), jnp.float32)
    b0, b1, b2 = u['bands']
    out_shape = [jax.ShapeDtypeStruct((n, h, wcout), jnp.float32)]
    out_specs = [pl.BlockSpec((1, h, wcout), lambda i: (i, 0, 0))]
    if emit_stats:
        out_shape.append(jax.ShapeDtypeStruct((n, 2, wcout), jnp.float32))
        out_specs.append(pl.BlockSpec((1, 2, wcout), lambda i: (i, 0, 0)))
    return pl.pallas_call(
        functools.partial(_conv_kernel, h=h, apply_in_bn=apply_in_bn,
                          emit_stats=emit_stats, count_in=float(count_in),
                          eps=_EPS),
        grid=(n,),
        in_specs=[pl.BlockSpec((1, h, wcin), lambda i: (i, 0, 0)),
                  _full_spec(prev_stats), _full_spec(prev_g), _full_spec(prev_s),
                  _full_spec(b0), _full_spec(b1), _full_spec(b2),
                  _full_spec(u['bias_cols'])],
        out_specs=out_specs if emit_stats else out_specs[0],
        out_shape=out_shape if emit_stats else out_shape[0],
        scratch_shapes=[pltpu.VMEM((h + 2, wcin), jnp.float32)],
        compiler_params=pltpu.CompilerParams(dimension_semantics=("parallel",)),
    )(x, prev_stats, prev_g, prev_s, b0, b1, b2, u['bias_cols'])


def tconv_unit(x, u, *, prev_stats=None, prev_g=None, prev_s=None, count_in=1):
    n, h, wcin = x.shape
    w2c = u['bias_cols'].shape[-1]                  # 2*W*Cout
    apply_in_bn = prev_stats is not None
    if not apply_in_bn:
        prev_stats = jnp.zeros((1, 2, 1), jnp.float32)
        prev_g = jnp.zeros((1, 1), jnp.float32)
        prev_s = jnp.zeros((1, 1), jnp.float32)
    return pl.pallas_call(
        functools.partial(_tconv_kernel, h=h, apply_in_bn=apply_in_bn,
                          count_in=float(count_in), eps=_EPS),
        grid=(n,),
        in_specs=[pl.BlockSpec((1, h, wcin), lambda i: (i, 0, 0)),
                  _full_spec(prev_stats), _full_spec(prev_g), _full_spec(prev_s),
                  _full_spec(u['Ge']), _full_spec(u['Go0']), _full_spec(u['Go1']),
                  _full_spec(u['bias_cols']), _full_spec(u['Re']), _full_spec(u['Ro'])],
        out_specs=[pl.BlockSpec((1, 2 * h, w2c), lambda i: (i, 0, 0)),
                   pl.BlockSpec((1, 2, w2c), lambda i: (i, 0, 0))],
        out_shape=[jax.ShapeDtypeStruct((n, 2 * h, w2c), jnp.float32),
                   jax.ShapeDtypeStruct((n, 2, w2c), jnp.float32)],
        scratch_shapes=[pltpu.VMEM((h + 1, wcin), jnp.float32)],
        compiler_params=pltpu.CompilerParams(dimension_semantics=("parallel",)),
    )(x, prev_stats, prev_g, prev_s, u['Ge'], u['Go0'], u['Go1'],
      u['bias_cols'], u['Re'], u['Ro'])


def pool_bn_relu(y, stats, u, count):
    n, h, wc = y.shape
    ho = u['Pe'].shape[0]
    wco = u['Se'].shape[1]
    return pl.pallas_call(
        functools.partial(_pool_bn_relu_kernel, count=float(count), eps=_EPS),
        grid=(n,),
        in_specs=[pl.BlockSpec((1, h, wc), lambda i: (i, 0, 0)),
                  _full_spec(stats), _full_spec(u['Gin']), _full_spec(u['Spool']),
                  _full_spec(u['Pe']), _full_spec(u['Po']),
                  _full_spec(u['Se']), _full_spec(u['So'])],
        out_specs=pl.BlockSpec((1, ho, wco), lambda i: (i, 0, 0)),
        out_shape=jax.ShapeDtypeStruct((n, ho, wco), jnp.float32),
        compiler_params=pltpu.CompilerParams(dimension_semantics=("parallel",)),
    )(y, stats, u['Gin'], u['Spool'], u['Pe'], u['Po'], u['Se'], u['So'])


def mlp_block(x, p):
    n = x.shape[0]
    f = p['w4'].shape[1]
    vmem = pl.BlockSpec(memory_space=pltpu.MemorySpace.VMEM)
    return pl.pallas_call(
        functools.partial(_mlp_kernel, n=float(n),
                          count4=float(n * p['s2']), eps=_EPS),
        out_shape=jax.ShapeDtypeStruct((n, f), jnp.float32),
        in_specs=[vmem] * 11,
        out_specs=vmem,
    )(x, p['w1'], p['b1'], p['w2'], p['b2'], p['w3'], p['b3'],
      p['w4'], p['b4'], p['tg'], p['ts'])


# ---------------------- derived-weight construction (init) ----------------------

def _expand(mask_vj, w_ic_oc):
    v, j = mask_vj.shape
    cin, cout = w_ic_oc.shape
    t = jnp.einsum('vj,io->vijo', mask_vj, w_ic_oc)
    return t.reshape(v * cin, j * cout)


def _conv_band_mats(w_hwio, width):
    """B[dh][wi*Cin+ci, wo*Cout+co] = w[dh, wi-wo+1, ci, co] (same-pad along W)."""
    kh, kw, _, _ = w_hwio.shape
    wi = jnp.arange(width)[:, None]
    wo = jnp.arange(width)[None, :]
    mats = []
    for dh in range(kh):
        b = None
        for dw in range(kw):
            m = (wi == (wo + dw - 1)).astype(jnp.float32)
            term = _expand(m, w_hwio[dh, dw])
            b = term if b is None else b + term
        mats.append(b)
    return mats


def _phase_mask(width, pw, wi_rel):
    jw = jnp.arange(2 * width)
    ok = (jw % 2) == pw
    b = (jw - pw) // 2
    wi = jnp.arange(width)
    return (ok[None, :] & (wi[:, None] == (b + wi_rel)[None, :])).astype(jnp.float32)


def _tconv_mats(w_hwio, width):
    """Banded matrices for the 4-phase stride-2 transposed conv decomposition.
    w_hwio is the equivalent (flipped) regular-conv kernel."""
    m00 = _phase_mask(width, 0, 0)
    m10 = _phase_mask(width, 1, 0)
    m11 = _phase_mask(width, 1, 1)
    ge = _expand(m00, w_hwio[1, 1]) + _expand(m10, w_hwio[1, 0]) + _expand(m11, w_hwio[1, 2])
    go0 = _expand(m00, w_hwio[0, 1]) + _expand(m10, w_hwio[0, 0]) + _expand(m11, w_hwio[0, 2])
    go1 = _expand(m00, w_hwio[2, 1]) + _expand(m10, w_hwio[2, 0]) + _expand(m11, w_hwio[2, 2])
    return ge, go0, go1


def _pool_row_mats(h):
    a = jnp.arange(h // 2)[:, None]
    r = jnp.arange(h)[None, :]
    return ((r == 2 * a).astype(jnp.float32), (r == 2 * a + 1).astype(jnp.float32))


def _pool_col_mats(width, c):
    rows = jnp.arange(width * c)
    cols = jnp.arange((width // 2) * c)
    w_in, c_in = rows // c, rows % c
    wo, co = cols // c, cols % c
    same_c = c_in[:, None] == co[None, :]
    se = ((w_in[:, None] == 2 * wo[None, :]) & same_c).astype(jnp.float32)
    so = ((w_in[:, None] == 2 * wo[None, :] + 1) & same_c).astype(jnp.float32)
    return se, so


def _interleave_row_mats(h):
    r = jnp.arange(2 * h)[:, None]
    a = jnp.arange(h)[None, :]
    return ((r == 2 * a).astype(jnp.float32), (r == 2 * a + 1).astype(jnp.float32))


def _channel_gather(f, c):
    r = jnp.arange(f)
    cc = jnp.arange(c)
    return ((r[:, None] % c) == cc[None, :]).astype(jnp.float32)      # (F, C)


# ----------------------------- parameter setup -----------------------------

def calculate_im_size(image_size, hidden_layers):
    s = image_size
    for _ in range(hidden_layers):
        s = s // 2
    return s


def _conv_w(key, cin, cout):
    std = (2.0 / (cin * 9)) ** 0.5            # kaiming_normal_; bias is zeroed
    return std * jax.random.normal(key, (3, 3, cin, cout), jnp.float32)


def _linear_w(key, fin, fout):
    kw_, kb_ = jax.random.split(key)
    lim = 1.0 / (fin ** 0.5)
    w = jax.random.uniform(kw_, (fin, fout), jnp.float32, -lim, lim)
    b = jax.random.uniform(kb_, (fout,), jnp.float32, -lim, lim)
    return w, b


def init_params(key, latent_size, hidden_layers, size_mult, in_channels, image_size):
    topology = [in_channels] + [size_mult * 2 ** x for x in range(1, hidden_layers)]
    keys = iter(jax.random.split(key, 64))
    prep = {'in_channels': in_channels, 'image_size': image_size}

    # encoder ConvUnits: Conv3x3(same) -> BN2d -> ReLU -> MaxPool(2)
    enc_units = []
    h = w = image_size
    prev = topology[0]
    for ch in topology:
        w_hwio = _conv_w(next(keys), prev, ch)
        b0, b1, b2 = _conv_band_mats(w_hwio, w)
        pe, po = _pool_row_mats(h)
        se, so = _pool_col_mats(w, ch)
        gin = _channel_gather(w * ch, ch)                     # conv cols -> C
        spool = _channel_gather((w // 2) * ch, ch).T          # C -> pooled cols
        enc_units.append(dict(
            H=h, W=w, Cout=ch,
            bands=tuple(m.astype(jnp.bfloat16) for m in (b0, b1, b2)),
            bias_cols=jnp.tile(jnp.zeros((ch,), jnp.float32), w)[None, :],
            Pe=pe, Po=po, Se=se, So=so, Gin=gin, Spool=spool))
        prev = ch
        h //= 2
        w //= 2
    prep['enc_units'] = enc_units

    s = calculate_im_size(image_size, hidden_layers)
    flatten_size = prev * s * s
    linear_layers = [flatten_size, flatten_size // 2, latent_size]

    # flatten/unflatten ordering (PyTorch (c,h,w) <-> our (h,w,c)) folded into weights
    hh, ww, cc = jnp.meshgrid(jnp.arange(s), jnp.arange(s), jnp.arange(prev), indexing='ij')
    perm = (cc * (s * s) + hh * s + ww).reshape(-1)

    w1, b1 = _linear_w(next(keys), linear_layers[0], linear_layers[1])
    w1 = w1[perm, :]
    w2, b2 = _linear_w(next(keys), linear_layers[1], linear_layers[2])
    w3, b3 = _linear_w(next(keys), latent_size, linear_layers[1])
    w4, b4 = _linear_w(next(keys), linear_layers[1], linear_layers[0])
    w4 = w4[:, perm]
    b4 = b4[perm]
    tg = _channel_gather(flatten_size, prev)
    prep['mlp'] = dict(
        w1=w1.astype(jnp.bfloat16), b1=b1[None, :],
        w2=w2.astype(jnp.bfloat16), b2=b2[None, :],
        w3=w3.astype(jnp.bfloat16), b3=b3[None, :],
        w4=w4.astype(jnp.bfloat16), b4=b4[None, :],
        tg=tg, ts=tg.T, s2=s * s)
    prep['unflatten'] = (prev, s)

    # decoder ConvTransposeUnits: ConvTranspose3x3(s=2,p=1,op=1) -> BN2d -> ReLU
    dec_units = []
    hd = wd = s
    prev_d = prev
    for ch in reversed(topology):
        w_hwio = _conv_w(next(keys), prev_d, ch)    # equivalent-conv HWIO kernel
        ge, go0, go1 = _tconv_mats(w_hwio, wd)
        re, ro = _interleave_row_mats(hd)
        gout = _channel_gather(2 * wd * ch, ch)     # this unit's output cols -> C
        dec_units.append(dict(
            H=hd, W=wd, Cout=ch,
            Ge=ge.astype(jnp.bfloat16), Go0=go0.astype(jnp.bfloat16),
            Go1=go1.astype(jnp.bfloat16),
            bias_cols=jnp.tile(jnp.zeros((ch,), jnp.float32), 2 * wd)[None, :],
            Re=re, Ro=ro, Gout=gout, Sout=gout.T))
        prev_d = ch
        hd *= 2
        wd *= 2
    prep['dec_units'] = dec_units

    # final ConvUnit (bn=False, activation=None)
    w_hwio = _conv_w(next(keys), prev_d, in_channels)
    b0, b1, b2 = _conv_band_mats(w_hwio, wd)
    prep['final_conv'] = dict(
        H=hd, W=wd, Cout=in_channels,
        bands=tuple(m.astype(jnp.bfloat16) for m in (b0, b1, b2)),
        bias_cols=jnp.tile(jnp.zeros((in_channels,), jnp.float32), wd)[None, :])
    return prep


# ------------------------------- forward pass -------------------------------

def convae_forward(x_nchw, prep):
    n = x_nchw.shape[0]
    c_in = prep['in_channels']
    img = prep['image_size']

    # NCHW -> (N, H, W*C) lane-dense row-slab layout
    x = jnp.transpose(x_nchw, (0, 2, 3, 1)).astype(jnp.float32).reshape(n, img, img * c_in)

    # ---------------- encoder conv units ----------------
    for u in prep['enc_units']:
        h, w = u['H'], u['W']
        y, stats = conv_unit(x, u, emit_stats=True)
        x = pool_bn_relu(y, stats, u, count=n * h * w)

    # ---------------- fused bottleneck MLP (enc + dec linears) ----------------
    x = mlp_block(x.reshape(n, -1), prep['mlp'])
    c_top, s = prep['unflatten']
    x = x.reshape(n, s, s * c_top)

    # ---------------- decoder transposed conv units ----------------
    prev_stats = prev_g = prev_s = None
    count_in = 1
    for u in prep['dec_units']:
        h, w = u['H'], u['W']
        x, stats = tconv_unit(x, u, prev_stats=prev_stats, prev_g=prev_g,
                              prev_s=prev_s, count_in=count_in)
        prev_stats, prev_g, prev_s = stats, u['Gout'], u['Sout']
        count_in = n * 4 * h * w

    # ---------------- final conv (no BN, no activation) + Crop ----------------
    u = prep['final_conv']
    y = conv_unit(x, u, prev_stats=prev_stats, prev_g=prev_g, prev_s=prev_s,
                  count_in=count_in, emit_stats=False)
    out = y.reshape(n, u['H'], u['W'], c_in)[:, :img, :img, :]
    return jnp.transpose(out, (0, 3, 1, 2))            # back to NCHW


# ----------------------------------- main -----------------------------------

if __name__ == "__main__":
    LATENT, HIDDEN_LAYERS, SIZE_MULT, IN_CH, IMG = 8, 2, 4, 4, 16
    key = jax.random.PRNGKey(0)
    kp, kx = jax.random.split(key)
    prep = init_params(kp, LATENT, HIDDEN_LAYERS, SIZE_MULT, IN_CH, IMG)
    x = jax.random.normal(kx, (2, IN_CH, IMG, IMG), jnp.float32)   # NCHW input

    fwd = jax.jit(functools.partial(convae_forward, prep=prep))
    y = jax.block_until_ready(fwd(x))

    assert y.shape == (2, IN_CH, IMG, IMG), y.shape
    assert bool(jnp.all(jnp.isfinite(y)))
    print("KERNEL_OK")
</pallas_src>

<mosaic_0001>
module attributes {stable_mosaic.version = 11 : i64} {
  func.func @_conv_kernel(%arg0: i32, %arg1: memref<1x16x64xf32, #tpu.memory_space<vmem>>, %arg2: memref<1x2x1xf32, #tpu.memory_space<vmem>>, %arg3: memref<1x1xf32, #tpu.memory_space<vmem>>, %arg4: memref<1x1xf32, #tpu.memory_space<vmem>>, %arg5: memref<64x64xbf16, #tpu.memory_space<vmem>>, %arg6: memref<64x64xbf16, #tpu.memory_space<vmem>>, %arg7: memref<64x64xbf16, #tpu.memory_space<vmem>>, %arg8: memref<1x64xf32, #tpu.memory_space<vmem>>, %arg9: memref<1x16x64xf32, #tpu.memory_space<vmem>>, %arg10: memref<1x2x64xf32, #tpu.memory_space<vmem>>, %arg11: memref<18x64xf32, #tpu.memory_space<vmem>>) attributes {dimension_semantics = [#tpu.dimension_semantics<parallel>], iteration_bounds = array<i64: 2>, scalar_prefetch = 0 : i64, scratch_operands = 1 : i64, tpu.core_type = #tpu.core_type<tc>, window_params = [{transform_indices = @transform_0, window_bounds = array<i64: 1, 16, 64>}, {pipeline_mode = #tpu.pipeline_mode<synchronous>, transform_indices = @transform_1, window_bounds = array<i64: 1, 2, 1>}, {pipeline_mode = #tpu.pipeline_mode<synchronous>, transform_indices = @transform_2, window_bounds = array<i64: 1, 1>}, {pipeline_mode = #tpu.pipeline_mode<synchronous>, transform_indices = @transform_3, window_bounds = array<i64: 1, 1>}, {pipeline_mode = #tpu.pipeline_mode<synchronous>, transform_indices = @transform_4, window_bounds = array<i64: 64, 64>}, {pipeline_mode = #tpu.pipeline_mode<synchronous>, transform_indices = @transform_5, window_bounds = array<i64: 64, 64>}, {pipeline_mode = #tpu.pipeline_mode<synchronous>, transform_indices = @transform_6, window_bounds = array<i64: 64, 64>}, {pipeline_mode = #tpu.pipeline_mode<synchronous>, transform_indices = @transform_7, window_bounds = array<i64: 1, 64>}, {transform_indices = @transform_8, window_bounds = array<i64: 1, 16, 64>}, {transform_indices = @transform_9, window_bounds = array<i64: 1, 2, 64>}]} {
    %c0 = arith.constant 0 : index
    %c0_0 = arith.constant 0 : index
    %c0_1 = arith.constant 0 : index
    %0 = vector.load %arg1[%c0, %c0_0, %c0_1] : memref<1x16x64xf32, #tpu.memory_space<vmem>>, vector<1x16x64xf32>
    %1 = vector.shape_cast %0 : vector<1x16x64xf32> to vector<16x64xf32>
    %cst = arith.constant 0.000000e+00 : f32
    %2 = vector.broadcast %cst : f32 to vector<1x64xf32>
    %c0_2 = arith.constant 0 : index
    %c0_3 = arith.constant 0 : index
    %3 = vector.load %arg11[%c0_2, %c0_3] : memref<18x64xf32, #tpu.memory_space<vmem>>, vector<1x64xf32>
    tpu.vector_store %arg11[%c0_2, %c0_3], %2 {strides = array<i32>} : memref<18x64xf32, #tpu.memory_space<vmem>>, vector<1x64xf32>,
    %cst_4 = arith.constant 0.000000e+00 : f32
    %4 = vector.broadcast %cst_4 : f32 to vector<1x64xf32>
    %c17 = arith.constant 17 : index
    %c0_5 = arith.constant 0 : index
    %5 = vector.load %arg11[%c17, %c0_5] : memref<18x64xf32, #tpu.memory_space<vmem>>, vector<1x64xf32>
    tpu.vector_store %arg11[%c17, %c0_5], %4 {strides = array<i32>} : memref<18x64xf32, #tpu.memory_space<vmem>>, vector<1x64xf32>,
    %c1 = arith.constant 1 : index
    %c0_6 = arith.constant 0 : index
    %6 = vector.load %arg11[%c1, %c0_6] : memref<18x64xf32, #tpu.memory_space<vmem>>, vector<16x64xf32>
    tpu.vector_store %arg11[%c1, %c0_6], %1 {strides = array<i32>} : memref<18x64xf32, #tpu.memory_space<vmem>>, vector<16x64xf32>,
    %c0_7 = arith.constant 0 : index
    %c0_8 = arith.constant 0 : index
    %7 = vector.load %arg11[%c0_7, %c0_8] : memref<18x64xf32, #tpu.memory_space<vmem>>, vector<16x64xf32>
    %8 = arith.truncf %7 : vector<16x64xf32> to vector<16x64xbf16>
    %c0_9 = arith.constant 0 : index
    %c0_10 = arith.constant 0 : index
    %9 = vector.load %arg5[%c0_9, %c0_10] : memref<64x64xbf16, #tpu.memory_space<vmem>>, vector<64x64xbf16>
    %cst_11 = arith.constant dense<0.000000e+00> : vector<16x64xf32>
    %10 = tpu.matmul %8, %9, %cst_11 {dimension_numbers = #tpu.dot_dimension_numbers<[1], [0], [0], [1], [0, 0, 1, 1], [], []>} : vector<16x64xbf16>, vector<64x64xbf16>, vector<16x64xf32> -> vector<16x64xf32>
    %c1_12 = arith.constant 1 : index
    %c0_13 = arith.constant 0 : index
    %11 = vector.load %arg11[%c1_12, %c0_13] : memref<18x64xf32, #tpu.memory_space<vmem>>, vector<16x64xf32>
    %12 = arith.truncf %11 : vector<16x64xf32> to vector<16x64xbf16>
    %c0_14 = arith.constant 0 : index
    %c0_15 = arith.constant 0 : index
    %13 = vector.load %arg6[%c0_14, %c0_15] : memref<64x64xbf16, #tpu.memory_space<vmem>>, vector<64x64xbf16>
    %cst_16 = arith.constant dense<0.000000e+00> : vector<16x64xf32>
    %14 = tpu.matmul %12, %13, %cst_16 {dimension_numbers = #tpu.dot_dimension_numbers<[1], [0], [0], [1], [0, 0, 1, 1], [], []>} : vector<16x64xbf16>, vector<64x64xbf16>, vector<16x64xf32> -> vector<16x64xf32>
    %15 = arith.addf %10, %14 : vector<16x64xf32>
    %c2 = arith.constant 2 : index
    %c0_17 = arith.constant 0 : index
    %16 = vector.load %arg11[%c2, %c0_17] : memref<18x64xf32, #tpu.memory_space<vmem>>, vector<16x64xf32>
    %17 = arith.truncf %16 : vector<16x64xf32> to vector<16x64xbf16>
    %c0_18 = arith.constant 0 : index
    %c0_19 = arith.constant 0 : index
    %18 = vector.load %arg7[%c0_18, %c0_19] : memref<64x64xbf16, #tpu.memory_space<vmem>>, vector<64x64xbf16>
    %cst_20 = arith.constant dense<0.000000e+00> : vector<16x64xf32>
    %19 = tpu.matmul %17, %18, %cst_20 {dimension_numbers = #tpu.dot_dimension_numbers<[1], [0], [0], [1], [0, 0, 1, 1], [], []>} : vector<16x64xbf16>, vector<64x64xbf16>, vector<16x64xf32> -> vector<16x64xf32>
    %20 = arith.addf %15, %19 : vector<16x64xf32>
    %c0_21 = arith.constant 0 : index
    %c0_22 = arith.constant 0 : index
    %21 = vector.load %arg8[%c0_21, %c0_22] : memref<1x64xf32, #tpu.memory_space<vmem>>, vector<1x64xf32>
    %22 = vector.broadcast %21 : vector<1x64xf32> to vector<16x64xf32>
    %23 = arith.addf %20, %22 : vector<16x64xf32>
    %c0_23 = arith.constant 0 : index
    %c0_24 = arith.constant 0 : index
    %c0_25 = arith.constant 0 : index
    %24 = vector.load %arg9[%c0_23, %c0_24, %c0_25] : memref<1x16x64xf32, #tpu.memory_space<vmem>>, vector<1x16x64xf32>
    %25 = vector.shape_cast %24 : vector<1x16x64xf32> to vector<16x64xf32>
    %26 = vector.shape_cast %23 : vector<16x64xf32> to vector<1x16x64xf32>
    tpu.vector_store %arg9[%c0_23, %c0_24, %c0_25], %26 {strides = array<i32>} : memref<1x16x64xf32, #tpu.memory_space<vmem>>, vector<1x16x64xf32>,
    %cst_26 = arith.constant dense<0.000000e+00> : vector<64xf32>
    %27 = vector.multi_reduction <add>, %23, %cst_26 [0] : vector<16x64xf32> to vector<64xf32>
    %28 = vector.shape_cast %27 : vector<64xf32> to vector<1x64xf32>
    %c0_27 = arith.constant 0 : index
    %c0_28 = arith.constant 0 : index
    %c0_29 = arith.constant 0 : index
    %29 = vector.load %arg10[%c0_27, %c0_28, %c0_29] : memref<1x2x64xf32, #tpu.memory_space<vmem>>, vector<1x1x64xf32>
    %30 = vector.shape_cast %29 : vector<1x1x64xf32> to vector<1x64xf32>
    %31 = vector.shape_cast %28 : vector<1x64xf32> to vector<1x1x64xf32>
    tpu.vector_store %arg10[%c0_27, %c0_28, %c0_29], %31 {strides = array<i32>} : memref<1x2x64xf32, #tpu.memory_space<vmem>>, vector<1x1x64xf32>,
    %32 = arith.mulf %23, %23 : vector<16x64xf32>
    %cst_30 = arith.constant dense<0.000000e+00> : vector<64xf32>
    %33 = vector.multi_reduction <add>, %32, %cst_30 [0] : vector<16x64xf32> to vector<64xf32>
    %34 = vector.shape_cast %33 : vector<64xf32> to vector<1x64xf32>
    %c0_31 = arith.constant 0 : index
    %c1_32 = arith.constant 1 : index
    %c0_33 = arith.constant 0 : index
    %35 = vector.load %arg10[%c0_31, %c1_32, %c0_33] : memref<1x2x64xf32, #tpu.memory_space<vmem>>, vector<1x1x64xf32>
    %36 = vector.shape_cast %35 : vector<1x1x64xf32> to vector<1x64xf32>
    %37 = vector.shape_cast %34 : vector<1x64xf32> to vector<1x1x64xf32>
    tpu.vector_store %arg10[%c0_31, %c1_32, %c0_33], %37 {strides = array<i32>} : memref<1x2x64xf32, #tpu.memory_space<vmem>>, vector<1x1x64xf32>,
    return
  }
  func.func @transform_0(%arg0: i32) -> (i32, i32, i32) {
    %c0_i32 = arith.constant 0 : i32
    %c0_i32_0 = arith.constant 0 : i32
    %c0_i32_1 = arith.constant 0 : i32
    return %arg0, %c0_i32, %c0_i32_0 : i32, i32, i32
  }
  func.func @transform_1(%arg0: i32) -> (i32, i32, i32) {
    %c0_i32 = arith.constant 0 : i32
    %c0_i32_0 = arith.constant 0 : i32
    %c0_i32_1 = arith.constant 0 : i32
    %c0_i32_2 = arith.constant 0 : i32
    return %c0_i32, %c0_i32_0, %c0_i32_1 : i32, i32, i32
  }
  func.func @transform_2(%arg0: i32) -> (i32, i32) {
    %c0_i32 = arith.constant 0 : i32
    %c0_i32_0 = arith.constant 0 : i32
    %c0_i32_1 = arith.constant 0 : i32
    return %c0_i32, %c0_i32_0 : i32, i32
  }
  func.func @transform_3(%arg0: i32) -> (i32, i32) {
    %c0_i32 = arith.constant 0 : i32
    %c0_i32_0 = arith.constant 0 : i32
    %c0_i32_1 = arith.constant 0 : i32
    return %c0_i32, %c0_i32_0 : i32, i32
  }
  func.func @transform_4(%arg0: i32) -> (i32, i32) {
    %c0_i32 = arith.constant 0 : i32
    %c0_i32_0 = arith.constant 0 : i32
    %c0_i32_1 = arith.constant 0 : i32
    return %c0_i32, %c0_i32_0 : i32, i32
  }
  func.func @transform_5(%arg0: i32) -> (i32, i32) {
    %c0_i32 = arith.constant 0 : i32
    %c0_i32_0 = arith.constant 0 : i32
    %c0_i32_1 = arith.constant 0 : i32
    return %c0_i32, %c0_i32_0 : i32, i32
  }
  func.func @transform_6(%arg0: i32) -> (i32, i32) {
    %c0_i32 = arith.constant 0 : i32
    %c0_i32_0 = arith.constant 0 : i32
    %c0_i32_1 = arith.constant 0 : i32
    return %c0_i32, %c0_i32_0 : i32, i32
  }
  func.func @transform_7(%arg0: i32) -> (i32, i32) {
    %c0_i32 = arith.constant 0 : i32
    %c0_i32_0 = arith.constant 0 : i32
    %c0_i32_1 = arith.constant 0 : i32
    return %c0_i32, %c0_i32_0 : i32, i32
  }
  func.func @transform_8(%arg0: i32) -> (i32, i32, i32) {
    %c0_i32 = arith.constant 0 : i32
    %c0_i32_0 = arith.constant 0 : i32
    %c0_i32_1 = arith.constant 0 : i32
    return %arg0, %c0_i32, %c0_i32_0 : i32, i32, i32
  }
  func.func @transform_9(%arg0: i32) -> (i32, i32, i32) {
    %c0_i32 = arith.constant 0 : i32
    %c0_i32_0 = arith.constant 0 : i32
    %c0_i32_1 = arith.constant 0 : i32
    return %arg0, %c0_i32, %c0_i32_0 : i32, i32, i32
  }
}

module attributes {stable_mosaic.version = 11 : i64} {
  func.func @_conv_kernel(%arg0: i32, %arg1: memref<1x8x32xf32, #tpu.memory_space<vmem>>, %arg2: memref<1x2x1xf32, #tpu.memory_space<vmem>>, %arg3: memref<1x1xf32, #tpu.memory_space<vmem>>, %arg4: memref<1x1xf32, #tpu.memory_space<vmem>>, %arg5: memref<32x64xbf16, #tpu.memory_space<vmem>>, %arg6: memref<32x64xbf16, #tpu.memory_space<vmem>>, %arg7: memref<32x64xbf16, #tpu.memory_space<vmem>>, %arg8: memref<1x64xf32, #tpu.memory_space<vmem>>, %arg9: memref<1x8x64xf32, #tpu.memory_space<vmem>>, %arg10: memref<1x2x64xf32, #tpu.memory_space<vmem>>, %arg11: memref<10x32xf32, #tpu.memory_space<vmem>>) attributes {dimension_semantics = [#tpu.dimension_semantics<parallel>], iteration_bounds = array<i64: 2>, scalar_prefetch = 0 : i64, scratch_operands = 1 : i64, tpu.core_type = #tpu.core_type<tc>, window_params = [{transform_indices = @transform_0, window_bounds = array<i64: 1, 8, 32>}, {pipeline_mode = #tpu.pipeline_mode<synchronous>, transform_indices = @transform_1, window_bounds = array<i64: 1, 2, 1>}, {pipeline_mode = #tpu.pipeline_mode<synchronous>, transform_indices = @transform_2, window_bounds = array<i64: 1, 1>}, {pipeline_mode = #tpu.pipeline_mode<synchronous>, transform_indices = @transform_3, window_bounds = array<i64: 1, 1>}, {pipeline_mode = #tpu.pipeline_mode<synchronous>, transform_indices = @transform_4, window_bounds = array<i64: 32, 64>}, {pipeline_mode = #tpu.pipeline_mode<synchronous>, transform_indices = @transform_5, window_bounds = array<i64: 32, 64>}, {pipeline_mode = #tpu.pipeline_mode<synchronous>, transform_indices = @transform_6, window_bounds = array<i64: 32, 64>}, {pipeline_mode = #tpu.pipeline_mode<synchronous>, transform_indices = @transform_7, window_bounds = array<i64: 1, 64>}, {transform_indices = @transform_8, window_bounds = array<i64: 1, 8, 64>}, {transform_indices = @transform_9, window_bounds = array<i64: 1, 2, 64>}]} {
    %c0 = arith.constant 0 : index
    %c0_0 = arith.constant 0 : index
    %c0_1 = arith.constant 0 : index
    %0 = vector.load %arg1[%c0, %c0_0, %c0_1] : memref<1x8x32xf32, #tpu.memory_space<vmem>>, vector<1x8x32xf32>
    %1 = vector.shape_cast %0 : vector<1x8x32xf32> to vector<8x32xf32>
    %cst = arith.constant 0.000000e+00 : f32
    %2 = vector.broadcast %cst : f32 to vector<1x32xf32>
    %c0_2 = arith.constant 0 : index
    %c0_3 = arith.constant 0 : index
    %3 = vector.load %arg11[%c0_2, %c0_3] : memref<10x32xf32, #tpu.memory_space<vmem>>, vector<1x32xf32>
    tpu.vector_store %arg11[%c0_2, %c0_3], %2 {strides = array<i32>} : memref<10x32xf32, #tpu.memory_space<vmem>>, vector<1x32xf32>,
    %cst_4 = arith.constant 0.000000e+00 : f32
    %4 = vector.broadcast %cst_4 : f32 to vector<1x32xf32>
    %c9 = arith.constant 9 : index
    %c0_5 = arith.constant 0 : index
    %5 = vector.load %arg11[%c9, %c0_5] : memref<10x32xf32, #tpu.memory_space<vmem>>, vector<1x32xf32>
    tpu.vector_store %arg11[%c9, %c0_5], %4 {strides = array<i32>} : memref<10x32xf32, #tpu.memory_space<vmem>>, vector<1x32xf32>,
    %c1 = arith.constant 1 : index
    %c0_6 = arith.constant 0 : index
    %6 = vector.load %arg11[%c1, %c0_6] : memref<10x32xf32, #tpu.memory_space<vmem>>, vector<8x32xf32>
    tpu.vector_store %arg11[%c1, %c0_6], %1 {strides = array<i32>} : memref<10x32xf32, #tpu.memory_space<vmem>>, vector<8x32xf32>,
    %c0_7 = arith.constant 0 : index
    %c0_8 = arith.constant 0 : index
    %7 = vector.load %arg11[%c0_7, %c0_8] : memref<10x32xf32, #tpu.memory_space<vmem>>, vector<8x32xf32>
    %8 = arith.truncf %7 : vector<8x32xf32> to vector<8x32xbf16>
    %c0_9 = arith.constant 0 : index
    %c0_10 = arith.constant 0 : index
    %9 = vector.load %arg5[%c0_9, %c0_10] : memref<32x64xbf16, #tpu.memory_space<vmem>>, vector<32x64xbf16>
    %cst_11 = arith.constant dense<0.000000e+00> : vector<8x64xf32>
    %10 = tpu.matmul %8, %9, %cst_11 {dimension_numbers = #tpu.dot_dimension_numbers<[1], [0], [0], [1], [0, 0, 1, 1], [], []>} : vector<8x32xbf16>, vector<32x64xbf16>, vector<8x64xf32> -> vector<8x64xf32>
    %c1_12 = arith.constant 1 : index
    %c0_13 = arith.constant 0 : index
    %11 = vector.load %arg11[%c1_12, %c0_13] : memref<10x32xf32, #tpu.memory_space<vmem>>, vector<8x32xf32>
    %12 = arith.truncf %11 : vector<8x32xf32> to vector<8x32xbf16>
    %c0_14 = arith.constant 0 : index
    %c0_15 = arith.constant 0 : index
    %13 = vector.load %arg6[%c0_14, %c0_15] : memref<32x64xbf16, #tpu.memory_space<vmem>>, vector<32x64xbf16>
    %cst_16 = arith.constant dense<0.000000e+00> : vector<8x64xf32>
    %14 = tpu.matmul %12, %13, %cst_16 {dimension_numbers = #tpu.dot_dimension_numbers<[1], [0], [0], [1], [0, 0, 1, 1], [], []>} : vector<8x32xbf16>, vector<32x64xbf16>, vector<8x64xf32> -> vector<8x64xf32>
    %15 = arith.addf %10, %14 : vector<8x64xf32>
    %c2 = arith.constant 2 : index
    %c0_17 = arith.constant 0 : index
    %16 = vector.load %arg11[%c2, %c0_17] : memref<10x32xf32, #tpu.memory_space<vmem>>, vector<8x32xf32>
    %17 = arith.truncf %16 : vector<8x32xf32> to vector<8x32xbf16>
    %c0_18 = arith.constant 0 : index
    %c0_19 = arith.constant 0 : index
    %18 = vector.load %arg7[%c0_18, %c0_19] : memref<32x64xbf16, #tpu.memory_space<vmem>>, vector<32x64xbf16>
    %cst_20 = arith.constant dense<0.000000e+00> : vector<8x64xf32>
    %19 = tpu.matmul %17, %18, %cst_20 {dimension_numbers = #tpu.dot_dimension_numbers<[1], [0], [0], [1], [0, 0, 1, 1], [], []>} : vector<8x32xbf16>, vector<32x64xbf16>, vector<8x64xf32> -> vector<8x64xf32>
    %20 = arith.addf %15, %19 : vector<8x64xf32>
    %c0_21 = arith.constant 0 : index
    %c0_22 = arith.constant 0 : index
    %21 = vector.load %arg8[%c0_21, %c0_22] : memref<1x64xf32, #tpu.memory_space<vmem>>, vector<1x64xf32>
    %22 = vector.broadcast %21 : vector<1x64xf32> to vector<8x64xf32>
    %23 = arith.addf %20, %22 : vector<8x64xf32>
    %c0_23 = arith.constant 0 : index
    %c0_24 = arith.constant 0 : index
    %c0_25 = arith.constant 0 : index
    %24 = vector.load %arg9[%c0_23, %c0_24, %c0_25] : memref<1x8x64xf32, #tpu.memory_space<vmem>>, vector<1x8x64xf32>
    %25 = vector.shape_cast %24 : vector<1x8x64xf32> to vector<8x64xf32>
    %26 = vector.shape_cast %23 : vector<8x64xf32> to vector<1x8x64xf32>
    tpu.vector_store %arg9[%c0_23, %c0_24, %c0_25], %26 {strides = array<i32>} : memref<1x8x64xf32, #tpu.memory_space<vmem>>, vector<1x8x64xf32>,
    %cst_26 = arith.constant dense<0.000000e+00> : vector<64xf32>
    %27 = vector.multi_reduction <add>, %23, %cst_26 [0] : vector<8x64xf32> to vector<64xf32>
    %28 = vector.shape_cast %27 : vector<64xf32> to vector<1x64xf32>
    %c0_27 = arith.constant 0 : index
    %c0_28 = arith.constant 0 : index
    %c0_29 = arith.constant 0 : index
    %29 = vector.load %arg10[%c0_27, %c0_28, %c0_29] : memref<1x2x64xf32, #tpu.memory_space<vmem>>, vector<1x1x64xf32>
    %30 = vector.shape_cast %29 : vector<1x1x64xf32> to vector<1x64xf32>
    %31 = vector.shape_cast %28 : vector<1x64xf32> to vector<1x1x64xf32>
    tpu.vector_store %arg10[%c0_27, %c0_28, %c0_29], %31 {strides = array<i32>} : memref<1x2x64xf32, #tpu.memory_space<vmem>>, vector<1x1x64xf32>,
    %32 = arith.mulf %23, %23 : vector<8x64xf32>
    %cst_30 = arith.constant dense<0.000000e+00> : vector<64xf32>
    %33 = vector.multi_reduction <add>, %32, %cst_30 [0] : vector<8x64xf32> to vector<64xf32>
    %34 = vector.shape_cast %33 : vector<64xf32> to vector<1x64xf32>
    %c0_31 = arith.constant 0 : index
    %c1_32 = arith.constant 1 : index
    %c0_33 = arith.constant 0 : index
    %35 = vector.load %arg10[%c0_31, %c1_32, %c0_33] : memref<1x2x64xf32, #tpu.memory_space<vmem>>, vector<1x1x64xf32>
    %36 = vector.shape_cast %35 : vector<1x1x64xf32> to vector<1x64xf32>
    %37 = vector.shape_cast %34 : vector<1x64xf32> to vector<1x1x64xf32>
    tpu.vector_store %arg10[%c0_31, %c1_32, %c0_33], %37 {strides = array<i32>} : memref<1x2x64xf32, #tpu.memory_space<vmem>>, vector<1x1x64xf32>,
    return
  }
  func.func @transform_0(%arg0: i32) -> (i32, i32, i32) {
    %c0_i32 = arith.constant 0 : i32
    %c0_i32_0 = arith.constant 0 : i32
    %c0_i32_1 = arith.constant 0 : i32
    return %arg0, %c0_i32, %c0_i32_0 : i32, i32, i32
  }
  func.func @transform_1(%arg0: i32) -> (i32, i32, i32) {
    %c0_i32 = arith.constant 0 : i32
    %c0_i32_0 = arith.constant 0 : i32
    %c0_i32_1 = arith.constant 0 : i32
    %c0_i32_2 = arith.constant 0 : i32
    return %c0_i32, %c0_i32_0, %c0_i32_1 : i32, i32, i32
  }
  func.func @transform_2(%arg0: i32) -> (i32, i32) {
    %c0_i32 = arith.constant 0 : i32
    %c0_i32_0 = arith.constant 0 : i32
    %c0_i32_1 = arith.constant 0 : i32
    return %c0_i32, %c0_i32_0 : i32, i32
  }
  func.func @transform_3(%arg0: i32) -> (i32, i32) {
    %c0_i32 = arith.constant 0 : i32
    %c0_i32_0 = arith.constant 0 : i32
    %c0_i32_1 = arith.constant 0 : i32
    return %c0_i32, %c0_i32_0 : i32, i32
  }
  func.func @transform_4(%arg0: i32) -> (i32, i32) {
    %c0_i32 = arith.constant 0 : i32
    %c0_i32_0 = arith.constant 0 : i32
    %c0_i32_1 = arith.constant 0 : i32
    return %c0_i32, %c0_i32_0 : i32, i32
  }
  func.func @transform_5(%arg0: i32) -> (i32, i32) {
    %c0_i32 = arith.constant 0 : i32
    %c0_i32_0 = arith.constant 0 : i32
    %c0_i32_1 = arith.constant 0 : i32
    return %c0_i32, %c0_i32_0 : i32, i32
  }
  func.func @transform_6(%arg0: i32) -> (i32, i32) {
    %c0_i32 = arith.constant 0 : i32
    %c0_i32_0 = arith.constant 0 : i32
    %c0_i32_1 = arith.constant 0 : i32
    return %c0_i32, %c0_i32_0 : i32, i32
  }
  func.func @transform_7(%arg0: i32) -> (i32, i32) {
    %c0_i32 = arith.constant 0 : i32
    %c0_i32_0 = arith.constant 0 : i32
    %c0_i32_1 = arith.constant 0 : i32
    return %c0_i32, %c0_i32_0 : i32, i32
  }
  func.func @transform_8(%arg0: i32) -> (i32, i32, i32) {
    %c0_i32 = arith.constant 0 : i32
    %c0_i32_0 = arith.constant 0 : i32
    %c0_i32_1 = arith.constant 0 : i32
    return %arg0, %c0_i32, %c0_i32_0 : i32, i32, i32
  }
  func.func @transform_9(%arg0: i32) -> (i32, i32, i32) {
    %c0_i32 = arith.constant 0 : i32
    %c0_i32_0 = arith.constant 0 : i32
    %c0_i32_1 = arith.constant 0 : i32
    return %arg0, %c0_i32, %c0_i32_0 : i32, i32, i32
  }
}

module attributes {stable_mosaic.version = 11 : i64} {
  func.func @_pool_bn_relu_kernel(%arg0: i32, %arg1: memref<1x16x64xf32, #tpu.memory_space<vmem>>, %arg2: memref<2x2x64xf32, #tpu.memory_space<vmem>>, %arg3: memref<64x4xf32, #tpu.memory_space<vmem>>, %arg4: memref<4x32xf32, #tpu.memory_space<vmem>>, %arg5: memref<8x16xf32, #tpu.memory_space<vmem>>, %arg6: memref<8x16xf32, #tpu.memory_space<vmem>>, %arg7: memref<64x32xf32, #tpu.memory_space<vmem>>, %arg8: memref<64x32xf32, #tpu.memory_space<vmem>>, %arg9: memref<1x8x32xf32, #tpu.memory_space<vmem>>) attributes {dimension_semantics = [#tpu.dimension_semantics<parallel>], iteration_bounds = array<i64: 2>, scalar_prefetch = 0 : i64, scratch_operands = 0 : i64, tpu.core_type = #tpu.core_type<tc>, window_params = [{transform_indices = @transform_0, window_bounds = array<i64: 1, 16, 64>}, {pipeline_mode = #tpu.pipeline_mode<synchronous>, transform_indices = @transform_1, window_bounds = array<i64: 2, 2, 64>}, {pipeline_mode = #tpu.pipeline_mode<synchronous>, transform_indices = @transform_2, window_bounds = array<i64: 64, 4>}, {pipeline_mode = #tpu.pipeline_mode<synchronous>, transform_indices = @transform_3, window_bounds = array<i64: 4, 32>}, {pipeline_mode = #tpu.pipeline_mode<synchronous>, transform_indices = @transform_4, window_bounds = array<i64: 8, 16>}, {pipeline_mode = #tpu.pipeline_mode<synchronous>, transform_indices = @transform_5, window_bounds = array<i64: 8, 16>}, {pipeline_mode = #tpu.pipeline_mode<synchronous>, transform_indices = @transform_6, window_bounds = array<i64: 64, 32>}, {pipeline_mode = #tpu.pipeline_mode<synchronous>, transform_indices = @transform_7, window_bounds = array<i64: 64, 32>}, {transform_indices = @transform_8, window_bounds = array<i64: 1, 8, 32>}]} {
    %c0 = arith.constant 0 : index
    %c0_0 = arith.constant 0 : index
    %c0_1 = arith.constant 0 : index
    %0 = vector.load %arg1[%c0, %c0_0, %c0_1] : memref<1x16x64xf32, #tpu.memory_space<vmem>>, vector<1x16x64xf32>
    %1 = vector.shape_cast %0 : vector<1x16x64xf32> to vector<16x64xf32>
    %c0_2 = arith.constant 0 : index
    %c0_3 = arith.constant 0 : index
    %c0_4 = arith.constant 0 : index
    %2 = vector.load %arg2[%c0_2, %c0_3, %c0_4] : memref<2x2x64xf32, #tpu.memory_space<vmem>>, vector<2x2x64xf32>
    %c0_5 = arith.constant 0 : index
    %c0_6 = arith.constant 0 : index
    %3 = vector.load %arg3[%c0_5, %c0_6] : memref<64x4xf32, #tpu.memory_space<vmem>>, vector<64x4xf32>
    %c0_7 = arith.constant 0 : index
    %c0_8 = arith.constant 0 : index
    %4 = vector.load %arg4[%c0_7, %c0_8] : memref<4x32xf32, #tpu.memory_space<vmem>>, vector<4x32xf32>
    %cst = arith.constant dense<0.000000e+00> : vector<2x64xf32>
    %5 = vector.multi_reduction <add>, %2, %cst [0] : vector<2x2x64xf32> to vector<2x64xf32>
    %6 = vector.extract_strided_slice %5 {offsets = [0, 0], sizes = [1, 64], strides = [1, 1]} : vector<2x64xf32> to vector<1x64xf32>
    %cst_9 = arith.constant dense<0.000000e+00> : vector<1x4xf32>
    %7 = tpu.matmul %6, %3, %cst_9 {dimension_numbers = #tpu.dot_dimension_numbers<[1], [0], [0], [1], [0, 0, 1, 1], [], []>} : vector<1x64xf32>, vector<64x4xf32>, vector<1x4xf32> -> vector<1x4xf32>
    %8 = vector.extract_strided_slice %5 {offsets = [1, 0], sizes = [1, 64], strides = [1, 1]} : vector<2x64xf32> to vector<1x64xf32>
    %cst_10 = arith.constant dense<0.000000e+00> : vector<1x4xf32>
    %9 = tpu.matmul %8, %3, %cst_10 {dimension_numbers = #tpu.dot_dimension_numbers<[1], [0], [0], [1], [0, 0, 1, 1], [], []>} : vector<1x64xf32>, vector<64x4xf32>, vector<1x4xf32> -> vector<1x4xf32>
    %cst_11 = arith.constant 5.120000e+02 : f32
    %10 = vector.broadcast %cst_11 : f32 to vector<1x4xf32>
    %11 = arith.divf %7, %10 : vector<1x4xf32>
    %cst_12 = arith.constant 5.120000e+02 : f32
    %12 = vector.broadcast %cst_12 : f32 to vector<1x4xf32>
    %13 = arith.divf %9, %12 : vector<1x4xf32>
    %14 = arith.mulf %11, %11 : vector<1x4xf32>
    %15 = arith.subf %13, %14 : vector<1x4xf32>
    %cst_13 = arith.constant 0.000000e+00 : f32
    %16 = vector.broadcast %cst_13 : f32 to vector<1x4xf32>
    %17 = arith.maximumf %15, %16 : vector<1x4xf32>
    %cst_14 = arith.constant 9.99999974E-6 : f32
    %18 = vector.broadcast %cst_14 : f32 to vector<1x4xf32>
    %19 = arith.addf %17, %18 : vector<1x4xf32>
    %20 = math.rsqrt %19 : vector<1x4xf32>
    %cst_15 = arith.constant dense<0.000000e+00> : vector<1x32xf32>
    %21 = tpu.matmul %20, %4, %cst_15 {dimension_numbers = #tpu.dot_dimension_numbers<[1], [0], [0], [1], [0, 0, 1, 1], [], []>} : vector<1x4xf32>, vector<4x32xf32>, vector<1x32xf32> -> vector<1x32xf32>
    %cst_16 = arith.constant 0.000000e+00 : f32
    %22 = vector.broadcast %cst_16 : f32 to vector<1x4xf32>
    %23 = arith.subf %22, %11 : vector<1x4xf32>
    %24 = arith.mulf %23, %20 : vector<1x4xf32>
    %cst_17 = arith.constant dense<0.000000e+00> : vector<1x32xf32>
    %25 = tpu.matmul %24, %4, %cst_17 {dimension_numbers = #tpu.dot_dimension_numbers<[1], [0], [0], [1], [0, 0, 1, 1], [], []>} : vector<1x4xf32>, vector<4x32xf32>, vector<1x32xf32> -> vector<1x32xf32>
    %c0_18 = arith.constant 0 : index
    %c0_19 = arith.constant 0 : index
    %26 = vector.load %arg5[%c0_18, %c0_19] : memref<8x16xf32, #tpu.memory_space<vmem>>, vector<8x16xf32>
    %cst_20 = arith.constant dense<0.000000e+00> : vector<8x64xf32>
    %27 = tpu.matmul %26, %1, %cst_20 {dimension_numbers = #tpu.dot_dimension_numbers<[1], [0], [0], [1], [0, 0, 1, 1], [], []>} : vector<8x16xf32>, vector<16x64xf32>, vector<8x64xf32> -> vector<8x64xf32>
    %c0_21 = arith.constant 0 : index
    %c0_22 = arith.constant 0 : index
    %28 = vector.load %arg6[%c0_21, %c0_22] : memref<8x16xf32, #tpu.memory_space<vmem>>, vector<8x16xf32>
    %cst_23 = arith.constant dense<0.000000e+00> : vector<8x64xf32>
    %29 = tpu.matmul %28, %1, %cst_23 {dimension_numbers = #tpu.dot_dimension_numbers<[1], [0], [0], [1], [0, 0, 1, 1], [], []>} : vector<8x16xf32>, vector<16x64xf32>, vector<8x64xf32> -> vector<8x64xf32>
    %30 = arith.maximumf %27, %29 : vector<8x64xf32>
    %c0_24 = arith.constant 0 : index
    %c0_25 = arith.constant 0 : index
    %31 = vector.load %arg7[%c0_24, %c0_25] : memref<64x32xf32, #tpu.memory_space<vmem>>, vector<64x32xf32>
    %cst_26 = arith.constant dense<0.000000e+00> : vector<8x32xf32>
    %32 = tpu.matmul %30, %31, %cst_26 {dimension_numbers = #tpu.dot_dimension_numbers<[1], [0], [0], [1], [0, 0, 1, 1], [], []>} : vector<8x64xf32>, vector<64x32xf32>, vector<8x32xf32> -> vector<8x32xf32>
    %c0_27 = arith.constant 0 : index
    %c0_28 = arith.constant 0 : index
    %33 = vector.load %arg8[%c0_27, %c0_28] : memref<64x32xf32, #tpu.memory_space<vmem>>, vector<64x32xf32>
    %cst_29 = arith.constant dense<0.000000e+00> : vector<8x32xf32>
    %34 = tpu.matmul %30, %33, %cst_29 {dimension_numbers = #tpu.dot_dimension_numbers<[1], [0], [0], [1], [0, 0, 1, 1], [], []>} : vector<8x64xf32>, vector<64x32xf32>, vector<8x32xf32> -> vector<8x32xf32>
    %35 = arith.maximumf %32, %34 : vector<8x32xf32>
    %36 = vector.broadcast %21 : vector<1x32xf32> to vector<8x32xf32>
    %37 = arith.mulf %35, %36 : vector<8x32xf32>
    %38 = vector.broadcast %25 : vector<1x32xf32> to vector<8x32xf32>
    %39 = arith.addf %37, %38 : vector<8x32xf32>
    %cst_30 = arith.constant 0.000000e+00 : f32
    %40 = vector.broadcast %cst_30 : f32 to vector<8x32xf32>
    %41 = arith.maximumf %39, %40 : vector<8x32xf32>
    %c0_31 = arith.constant 0 : index
    %c0_32 = arith.constant 0 : index
    %c0_33 = arith.constant 0 : index
    %42 = vector.load %arg9[%c0_31, %c0_32, %c0_33] : memref<1x8x32xf32, #tpu.memory_space<vmem>>, vector<1x8x32xf32>
    %43 = vector.shape_cast %42 : vector<1x8x32xf32> to vector<8x32xf32>
    %44 = vector.shape_cast %41 : vector<8x32xf32> to vector<1x8x32xf32>
    tpu.vector_store %arg9[%c0_31, %c0_32, %c0_33], %44 {strides = array<i32>} : memref<1x8x32xf32, #tpu.memory_space<vmem>>, vector<1x8x32xf32>,
    return
  }
  func.func @transform_0(%arg0: i32) -> (i32, i32, i32) {
    %c0_i32 = arith.constant 0 : i32
    %c0_i32_0 = arith.constant 0 : i32
    %c0_i32_1 = arith.constant 0 : i32
    return %arg0, %c0_i32, %c0_i32_0 : i32, i32, i32
  }
  func.func @transform_1(%arg0: i32) -> (i32, i32, i32) {
    %c0_i32 = arith.constant 0 : i32
    %c0_i32_0 = arith.constant 0 : i32
    %c0_i32_1 = arith.constant 0 : i32
    %c0_i32_2 = arith.constant 0 : i32
    return %c0_i32, %c0_i32_0, %c0_i32_1 : i32, i32, i32
  }
  func.func @transform_2(%arg0: i32) -> (i32, i32) {
    %c0_i32 = arith.constant 0 : i32
    %c0_i32_0 = arith.constant 0 : i32
    %c0_i32_1 = arith.constant 0 : i32
    return %c0_i32, %c0_i32_0 : i32, i32
  }
  func.func @transform_3(%arg0: i32) -> (i32, i32) {
    %c0_i32 = arith.constant 0 : i32
    %c0_i32_0 = arith.constant 0 : i32
    %c0_i32_1 = arith.constant 0 : i32
    return %c0_i32, %c0_i32_0 : i32, i32
  }
  func.func @transform_4(%arg0: i32) -> (i32, i32) {
    %c0_i32 = arith.constant 0 : i32
    %c0_i32_0 = arith.constant 0 : i32
    %c0_i32_1 = arith.constant 0 : i32
    return %c0_i32, %c0_i32_0 : i32, i32
  }
  func.func @transform_5(%arg0: i32) -> (i32, i32) {
    %c0_i32 = arith.constant 0 : i32
    %c0_i32_0 = arith.constant 0 : i32
    %c0_i32_1 = arith.constant 0 : i32
    return %c0_i32, %c0_i32_0 : i32, i32
  }
  func.func @transform_6(%arg0: i32) -> (i32, i32) {
    %c0_i32 = arith.constant 0 : i32
    %c0_i32_0 = arith.constant 0 : i32
    %c0_i32_1 = arith.constant 0 : i32
    return %c0_i32, %c0_i32_0 : i32, i32
  }
  func.func @transform_7(%arg0: i32) -> (i32, i32) {
    %c0_i32 = arith.constant 0 : i32
    %c0_i32_0 = arith.constant 0 : i32
    %c0_i32_1 = arith.constant 0 : i32
    return %c0_i32, %c0_i32_0 : i32, i32
  }
  func.func @transform_8(%arg0: i32) -> (i32, i32, i32) {
    %c0_i32 = arith.constant 0 : i32
    %c0_i32_0 = arith.constant 0 : i32
    %c0_i32_1 = arith.constant 0 : i32
    return %arg0, %c0_i32, %c0_i32_0 : i32, i32, i32
  }
}

module attributes {stable_mosaic.version = 11 : i64} {
  func.func @_pool_bn_relu_kernel(%arg0: i32, %arg1: memref<1x8x64xf32, #tpu.memory_space<vmem>>, %arg2: memref<2x2x64xf32, #tpu.memory_space<vmem>>, %arg3: memref<64x8xf32, #tpu.memory_space<vmem>>, %arg4: memref<8x32xf32, #tpu.memory_space<vmem>>, %arg5: memref<4x8xf32, #tpu.memory_space<vmem>>, %arg6: memref<4x8xf32, #tpu.memory_space<vmem>>, %arg7: memref<64x32xf32, #tpu.memory_space<vmem>>, %arg8: memref<64x32xf32, #tpu.memory_space<vmem>>, %arg9: memref<1x4x32xf32, #tpu.memory_space<vmem>>) attributes {dimension_semantics = [#tpu.dimension_semantics<parallel>], iteration_bounds = array<i64: 2>, scalar_prefetch = 0 : i64, scratch_operands = 0 : i64, tpu.core_type = #tpu.core_type<tc>, window_params = [{transform_indices = @transform_0, window_bounds = array<i64: 1, 8, 64>}, {pipeline_mode = #tpu.pipeline_mode<synchronous>, transform_indices = @transform_1, window_bounds = array<i64: 2, 2, 64>}, {pipeline_mode = #tpu.pipeline_mode<synchronous>, transform_indices = @transform_2, window_bounds = array<i64: 64, 8>}, {pipeline_mode = #tpu.pipeline_mode<synchronous>, transform_indices = @transform_3, window_bounds = array<i64: 8, 32>}, {pipeline_mode = #tpu.pipeline_mode<synchronous>, transform_indices = @transform_4, window_bounds = array<i64: 4, 8>}, {pipeline_mode = #tpu.pipeline_mode<synchronous>, transform_indices = @transform_5, window_bounds = array<i64: 4, 8>}, {pipeline_mode = #tpu.pipeline_mode<synchronous>, transform_indices = @transform_6, window_bounds = array<i64: 64, 32>}, {pipeline_mode = #tpu.pipeline_mode<synchronous>, transform_indices = @transform_7, window_bounds = array<i64: 64, 32>}, {transform_indices = @transform_8, window_bounds = array<i64: 1, 4, 32>}]} {
    %c0 = arith.constant 0 : index
    %c0_0 = arith.constant 0 : index
    %c0_1 = arith.constant 0 : index
    %0 = vector.load %arg1[%c0, %c0_0, %c0_1] : memref<1x8x64xf32, #tpu.memory_space<vmem>>, vector<1x8x64xf32>
    %1 = vector.shape_cast %0 : vector<1x8x64xf32> to vector<8x64xf32>
    %c0_2 = arith.constant 0 : index
    %c0_3 = arith.constant 0 : index
    %c0_4 = arith.constant 0 : index
    %2 = vector.load %arg2[%c0_2, %c0_3, %c0_4] : memref<2x2x64xf32, #tpu.memory_space<vmem>>, vector<2x2x64xf32>
    %c0_5 = arith.constant 0 : index
    %c0_6 = arith.constant 0 : index
    %3 = vector.load %arg3[%c0_5, %c0_6] : memref<64x8xf32, #tpu.memory_space<vmem>>, vector<64x8xf32>
    %c0_7 = arith.constant 0 : index
    %c0_8 = arith.constant 0 : index
    %4 = vector.load %arg4[%c0_7, %c0_8] : memref<8x32xf32, #tpu.memory_space<vmem>>, vector<8x32xf32>
    %cst = arith.constant dense<0.000000e+00> : vector<2x64xf32>
    %5 = vector.multi_reduction <add>, %2, %cst [0] : vector<2x2x64xf32> to vector<2x64xf32>
    %6 = vector.extract_strided_slice %5 {offsets = [0, 0], sizes = [1, 64], strides = [1, 1]} : vector<2x64xf32> to vector<1x64xf32>
    %cst_9 = arith.constant dense<0.000000e+00> : vector<1x8xf32>
    %7 = tpu.matmul %6, %3, %cst_9 {dimension_numbers = #tpu.dot_dimension_numbers<[1], [0], [0], [1], [0, 0, 1, 1], [], []>} : vector<1x64xf32>, vector<64x8xf32>, vector<1x8xf32> -> vector<1x8xf32>
    %8 = vector.extract_strided_slice %5 {offsets = [1, 0], sizes = [1, 64], strides = [1, 1]} : vector<2x64xf32> to vector<1x64xf32>
    %cst_10 = arith.constant dense<0.000000e+00> : vector<1x8xf32>
    %9 = tpu.matmul %8, %3, %cst_10 {dimension_numbers = #tpu.dot_dimension_numbers<[1], [0], [0], [1], [0, 0, 1, 1], [], []>} : vector<1x64xf32>, vector<64x8xf32>, vector<1x8xf32> -> vector<1x8xf32>
    %cst_11 = arith.constant 1.280000e+02 : f32
    %10 = vector.broadcast %cst_11 : f32 to vector<1x8xf32>
    %11 = arith.divf %7, %10 : vector<1x8xf32>
    %cst_12 = arith.constant 1.280000e+02 : f32
    %12 = vector.broadcast %cst_12 : f32 to vector<1x8xf32>
    %13 = arith.divf %9, %12 : vector<1x8xf32>
    %14 = arith.mulf %11, %11 : vector<1x8xf32>
    %15 = arith.subf %13, %14 : vector<1x8xf32>
    %cst_13 = arith.constant 0.000000e+00 : f32
    %16 = vector.broadcast %cst_13 : f32 to vector<1x8xf32>
    %17 = arith.maximumf %15, %16 : vector<1x8xf32>
    %cst_14 = arith.constant 9.99999974E-6 : f32
    %18 = vector.broadcast %cst_14 : f32 to vector<1x8xf32>
    %19 = arith.addf %17, %18 : vector<1x8xf32>
    %20 = math.rsqrt %19 : vector<1x8xf32>
    %cst_15 = arith.constant dense<0.000000e+00> : vector<1x32xf32>
    %21 = tpu.matmul %20, %4, %cst_15 {dimension_numbers = #tpu.dot_dimension_numbers<[1], [0], [0], [1], [0, 0, 1, 1], [], []>} : vector<1x8xf32>, vector<8x32xf32>, vector<1x32xf32> -> vector<1x32xf32>
    %cst_16 = arith.constant 0.000000e+00 : f32
    %22 = vector.broadcast %cst_16 : f32 to vector<1x8xf32>
    %23 = arith.subf %22, %11 : vector<1x8xf32>
    %24 = arith.mulf %23, %20 : vector<1x8xf32>
    %cst_17 = arith.constant dense<0.000000e+00> : vector<1x32xf32>
    %25 = tpu.matmul %24, %4, %cst_17 {dimension_numbers = #tpu.dot_dimension_numbers<[1], [0], [0], [1], [0, 0, 1, 1], [], []>} : vector<1x8xf32>, vector<8x32xf32>, vector<1x32xf32> -> vector<1x32xf32>
    %c0_18 = arith.constant 0 : index
    %c0_19 = arith.constant 0 : index
    %26 = vector.load %arg5[%c0_18, %c0_19] : memref<4x8xf32, #tpu.memory_space<vmem>>, vector<4x8xf32>
    %cst_20 = arith.constant dense<0.000000e+00> : vector<4x64xf32>
    %27 = tpu.matmul %26, %1, %cst_20 {dimension_numbers = #tpu.dot_dimension_numbers<[1], [0], [0], [1], [0, 0, 1, 1], [], []>} : vector<4x8xf32>, vector<8x64xf32>, vector<4x64xf32> -> vector<4x64xf32>
    %c0_21 = arith.constant 0 : index
    %c0_22 = arith.constant 0 : index
    %28 = vector.load %arg6[%c0_21, %c0_22] : memref<4x8xf32, #tpu.memory_space<vmem>>, vector<4x8xf32>
    %cst_23 = arith.constant dense<0.000000e+00> : vector<4x64xf32>
    %29 = tpu.matmul %28, %1, %cst_23 {dimension_numbers = #tpu.dot_dimension_numbers<[1], [0], [0], [1], [0, 0, 1, 1], [], []>} : vector<4x8xf32>, vector<8x64xf32>, vector<4x64xf32> -> vector<4x64xf32>
    %30 = arith.maximumf %27, %29 : vector<4x64xf32>
    %c0_24 = arith.constant 0 : index
    %c0_25 = arith.constant 0 : index
    %31 = vector.load %arg7[%c0_24, %c0_25] : memref<64x32xf32, #tpu.memory_space<vmem>>, vector<64x32xf32>
    %cst_26 = arith.constant dense<0.000000e+00> : vector<4x32xf32>
    %32 = tpu.matmul %30, %31, %cst_26 {dimension_numbers = #tpu.dot_dimension_numbers<[1], [0], [0], [1], [0, 0, 1, 1], [], []>} : vector<4x64xf32>, vector<64x32xf32>, vector<4x32xf32> -> vector<4x32xf32>
    %c0_27 = arith.constant 0 : index
    %c0_28 = arith.constant 0 : index
    %33 = vector.load %arg8[%c0_27, %c0_28] : memref<64x32xf32, #tpu.memory_space<vmem>>, vector<64x32xf32>
    %cst_29 = arith.constant dense<0.000000e+00> : vector<4x32xf32>
    %34 = tpu.matmul %30, %33, %cst_29 {dimension_numbers = #tpu.dot_dimension_numbers<[1], [0], [0], [1], [0, 0, 1, 1], [], []>} : vector<4x64xf32>, vector<64x32xf32>, vector<4x32xf32> -> vector<4x32xf32>
    %35 = arith.maximumf %32, %34 : vector<4x32xf32>
    %36 = vector.broadcast %21 : vector<1x32xf32> to vector<4x32xf32>
    %37 = arith.mulf %35, %36 : vector<4x32xf32>
    %38 = vector.broadcast %25 : vector<1x32xf32> to vector<4x32xf32>
    %39 = arith.addf %37, %38 : vector<4x32xf32>
    %cst_30 = arith.constant 0.000000e+00 : f32
    %40 = vector.broadcast %cst_30 : f32 to vector<4x32xf32>
    %41 = arith.maximumf %39, %40 : vector<4x32xf32>
    %c0_31 = arith.constant 0 : index
    %c0_32 = arith.constant 0 : index
    %c0_33 = arith.constant 0 : index
    %42 = vector.load %arg9[%c0_31, %c0_32, %c0_33] : memref<1x4x32xf32, #tpu.memory_space<vmem>>, vector<1x4x32xf32>
    %43 = vector.shape_cast %42 : vector<1x4x32xf32> to vector<4x32xf32>
    %44 = vector.shape_cast %41 : vector<4x32xf32> to vector<1x4x32xf32>
    tpu.vector_store %arg9[%c0_31, %c0_32, %c0_33], %44 {strides = array<i32>} : memref<1x4x32xf32, #tpu.memory_space<vmem>>, vector<1x4x32xf32>,
    return
  }
  func.func @transform_0(%arg0: i32) -> (i32, i32, i32) {
    %c0_i32 = arith.constant 0 : i32
    %c0_i32_0 = arith.constant 0 : i32
    %c0_i32_1 = arith.constant 0 : i32
    return %arg0, %c0_i32, %c0_i32_0 : i32, i32, i32
  }
  func.func @transform_1(%arg0: i32) -> (i32, i32, i32) {
    %c0_i32 = arith.constant 0 : i32
    %c0_i32_0 = arith.constant 0 : i32
    %c0_i32_1 = arith.constant 0 : i32
    %c0_i32_2 = arith.constant 0 : i32
    return %c0_i32, %c0_i32_0, %c0_i32_1 : i32, i32, i32
  }
  func.func @transform_2(%arg0: i32) -> (i32, i32) {
    %c0_i32 = arith.constant 0 : i32
    %c0_i32_0 = arith.constant 0 : i32
    %c0_i32_1 = arith.constant 0 : i32
    return %c0_i32, %c0_i32_0 : i32, i32
  }
  func.func @transform_3(%arg0: i32) -> (i32, i32) {
    %c0_i32 = arith.constant 0 : i32
    %c0_i32_0 = arith.constant 0 : i32
    %c0_i32_1 = arith.constant 0 : i32
    return %c0_i32, %c0_i32_0 : i32, i32
  }
  func.func @transform_4(%arg0: i32) -> (i32, i32) {
    %c0_i32 = arith.constant 0 : i32
    %c0_i32_0 = arith.constant 0 : i32
    %c0_i32_1 = arith.constant 0 : i32
    return %c0_i32, %c0_i32_0 : i32, i32
  }
  func.func @transform_5(%arg0: i32) -> (i32, i32) {
    %c0_i32 = arith.constant 0 : i32
    %c0_i32_0 = arith.constant 0 : i32
    %c0_i32_1 = arith.constant 0 : i32
    return %c0_i32, %c0_i32_0 : i32, i32
  }
  func.func @transform_6(%arg0: i32) -> (i32, i32) {
    %c0_i32 = arith.constant 0 : i32
    %c0_i32_0 = arith.constant 0 : i32
    %c0_i32_1 = arith.constant 0 : i32
    return %c0_i32, %c0_i32_0 : i32, i32
  }
  func.func @transform_7(%arg0: i32) -> (i32, i32) {
    %c0_i32 = arith.constant 0 : i32
    %c0_i32_0 = arith.constant 0 : i32
    %c0_i32_1 = arith.constant 0 : i32
    return %c0_i32, %c0_i32_0 : i32, i32
  }
  func.func @transform_8(%arg0: i32) -> (i32, i32, i32) {
    %c0_i32 = arith.constant 0 : i32
    %c0_i32_0 = arith.constant 0 : i32
    %c0_i32_1 = arith.constant 0 : i32
    return %arg0, %c0_i32, %c0_i32_0 : i32, i32, i32
  }
}

module attributes {stable_mosaic.version = 11 : i64} {
  func.func @_mlp_kernel(%arg0: memref<2x128xf32, #tpu.memory_space<vmem>>, %arg1: memref<128x64xbf16, #tpu.memory_space<vmem>>, %arg2: memref<1x64xf32, #tpu.memory_space<vmem>>, %arg3: memref<64x8xbf16, #tpu.memory_space<vmem>>, %arg4: memref<1x8xf32, #tpu.memory_space<vmem>>, %arg5: memref<8x64xbf16, #tpu.memory_space<vmem>>, %arg6: memref<1x64xf32, #tpu.memory_space<vmem>>, %arg7: memref<64x128xbf16, #tpu.memory_space<vmem>>, %arg8: memref<1x128xf32, #tpu.memory_space<vmem>>, %arg9: memref<128x8xf32, #tpu.memory_space<vmem>>, %arg10: memref<8x128xf32, #tpu.memory_space<vmem>>, %arg11: memref<2x128xf32, #tpu.memory_space<vmem>>) attributes {dimension_semantics = [], scalar_prefetch = 0 : i64, scratch_operands = 0 : i64, tpu.core_type = #tpu.core_type<tc>} {
    %c0 = arith.constant 0 : index
    %c0_0 = arith.constant 0 : index
    %0 = vector.load %arg0[%c0, %c0_0] : memref<2x128xf32, #tpu.memory_space<vmem>>, vector<2x128xf32>
    %1 = arith.truncf %0 : vector<2x128xf32> to vector<2x128xbf16>
    %c0_1 = arith.constant 0 : index
    %c0_2 = arith.constant 0 : index
    %2 = vector.load %arg1[%c0_1, %c0_2] : memref<128x64xbf16, #tpu.memory_space<vmem>>, vector<128x64xbf16>
    %cst = arith.constant dense<0.000000e+00> : vector<2x64xf32>
    %3 = tpu.matmul %1, %2, %cst {dimension_numbers = #tpu.dot_dimension_numbers<[1], [0], [0], [1], [0, 0, 1, 1], [], []>} : vector<2x128xbf16>, vector<128x64xbf16>, vector<2x64xf32> -> vector<2x64xf32>
    %c0_3 = arith.constant 0 : index
    %c0_4 = arith.constant 0 : index
    %4 = vector.load %arg2[%c0_3, %c0_4] : memref<1x64xf32, #tpu.memory_space<vmem>>, vector<1x64xf32>
    %5 = vector.broadcast %4 : vector<1x64xf32> to vector<2x64xf32>
    %6 = arith.addf %3, %5 : vector<2x64xf32>
    %cst_5 = arith.constant dense<0.000000e+00> : vector<64xf32>
    %7 = vector.multi_reduction <add>, %6, %cst_5 [0] : vector<2x64xf32> to vector<64xf32>
    %8 = vector.shape_cast %7 : vector<64xf32> to vector<1x64xf32>
    %cst_6 = arith.constant 2.000000e+00 : f32
    %9 = vector.broadcast %cst_6 : f32 to vector<1x64xf32>
    %10 = arith.divf %8, %9 : vector<1x64xf32>
    %11 = arith.mulf %6, %6 : vector<2x64xf32>
    %cst_7 = arith.constant dense<0.000000e+00> : vector<64xf32>
    %12 = vector.multi_reduction <add>, %11, %cst_7 [0] : vector<2x64xf32> to vector<64xf32>
    %13 = vector.shape_cast %12 : vector<64xf32> to vector<1x64xf32>
    %cst_8 = arith.constant 2.000000e+00 : f32
    %14 = vector.broadcast %cst_8 : f32 to vector<1x64xf32>
    %15 = arith.divf %13, %14 : vector<1x64xf32>
    %16 = arith.mulf %10, %10 : vector<1x64xf32>
    %17 = arith.subf %15, %16 : vector<1x64xf32>
    %cst_9 = arith.constant 0.000000e+00 : f32
    %18 = vector.broadcast %cst_9 : f32 to vector<1x64xf32>
    %19 = arith.maximumf %17, %18 : vector<1x64xf32>
    %cst_10 = arith.constant 9.99999974E-6 : f32
    %20 = vector.broadcast %cst_10 : f32 to vector<1x64xf32>
    %21 = arith.addf %19, %20 : vector<1x64xf32>
    %22 = math.rsqrt %21 : vector<1x64xf32>
    %23 = vector.broadcast %10 : vector<1x64xf32> to vector<2x64xf32>
    %24 = arith.subf %6, %23 : vector<2x64xf32>
    %25 = vector.broadcast %22 : vector<1x64xf32> to vector<2x64xf32>
    %26 = arith.mulf %24, %25 : vector<2x64xf32>
    %cst_11 = arith.constant 0.000000e+00 : f32
    %27 = vector.broadcast %cst_11 : f32 to vector<2x64xf32>
    %28 = arith.maximumf %26, %27 : vector<2x64xf32>
    %29 = arith.truncf %28 : vector<2x64xf32> to vector<2x64xbf16>
    %c0_12 = arith.constant 0 : index
    %c0_13 = arith.constant 0 : index
    %30 = vector.load %arg3[%c0_12, %c0_13] : memref<64x8xbf16, #tpu.memory_space<vmem>>, vector<64x8xbf16>
    %cst_14 = arith.constant dense<0.000000e+00> : vector<2x8xf32>
    %31 = tpu.matmul %29, %30, %cst_14 {dimension_numbers = #tpu.dot_dimension_numbers<[1], [0], [0], [1], [0, 0, 1, 1], [], []>} : vector<2x64xbf16>, vector<64x8xbf16>, vector<2x8xf32> -> vector<2x8xf32>
    %c0_15 = arith.constant 0 : index
    %c0_16 = arith.constant 0 : index
    %32 = vector.load %arg4[%c0_15, %c0_16] : memref<1x8xf32, #tpu.memory_space<vmem>>, vector<1x8xf32>
    %33 = vector.broadcast %32 : vector<1x8xf32> to vector<2x8xf32>
    %34 = arith.addf %31, %33 : vector<2x8xf32>
    %cst_17 = arith.constant dense<0.000000e+00> : vector<8xf32>
    %35 = vector.multi_reduction <add>, %34, %cst_17 [0] : vector<2x8xf32> to vector<8xf32>
    %36 = vector.shape_cast %35 : vector<8xf32> to vector<1x8xf32>
    %cst_18 = arith.constant 2.000000e+00 : f32
    %37 = vector.broadcast %cst_18 : f32 to vector<1x8xf32>
    %38 = arith.divf %36, %37 : vector<1x8xf32>
    %39 = arith.mulf %34, %34 : vector<2x8xf32>
    %cst_19 = arith.constant dense<0.000000e+00> : vector<8xf32>
    %40 = vector.multi_reduction <add>, %39, %cst_19 [0] : vector<2x8xf32> to vector<8xf32>
    %41 = vector.shape_cast %40 : vector<8xf32> to vector<1x8xf32>
    %cst_20 = arith.constant 2.000000e+00 : f32
    %42 = vector.broadcast %cst_20 : f32 to vector<1x8xf32>
    %43 = arith.divf %41, %42 : vector<1x8xf32>
    %44 = arith.mulf %38, %38 : vector<1x8xf32>
    %45 = arith.subf %43, %44 : vector<1x8xf32>
    %cst_21 = arith.constant 0.000000e+00 : f32
    %46 = vector.broadcast %cst_21 : f32 to vector<1x8xf32>
    %47 = arith.maximumf %45, %46 : vector<1x8xf32>
    %cst_22 = arith.constant 9.99999974E-6 : f32
    %48 = vector.broadcast %cst_22 : f32 to vector<1x8xf32>
    %49 = arith.addf %47, %48 : vector<1x8xf32>
    %50 = math.rsqrt %49 : vector<1x8xf32>
    %51 = vector.broadcast %38 : vector<1x8xf32> to vector<2x8xf32>
    %52 = arith.subf %34, %51 : vector<2x8xf32>
    %53 = vector.broadcast %50 : vector<1x8xf32> to vector<2x8xf32>
    %54 = arith.mulf %52, %53 : vector<2x8xf32>
    %cst_23 = arith.constant 0.000000e+00 : f32
    %55 = vector.broadcast %cst_23 : f32 to vector<2x8xf32>
    %56 = arith.maximumf %54, %55 : vector<2x8xf32>
    %57 = arith.truncf %56 : vector<2x8xf32> to vector<2x8xbf16>
    %c0_24 = arith.constant 0 : index
    %c0_25 = arith.constant 0 : index
    %58 = vector.load %arg5[%c0_24, %c0_25] : memref<8x64xbf16, #tpu.memory_space<vmem>>, vector<8x64xbf16>
    %cst_26 = arith.constant dense<0.000000e+00> : vector<2x64xf32>
    %59 = tpu.matmul %57, %58, %cst_26 {dimension_numbers = #tpu.dot_dimension_numbers<[1], [0], [0], [1], [0, 0, 1, 1], [], []>} : vector<2x8xbf16>, vector<8x64xbf16>, vector<2x64xf32> -> vector<2x64xf32>
    %c0_27 = arith.constant 0 : index
    %c0_28 = arith.constant 0 : index
    %60 = vector.load %arg6[%c0_27, %c0_28] : memref<1x64xf32, #tpu.memory_space<vmem>>, vector<1x64xf32>
    %61 = vector.broadcast %60 : vector<1x64xf32> to vector<2x64xf32>
    %62 = arith.addf %59, %61 : vector<2x64xf32>
    %cst_29 = arith.constant dense<0.000000e+00> : vector<64xf32>
    %63 = vector.multi_reduction <add>, %62, %cst_29 [0] : vector<2x64xf32> to vector<64xf32>
    %64 = vector.shape_cast %63 : vector<64xf32> to vector<1x64xf32>
    %cst_30 = arith.constant 2.000000e+00 : f32
    %65 = vector.broadcast %cst_30 : f32 to vector<1x64xf32>
    %66 = arith.divf %64, %65 : vector<1x64xf32>
    %67 = arith.mulf %62, %62 : vector<2x64xf32>
    %cst_31 = arith.constant dense<0.000000e+00> : vector<64xf32>
    %68 = vector.multi_reduction <add>, %67, %cst_31 [0] : vector<2x64xf32> to vector<64xf32>
    %69 = vector.shape_cast %68 : vector<64xf32> to vector<1x64xf32>
    %cst_32 = arith.constant 2.000000e+00 : f32
    %70 = vector.broadcast %cst_32 : f32 to vector<1x64xf32>
    %71 = arith.divf %69, %70 : vector<1x64xf32>
    %72 = arith.mulf %66, %66 : vector<1x64xf32>
    %73 = arith.subf %71, %72 : vector<1x64xf32>
    %cst_33 = arith.constant 0.000000e+00 : f32
    %74 = vector.broadcast %cst_33 : f32 to vector<1x64xf32>
    %75 = arith.maximumf %73, %74 : vector<1x64xf32>
    %cst_34 = arith.constant 9.99999974E-6 : f32
    %76 = vector.broadcast %cst_34 : f32 to vector<1x64xf32>
    %77 = arith.addf %75, %76 : vector<1x64xf32>
    %78 = math.rsqrt %77 : vector<1x64xf32>
    %79 = vector.broadcast %66 : vector<1x64xf32> to vector<2x64xf32>
    %80 = arith.subf %62, %79 : vector<2x64xf32>
    %81 = vector.broadcast %78 : vector<1x64xf32> to vector<2x64xf32>
    %82 = arith.mulf %80, %81 : vector<2x64xf32>
    %cst_35 = arith.constant 0.000000e+00 : f32
    %83 = vector.broadcast %cst_35 : f32 to vector<2x64xf32>
    %84 = arith.maximumf %82, %83 : vector<2x64xf32>
    %85 = arith.truncf %84 : vector<2x64xf32> to vector<2x64xbf16>
    %c0_36 = arith.constant 0 : index
    %c0_37 = arith.constant 0 : index
    %86 = vector.load %arg7[%c0_36, %c0_37] : memref<64x128xbf16, #tpu.memory_space<vmem>>, vector<64x128xbf16>
    %cst_38 = arith.constant dense<0.000000e+00> : vector<2x128xf32>
    %87 = tpu.matmul %85, %86, %cst_38 {dimension_numbers = #tpu.dot_dimension_numbers<[1], [0], [0], [1], [0, 0, 1, 1], [], []>} : vector<2x64xbf16>, vector<64x128xbf16>, vector<2x128xf32> -> vector<2x128xf32>
    %c0_39 = arith.constant 0 : index
    %c0_40 = arith.constant 0 : index
    %88 = vector.load %arg8[%c0_39, %c0_40] : memref<1x128xf32, #tpu.memory_space<vmem>>, vector<1x128xf32>
    %89 = vector.broadcast %88 : vector<1x128xf32> to vector<2x128xf32>
    %90 = arith.addf %87, %89 : vector<2x128xf32>
    %cst_41 = arith.constant dense<0.000000e+00> : vector<128xf32>
    %91 = vector.multi_reduction <add>, %90, %cst_41 [0] : vector<2x128xf32> to vector<128xf32>
    %92 = vector.shape_cast %91 : vector<128xf32> to vector<1x128xf32>
    %93 = arith.mulf %90, %90 : vector<2x128xf32>
    %cst_42 = arith.constant dense<0.000000e+00> : vector<128xf32>
    %94 = vector.multi_reduction <add>, %93, %cst_42 [0] : vector<2x128xf32> to vector<128xf32>
    %95 = vector.shape_cast %94 : vector<128xf32> to vector<1x128xf32>
    %c0_43 = arith.constant 0 : index
    %c0_44 = arith.constant 0 : index
    %96 = vector.load %arg9[%c0_43, %c0_44] : memref<128x8xf32, #tpu.memory_space<vmem>>, vector<128x8xf32>
    %cst_45 = arith.constant dense<0.000000e+00> : vector<1x8xf32>
    %97 = tpu.matmul %92, %96, %cst_45 {dimension_numbers = #tpu.dot_dimension_numbers<[1], [0], [0], [1], [0, 0, 1, 1], [], []>} : vector<1x128xf32>, vector<128x8xf32>, vector<1x8xf32> -> vector<1x8xf32>
    %c0_46 = arith.constant 0 : index
    %c0_47 = arith.constant 0 : index
    %98 = vector.load %arg9[%c0_46, %c0_47] : memref<128x8xf32, #tpu.memory_space<vmem>>, vector<128x8xf32>
    %cst_48 = arith.constant dense<0.000000e+00> : vector<1x8xf32>
    %99 = tpu.matmul %95, %98, %cst_48 {dimension_numbers = #tpu.dot_dimension_numbers<[1], [0], [0], [1], [0, 0, 1, 1], [], []>} : vector<1x128xf32>, vector<128x8xf32>, vector<1x8xf32> -> vector<1x8xf32>
    %cst_49 = arith.constant 3.200000e+01 : f32
    %100 = vector.broadcast %cst_49 : f32 to vector<1x8xf32>
    %101 = arith.divf %97, %100 : vector<1x8xf32>
    %cst_50 = arith.constant 3.200000e+01 : f32
    %102 = vector.broadcast %cst_50 : f32 to vector<1x8xf32>
    %103 = arith.divf %99, %102 : vector<1x8xf32>
    %104 = arith.mulf %101, %101 : vector<1x8xf32>
    %105 = arith.subf %103, %104 : vector<1x8xf32>
    %cst_51 = arith.constant 0.000000e+00 : f32
    %106 = vector.broadcast %cst_51 : f32 to vector<1x8xf32>
    %107 = arith.maximumf %105, %106 : vector<1x8xf32>
    %cst_52 = arith.constant 9.99999974E-6 : f32
    %108 = vector.broadcast %cst_52 : f32 to vector<1x8xf32>
    %109 = arith.addf %107, %108 : vector<1x8xf32>
    %110 = math.rsqrt %109 : vector<1x8xf32>
    %c0_53 = arith.constant 0 : index
    %c0_54 = arith.constant 0 : index
    %111 = vector.load %arg10[%c0_53, %c0_54] : memref<8x128xf32, #tpu.memory_space<vmem>>, vector<8x128xf32>
    %cst_55 = arith.constant dense<0.000000e+00> : vector<1x128xf32>
    %112 = tpu.matmul %110, %111, %cst_55 {dimension_numbers = #tpu.dot_dimension_numbers<[1], [0], [0], [1], [0, 0, 1, 1], [], []>} : vector<1x8xf32>, vector<8x128xf32>, vector<1x128xf32> -> vector<1x128xf32>
    %cst_56 = arith.constant 0.000000e+00 : f32
    %113 = vector.broadcast %cst_56 : f32 to vector<1x8xf32>
    %114 = arith.subf %113, %101 : vector<1x8xf32>
    %115 = arith.mulf %114, %110 : vector<1x8xf32>
    %c0_57 = arith.constant 0 : index
    %c0_58 = arith.constant 0 : index
    %116 = vector.load %arg10[%c0_57, %c0_58] : memref<8x128xf32, #tpu.memory_space<vmem>>, vector<8x128xf32>
    %cst_59 = arith.constant dense<0.000000e+00> : vector<1x128xf32>
    %117 = tpu.matmul %115, %116, %cst_59 {dimension_numbers = #tpu.dot_dimension_numbers<[1], [0], [0], [1], [0, 0, 1, 1], [], []>} : vector<1x8xf32>, vector<8x128xf32>, vector<1x128xf32> -> vector<1x128xf32>
    %118 = vector.broadcast %112 : vector<1x128xf32> to vector<2x128xf32>
    %119 = arith.mulf %90, %118 : vector<2x128xf32>
    %120 = vector.broadcast %117 : vector<1x128xf32> to vector<2x128xf32>
    %121 = arith.addf %119, %120 : vector<2x128xf32>
    %cst_60 = arith.constant 0.000000e+00 : f32
    %122 = vector.broadcast %cst_60 : f32 to vector<2x128xf32>
    %123 = arith.maximumf %121, %122 : vector<2x128xf32>
    %c0_61 = arith.constant 0 : index
    %c0_62 = arith.constant 0 : index
    %124 = vector.load %arg11[%c0_61, %c0_62] : memref<2x128xf32, #tpu.memory_space<vmem>>, vector<2x128xf32>
    tpu.vector_store %arg11[%c0_61, %c0_62], %123 {strides = array<i32>} : memref<2x128xf32, #tpu.memory_space<vmem>>, vector<2x128xf32>,
    return
  }
}

module attributes {stable_mosaic.version = 11 : i64} {
  func.func @_tconv_kernel(%arg0: i32, %arg1: memref<1x8x64xf32, #tpu.memory_space<vmem>>, %arg2: memref<2x2x64xf32, #tpu.memory_space<vmem>>, %arg3: memref<64x8xf32, #tpu.memory_space<vmem>>, %arg4: memref<8x64xf32, #tpu.memory_space<vmem>>, %arg5: memref<64x64xbf16, #tpu.memory_space<vmem>>, %arg6: memref<64x64xbf16, #tpu.memory_space<vmem>>, %arg7: memref<64x64xbf16, #tpu.memory_space<vmem>>, %arg8: memref<1x64xf32, #tpu.memory_space<vmem>>, %arg9: memref<16x8xf32, #tpu.memory_space<vmem>>, %arg10: memref<16x8xf32, #tpu.memory_space<vmem>>, %arg11: memref<1x16x64xf32, #tpu.memory_space<vmem>>, %arg12: memref<1x2x64xf32, #tpu.memory_space<vmem>>, %arg13: memref<9x64xf32, #tpu.memory_space<vmem>>) attributes {dimension_semantics = [#tpu.dimension_semantics<parallel>], iteration_bounds = array<i64: 2>, scalar_prefetch = 0 : i64, scratch_operands = 1 : i64, tpu.core_type = #tpu.core_type<tc>, window_params = [{transform_indices = @transform_0, window_bounds = array<i64: 1, 8, 64>}, {pipeline_mode = #tpu.pipeline_mode<synchronous>, transform_indices = @transform_1, window_bounds = array<i64: 2, 2, 64>}, {pipeline_mode = #tpu.pipeline_mode<synchronous>, transform_indices = @transform_2, window_bounds = array<i64: 64, 8>}, {pipeline_mode = #tpu.pipeline_mode<synchronous>, transform_indices = @transform_3, window_bounds = array<i64: 8, 64>}, {pipeline_mode = #tpu.pipeline_mode<synchronous>, transform_indices = @transform_4, window_bounds = array<i64: 64, 64>}, {pipeline_mode = #tpu.pipeline_mode<synchronous>, transform_indices = @transform_5, window_bounds = array<i64: 64, 64>}, {pipeline_mode = #tpu.pipeline_mode<synchronous>, transform_indices = @transform_6, window_bounds = array<i64: 64, 64>}, {pipeline_mode = #tpu.pipeline_mode<synchronous>, transform_indices = @transform_7, window_bounds = array<i64: 1, 64>}, {pipeline_mode = #tpu.pipeline_mode<synchronous>, transform_indices = @transform_8, window_bounds = array<i64: 16, 8>}, {pipeline_mode = #tpu.pipeline_mode<synchronous>, transform_indices = @transform_9, window_bounds = array<i64: 16, 8>}, {transform_indices = @transform_10, window_bounds = array<i64: 1, 16, 64>}, {transform_indices = @transform_11, window_bounds = array<i64: 1, 2, 64>}]} {
    %c0 = arith.constant 0 : index
    %c0_0 = arith.constant 0 : index
    %c0_1 = arith.constant 0 : index
    %0 = vector.load %arg1[%c0, %c0_0, %c0_1] : memref<1x8x64xf32, #tpu.memory_space<vmem>>, vector<1x8x64xf32>
    %1 = vector.shape_cast %0 : vector<1x8x64xf32> to vector<8x64xf32>
    %c0_2 = arith.constant 0 : index
    %c0_3 = arith.constant 0 : index
    %c0_4 = arith.constant 0 : index
    %2 = vector.load %arg2[%c0_2, %c0_3, %c0_4] : memref<2x2x64xf32, #tpu.memory_space<vmem>>, vector<2x2x64xf32>
    %c0_5 = arith.constant 0 : index
    %c0_6 = arith.constant 0 : index
    %3 = vector.load %arg3[%c0_5, %c0_6] : memref<64x8xf32, #tpu.memory_space<vmem>>, vector<64x8xf32>
    %c0_7 = arith.constant 0 : index
    %c0_8 = arith.constant 0 : index
    %4 = vector.load %arg4[%c0_7, %c0_8] : memref<8x64xf32, #tpu.memory_space<vmem>>, vector<8x64xf32>
    %cst = arith.constant dense<0.000000e+00> : vector<2x64xf32>
    %5 = vector.multi_reduction <add>, %2, %cst [0] : vector<2x2x64xf32> to vector<2x64xf32>
    %6 = vector.extract_strided_slice %5 {offsets = [0, 0], sizes = [1, 64], strides = [1, 1]} : vector<2x64xf32> to vector<1x64xf32>
    %cst_9 = arith.constant dense<0.000000e+00> : vector<1x8xf32>
    %7 = tpu.matmul %6, %3, %cst_9 {dimension_numbers = #tpu.dot_dimension_numbers<[1], [0], [0], [1], [0, 0, 1, 1], [], []>} : vector<1x64xf32>, vector<64x8xf32>, vector<1x8xf32> -> vector<1x8xf32>
    %8 = vector.extract_strided_slice %5 {offsets = [1, 0], sizes = [1, 64], strides = [1, 1]} : vector<2x64xf32> to vector<1x64xf32>
    %cst_10 = arith.constant dense<0.000000e+00> : vector<1x8xf32>
    %9 = tpu.matmul %8, %3, %cst_10 {dimension_numbers = #tpu.dot_dimension_numbers<[1], [0], [0], [1], [0, 0, 1, 1], [], []>} : vector<1x64xf32>, vector<64x8xf32>, vector<1x8xf32> -> vector<1x8xf32>
    %cst_11 = arith.constant 1.280000e+02 : f32
    %10 = vector.broadcast %cst_11 : f32 to vector<1x8xf32>
    %11 = arith.divf %7, %10 : vector<1x8xf32>
    %cst_12 = arith.constant 1.280000e+02 : f32
    %12 = vector.broadcast %cst_12 : f32 to vector<1x8xf32>
    %13 = arith.divf %9, %12 : vector<1x8xf32>
    %14 = arith.mulf %11, %11 : vector<1x8xf32>
    %15 = arith.subf %13, %14 : vector<1x8xf32>
    %cst_13 = arith.constant 0.000000e+00 : f32
    %16 = vector.broadcast %cst_13 : f32 to vector<1x8xf32>
    %17 = arith.maximumf %15, %16 : vector<1x8xf32>
    %cst_14 = arith.constant 9.99999974E-6 : f32
    %18 = vector.broadcast %cst_14 : f32 to vector<1x8xf32>
    %19 = arith.addf %17, %18 : vector<1x8xf32>
    %20 = math.rsqrt %19 : vector<1x8xf32>
    %cst_15 = arith.constant dense<0.000000e+00> : vector<1x64xf32>
    %21 = tpu.matmul %20, %4, %cst_15 {dimension_numbers = #tpu.dot_dimension_numbers<[1], [0], [0], [1], [0, 0, 1, 1], [], []>} : vector<1x8xf32>, vector<8x64xf32>, vector<1x64xf32> -> vector<1x64xf32>
    %cst_16 = arith.constant 0.000000e+00 : f32
    %22 = vector.broadcast %cst_16 : f32 to vector<1x8xf32>
    %23 = arith.subf %22, %11 : vector<1x8xf32>
    %24 = arith.mulf %23, %20 : vector<1x8xf32>
    %cst_17 = arith.constant dense<0.000000e+00> : vector<1x64xf32>
    %25 = tpu.matmul %24, %4, %cst_17 {dimension_numbers = #tpu.dot_dimension_numbers<[1], [0], [0], [1], [0, 0, 1, 1], [], []>} : vector<1x8xf32>, vector<8x64xf32>, vector<1x64xf32> -> vector<1x64xf32>
    %26 = vector.broadcast %21 : vector<1x64xf32> to vector<8x64xf32>
    %27 = arith.mulf %1, %26 : vector<8x64xf32>
    %28 = vector.broadcast %25 : vector<1x64xf32> to vector<8x64xf32>
    %29 = arith.addf %27, %28 : vector<8x64xf32>
    %cst_18 = arith.constant 0.000000e+00 : f32
    %30 = vector.broadcast %cst_18 : f32 to vector<8x64xf32>
    %31 = arith.maximumf %29, %30 : vector<8x64xf32>
    %c0_19 = arith.constant 0 : index
    %c0_20 = arith.constant 0 : index
    %32 = vector.load %arg13[%c0_19, %c0_20] : memref<9x64xf32, #tpu.memory_space<vmem>>, vector<8x64xf32>
    tpu.vector_store %arg13[%c0_19, %c0_20], %31 {strides = array<i32>} : memref<9x64xf32, #tpu.memory_space<vmem>>, vector<8x64xf32>,
    %cst_21 = arith.constant 0.000000e+00 : f32
    %33 = vector.broadcast %cst_21 : f32 to vector<1x64xf32>
    %c8 = arith.constant 8 : index
    %c0_22 = arith.constant 0 : index
    %34 = vector.load %arg13[%c8, %c0_22] : memref<9x64xf32, #tpu.memory_space<vmem>>, vector<1x64xf32>
    tpu.vector_store %arg13[%c8, %c0_22], %33 {strides = array<i32>} : memref<9x64xf32, #tpu.memory_space<vmem>>, vector<1x64xf32>,
    %c0_23 = arith.constant 0 : index
    %c0_24 = arith.constant 0 : index
    %35 = vector.load %arg13[%c0_23, %c0_24] : memref<9x64xf32, #tpu.memory_space<vmem>>, vector<8x64xf32>
    %36 = arith.truncf %35 : vector<8x64xf32> to vector<8x64xbf16>
    %c1 = arith.constant 1 : index
    %c0_25 = arith.constant 0 : index
    %37 = vector.load %arg13[%c1, %c0_25] : memref<9x64xf32, #tpu.memory_space<vmem>>, vector<8x64xf32>
    %38 = arith.truncf %37 : vector<8x64xf32> to vector<8x64xbf16>
    %c0_26 = arith.constant 0 : index
    %c0_27 = arith.constant 0 : index
    %39 = vector.load %arg5[%c0_26, %c0_27] : memref<64x64xbf16, #tpu.memory_space<vmem>>, vector<64x64xbf16>
    %cst_28 = arith.constant dense<0.000000e+00> : vector<8x64xf32>
    %40 = tpu.matmul %36, %39, %cst_28 {dimension_numbers = #tpu.dot_dimension_numbers<[1], [0], [0], [1], [0, 0, 1, 1], [], []>} : vector<8x64xbf16>, vector<64x64xbf16>, vector<8x64xf32> -> vector<8x64xf32>
    %c0_29 = arith.constant 0 : index
    %c0_30 = arith.constant 0 : index
    %41 = vector.load %arg8[%c0_29, %c0_30] : memref<1x64xf32, #tpu.memory_space<vmem>>, vector<1x64xf32>
    %42 = vector.broadcast %41 : vector<1x64xf32> to vector<8x64xf32>
    %43 = arith.addf %40, %42 : vector<8x64xf32>
    %c0_31 = arith.constant 0 : index
    %c0_32 = arith.constant 0 : index
    %44 = vector.load %arg6[%c0_31, %c0_32] : memref<64x64xbf16, #tpu.memory_space<vmem>>, vector<64x64xbf16>
    %cst_33 = arith.constant dense<0.000000e+00> : vector<8x64xf32>
    %45 = tpu.matmul %36, %44, %cst_33 {dimension_numbers = #tpu.dot_dimension_numbers<[1], [0], [0], [1], [0, 0, 1, 1], [], []>} : vector<8x64xbf16>, vector<64x64xbf16>, vector<8x64xf32> -> vector<8x64xf32>
    %c0_34 = arith.constant 0 : index
    %c0_35 = arith.constant 0 : index
    %46 = vector.load %arg7[%c0_34, %c0_35] : memref<64x64xbf16, #tpu.memory_space<vmem>>, vector<64x64xbf16>
    %cst_36 = arith.constant dense<0.000000e+00> : vector<8x64xf32>
    %47 = tpu.matmul %38, %46, %cst_36 {dimension_numbers = #tpu.dot_dimension_numbers<[1], [0], [0], [1], [0, 0, 1, 1], [], []>} : vector<8x64xbf16>, vector<64x64xbf16>, vector<8x64xf32> -> vector<8x64xf32>
    %48 = arith.addf %45, %47 : vector<8x64xf32>
    %c0_37 = arith.constant 0 : index
    %c0_38 = arith.constant 0 : index
    %49 = vector.load %arg8[%c0_37, %c0_38] : memref<1x64xf32, #tpu.memory_space<vmem>>, vector<1x64xf32>
    %50 = vector.broadcast %49 : vector<1x64xf32> to vector<8x64xf32>
    %51 = arith.addf %48, %50 : vector<8x64xf32>
    %c0_39 = arith.constant 0 : index
    %c0_40 = arith.constant 0 : index
    %52 = vector.load %arg9[%c0_39, %c0_40] : memref<16x8xf32, #tpu.memory_space<vmem>>, vector<16x8xf32>
    %cst_41 = arith.constant dense<0.000000e+00> : vector<16x64xf32>
    %53 = tpu.matmul %52, %43, %cst_41 {dimension_numbers = #tpu.dot_dimension_numbers<[1], [0], [0], [1], [0, 0, 1, 1], [], []>} : vector<16x8xf32>, vector<8x64xf32>, vector<16x64xf32> -> vector<16x64xf32>
    %c0_42 = arith.constant 0 : index
    %c0_43 = arith.constant 0 : index
    %54 = vector.load %arg10[%c0_42, %c0_43] : memref<16x8xf32, #tpu.memory_space<vmem>>, vector<16x8xf32>
    %cst_44 = arith.constant dense<0.000000e+00> : vector<16x64xf32>
    %55 = tpu.matmul %54, %51, %cst_44 {dimension_numbers = #tpu.dot_dimension_numbers<[1], [0], [0], [1], [0, 0, 1, 1], [], []>} : vector<16x8xf32>, vector<8x64xf32>, vector<16x64xf32> -> vector<16x64xf32>
    %56 = arith.addf %53, %55 : vector<16x64xf32>
    %c0_45 = arith.constant 0 : index
    %c0_46 = arith.constant 0 : index
    %c0_47 = arith.constant 0 : index
    %57 = vector.load %arg11[%c0_45, %c0_46, %c0_47] : memref<1x16x64xf32, #tpu.memory_space<vmem>>, vector<1x16x64xf32>
    %58 = vector.shape_cast %57 : vector<1x16x64xf32> to vector<16x64xf32>
    %59 = vector.shape_cast %56 : vector<16x64xf32> to vector<1x16x64xf32>
    tpu.vector_store %arg11[%c0_45, %c0_46, %c0_47], %59 {strides = array<i32>} : memref<1x16x64xf32, #tpu.memory_space<vmem>>, vector<1x16x64xf32>,
    %cst_48 = arith.constant dense<0.000000e+00> : vector<64xf32>
    %60 = vector.multi_reduction <add>, %56, %cst_48 [0] : vector<16x64xf32> to vector<64xf32>
    %61 = vector.shape_cast %60 : vector<64xf32> to vector<1x64xf32>
    %c0_49 = arith.constant 0 : index
    %c0_50 = arith.constant 0 : index
    %c0_51 = arith.constant 0 : index
    %62 = vector.load %arg12[%c0_49, %c0_50, %c0_51] : memref<1x2x64xf32, #tpu.memory_space<vmem>>, vector<1x1x64xf32>
    %63 = vector.shape_cast %62 : vector<1x1x64xf32> to vector<1x64xf32>
    %64 = vector.shape_cast %61 : vector<1x64xf32> to vector<1x1x64xf32>
    tpu.vector_store %arg12[%c0_49, %c0_50, %c0_51], %64 {strides = array<i32>} : memref<1x2x64xf32, #tpu.memory_space<vmem>>, vector<1x1x64xf32>,
    %65 = arith.mulf %56, %56 : vector<16x64xf32>
    %cst_52 = arith.constant dense<0.000000e+00> : vector<64xf32>
    %66 = vector.multi_reduction <add>, %65, %cst_52 [0] : vector<16x64xf32> to vector<64xf32>
    %67 = vector.shape_cast %66 : vector<64xf32> to vector<1x64xf32>
    %c0_53 = arith.constant 0 : index
    %c1_54 = arith.constant 1 : index
    %c0_55 = arith.constant 0 : index
    %68 = vector.load %arg12[%c0_53, %c1_54, %c0_55] : memref<1x2x64xf32, #tpu.memory_space<vmem>>, vector<1x1x64xf32>
    %69 = vector.shape_cast %68 : vector<1x1x64xf32> to vector<1x64xf32>
    %70 = vector.shape_cast %67 : vector<1x64xf32> to vector<1x1x64xf32>
    tpu.vector_store %arg12[%c0_53, %c1_54, %c0_55], %70 {strides = array<i32>} : memref<1x2x64xf32, #tpu.memory_space<vmem>>, vector<1x1x64xf32>,
    return
  }
  func.func @transform_0(%arg0: i32) -> (i32, i32, i32) {
    %c0_i32 = arith.constant 0 : i32
    %c0_i32_0 = arith.constant 0 : i32
    %c0_i32_1 = arith.constant 0 : i32
    return %arg0, %c0_i32, %c0_i32_0 : i32, i32, i32
  }
  func.func @transform_1(%arg0: i32) -> (i32, i32, i32) {
    %c0_i32 = arith.constant 0 : i32
    %c0_i32_0 = arith.constant 0 : i32
    %c0_i32_1 = arith.constant 0 : i32
    %c0_i32_2 = arith.constant 0 : i32
    return %c0_i32, %c0_i32_0, %c0_i32_1 : i32, i32, i32
  }
  func.func @transform_2(%arg0: i32) -> (i32, i32) {
    %c0_i32 = arith.constant 0 : i32
    %c0_i32_0 = arith.constant 0 : i32
    %c0_i32_1 = arith.constant 0 : i32
    return %c0_i32, %c0_i32_0 : i32, i32
  }
  func.func @transform_3(%arg0: i32) -> (i32, i32) {
    %c0_i32 = arith.constant 0 : i32
    %c0_i32_0 = arith.constant 0 : i32
    %c0_i32_1 = arith.constant 0 : i32
    return %c0_i32, %c0_i32_0 : i32, i32
  }
  func.func @transform_4(%arg0: i32) -> (i32, i32) {
    %c0_i32 = arith.constant 0 : i32
    %c0_i32_0 = arith.constant 0 : i32
    %c0_i32_1 = arith.constant 0 : i32
    return %c0_i32, %c0_i32_0 : i32, i32
  }
  func.func @transform_5(%arg0: i32) -> (i32, i32) {
    %c0_i32 = arith.constant 0 : i32
    %c0_i32_0 = arith.constant 0 : i32
    %c0_i32_1 = arith.constant 0 : i32
    return %c0_i32, %c0_i32_0 : i32, i32
  }
  func.func @transform_6(%arg0: i32) -> (i32, i32) {
    %c0_i32 = arith.constant 0 : i32
    %c0_i32_0 = arith.constant 0 : i32
    %c0_i32_1 = arith.constant 0 : i32
    return %c0_i32, %c0_i32_0 : i32, i32
  }
  func.func @transform_7(%arg0: i32) -> (i32, i32) {
    %c0_i32 = arith.constant 0 : i32
    %c0_i32_0 = arith.constant 0 : i32
    %c0_i32_1 = arith.constant 0 : i32
    return %c0_i32, %c0_i32_0 : i32, i32
  }
  func.func @transform_8(%arg0: i32) -> (i32, i32) {
    %c0_i32 = arith.constant 0 : i32
    %c0_i32_0 = arith.constant 0 : i32
    %c0_i32_1 = arith.constant 0 : i32
    return %c0_i32, %c0_i32_0 : i32, i32
  }
  func.func @transform_9(%arg0: i32) -> (i32, i32) {
    %c0_i32 = arith.constant 0 : i32
    %c0_i32_0 = arith.constant 0 : i32
    %c0_i32_1 = arith.constant 0 : i32
    return %c0_i32, %c0_i32_0 : i32, i32
  }
  func.func @transform_10(%arg0: i32) -> (i32, i32, i32) {
    %c0_i32 = arith.constant 0 : i32
    %c0_i32_0 = arith.constant 0 : i32
    %c0_i32_1 = arith.constant 0 : i32
    return %arg0, %c0_i32, %c0_i32_0 : i32, i32, i32
  }
  func.func @transform_11(%arg0: i32) -> (i32, i32, i32) {
    %c0_i32 = arith.constant 0 : i32
    %c0_i32_0 = arith.constant 0 : i32
    %c0_i32_1 = arith.constant 0 : i32
    return %arg0, %c0_i32, %c0_i32_0 : i32, i32, i32
  }
}

module attributes {stable_mosaic.version = 11 : i64} {
  func.func @_conv_kernel(%arg0: i32, %arg1: memref<1x16x64xf32, #tpu.memory_space<vmem>>, %arg2: memref<2x2x64xf32, #tpu.memory_space<vmem>>, %arg3: memref<64x4xf32, #tpu.memory_space<vmem>>, %arg4: memref<4x64xf32, #tpu.memory_space<vmem>>, %arg5: memref<64x64xbf16, #tpu.memory_space<vmem>>, %arg6: memref<64x64xbf16, #tpu.memory_space<vmem>>, %arg7: memref<64x64xbf16, #tpu.memory_space<vmem>>, %arg8: memref<1x64xf32, #tpu.memory_space<vmem>>, %arg9: memref<1x16x64xf32, #tpu.memory_space<vmem>>, %arg10: memref<18x64xf32, #tpu.memory_space<vmem>>) attributes {dimension_semantics = [#tpu.dimension_semantics<parallel>], iteration_bounds = array<i64: 2>, scalar_prefetch = 0 : i64, scratch_operands = 1 : i64, tpu.core_type = #tpu.core_type<tc>, window_params = [{transform_indices = @transform_0, window_bounds = array<i64: 1, 16, 64>}, {pipeline_mode = #tpu.pipeline_mode<synchronous>, transform_indices = @transform_1, window_bounds = array<i64: 2, 2, 64>}, {pipeline_mode = #tpu.pipeline_mode<synchronous>, transform_indices = @transform_2, window_bounds = array<i64: 64, 4>}, {pipeline_mode = #tpu.pipeline_mode<synchronous>, transform_indices = @transform_3, window_bounds = array<i64: 4, 64>}, {pipeline_mode = #tpu.pipeline_mode<synchronous>, transform_indices = @transform_4, window_bounds = array<i64: 64, 64>}, {pipeline_mode = #tpu.pipeline_mode<synchronous>, transform_indices = @transform_5, window_bounds = array<i64: 64, 64>}, {pipeline_mode = #tpu.pipeline_mode<synchronous>, transform_indices = @transform_6, window_bounds = array<i64: 64, 64>}, {pipeline_mode = #tpu.pipeline_mode<synchronous>, transform_indices = @transform_7, window_bounds = array<i64: 1, 64>}, {transform_indices = @transform_8, window_bounds = array<i64: 1, 16, 64>}]} {
    %c0 = arith.constant 0 : index
    %c0_0 = arith.constant 0 : index
    %c0_1 = arith.constant 0 : index
    %0 = vector.load %arg1[%c0, %c0_0, %c0_1] : memref<1x16x64xf32, #tpu.memory_space<vmem>>, vector<1x16x64xf32>
    %1 = vector.shape_cast %0 : vector<1x16x64xf32> to vector<16x64xf32>
    %c0_2 = arith.constant 0 : index
    %c0_3 = arith.constant 0 : index
    %c0_4 = arith.constant 0 : index
    %2 = vector.load %arg2[%c0_2, %c0_3, %c0_4] : memref<2x2x64xf32, #tpu.memory_space<vmem>>, vector<2x2x64xf32>
    %c0_5 = arith.constant 0 : index
    %c0_6 = arith.constant 0 : index
    %3 = vector.load %arg3[%c0_5, %c0_6] : memref<64x4xf32, #tpu.memory_space<vmem>>, vector<64x4xf32>
    %c0_7 = arith.constant 0 : index
    %c0_8 = arith.constant 0 : index
    %4 = vector.load %arg4[%c0_7, %c0_8] : memref<4x64xf32, #tpu.memory_space<vmem>>, vector<4x64xf32>
    %cst = arith.constant dense<0.000000e+00> : vector<2x64xf32>
    %5 = vector.multi_reduction <add>, %2, %cst [0] : vector<2x2x64xf32> to vector<2x64xf32>
    %6 = vector.extract_strided_slice %5 {offsets = [0, 0], sizes = [1, 64], strides = [1, 1]} : vector<2x64xf32> to vector<1x64xf32>
    %cst_9 = arith.constant dense<0.000000e+00> : vector<1x4xf32>
    %7 = tpu.matmul %6, %3, %cst_9 {dimension_numbers = #tpu.dot_dimension_numbers<[1], [0], [0], [1], [0, 0, 1, 1], [], []>} : vector<1x64xf32>, vector<64x4xf32>, vector<1x4xf32> -> vector<1x4xf32>
    %8 = vector.extract_strided_slice %5 {offsets = [1, 0], sizes = [1, 64], strides = [1, 1]} : vector<2x64xf32> to vector<1x64xf32>
    %cst_10 = arith.constant dense<0.000000e+00> : vector<1x4xf32>
    %9 = tpu.matmul %8, %3, %cst_10 {dimension_numbers = #tpu.dot_dimension_numbers<[1], [0], [0], [1], [0, 0, 1, 1], [], []>} : vector<1x64xf32>, vector<64x4xf32>, vector<1x4xf32> -> vector<1x4xf32>
    %cst_11 = arith.constant 5.120000e+02 : f32
    %10 = vector.broadcast %cst_11 : f32 to vector<1x4xf32>
    %11 = arith.divf %7, %10 : vector<1x4xf32>
    %cst_12 = arith.constant 5.120000e+02 : f32
    %12 = vector.broadcast %cst_12 : f32 to vector<1x4xf32>
    %13 = arith.divf %9, %12 : vector<1x4xf32>
    %14 = arith.mulf %11, %11 : vector<1x4xf32>
    %15 = arith.subf %13, %14 : vector<1x4xf32>
    %cst_13 = arith.constant 0.000000e+00 : f32
    %16 = vector.broadcast %cst_13 : f32 to vector<1x4xf32>
    %17 = arith.maximumf %15, %16 : vector<1x4xf32>
    %cst_14 = arith.constant 9.99999974E-6 : f32
    %18 = vector.broadcast %cst_14 : f32 to vector<1x4xf32>
    %19 = arith.addf %17, %18 : vector<1x4xf32>
    %20 = math.rsqrt %19 : vector<1x4xf32>
    %cst_15 = arith.constant dense<0.000000e+00> : vector<1x64xf32>
    %21 = tpu.matmul %20, %4, %cst_15 {dimension_numbers = #tpu.dot_dimension_numbers<[1], [0], [0], [1], [0, 0, 1, 1], [], []>} : vector<1x4xf32>, vector<4x64xf32>, vector<1x64xf32> -> vector<1x64xf32>
    %cst_16 = arith.constant 0.000000e+00 : f32
    %22 = vector.broadcast %cst_16 : f32 to vector<1x4xf32>
    %23 = arith.subf %22, %11 : vector<1x4xf32>
    %24 = arith.mulf %23, %20 : vector<1x4xf32>
    %cst_17 = arith.constant dense<0.000000e+00> : vector<1x64xf32>
    %25 = tpu.matmul %24, %4, %cst_17 {dimension_numbers = #tpu.dot_dimension_numbers<[1], [0], [0], [1], [0, 0, 1, 1], [], []>} : vector<1x4xf32>, vector<4x64xf32>, vector<1x64xf32> -> vector<1x64xf32>
    %26 = vector.broadcast %21 : vector<1x64xf32> to vector<16x64xf32>
    %27 = arith.mulf %1, %26 : vector<16x64xf32>
    %28 = vector.broadcast %25 : vector<1x64xf32> to vector<16x64xf32>
    %29 = arith.addf %27, %28 : vector<16x64xf32>
    %cst_18 = arith.constant 0.000000e+00 : f32
    %30 = vector.broadcast %cst_18 : f32 to vector<16x64xf32>
    %31 = arith.maximumf %29, %30 : vector<16x64xf32>
    %cst_19 = arith.constant 0.000000e+00 : f32
    %32 = vector.broadcast %cst_19 : f32 to vector<1x64xf32>
    %c0_20 = arith.constant 0 : index
    %c0_21 = arith.constant 0 : index
    %33 = vector.load %arg10[%c0_20, %c0_21] : memref<18x64xf32, #tpu.memory_space<vmem>>, vector<1x64xf32>
    tpu.vector_store %arg10[%c0_20, %c0_21], %32 {strides = array<i32>} : memref<18x64xf32, #tpu.memory_space<vmem>>, vector<1x64xf32>,
    %cst_22 = arith.constant 0.000000e+00 : f32
    %34 = vector.broadcast %cst_22 : f32 to vector<1x64xf32>
    %c17 = arith.constant 17 : index
    %c0_23 = arith.constant 0 : index
    %35 = vector.load %arg10[%c17, %c0_23] : memref<18x64xf32, #tpu.memory_space<vmem>>, vector<1x64xf32>
    tpu.vector_store %arg10[%c17, %c0_23], %34 {strides = array<i32>} : memref<18x64xf32, #tpu.memory_space<vmem>>, vector<1x64xf32>,
    %c1 = arith.constant 1 : index
    %c0_24 = arith.constant 0 : index
    %36 = vector.load %arg10[%c1, %c0_24] : memref<18x64xf32, #tpu.memory_space<vmem>>, vector<16x64xf32>
    tpu.vector_store %arg10[%c1, %c0_24], %31 {strides = array<i32>} : memref<18x64xf32, #tpu.memory_space<vmem>>, vector<16x64xf32>,
    %c0_25 = arith.constant 0 : index
    %c0_26 = arith.constant 0 : index
    %37 = vector.load %arg10[%c0_25, %c0_26] : memref<18x64xf32, #tpu.memory_space<vmem>>, vector<16x64xf32>
    %38 = arith.truncf %37 : vector<16x64xf32> to vector<16x64xbf16>
    %c0_27 = arith.constant 0 : index
    %c0_28 = arith.constant 0 : index
    %39 = vector.load %arg5[%c0_27, %c0_28] : memref<64x64xbf16, #tpu.memory_space<vmem>>, vector<64x64xbf16>
    %cst_29 = arith.constant dense<0.000000e+00> : vector<16x64xf32>
    %40 = tpu.matmul %38, %39, %cst_29 {dimension_numbers = #tpu.dot_dimension_numbers<[1], [0], [0], [1], [0, 0, 1, 1], [], []>} : vector<16x64xbf16>, vector<64x64xbf16>, vector<16x64xf32> -> vector<16x64xf32>
    %c1_30 = arith.constant 1 : index
    %c0_31 = arith.constant 0 : index
    %41 = vector.load %arg10[%c1_30, %c0_31] : memref<18x64xf32, #tpu.memory_space<vmem>>, vector<16x64xf32>
    %42 = arith.truncf %41 : vector<16x64xf32> to vector<16x64xbf16>
    %c0_32 = arith.constant 0 : index
    %c0_33 = arith.constant 0 : index
    %43 = vector.load %arg6[%c0_32, %c0_33] : memref<64x64xbf16, #tpu.memory_space<vmem>>, vector<64x64xbf16>
    %cst_34 = arith.constant dense<0.000000e+00> : vector<16x64xf32>
    %44 = tpu.matmul %42, %43, %cst_34 {dimension_numbers = #tpu.dot_dimension_numbers<[1], [0], [0], [1], [0, 0, 1, 1], [], []>} : vector<16x64xbf16>, vector<64x64xbf16>, vector<16x64xf32> -> vector<16x64xf32>
    %45 = arith.addf %40, %44 : vector<16x64xf32>
    %c2 = arith.constant 2 : index
    %c0_35 = arith.constant 0 : index
    %46 = vector.load %arg10[%c2, %c0_35] : memref<18x64xf32, #tpu.memory_space<vmem>>, vector<16x64xf32>
    %47 = arith.truncf %46 : vector<16x64xf32> to vector<16x64xbf16>
    %c0_36 = arith.constant 0 : index
    %c0_37 = arith.constant 0 : index
    %48 = vector.load %arg7[%c0_36, %c0_37] : memref<64x64xbf16, #tpu.memory_space<vmem>>, vector<64x64xbf16>
    %cst_38 = arith.constant dense<0.000000e+00> : vector<16x64xf32>
    %49 = tpu.matmul %47, %48, %cst_38 {dimension_numbers = #tpu.dot_dimension_numbers<[1], [0], [0], [1], [0, 0, 1, 1], [], []>} : vector<16x64xbf16>, vector<64x64xbf16>, vector<16x64xf32> -> vector<16x64xf32>
    %50 = arith.addf %45, %49 : vector<16x64xf32>
    %c0_39 = arith.constant 0 : index
    %c0_40 = arith.constant 0 : index
    %51 = vector.load %arg8[%c0_39, %c0_40] : memref<1x64xf32, #tpu.memory_space<vmem>>, vector<1x64xf32>
    %52 = vector.broadcast %51 : vector<1x64xf32> to vector<16x64xf32>
    %53 = arith.addf %50, %52 : vector<16x64xf32>
    %c0_41 = arith.constant 0 : index
    %c0_42 = arith.constant 0 : index
    %c0_43 = arith.constant 0 : index
    %54 = vector.load %arg9[%c0_41, %c0_42, %c0_43] : memref<1x16x64xf32, #tpu.memory_space<vmem>>, vector<1x16x64xf32>
    %55 = vector.shape_cast %54 : vector<1x16x64xf32> to vector<16x64xf32>
    %56 = vector.shape_cast %53 : vector<16x64xf32> to vector<1x16x64xf32>
    tpu.vector_store %arg9[%c0_41, %c0_42, %c0_43], %56 {strides = array<i32>} : memref<1x16x64xf32, #tpu.memory_space<vmem>>, vector<1x16x64xf32>,
    return
  }
  func.func @transform_0(%arg0: i32) -> (i32, i32, i32) {
    %c0_i32 = arith.constant 0 : i32
    %c0_i32_0 = arith.constant 0 : i32
    %c0_i32_1 = arith.constant 0 : i32
    return %arg0, %c0_i32, %c0_i32_0 : i32, i32, i32
  }
  func.func @transform_1(%arg0: i32) -> (i32, i32, i32) {
    %c0_i32 = arith.constant 0 : i32
    %c0_i32_0 = arith.constant 0 : i32
    %c0_i32_1 = arith.constant 0 : i32
    %c0_i32_2 = arith.constant 0 : i32
    return %c0_i32, %c0_i32_0, %c0_i32_1 : i32, i32, i32
  }
  func.func @transform_2(%arg0: i32) -> (i32, i32) {
    %c0_i32 = arith.constant 0 : i32
    %c0_i32_0 = arith.constant 0 : i32
    %c0_i32_1 = arith.constant 0 : i32
    return %c0_i32, %c0_i32_0 : i32, i32
  }
  func.func @transform_3(%arg0: i32) -> (i32, i32) {
    %c0_i32 = arith.constant 0 : i32
    %c0_i32_0 = arith.constant 0 : i32
    %c0_i32_1 = arith.constant 0 : i32
    return %c0_i32, %c0_i32_0 : i32, i32
  }
  func.func @transform_4(%arg0: i32) -> (i32, i32) {
    %c0_i32 = arith.constant 0 : i32
    %c0_i32_0 = arith.constant 0 : i32
    %c0_i32_1 = arith.constant 0 : i32
    return %c0_i32, %c0_i32_0 : i32, i32
  }
  func.func @transform_5(%arg0: i32) -> (i32, i32) {
    %c0_i32 = arith.constant 0 : i32
    %c0_i32_0 = arith.constant 0 : i32
    %c0_i32_1 = arith.constant 0 : i32
    return %c0_i32, %c0_i32_0 : i32, i32
  }
  func.func @transform_6(%arg0: i32) -> (i32, i32) {
    %c0_i32 = arith.constant 0 : i32
    %c0_i32_0 = arith.constant 0 : i32
    %c0_i32_1 = arith.constant 0 : i32
    return %c0_i32, %c0_i32_0 : i32, i32
  }
  func.func @transform_7(%arg0: i32) -> (i32, i32) {
    %c0_i32 = arith.constant 0 : i32
    %c0_i32_0 = arith.constant 0 : i32
    %c0_i32_1 = arith.constant 0 : i32
    return %c0_i32, %c0_i32_0 : i32, i32
  }
  func.func @transform_8(%arg0: i32) -> (i32, i32, i32) {
    %c0_i32 = arith.constant 0 : i32
    %c0_i32_0 = arith.constant 0 : i32
    %c0_i32_1 = arith.constant 0 : i32
    return %arg0, %c0_i32, %c0_i32_0 : i32, i32, i32
  }
}

module attributes {stable_mosaic.version = 11 : i64} {
  func.func @_tconv_kernel(%arg0: i32, %arg1: memref<1x4x32xf32, #tpu.memory_space<vmem>>, %arg2: memref<1x2x1xf32, #tpu.memory_space<vmem>>, %arg3: memref<1x1xf32, #tpu.memory_space<vmem>>, %arg4: memref<1x1xf32, #tpu.memory_space<vmem>>, %arg5: memref<32x64xbf16, #tpu.memory_space<vmem>>, %arg6: memref<32x64xbf16, #tpu.memory_space<vmem>>, %arg7: memref<32x64xbf16, #tpu.memory_space<vmem>>, %arg8: memref<1x64xf32, #tpu.memory_space<vmem>>, %arg9: memref<8x4xf32, #tpu.memory_space<vmem>>, %arg10: memref<8x4xf32, #tpu.memory_space<vmem>>, %arg11: memref<1x8x64xf32, #tpu.memory_space<vmem>>, %arg12: memref<1x2x64xf32, #tpu.memory_space<vmem>>, %arg13: memref<5x32xf32, #tpu.memory_space<vmem>>) attributes {dimension_semantics = [#tpu.dimension_semantics<parallel>], iteration_bounds = array<i64: 2>, scalar_prefetch = 0 : i64, scratch_operands = 1 : i64, tpu.core_type = #tpu.core_type<tc>, window_params = [{transform_indices = @transform_0, window_bounds = array<i64: 1, 4, 32>}, {pipeline_mode = #tpu.pipeline_mode<synchronous>, transform_indices = @transform_1, window_bounds = array<i64: 1, 2, 1>}, {pipeline_mode = #tpu.pipeline_mode<synchronous>, transform_indices = @transform_2, window_bounds = array<i64: 1, 1>}, {pipeline_mode = #tpu.pipeline_mode<synchronous>, transform_indices = @transform_3, window_bounds = array<i64: 1, 1>}, {pipeline_mode = #tpu.pipeline_mode<synchronous>, transform_indices = @transform_4, window_bounds = array<i64: 32, 64>}, {pipeline_mode = #tpu.pipeline_mode<synchronous>, transform_indices = @transform_5, window_bounds = array<i64: 32, 64>}, {pipeline_mode = #tpu.pipeline_mode<synchronous>, transform_indices = @transform_6, window_bounds = array<i64: 32, 64>}, {pipeline_mode = #tpu.pipeline_mode<synchronous>, transform_indices = @transform_7, window_bounds = array<i64: 1, 64>}, {pipeline_mode = #tpu.pipeline_mode<synchronous>, transform_indices = @transform_8, window_bounds = array<i64: 8, 4>}, {pipeline_mode = #tpu.pipeline_mode<synchronous>, transform_indices = @transform_9, window_bounds = array<i64: 8, 4>}, {transform_indices = @transform_10, window_bounds = array<i64: 1, 8, 64>}, {transform_indices = @transform_11, window_bounds = array<i64: 1, 2, 64>}]} {
    %c0 = arith.constant 0 : index
    %c0_0 = arith.constant 0 : index
    %c0_1 = arith.constant 0 : index
    %0 = vector.load %arg1[%c0, %c0_0, %c0_1] : memref<1x4x32xf32, #tpu.memory_space<vmem>>, vector<1x4x32xf32>
    %1 = vector.shape_cast %0 : vector<1x4x32xf32> to vector<4x32xf32>
    %c0_2 = arith.constant 0 : index
    %c0_3 = arith.constant 0 : index
    %2 = vector.load %arg13[%c0_2, %c0_3] : memref<5x32xf32, #tpu.memory_space<vmem>>, vector<4x32xf32>
    tpu.vector_store %arg13[%c0_2, %c0_3], %1 {strides = array<i32>} : memref<5x32xf32, #tpu.memory_space<vmem>>, vector<4x32xf32>,
    %cst = arith.constant 0.000000e+00 : f32
    %3 = vector.broadcast %cst : f32 to vector<1x32xf32>
    %c4 = arith.constant 4 : index
    %c0_4 = arith.constant 0 : index
    %4 = vector.load %arg13[%c4, %c0_4] : memref<5x32xf32, #tpu.memory_space<vmem>>, vector<1x32xf32>
    tpu.vector_store %arg13[%c4, %c0_4], %3 {strides = array<i32>} : memref<5x32xf32, #tpu.memory_space<vmem>>, vector<1x32xf32>,
    %c0_5 = arith.constant 0 : index
    %c0_6 = arith.constant 0 : index
    %5 = vector.load %arg13[%c0_5, %c0_6] : memref<5x32xf32, #tpu.memory_space<vmem>>, vector<4x32xf32>
    %6 = arith.truncf %5 : vector<4x32xf32> to vector<4x32xbf16>
    %c1 = arith.constant 1 : index
    %c0_7 = arith.constant 0 : index
    %7 = vector.load %arg13[%c1, %c0_7] : memref<5x32xf32, #tpu.memory_space<vmem>>, vector<4x32xf32>
    %8 = arith.truncf %7 : vector<4x32xf32> to vector<4x32xbf16>
    %c0_8 = arith.constant 0 : index
    %c0_9 = arith.constant 0 : index
    %9 = vector.load %arg5[%c0_8, %c0_9] : memref<32x64xbf16, #tpu.memory_space<vmem>>, vector<32x64xbf16>
    %cst_10 = arith.constant dense<0.000000e+00> : vector<4x64xf32>
    %10 = tpu.matmul %6, %9, %cst_10 {dimension_numbers = #tpu.dot_dimension_numbers<[1], [0], [0], [1], [0, 0, 1, 1], [], []>} : vector<4x32xbf16>, vector<32x64xbf16>, vector<4x64xf32> -> vector<4x64xf32>
    %c0_11 = arith.constant 0 : index
    %c0_12 = arith.constant 0 : index
    %11 = vector.load %arg8[%c0_11, %c0_12] : memref<1x64xf32, #tpu.memory_space<vmem>>, vector<1x64xf32>
    %12 = vector.broadcast %11 : vector<1x64xf32> to vector<4x64xf32>
    %13 = arith.addf %10, %12 : vector<4x64xf32>
    %c0_13 = arith.constant 0 : index
    %c0_14 = arith.constant 0 : index
    %14 = vector.load %arg6[%c0_13, %c0_14] : memref<32x64xbf16, #tpu.memory_space<vmem>>, vector<32x64xbf16>
    %cst_15 = arith.constant dense<0.000000e+00> : vector<4x64xf32>
    %15 = tpu.matmul %6, %14, %cst_15 {dimension_numbers = #tpu.dot_dimension_numbers<[1], [0], [0], [1], [0, 0, 1, 1], [], []>} : vector<4x32xbf16>, vector<32x64xbf16>, vector<4x64xf32> -> vector<4x64xf32>
    %c0_16 = arith.constant 0 : index
    %c0_17 = arith.constant 0 : index
    %16 = vector.load %arg7[%c0_16, %c0_17] : memref<32x64xbf16, #tpu.memory_space<vmem>>, vector<32x64xbf16>
    %cst_18 = arith.constant dense<0.000000e+00> : vector<4x64xf32>
    %17 = tpu.matmul %8, %16, %cst_18 {dimension_numbers = #tpu.dot_dimension_numbers<[1], [0], [0], [1], [0, 0, 1, 1], [], []>} : vector<4x32xbf16>, vector<32x64xbf16>, vector<4x64xf32> -> vector<4x64xf32>
    %18 = arith.addf %15, %17 : vector<4x64xf32>
    %c0_19 = arith.constant 0 : index
    %c0_20 = arith.constant 0 : index
    %19 = vector.load %arg8[%c0_19, %c0_20] : memref<1x64xf32, #tpu.memory_space<vmem>>, vector<1x64xf32>
    %20 = vector.broadcast %19 : vector<1x64xf32> to vector<4x64xf32>
    %21 = arith.addf %18, %20 : vector<4x64xf32>
    %c0_21 = arith.constant 0 : index
    %c0_22 = arith.constant 0 : index
    %22 = vector.load %arg9[%c0_21, %c0_22] : memref<8x4xf32, #tpu.memory_space<vmem>>, vector<8x4xf32>
    %cst_23 = arith.constant dense<0.000000e+00> : vector<8x64xf32>
    %23 = tpu.matmul %22, %13, %cst_23 {dimension_numbers = #tpu.dot_dimension_numbers<[1], [0], [0], [1], [0, 0, 1, 1], [], []>} : vector<8x4xf32>, vector<4x64xf32>, vector<8x64xf32> -> vector<8x64xf32>
    %c0_24 = arith.constant 0 : index
    %c0_25 = arith.constant 0 : index
    %24 = vector.load %arg10[%c0_24, %c0_25] : memref<8x4xf32, #tpu.memory_space<vmem>>, vector<8x4xf32>
    %cst_26 = arith.constant dense<0.000000e+00> : vector<8x64xf32>
    %25 = tpu.matmul %24, %21, %cst_26 {dimension_numbers = #tpu.dot_dimension_numbers<[1], [0], [0], [1], [0, 0, 1, 1], [], []>} : vector<8x4xf32>, vector<4x64xf32>, vector<8x64xf32> -> vector<8x64xf32>
    %26 = arith.addf %23, %25 : vector<8x64xf32>
    %c0_27 = arith.constant 0 : index
    %c0_28 = arith.constant 0 : index
    %c0_29 = arith.constant 0 : index
    %27 = vector.load %arg11[%c0_27, %c0_28, %c0_29] : memref<1x8x64xf32, #tpu.memory_space<vmem>>, vector<1x8x64xf32>
    %28 = vector.shape_cast %27 : vector<1x8x64xf32> to vector<8x64xf32>
    %29 = vector.shape_cast %26 : vector<8x64xf32> to vector<1x8x64xf32>
    tpu.vector_store %arg11[%c0_27, %c0_28, %c0_29], %29 {strides = array<i32>} : memref<1x8x64xf32, #tpu.memory_space<vmem>>, vector<1x8x64xf32>,
    %cst_30 = arith.constant dense<0.000000e+00> : vector<64xf32>
    %30 = vector.multi_reduction <add>, %26, %cst_30 [0] : vector<8x64xf32> to vector<64xf32>
    %31 = vector.shape_cast %30 : vector<64xf32> to vector<1x64xf32>
    %c0_31 = arith.constant 0 : index
    %c0_32 = arith.constant 0 : index
    %c0_33 = arith.constant 0 : index
    %32 = vector.load %arg12[%c0_31, %c0_32, %c0_33] : memref<1x2x64xf32, #tpu.memory_space<vmem>>, vector<1x1x64xf32>
    %33 = vector.shape_cast %32 : vector<1x1x64xf32> to vector<1x64xf32>
    %34 = vector.shape_cast %31 : vector<1x64xf32> to vector<1x1x64xf32>
    tpu.vector_store %arg12[%c0_31, %c0_32, %c0_33], %34 {strides = array<i32>} : memref<1x2x64xf32, #tpu.memory_space<vmem>>, vector<1x1x64xf32>,
    %35 = arith.mulf %26, %26 : vector<8x64xf32>
    %cst_34 = arith.constant dense<0.000000e+00> : vector<64xf32>
    %36 = vector.multi_reduction <add>, %35, %cst_34 [0] : vector<8x64xf32> to vector<64xf32>
    %37 = vector.shape_cast %36 : vector<64xf32> to vector<1x64xf32>
    %c0_35 = arith.constant 0 : index
    %c1_36 = arith.constant 1 : index
    %c0_37 = arith.constant 0 : index
    %38 = vector.load %arg12[%c0_35, %c1_36, %c0_37] : memref<1x2x64xf32, #tpu.memory_space<vmem>>, vector<1x1x64xf32>
    %39 = vector.shape_cast %38 : vector<1x1x64xf32> to vector<1x64xf32>
    %40 = vector.shape_cast %37 : vector<1x64xf32> to vector<1x1x64xf32>
    tpu.vector_store %arg12[%c0_35, %c1_36, %c0_37], %40 {strides = array<i32>} : memref<1x2x64xf32, #tpu.memory_space<vmem>>, vector<1x1x64xf32>,
    return
  }
  func.func @transform_0(%arg0: i32) -> (i32, i32, i32) {
    %c0_i32 = arith.constant 0 : i32
    %c0_i32_0 = arith.constant 0 : i32
    %c0_i32_1 = arith.constant 0 : i32
    return %arg0, %c0_i32, %c0_i32_0 : i32, i32, i32
  }
  func.func @transform_1(%arg0: i32) -> (i32, i32, i32) {
    %c0_i32 = arith.constant 0 : i32
    %c0_i32_0 = arith.constant 0 : i32
    %c0_i32_1 = arith.constant 0 : i32
    %c0_i32_2 = arith.constant 0 : i32
    return %c0_i32, %c0_i32_0, %c0_i32_1 : i32, i32, i32
  }
  func.func @transform_2(%arg0: i32) -> (i32, i32) {
    %c0_i32 = arith.constant 0 : i32
    %c0_i32_0 = arith.constant 0 : i32
    %c0_i32_1 = arith.constant 0 : i32
    return %c0_i32, %c0_i32_0 : i32, i32
  }
  func.func @transform_3(%arg0: i32) -> (i32, i32) {
    %c0_i32 = arith.constant 0 : i32
    %c0_i32_0 = arith.constant 0 : i32
    %c0_i32_1 = arith.constant 0 : i32
    return %c0_i32, %c0_i32_0 : i32, i32
  }
  func.func @transform_4(%arg0: i32) -> (i32, i32) {
    %c0_i32 = arith.constant 0 : i32
    %c0_i32_0 = arith.constant 0 : i32
    %c0_i32_1 = arith.constant 0 : i32
    return %c0_i32, %c0_i32_0 : i32, i32
  }
  func.func @transform_5(%arg0: i32) -> (i32, i32) {
    %c0_i32 = arith.constant 0 : i32
    %c0_i32_0 = arith.constant 0 : i32
    %c0_i32_1 = arith.constant 0 : i32
    return %c0_i32, %c0_i32_0 : i32, i32
  }
  func.func @transform_6(%arg0: i32) -> (i32, i32) {
    %c0_i32 = arith.constant 0 : i32
    %c0_i32_0 = arith.constant 0 : i32
    %c0_i32_1 = arith.constant 0 : i32
    return %c0_i32, %c0_i32_0 : i32, i32
  }
  func.func @transform_7(%arg0: i32) -> (i32, i32) {
    %c0_i32 = arith.constant 0 : i32
    %c0_i32_0 = arith.constant 0 : i32
    %c0_i32_1 = arith.constant 0 : i32
    return %c0_i32, %c0_i32_0 : i32, i32
  }
  func.func @transform_8(%arg0: i32) -> (i32, i32) {
    %c0_i32 = arith.constant 0 : i32
    %c0_i32_0 = arith.constant 0 : i32
    %c0_i32_1 = arith.constant 0 : i32
    return %c0_i32, %c0_i32_0 : i32, i32
  }
  func.func @transform_9(%arg0: i32) -> (i32, i32) {
    %c0_i32 = arith.constant 0 : i32
    %c0_i32_0 = arith.constant 0 : i32
    %c0_i32_1 = arith.constant 0 : i32
    return %c0_i32, %c0_i32_0 : i32, i32
  }
  func.func @transform_10(%arg0: i32) -> (i32, i32, i32) {
    %c0_i32 = arith.constant 0 : i32
    %c0_i32_0 = arith.constant 0 : i32
    %c0_i32_1 = arith.constant 0 : i32
    return %arg0, %c0_i32, %c0_i32_0 : i32, i32, i32
  }
  func.func @transform_11(%arg0: i32) -> (i32, i32, i32) {
    %c0_i32 = arith.constant 0 : i32
    %c0_i32_0 = arith.constant 0 : i32
    %c0_i32_1 = arith.constant 0 : i32
    return %arg0, %c0_i32, %c0_i32_0 : i32, i32, i32
  }
}

</mosaic_0001>

<llo_original>
// kernel: convae_forward.10
$region0: #{convae_forward.10}
  #allocation0 [shape = 'u32[]', space=smem, size = 0x4, offset = 0x4, fixed_abs, tag = 'smem constant byte address 0x4 - core index']
  #allocation1 [shape = 'u32[144,128]{1,0:T(1,128)}', space=vmem, size = 0x12000, scoped, tag = 'internal scratch']
  #allocation2 [shape = 'f32[10,32]{1,0:T(8,128)}', space=vmem, size = 0x2000, scoped, tag = 'scratch operand']
  #allocation3 [shape = 'f32[1,1]{1,0:T(1,128)S(1)}', space=vmem, size = 0x200, scoped, tag = 'scoped memory for convae_forward.10']
  #allocation4 [shape = 'f32[1,1]{1,0:T(1,128)S(1)}', space=vmem, size = 0x200, scoped, tag = 'scoped memory for convae_forward.10']
  %s0 = inlined_call_operand.vmem [shape: f32[2,8,32], index: 0, kind: input, shape index: {}]
  %s1 = inlined_call_operand.vmem [shape: f32[1,2,1], index: 1, kind: input, shape index: {}]
  %s2 = inlined_call_operand.<no memory space> [shape: f32[1,1], index: 2, kind: input, shape index: {}, may-alias: {2,3}]
  %s3 = inlined_call_operand.<no memory space> [shape: f32[1,1], index: 3, kind: input, shape index: {}, may-alias: {2,3}]
  %s4 = inlined_call_operand.vmem [shape: bf16[32,64], index: 4, kind: input, shape index: {}]
  %s5 = inlined_call_operand.vmem [shape: bf16[32,64], index: 5, kind: input, shape index: {}]
  %s6 = inlined_call_operand.vmem [shape: bf16[32,64], index: 6, kind: input, shape index: {}]
  %s7 = inlined_call_operand.vmem [shape: f32[1,64], index: 7, kind: input, shape index: {}]
  %s8 = inlined_call_operand.vmem [shape: f32[2,8,64], index: 8, kind: output, shape index: {0}]
  %s9 = inlined_call_operand.vmem [shape: f32[2,2,64], index: 9, kind: output, shape index: {1}]
  %10 = xla_tuple %s8, %s9
  %s11 = sld [smem:[#allocation0]]
  $region73: #{convae_forward.10} parent=0
    _
  %s13 = ssub.s32 1, %s11
  %s14 = scalar_select 0, %s13, %s11
  %v15 = vstv %s2
  %16 = vst [vmem:[#allocation3] sm:$0x1] %v15
  %v17 = vstv %s3
  %18 = vst [vmem:[#allocation4] sm:$0x1] %v17
  loop: start=0, step=1, limit=4
  $region2: #{convae_forward.10} parent=0 // loop_pre_header
    _
  $region3: #{convae_forward.10} parent=0 // loop_header
    %s20 = sphi 0, %s24
    %p21 = scmp.ge.s32.totalorder %s20, 4
    %s30 = sphi 0, %s32
    %s33 = sphi 0, %s30
    %s34 = sphi 0, %s33
    %s50 = sphi 0, %s34
    %s54 = sphi 0, %s54
    %s56 = sphi 0, %s54
    %s57 = sphi 0, %s56
    %s71 = sphi 0, %s57
    %s75 = sphi 0, %s75
    %s77 = sphi 0, %s75
    %s78 = sphi 0, %s77
    %s92 = sphi 0, %s78
    %s96 = sphi 0, %s96
    %s98 = sphi 0, %s96
    %s99 = sphi 0, %s98
    %s113 = sphi 0, %s99
    %s117 = sphi 0, %s117
    %s119 = sphi 0, %s117
    %s120 = sphi 0, %s119
    %s134 = sphi 0, %s120
    %s138 = sphi 0, %s138
    %s140 = sphi 0, %s138
    %s141 = sphi 0, %s140
    %s155 = sphi 0, %s141
    %s159 = sphi 0, %s159
    %s161 = sphi 0, %s159
    %s162 = sphi 0, %s161
    %s176 = sphi 0, %s162
    %s180 = sphi 0, %s180
    %s182 = sphi 0, %s180
    %s183 = sphi 0, %s182
    %s197 = sphi 0, %s183
    %s203 = sphi 0, %s205
    %s206 = sphi 0, %s203
    %s207 = sphi 0, %s206
    %s223 = sphi 0, %s207
    %s229 = sphi 0, %s231
    %s232 = sphi 0, %s229
    %s233 = sphi 0, %s232
    %s249 = sphi 0, %s233
  $region4: #{convae_forward.10} parent=0 // loop_header_branch
    %23 = sbr.rel (%p21) target = $region8
  $region5: #{convae_forward.10} parent=0 // loop_body
    %s25 = ssub.s32 %s20, 1
    %s26 = ssub.s32 %s20, 2
    %s27 = sadd.s32 %s20, 1
    %s28 = ssub.s32 %s20, %s27
    %p29 = scmp.eq.s32.totalorder %s28, 0
    %s31 = sadd.s32 %s30, 1
    %s32 = scalar_select %p29, %s30, %s31
    %p35 = pneg %p29
    %p36 = scmp.eq.s32.totalorder %s20, 1
    %p37 = por %p35, %p36
    %p38 = scmp.ne.s32.totalorder %s30, %s33
    %p39 = scmp.eq.s32.totalorder %s20, 0
    %p40 = por %p38, %p39
    %p41 = scmp.ne.s32.totalorder %s30, %s33
    %p42 = scmp.eq.s32.totalorder %s25, 1
    %p43 = por %p41, %p42
    %p44 = scmp.ne.s32.totalorder %s33, %s34
    %p45 = scmp.eq.s32.totalorder %s25, 0
    %p46 = por %p44, %p45
    %p47 = scmp.ne.s32.totalorder %s33, %s34
    %p48 = scmp.eq.s32.totalorder %s26, 1
    %p49 = por %p47, %p48
    %p51 = scmp.ne.s32.totalorder %s34, %s50
    %p52 = scmp.eq.s32.totalorder %s26, 0
    %p53 = por %p51, %p52
    %s55 = sadd.s32 %s54, 1
    %p58 = scmp.eq.s32.totalorder %s20, 1
    %p59 = scmp.ne.s32.totalorder %s54, %s56
    %p60 = scmp.eq.s32.totalorder %s20, 0
    %p61 = por %p59, %p60
    %p62 = scmp.ne.s32.totalorder %s54, %s56
    %p63 = scmp.eq.s32.totalorder %s25, 1
    %p64 = por %p62, %p63
    %p65 = scmp.ne.s32.totalorder %s56, %s57
    %p66 = scmp.eq.s32.totalorder %s25, 0
    %p67 = por %p65, %p66
    %p68 = scmp.ne.s32.totalorder %s56, %s57
    %p69 = scmp.eq.s32.totalorder %s26, 1
    %p70 = por %p68, %p69
    %p72 = scmp.ne.s32.totalorder %s57, %s71
    %p73 = scmp.eq.s32.totalorder %s26, 0
    %p74 = por %p72, %p73
    %s76 = sadd.s32 %s75, 1
    %p79 = scmp.eq.s32.totalorder %s20, 1
    %p80 = scmp.ne.s32.totalorder %s75, %s77
    %p81 = scmp.eq.s32.totalorder %s20, 0
    %p82 = por %p80, %p81
    %p83 = scmp.ne.s32.totalorder %s75, %s77
    %p84 = scmp.eq.s32.totalorder %s25, 1
    %p85 = por %p83, %p84
    %p86 = scmp.ne.s32.totalorder %s77, %s78
    %p87 = scmp.eq.s32.totalorder %s25, 0
    %p88 = por %p86, %p87
    %p89 = scmp.ne.s32.totalorder %s77, %s78
    %p90 = scmp.eq.s32.totalorder %s26, 1
    %p91 = por %p89, %p90
    %p93 = scmp.ne.s32.totalorder %s78, %s92
    %p94 = scmp.eq.s32.totalorder %s26, 0
    %p95 = por %p93, %p94
    %s97 = sadd.s32 %s96, 1
    %p100 = scmp.eq.s32.totalorder %s20, 1
    %p101 = scmp.ne.s32.totalorder %s96, %s98
    %p102 = scmp.eq.s32.totalorder %s20, 0
    %p103 = por %p101, %p102
    %p104 = scmp.ne.s32.totalorder %s96, %s98
    %p105 = scmp.eq.s32.totalorder %s25, 1
    %p106 = por %p104, %p105
    %p107 = scmp.ne.s32.totalorder %s98, %s99
    %p108 = scmp.eq.s32.totalorder %s25, 0
    %p109 = por %p107, %p108
    %p110 = scmp.ne.s32.totalorder %s98, %s99
    %p111 = scmp.eq.s32.totalorder %s26, 1
    %p112 = por %p110, %p111
    %p114 = scmp.ne.s32.totalorder %s99, %s113
    %p115 = scmp.eq.s32.totalorder %s26, 0
    %p116 = por %p114, %p115
    %s118 = sadd.s32 %s117, 1
    %p121 = scmp.eq.s32.totalorder %s20, 1
    %p122 = scmp.ne.s32.totalorder %s117, %s119
    %p123 = scmp.eq.s32.totalorder %s20, 0
    %p124 = por %p122, %p123
    %p125 = scmp.ne.s32.totalorder %s117, %s119
    %p126 = scmp.eq.s32.totalorder %s25, 1
    %p127 = por %p125, %p126
    %p128 = scmp.ne.s32.totalorder %s119, %s120
    %p129 = scmp.eq.s32.totalorder %s25, 0
    %p130 = por %p128, %p129
    %p131 = scmp.ne.s32.totalorder %s119, %s120
    %p132 = scmp.eq.s32.totalorder %s26, 1
    %p133 = por %p131, %p132
    %p135 = scmp.ne.s32.totalorder %s120, %s134
    %p136 = scmp.eq.s32.totalorder %s26, 0
    %p137 = por %p135, %p136
    %s139 = sadd.s32 %s138, 1
    %p142 = scmp.eq.s32.totalorder %s20, 1
    %p143 = scmp.ne.s32.totalorder %s138, %s140
    %p144 = scmp.eq.s32.totalorder %s20, 0
    %p145 = por %p143, %p144
    %p146 = scmp.ne.s32.totalorder %s138, %s140
    %p147 = scmp.eq.s32.totalorder %s25, 1
    %p148 = por %p146, %p147
    %p149 = scmp.ne.s32.totalorder %s140, %s141
    %p150 = scmp.eq.s32.totalorder %s25, 0
    %p151 = por %p149, %p150
    %p152 = scmp.ne.s32.totalorder %s140, %s141
    %p153 = scmp.eq.s32.totalorder %s26, 1
    %p154 = por %p152, %p153
    %p156 = scmp.ne.s32.totalorder %s141, %s155
    %p157 = scmp.eq.s32.totalorder %s26, 0
    %p158 = por %p156, %p157
    %s160 = sadd.s32 %s159, 1
    %p163 = scmp.eq.s32.totalorder %s20, 1
    %p164 = scmp.ne.s32.totalorder %s159, %s161
    %p165 = scmp.eq.s32.totalorder %s20, 0
    %p166 = por %p164, %p165
    %p167 = scmp.ne.s32.totalorder %s159, %s161
    %p168 = scmp.eq.s32.totalorder %s25, 1
    %p169 = por %p167, %p168
    %p170 = scmp.ne.s32.totalorder %s161, %s162
    %p171 = scmp.eq.s32.totalorder %s25, 0
    %p172 = por %p170, %p171
    %p173 = scmp.ne.s32.totalorder %s161, %s162
    %p174 = scmp.eq.s32.totalorder %s26, 1
    %p175 = por %p173, %p174
    %p177 = scmp.ne.s32.totalorder %s162, %s176
    %p178 = scmp.eq.s32.totalorder %s26, 0
    %p179 = por %p177, %p178
    %s181 = sadd.s32 %s180, 1
    %p184 = scmp.eq.s32.totalorder %s20, 1
    %p185 = scmp.ne.s32.totalorder %s180, %s182
    %p186 = scmp.eq.s32.totalorder %s20, 0
    %p187 = por %p185, %p186
    %p188 = scmp.ne.s32.totalorder %s180, %s182
    %p189 = scmp.eq.s32.totalorder %s25, 1
    %p190 = por %p188, %p189
    %p191 = scmp.ne.s32.totalorder %s182, %s183
    %p192 = scmp.eq.s32.totalorder %s25, 0
    %p193 = por %p191, %p192
    %p194 = scmp.ne.s32.totalorder %s182, %s183
    %p195 = scmp.eq.s32.totalorder %s26, 1
    %p196 = por %p194, %p195
    %p198 = scmp.ne.s32.totalorder %s183, %s197
    %p199 = scmp.eq.s32.totalorder %s26, 0
    %p200 = por %p198, %p199
    %s201 = ssub.s32 %s20, %s27
    %p202 = scmp.eq.s32.totalorder %s201, 0
    %s204 = sadd.s32 %s203, 1
    %s205 = scalar_select %p202, %s203, %s204
    %p208 = pneg %p202
    %p209 = scmp.eq.s32.totalorder %s20, 1
    %p210 = por %p208, %p209
    %p211 = scmp.ne.s32.totalorder %s203, %s206
    %p212 = scmp.eq.s32.totalorder %s20, 0
    %p213 = por %p211, %p212
    %p214 = scmp.ne.s32.totalorder %s203, %s206
    %p215 = scmp.eq.s32.totalorder %s25, 1
    %p216 = por %p214, %p215
    %p217 = scmp.ne.s32.totalorder %s206, %s207
    %p218 = scmp.eq.s32.totalorder %s25, 0
    %p219 = por %p217, %p218
    %p220 = scmp.ne.s32.totalorder %s206, %s207
    %p221 = scmp.eq.s32.totalorder %s26, 1
    %p222 = por %p220, %p221
    %p224 = scmp.ne.s32.totalorder %s207, %s223
    %p225 = scmp.eq.s32.totalorder %s26, 0
    %p226 = por %p224, %p225
    %s227 = ssub.s32 %s20, %s27
    %p228 = scmp.eq.s32.totalorder %s227, 0
    %s230 = sadd.s32 %s229, 1
    %s231 = scalar_select %p228, %s229, %s230
    %p234 = pneg %p228
    %p235 = scmp.eq.s32.totalorder %s20, 1
    %p236 = por %p234, %p235
    %p237 = scmp.ne.s32.totalorder %s229, %s232
    %p238 = scmp.eq.s32.totalorder %s20, 0
    %p239 = por %p237, %p238
    %p240 = scmp.ne.s32.totalorder %s229, %s232
    %p241 = scmp.eq.s32.totalorder %s25, 1
    %p242 = por %p240, %p241
    %p243 = scmp.ne.s32.totalorder %s232, %s233
    %p244 = scmp.eq.s32.totalorder %s25, 0
    %p245 = por %p243, %p244
    %p246 = scmp.ne.s32.totalorder %s232, %s233
    %p247 = scmp.eq.s32.totalorder %s26, 1
    %p248 = por %p246, %p247
    %p250 = scmp.ne.s32.totalorder %s233, %s249
    %p251 = scmp.eq.s32.totalorder %s26, 0
    %p252 = por %p250, %p251
    %p253 = scmp.le.s32.totalorder 1, %s20
    %p254 = scmp.lt.s32.totalorder %s20, 3
    %p255 = pnand %p253, %p254
    %p256 = pneg %p255
    // Predicated region
    $region9: #{convae_forward.10} parent=5 // pred_check
      _
    $region10: #{convae_forward.10} parent=5 // pred_check_branch
      %258 = sbr.rel (%p255) target = $region12
    $region11: #{convae_forward.10} parent=5 // pred_region
      %s259 = ssub.s32 %s20, 1
      // Predicated region
      $region13: #{convae_forward.10} parent=11 // pred_check
        %p260 = pneg %p67
      $region14: #{convae_forward.10} parent=11 // pred_check_branch
        %262 = sbr.rel (%p260) target = $region16
      $region15: #{convae_forward.10} parent=11 // pred_region
        _
      $region16: #{convae_forward.10} parent=11 // pred_fallthru
        _
      // Predicated region
      $region17: #{convae_forward.10} parent=11 // pred_check
        %p263 = pneg %p88
      $region18: #{convae_forward.10} parent=11 // pred_check_branch
        %265 = sbr.rel (%p263) target = $region20
      $region19: #{convae_forward.10} parent=11 // pred_region
        _
      $region20: #{convae_forward.10} parent=11 // pred_fallthru
        _
      // Predicated region
      $region21: #{convae_forward.10} parent=11 // pred_check
        %p266 = pneg %p109
      $region22: #{convae_forward.10} parent=11 // pred_check_branch
        %268 = sbr.rel (%p266) target = $region24
      $region23: #{convae_forward.10} parent=11 // pred_region
        _
      $region24: #{convae_forward.10} parent=11 // pred_fallthru
        _
      // Predicated region
      $region25: #{convae_forward.10} parent=11 // pred_check
        %p269 = pneg %p130
      $region26: #{convae_forward.10} parent=11 // pred_check_branch
        %271 = sbr.rel (%p269) target = $region28
      $region27: #{convae_forward.10} parent=11 // pred_region
        _
      $region28: #{convae_forward.10} parent=11 // pred_fallthru
        _
      // Predicated region
      $region29: #{convae_forward.10} parent=11 // pred_check
        %p272 = pneg %p151
      $region30: #{convae_forward.10} parent=11 // pred_check_branch
        %274 = sbr.rel (%p272) target = $region32
      $region31: #{convae_forward.10} parent=11 // pred_region
        _
      $region32: #{convae_forward.10} parent=11 // pred_fallthru
        _
      // Predicated region
      $region33: #{convae_forward.10} parent=11 // pred_check
        %p275 = pneg %p172
      $region34: #{convae_forward.10} parent=11 // pred_check_branch
        %277 = sbr.rel (%p275) target = $region36
      $region35: #{convae_forward.10} parent=11 // pred_region
        _
      $region36: #{convae_forward.10} parent=11 // pred_fallthru
        _
      // Predicated region
      $region37: #{convae_forward.10} parent=11 // pred_check
        %p278 = pneg %p193
      $region38: #{convae_forward.10} parent=11 // pred_check_branch
        %280 = sbr.rel (%p278) target = $region40
      $region39: #{convae_forward.10} parent=11 // pred_region
        _
      $region40: #{convae_forward.10} parent=11 // pred_fallthru
        _
    $region12: #{convae_forward.10} parent=5 // pred_fallthru
      _
    %p281 = scmp.lt.s32.totalorder %s20, 2
    // Predicated region
    $region41: #{convae_forward.10} parent=5 // pred_check
      %p282 = pneg %p281
    $region42: #{convae_forward.10} parent=5 // pred_check_branch
      %284 = sbr.rel (%p282) target = $region44
    $region43: #{convae_forward.10} parent=5 // pred_region
      // Predicated region
      $region45: #{convae_forward.10} parent=43 // pred_check
        %p285 = pneg %p40
      $region46: #{convae_forward.10} parent=43 // pred_check_branch
        %287 = sbr.rel (%p285) target = $region48
      $region47: #{convae_forward.10} parent=43 // pred_region
        %p288 = scmp.lt.s32.totalorder %s20, 1
        %s289 = scalar_select %p288, %s20, 1
        %s290 = smul.addr %s289, 8
        %s291 = scalar_lea.vmem %s0, %s290
      $region48: #{convae_forward.10} parent=43 // pred_fallthru
        _
    $region44: #{convae_forward.10} parent=5 // pred_fallthru
      _
    %p292 = scmp.le.s32.totalorder 1, %s20
    %p293 = scmp.lt.s32.totalorder %s20, 3
    %p294 = pnand %p292, %p293
    %p295 = pneg %p294
    // Predicated region
    $region49: #{convae_forward.10} parent=5 // pred_check
      _
    $region50: #{convae_forward.10} parent=5 // pred_check_branch
      %297 = sbr.rel (%p294) target = $region52
    $region51: #{convae_forward.10} parent=5 // pred_region
      %s298 = ssub.s32 %s20, 1
      %p299 = scmp.lt.s32.totalorder %s25, 1
      %s300 = scalar_select %p299, %s25, 1
      %s301 = smul.addr %s300, 8
      %s302 = scalar_lea.vmem %s0, %s301
      %p303 = pneg %p46
      %p304 = pneg %p43
      %p305 = pneg %p67
      %p306 = pneg %p64
      %p307 = pneg %p88
      %p308 = pneg %p85
      %p309 = pneg %p109
      %p310 = pneg %p106
      %p311 = pneg %p130
      %p312 = pneg %p127
      %p313 = pneg %p151
      %p314 = pneg %p148
      %p315 = pneg %p172
      %p316 = pneg %p169
      %p317 = pneg %p193
      %p318 = pneg %p190
      %p319 = pneg %p219
      %p320 = pneg %p216
      %p321 = scmp.lt.s32.totalorder %s25, 1
      %s322 = scalar_select %p321, %s25, 1
      %s323 = smul.addr %s322, 8
      %s324 = scalar_lea.vmem %s8, %s323
      %p325 = pneg %p245
      %p326 = pneg %p242
      %p327 = scmp.lt.s32.totalorder %s25, 1
      %s328 = scalar_select %p327, %s25, 1
      %s329 = smul.addr %s328, 2
      %s330 = scalar_lea.vmem %s9, %s329
      %p331 = scmp.lt.s32.totalorder %s25, 1
      %s332 = scalar_select %p331, %s25, 1
      %s333 = smul.addr %s332, 8
      %s334 = scalar_lea.vmem %s0, %s333
      %p335 = scmp.lt.s32.totalorder %s25, 1
      %s336 = scalar_select %p335, %s25, 1
      %s337 = smul.addr %s336, 8
      %s338 = scalar_lea.vmem %s8, %s337
      %p339 = scmp.lt.s32.totalorder %s25, 1
      %s340 = scalar_select %p339, %s25, 1
      %s341 = smul.addr %s340, 2
      %s342 = scalar_lea.vmem %s9, %s341
      %v344 = vld [vmem:[%s334] sm:$0xff]
      %vm345 = vcmask 253952
      %346 = vst.msk [vmem:[#allocation2] sm:$0x1] %vm345, 0.0
      %347 = vst.msk [vmem:[#allocation2 + $0x9] sm:$0x1] %vm345, 0.0
      %vm348 = vcmask 261120
      %349 = vst.msk [vmem:[#allocation2 + $0x1] sm:$0xff] %vm348, %v344
      %v350 = vld [vmem:[#allocation2] sm:$0xff]
      %v351 = vpack.c.bf16 %v350, %v350
      %v352 = vld [vmem:[%s4] sm:$0xf]
      %v353 = vld [vmem:[%s4 + $0x4] sm:$0xf]
      %v354 = vld [vmem:[%s4 + $0x8] sm:$0xf]
      %v355 = vld [vmem:[%s4 + $0xc] sm:$0xf]
      %v356 = vld [vmem:[#allocation2 + $0x1] sm:$0xff]
      %v357 = vpack.c.bf16 %v356, %v356
      %v358 = vld [vmem:[%s5] sm:$0xf]
      %v359 = vld [vmem:[%s5 + $0x4] sm:$0xf]
      %v360 = vld [vmem:[%s5 + $0x8] sm:$0xf]
      %v361 = vld [vmem:[%s5 + $0xc] sm:$0xf]
      %v366 = vunpack.c.l.b16 %v358
      %v367 = vunpack.c.l.b16 %v359
      %v368 = vunpack.c.l.b16 %v360
      %v369 = vunpack.c.l.b16 %v361
      %v370 = vpack.c.b16 %v367, %v366
      %v371 = vpack.c.b16 %v369, %v368
      %v375 = vsel %vm348, %v357, 0
      %377 = vmatprep.subr.bf16.mxu0 0
      %378 = vmatpush1.bf16.msra.mxu0 %v370
      %379 = vmatprep.subr.bf16.mxu0 0
      %380 = vmatpush1.bf16.msra.mxu0 %v371
      %381 = vmatprep.subr.bf16.mxu0 0
      %382 = vmatpush1.bf16.msra.mxu0 0
      %383 = vmatprep.subr.bf16.mxu0 0
      %384 = vmatpush1.bf16.msra.mxu0 0
      %385 = vmatprep.subr.bf16.mxu0 0
      %386 = vmatpush1.bf16.msra.mxu0 0
      %387 = vmatprep.subr.bf16.mxu0 0
      %388 = vmatpush1.bf16.msra.mxu0 0
      %389 = vmatprep.subr.bf16.mxu0 0
      %390 = vmatpush1.bf16.msra.mxu0 0
      %391 = vmatprep.subr.bf16.mxu0 0
      %392 = vmatpush1.bf16.msra.mxu0 0
      %393 = vmatprep.subr.bf16.mxu0 0
      %394 = vmatpush1.bf16.msra.mxu0 0
      %395 = vmatprep.subr.bf16.mxu0 0
      %396 = vmatpush1.bf16.msra.mxu0 0
      %397 = vmatprep.subr.bf16.mxu0 0
      %398 = vmatpush1.bf16.msra.mxu0 0
      %399 = vmatprep.subr.bf16.mxu0 0
      %400 = vmatpush1.bf16.msra.mxu0 0
      %401 = vmatprep.subr.bf16.mxu0 0
      %402 = vmatpush1.bf16.msra.mxu0 0
      %403 = vmatprep.subr.bf16.mxu0 0
      %404 = vmatpush1.bf16.msra.mxu0 0
      %405 = vmatprep.subr.bf16.mxu0 0
      %406 = vmatpush1.bf16.msra.mxu0 0
      %407 = vmatprep.subr.bf16.mxu0 0
      %408 = vmatpush1.bf16.msra.mxu0 0
      %409 = vmatprep.mubr.bf16.mxu0 0
      %410 = vmatmul.mubr.bf16.gmra.mrb[0].mxu0 %v375
      %v411 = vpop.f32.mrb[0].mxu0
      %v412 = vadd.f32 0.0, %v411
      %v413 = vpop.f32.mrb[0].mxu0
      %v414 = vpop.f32.mrb[0].mxu0
      %v415 = vpop.f32.mrb[0].mxu0
      %416 = vdwg.mxu0
      %v421 = vunpack.c.l.b16 %v352
      %v422 = vunpack.c.l.b16 %v353
      %v423 = vunpack.c.l.b16 %v354
      %v424 = vunpack.c.l.b16 %v355
      %v425 = vpack.c.b16 %v422, %v421
      %v426 = vpack.c.b16 %v424, %v423
      %v430 = vsel %vm348, %v351, 0
      %432 = vmatprep.subr.bf16.mxu0 0
      %433 = vmatpush1.bf16.msra.mxu0 %v425
      %434 = vmatprep.subr.bf16.mxu0 0
      %435 = vmatpush1.bf16.msra.mxu0 %v426
      %436 = vmatprep.subr.bf16.mxu0 0
      %437 = vmatpush1.bf16.msra.mxu0 0
      %438 = vmatprep.subr.bf16.mxu0 0
      %439 = vmatpush1.bf16.msra.mxu0 0
      %440 = vmatprep.subr.bf16.mxu0 0
      %441 = vmatpush1.bf16.msra.mxu0 0
      %442 = vmatprep.subr.bf16.mxu0 0
      %443 = vmatpush1.bf16.msra.mxu0 0
      %444 = vmatprep.subr.bf16.mxu0 0
      %445 = vmatpush1.bf16.msra.mxu0 0
      %446 = vmatprep.subr.bf16.mxu0 0
      %447 = vmatpush1.bf16.msra.mxu0 0
      %448 = vmatprep.subr.bf16.mxu0 0
      %449 = vmatpush1.bf16.msra.mxu0 0
      %450 = vmatprep.subr.bf16.mxu0 0
      %451 = vmatpush1.bf16.msra.mxu0 0
      %452 = vmatprep.subr.bf16.mxu0 0
      %453 = vmatpush1.bf16.msra.mxu0 0
      %454 = vmatprep.subr.bf16.mxu0 0
      %455 = vmatpush1.bf16.msra.mxu0 0
      %456 = vmatprep.subr.bf16.mxu0 0
      %457 = vmatpush1.bf16.msra.mxu0 0
      %458 = vmatprep.subr.bf16.mxu0 0
      %459 = vmatpush1.bf16.msra.mxu0 0
      %460 = vmatprep.subr.bf16.mxu0 0
      %461 = vmatpush1.bf16.msra.mxu0 0
      %462 = vmatprep.subr.bf16.mxu0 0
      %463 = vmatpush1.bf16.msra.mxu0 0
      %464 = vmatprep.mubr.bf16.mxu0 0
      %465 = vmatmul.mubr.bf16.gmra.mrb[0].mxu0 %v430
      %v466 = vpop.f32.mrb[0].mxu0
      %v467 = vadd.f32 %v412, %v466
      %v468 = vpop.f32.mrb[0].mxu0
      %v469 = vpop.f32.mrb[0].mxu0
      %v470 = vpop.f32.mrb[0].mxu0
      %471 = vdwg.mxu0
      %v472 = vld [vmem:[#allocation2 + $0x2] sm:$0xff]
      %v473 = vpack.c.bf16 %v472, %v472
      %v474 = vld [vmem:[%s6] sm:$0xf]
      %v475 = vld [vmem:[%s6 + $0x4] sm:$0xf]
      %v476 = vld [vmem:[%s6 + $0x8] sm:$0xf]
      %v477 = vld [vmem:[%s6 + $0xc] sm:$0xf]
      %v482 = vunpack.c.l.b16 %v474
      %v483 = vunpack.c.l.b16 %v475
      %v484 = vunpack.c.l.b16 %v476
      %v485 = vunpack.c.l.b16 %v477
      %v486 = vpack.c.b16 %v483, %v482
      %v487 = vpack.c.b16 %v485, %v484
      %v491 = vsel %vm348, %v473, 0
      %493 = vmatprep.subr.bf16.mxu0 0
      %494 = vmatpush1.bf16.msra.mxu0 %v486
      %495 = vmatprep.subr.bf16.mxu0 0
      %496 = vmatpush1.bf16.msra.mxu0 %v487
      %497 = vmatprep.subr.bf16.mxu0 0
      %498 = vmatpush1.bf16.msra.mxu0 0
      %499 = vmatprep.subr.bf16.mxu0 0
      %500 = vmatpush1.bf16.msra.mxu0 0
      %501 = vmatprep.subr.bf16.mxu0 0
      %502 = vmatpush1.bf16.msra.mxu0 0
      %503 = vmatprep.subr.bf16.mxu0 0
      %504 = vmatpush1.bf16.msra.mxu0 0
      %505 = vmatprep.subr.bf16.mxu0 0
      %506 = vmatpush1.bf16.msra.mxu0 0
      %507 = vmatprep.subr.bf16.mxu0 0
      %508 = vmatpush1.bf16.msra.mxu0 0
      %509 = vmatprep.subr.bf16.mxu0 0
      %510 = vmatpush1.bf16.msra.mxu0 0
      %511 = vmatprep.subr.bf16.mxu0 0
      %512 = vmatpush1.bf16.msra.mxu0 0
      %513 = vmatprep.subr.bf16.mxu0 0
      %514 = vmatpush1.bf16.msra.mxu0 0
      %515 = vmatprep.subr.bf16.mxu0 0
      %516 = vmatpush1.bf16.msra.mxu0 0
      %517 = vmatprep.subr.bf16.mxu0 0
      %518 = vmatpush1.bf16.msra.mxu0 0
      %519 = vmatprep.subr.bf16.mxu0 0
      %520 = vmatpush1.bf16.msra.mxu0 0
      %521 = vmatprep.subr.bf16.mxu0 0
      %522 = vmatpush1.bf16.msra.mxu0 0
      %523 = vmatprep.subr.bf16.mxu0 0
      %524 = vmatpush1.bf16.msra.mxu0 0
      %525 = vmatprep.mubr.bf16.mxu0 0
      %526 = vmatmul.mubr.bf16.gmra.mrb[0].mxu0 %v491
      %v527 = vpop.f32.mrb[0].mxu0
      %v528 = vadd.f32 0.0, %v527
      %v529 = vpop.f32.mrb[0].mxu0
      %v530 = vpop.f32.mrb[0].mxu0
      %v531 = vpop.f32.mrb[0].mxu0
      %532 = vdwg.mxu0
      %v533 = vadd.f32 %v467, %v528
      %v534 = vld [vmem:[%s7] sm:$0x1]
      %v536 = vlaneseq
      %v537 = vshrl.u32 %v536, 7
      %v538 = vsub.s32 0, %v537
      %v539 = vrot.slane %v534, %v538
      %v541 = vadd.f32 %v533, %v539
      %vm542 = vcmask 523264
      %543 = vst.msk [vmem:[%s338] sm:$0xff] %vm542, %v541
      %v544 = vsel %vm542, %v541, 0.0
      %v545 = vrot.slane %v544, 4
      %v546 = vadd.f32 %v544, %v545
      %v547 = vrot.slane %v546, 2
      %v548 = vadd.f32 %v546, %v547
      %v549 = vrot.slane %v548, 1
      %v550 = vadd.f32 %v548, %v549
      %vm551 = vcmask 516096
      %552 = vst.msk [vmem:[%s342] sm:$0x1] %vm551, %v550
      %v553 = vmul.f32 %v541, %v541
      %v554 = vsel %vm542, %v553, 0.0
      %v555 = vrot.slane %v554, 4
      %v556 = vadd.f32 %v554, %v555
      %v557 = vrot.slane %v556, 2
      %v558 = vadd.f32 %v556, %v557
      %v559 = vrot.slane %v558, 1
      %v560 = vadd.f32 %v558, %v559
      %561 = vst.msk [vmem:[%s342 + $0x1] sm:$0x1] %vm551, %v560
      %p562 = scmp.lt.s32.totalorder %s25, 1
      %s563 = scalar_select %p562, %s25, 1
      %s564 = smul.addr %s563, 8
      %s565 = scalar_lea.vmem %s8, %s564
      %p566 = scmp.lt.s32.totalorder %s25, 1
      %s567 = scalar_select %p566, %s25, 1
      %s568 = smul.addr %s567, 2
      %s569 = scalar_lea.vmem %s9, %s568
      // Predicated region
      $region53: #{convae_forward.10} parent=51 // pred_check
        %p570 = pneg %p216
      $region54: #{convae_forward.10} parent=51 // pred_check_branch
        %572 = sbr.rel (%p570) target = $region56
      $region55: #{convae_forward.10} parent=51 // pred_region
        _
      $region56: #{convae_forward.10} parent=51 // pred_fallthru
        _
      // Predicated region
      $region57: #{convae_forward.10} parent=51 // pred_check
        %p573 = pneg %p242
      $region58: #{convae_forward.10} parent=51 // pred_check_branch
        %575 = sbr.rel (%p573) target = $region60
      $region59: #{convae_forward.10} parent=51 // pred_region
        _
      $region60: #{convae_forward.10} parent=51 // pred_fallthru
        _
    $region52: #{convae_forward.10} parent=5 // pred_fallthru
      _
    %p576 = scmp.le.s32.totalorder 2, %s20
    // Predicated region
    $region61: #{convae_forward.10} parent=5 // pred_check
      %p577 = pneg %p576
    $region62: #{convae_forward.10} parent=5 // pred_check_branch
      %579 = sbr.rel (%p577) target = $region64
    $region63: #{convae_forward.10} parent=5 // pred_region
      %s580 = ssub.s32 %s20, 2
      // Predicated region
      $region65: #{convae_forward.10} parent=63 // pred_check
        %p581 = pneg %p222
      $region66: #{convae_forward.10} parent=63 // pred_check_branch
        %583 = sbr.rel (%p581) target = $region68
      $region67: #{convae_forward.10} parent=63 // pred_region
        %p584 = scmp.lt.s32.totalorder %s26, 1
        %s585 = scalar_select %p584, %s26, 1
        %s586 = smul.addr %s585, 8
        %s587 = scalar_lea.vmem %s8, %s586
      $region68: #{convae_forward.10} parent=63 // pred_fallthru
        _
      // Predicated region
      $region69: #{convae_forward.10} parent=63 // pred_check
        %p588 = pneg %p248
      $region70: #{convae_forward.10} parent=63 // pred_check_branch
        %590 = sbr.rel (%p588) target = $region72
      $region71: #{convae_forward.10} parent=63 // pred_region
        %p591 = scmp.lt.s32.totalorder %s26, 1
        %s592 = scalar_select %p591, %s26, 1
        %s593 = smul.addr %s592, 2
        %s594 = scalar_lea.vmem %s9, %s593
      $region72: #{convae_forward.10} parent=63 // pred_fallthru
        _
    $region64: #{convae_forward.10} parent=5 // pred_fallthru
      _
  $region6: #{convae_forward.10} parent=0 // loop_footer
    %s24 = sadd.s32 1, %s20
  $region7: #{convae_forward.10} parent=0 // loop_footer_branch
    %19 = sbr.rel target = $region3
  $region8: #{convae_forward.10} parent=0 // loop_exit
    _

// kernel: convae_forward.8
$region0: #{convae_forward.8}
  #allocation0 [shape = 'u32[]', space=smem, size = 0x4, offset = 0x4, fixed_abs, tag = 'smem constant byte address 0x4 - core index']
  #allocation1 [shape = 'u32[144,128]{1,0:T(1,128)}', space=vmem, size = 0x12000, scoped, tag = 'internal scratch']
  #allocation2 [shape = 'f32[18,64]{1,0:T(8,128)}', space=vmem, size = 0x3000, scoped, tag = 'scratch operand']
  #allocation3 [shape = 'f32[1,1]{1,0:T(1,128)S(1)}', space=vmem, size = 0x200, scoped, tag = 'scoped memory for convae_forward.8']
  #allocation4 [shape = 'f32[1,1]{1,0:T(1,128)S(1)}', space=vmem, size = 0x200, scoped, tag = 'scoped memory for convae_forward.8']
  %s0 = inlined_call_operand.vmem [shape: f32[2,16,64], index: 0, kind: input, shape index: {}]
  %s1 = inlined_call_operand.vmem [shape: f32[1,2,1], index: 1, kind: input, shape index: {}]
  %s2 = inlined_call_operand.<no memory space> [shape: f32[1,1], index: 2, kind: input, shape index: {}, may-alias: {2,3}]
  %s3 = inlined_call_operand.<no memory space> [shape: f32[1,1], index: 3, kind: input, shape index: {}, may-alias: {2,3}]
  %s4 = inlined_call_operand.vmem [shape: bf16[64,64], index: 4, kind: input, shape index: {}]
  %s5 = inlined_call_operand.vmem [shape: bf16[64,64], index: 5, kind: input, shape index: {}]
  %s6 = inlined_call_operand.vmem [shape: bf16[64,64], index: 6, kind: input, shape index: {}]
  %s7 = inlined_call_operand.vmem [shape: f32[1,64], index: 7, kind: input, shape index: {}]
  %s8 = inlined_call_operand.vmem [shape: f32[2,16,64], index: 8, kind: output, shape index: {0}]
  %s9 = inlined_call_operand.vmem [shape: f32[2,2,64], index: 9, kind: output, shape index: {1}]
  %10 = xla_tuple %s8, %s9
  %s11 = sld [smem:[#allocation0]]
  $region73: #{convae_forward.8} parent=0
    _
  %s13 = ssub.s32 1, %s11
  %s14 = scalar_select 0, %s13, %s11
  %v15 = vstv %s2
  %16 = vst [vmem:[#allocation3] sm:$0x1] %v15
  %v17 = vstv %s3
  %18 = vst [vmem:[#allocation4] sm:$0x1] %v17
  loop: start=0, step=1, limit=4
  $region2: #{convae_forward.8} parent=0 // loop_pre_header
    _
  $region3: #{convae_forward.8} parent=0 // loop_header
    %s20 = sphi 0, %s24
    %p21 = scmp.ge.s32.totalorder %s20, 4
    %s30 = sphi 0, %s32
    %s33 = sphi 0, %s30
    %s34 = sphi 0, %s33
    %s50 = sphi 0, %s34
    %s54 = sphi 0, %s54
    %s56 = sphi 0, %s54
    %s57 = sphi 0, %s56
    %s71 = sphi 0, %s57
    %s75 = sphi 0, %s75
    %s77 = sphi 0, %s75
    %s78 = sphi 0, %s77
    %s92 = sphi 0, %s78
    %s96 = sphi 0, %s96
    %s98 = sphi 0, %s96
    %s99 = sphi 0, %s98
    %s113 = sphi 0, %s99
    %s117 = sphi 0, %s117
    %s119 = sphi 0, %s117
    %s120 = sphi 0, %s119
    %s134 = sphi 0, %s120
    %s138 = sphi 0, %s138
    %s140 = sphi 0, %s138
    %s141 = sphi 0, %s140
    %s155 = sphi 0, %s141
    %s159 = sphi 0, %s159
    %s161 = sphi 0, %s159
    %s162 = sphi 0, %s161
    %s176 = sphi 0, %s162
    %s180 = sphi 0, %s180
    %s182 = sphi 0, %s180
    %s183 = sphi 0, %s182
    %s197 = sphi 0, %s183
    %s203 = sphi 0, %s205
    %s206 = sphi 0, %s203
    %s207 = sphi 0, %s206
    %s223 = sphi 0, %s207
    %s229 = sphi 0, %s231
    %s232 = sphi 0, %s229
    %s233 = sphi 0, %s232
    %s249 = sphi 0, %s233
  $region4: #{convae_forward.8} parent=0 // loop_header_branch
    %23 = sbr.rel (%p21) target = $region8
  $region5: #{convae_forward.8} parent=0 // loop_body
    %s25 = ssub.s32 %s20, 1
    %s26 = ssub.s32 %s20, 2
    %s27 = sadd.s32 %s20, 1
    %s28 = ssub.s32 %s20, %s27
    %p29 = scmp.eq.s32.totalorder %s28, 0
    %s31 = sadd.s32 %s30, 1
    %s32 = scalar_select %p29, %s30, %s31
    %p35 = pneg %p29
    %p36 = scmp.eq.s32.totalorder %s20, 1
    %p37 = por %p35, %p36
    %p38 = scmp.ne.s32.totalorder %s30, %s33
    %p39 = scmp.eq.s32.totalorder %s20, 0
    %p40 = por %p38, %p39
    %p41 = scmp.ne.s32.totalorder %s30, %s33
    %p42 = scmp.eq.s32.totalorder %s25, 1
    %p43 = por %p41, %p42
    %p44 = scmp.ne.s32.totalorder %s33, %s34
    %p45 = scmp.eq.s32.totalorder %s25, 0
    %p46 = por %p44, %p45
    %p47 = scmp.ne.s32.totalorder %s33, %s34
    %p48 = scmp.eq.s32.totalorder %s26, 1
    %p49 = por %p47, %p48
    %p51 = scmp.ne.s32.totalorder %s34, %s50
    %p52 = scmp.eq.s32.totalorder %s26, 0
    %p53 = por %p51, %p52
    %s55 = sadd.s32 %s54, 1
    %p58 = scmp.eq.s32.totalorder %s20, 1
    %p59 = scmp.ne.s32.totalorder %s54, %s56
    %p60 = scmp.eq.s32.totalorder %s20, 0
    %p61 = por %p59, %p60
    %p62 = scmp.ne.s32.totalorder %s54, %s56
    %p63 = scmp.eq.s32.totalorder %s25, 1
    %p64 = por %p62, %p63
    %p65 = scmp.ne.s32.totalorder %s56, %s57
    %p66 = scmp.eq.s32.totalorder %s25, 0
    %p67 = por %p65, %p66
    %p68 = scmp.ne.s32.totalorder %s56, %s57
    %p69 = scmp.eq.s32.totalorder %s26, 1
    %p70 = por %p68, %p69
    %p72 = scmp.ne.s32.totalorder %s57, %s71
    %p73 = scmp.eq.s32.totalorder %s26, 0
    %p74 = por %p72, %p73
    %s76 = sadd.s32 %s75, 1
    %p79 = scmp.eq.s32.totalorder %s20, 1
    %p80 = scmp.ne.s32.totalorder %s75, %s77
    %p81 = scmp.eq.s32.totalorder %s20, 0
    %p82 = por %p80, %p81
    %p83 = scmp.ne.s32.totalorder %s75, %s77
    %p84 = scmp.eq.s32.totalorder %s25, 1
    %p85 = por %p83, %p84
    %p86 = scmp.ne.s32.totalorder %s77, %s78
    %p87 = scmp.eq.s32.totalorder %s25, 0
    %p88 = por %p86, %p87
    %p89 = scmp.ne.s32.totalorder %s77, %s78
    %p90 = scmp.eq.s32.totalorder %s26, 1
    %p91 = por %p89, %p90
    %p93 = scmp.ne.s32.totalorder %s78, %s92
    %p94 = scmp.eq.s32.totalorder %s26, 0
    %p95 = por %p93, %p94
    %s97 = sadd.s32 %s96, 1
    %p100 = scmp.eq.s32.totalorder %s20, 1
    %p101 = scmp.ne.s32.totalorder %s96, %s98
    %p102 = scmp.eq.s32.totalorder %s20, 0
    %p103 = por %p101, %p102
    %p104 = scmp.ne.s32.totalorder %s96, %s98
    %p105 = scmp.eq.s32.totalorder %s25, 1
    %p106 = por %p104, %p105
    %p107 = scmp.ne.s32.totalorder %s98, %s99
    %p108 = scmp.eq.s32.totalorder %s25, 0
    %p109 = por %p107, %p108
    %p110 = scmp.ne.s32.totalorder %s98, %s99
    %p111 = scmp.eq.s32.totalorder %s26, 1
    %p112 = por %p110, %p111
    %p114 = scmp.ne.s32.totalorder %s99, %s113
    %p115 = scmp.eq.s32.totalorder %s26, 0
    %p116 = por %p114, %p115
    %s118 = sadd.s32 %s117, 1
    %p121 = scmp.eq.s32.totalorder %s20, 1
    %p122 = scmp.ne.s32.totalorder %s117, %s119
    %p123 = scmp.eq.s32.totalorder %s20, 0
    %p124 = por %p122, %p123
    %p125 = scmp.ne.s32.totalorder %s117, %s119
    %p126 = scmp.eq.s32.totalorder %s25, 1
    %p127 = por %p125, %p126
    %p128 = scmp.ne.s32.totalorder %s119, %s120
    %p129 = scmp.eq.s32.totalorder %s25, 0
    %p130 = por %p128, %p129
    %p131 = scmp.ne.s32.totalorder %s119, %s120
    %p132 = scmp.eq.s32.totalorder %s26, 1
    %p133 = por %p131, %p132
    %p135 = scmp.ne.s32.totalorder %s120, %s134
    %p136 = scmp.eq.s32.totalorder %s26, 0
    %p137 = por %p135, %p136
    %s139 = sadd.s32 %s138, 1
    %p142 = scmp.eq.s32.totalorder %s20, 1
    %p143 = scmp.ne.s32.totalorder %s138, %s140
    %p144 = scmp.eq.s32.totalorder %s20, 0
    %p145 = por %p143, %p144
    %p146 = scmp.ne.s32.totalorder %s138, %s140
    %p147 = scmp.eq.s32.totalorder %s25, 1
    %p148 = por %p146, %p147
    %p149 = scmp.ne.s32.totalorder %s140, %s141
    %p150 = scmp.eq.s32.totalorder %s25, 0
    %p151 = por %p149, %p150
    %p152 = scmp.ne.s32.totalorder %s140, %s141
    %p153 = scmp.eq.s32.totalorder %s26, 1
    %p154 = por %p152, %p153
    %p156 = scmp.ne.s32.totalorder %s141, %s155
    %p157 = scmp.eq.s32.totalorder %s26, 0
    %p158 = por %p156, %p157
    %s160 = sadd.s32 %s159, 1
    %p163 = scmp.eq.s32.totalorder %s20, 1
    %p164 = scmp.ne.s32.totalorder %s159, %s161
    %p165 = scmp.eq.s32.totalorder %s20, 0
    %p166 = por %p164, %p165
    %p167 = scmp.ne.s32.totalorder %s159, %s161
    %p168 = scmp.eq.s32.totalorder %s25, 1
    %p169 = por %p167, %p168
    %p170 = scmp.ne.s32.totalorder %s161, %s162
    %p171 = scmp.eq.s32.totalorder %s25, 0
    %p172 = por %p170, %p171
    %p173 = scmp.ne.s32.totalorder %s161, %s162
    %p174 = scmp.eq.s32.totalorder %s26, 1
    %p175 = por %p173, %p174
    %p177 = scmp.ne.s32.totalorder %s162, %s176
    %p178 = scmp.eq.s32.totalorder %s26, 0
    %p179 = por %p177, %p178
    %s181 = sadd.s32 %s180, 1
    %p184 = scmp.eq.s32.totalorder %s20, 1
    %p185 = scmp.ne.s32.totalorder %s180, %s182
    %p186 = scmp.eq.s32.totalorder %s20, 0
    %p187 = por %p185, %p186
    %p188 = scmp.ne.s32.totalorder %s180, %s182
    %p189 = scmp.eq.s32.totalorder %s25, 1
    %p190 = por %p188, %p189
    %p191 = scmp.ne.s32.totalorder %s182, %s183
    %p192 = scmp.eq.s32.totalorder %s25, 0
    %p193 = por %p191, %p192
    %p194 = scmp.ne.s32.totalorder %s182, %s183
    %p195 = scmp.eq.s32.totalorder %s26, 1
    %p196 = por %p194, %p195
    %p198 = scmp.ne.s32.totalorder %s183, %s197
    %p199 = scmp.eq.s32.totalorder %s26, 0
    %p200 = por %p198, %p199
    %s201 = ssub.s32 %s20, %s27
    %p202 = scmp.eq.s32.totalorder %s201, 0
    %s204 = sadd.s32 %s203, 1
    %s205 = scalar_select %p202, %s203, %s204
    %p208 = pneg %p202
    %p209 = scmp.eq.s32.totalorder %s20, 1
    %p210 = por %p208, %p209
    %p211 = scmp.ne.s32.totalorder %s203, %s206
    %p212 = scmp.eq.s32.totalorder %s20, 0
    %p213 = por %p211, %p212
    %p214 = scmp.ne.s32.totalorder %s203, %s206
    %p215 = scmp.eq.s32.totalorder %s25, 1
    %p216 = por %p214, %p215
    %p217 = scmp.ne.s32.totalorder %s206, %s207
    %p218 = scmp.eq.s32.totalorder %s25, 0
    %p219 = por %p217, %p218
    %p220 = scmp.ne.s32.totalorder %s206, %s207
    %p221 = scmp.eq.s32.totalorder %s26, 1
    %p222 = por %p220, %p221
    %p224 = scmp.ne.s32.totalorder %s207, %s223
    %p225 = scmp.eq.s32.totalorder %s26, 0
    %p226 = por %p224, %p225
    %s227 = ssub.s32 %s20, %s27
    %p228 = scmp.eq.s32.totalorder %s227, 0
    %s230 = sadd.s32 %s229, 1
    %s231 = scalar_select %p228, %s229, %s230
    %p234 = pneg %p228
    %p235 = scmp.eq.s32.totalorder %s20, 1
    %p236 = por %p234, %p235
    %p237 = scmp.ne.s32.totalorder %s229, %s232
    %p238 = scmp.eq.s32.totalorder %s20, 0
    %p239 = por %p237, %p238
    %p240 = scmp.ne.s32.totalorder %s229, %s232
    %p241 = scmp.eq.s32.totalorder %s25, 1
    %p242 = por %p240, %p241
    %p243 = scmp.ne.s32.totalorder %s232, %s233
    %p244 = scmp.eq.s32.totalorder %s25, 0
    %p245 = por %p243, %p244
    %p246 = scmp.ne.s32.totalorder %s232, %s233
    %p247 = scmp.eq.s32.totalorder %s26, 1
    %p248 = por %p246, %p247
    %p250 = scmp.ne.s32.totalorder %s233, %s249
    %p251 = scmp.eq.s32.totalorder %s26, 0
    %p252 = por %p250, %p251
    %p253 = scmp.le.s32.totalorder 1, %s20
    %p254 = scmp.lt.s32.totalorder %s20, 3
    %p255 = pnand %p253, %p254
    %p256 = pneg %p255
    // Predicated region
    $region9: #{convae_forward.8} parent=5 // pred_check
      _
    $region10: #{convae_forward.8} parent=5 // pred_check_branch
      %258 = sbr.rel (%p255) target = $region12
    $region11: #{convae_forward.8} parent=5 // pred_region
      %s259 = ssub.s32 %s20, 1
      // Predicated region
      $region13: #{convae_forward.8} parent=11 // pred_check
        %p260 = pneg %p67
      $region14: #{convae_forward.8} parent=11 // pred_check_branch
        %262 = sbr.rel (%p260) target = $region16
      $region15: #{convae_forward.8} parent=11 // pred_region
        _
      $region16: #{convae_forward.8} parent=11 // pred_fallthru
        _
      // Predicated region
      $region17: #{convae_forward.8} parent=11 // pred_check
        %p263 = pneg %p88
      $region18: #{convae_forward.8} parent=11 // pred_check_branch
        %265 = sbr.rel (%p263) target = $region20
      $region19: #{convae_forward.8} parent=11 // pred_region
        _
      $region20: #{convae_forward.8} parent=11 // pred_fallthru
        _
      // Predicated region
      $region21: #{convae_forward.8} parent=11 // pred_check
        %p266 = pneg %p109
      $region22: #{convae_forward.8} parent=11 // pred_check_branch
        %268 = sbr.rel (%p266) target = $region24
      $region23: #{convae_forward.8} parent=11 // pred_region
        _
      $region24: #{convae_forward.8} parent=11 // pred_fallthru
        _
      // Predicated region
      $region25: #{convae_forward.8} parent=11 // pred_check
        %p269 = pneg %p130
      $region26: #{convae_forward.8} parent=11 // pred_check_branch
        %271 = sbr.rel (%p269) target = $region28
      $region27: #{convae_forward.8} parent=11 // pred_region
        _
      $region28: #{convae_forward.8} parent=11 // pred_fallthru
        _
      // Predicated region
      $region29: #{convae_forward.8} parent=11 // pred_check
        %p272 = pneg %p151
      $region30: #{convae_forward.8} parent=11 // pred_check_branch
        %274 = sbr.rel (%p272) target = $region32
      $region31: #{convae_forward.8} parent=11 // pred_region
        _
      $region32: #{convae_forward.8} parent=11 // pred_fallthru
        _
      // Predicated region
      $region33: #{convae_forward.8} parent=11 // pred_check
        %p275 = pneg %p172
      $region34: #{convae_forward.8} parent=11 // pred_check_branch
        %277 = sbr.rel (%p275) target = $region36
      $region35: #{convae_forward.8} parent=11 // pred_region
        _
      $region36: #{convae_forward.8} parent=11 // pred_fallthru
        _
      // Predicated region
      $region37: #{convae_forward.8} parent=11 // pred_check
        %p278 = pneg %p193
      $region38: #{convae_forward.8} parent=11 // pred_check_branch
        %280 = sbr.rel (%p278) target = $region40
      $region39: #{convae_forward.8} parent=11 // pred_region
        _
      $region40: #{convae_forward.8} parent=11 // pred_fallthru
        _
    $region12: #{convae_forward.8} parent=5 // pred_fallthru
      _
    %p281 = scmp.lt.s32.totalorder %s20, 2
    // Predicated region
    $region41: #{convae_forward.8} parent=5 // pred_check
      %p282 = pneg %p281
    $region42: #{convae_forward.8} parent=5 // pred_check_branch
      %284 = sbr.rel (%p282) target = $region44
    $region43: #{convae_forward.8} parent=5 // pred_region
      // Predicated region
      $region45: #{convae_forward.8} parent=43 // pred_check
        %p285 = pneg %p40
      $region46: #{convae_forward.8} parent=43 // pred_check_branch
        %287 = sbr.rel (%p285) target = $region48
      $region47: #{convae_forward.8} parent=43 // pred_region
        %p288 = scmp.lt.s32.totalorder %s20, 1
        %s289 = scalar_select %p288, %s20, 1
        %s290 = smul.addr %s289, 2
        %s291 = smul.addr %s290, 8
        %s292 = scalar_lea.vmem %s0, %s291
      $region48: #{convae_forward.8} parent=43 // pred_fallthru
        _
    $region44: #{convae_forward.8} parent=5 // pred_fallthru
      _
    %p293 = scmp.le.s32.totalorder 1, %s20
    %p294 = scmp.lt.s32.totalorder %s20, 3
    %p295 = pnand %p293, %p294
    %p296 = pneg %p295
    // Predicated region
    $region49: #{convae_forward.8} parent=5 // pred_check
      _
    $region50: #{convae_forward.8} parent=5 // pred_check_branch
      %298 = sbr.rel (%p295) target = $region52
    $region51: #{convae_forward.8} parent=5 // pred_region
      %s299 = ssub.s32 %s20, 1
      %p300 = scmp.lt.s32.totalorder %s25, 1
      %s301 = scalar_select %p300, %s25, 1
      %s302 = smul.addr %s301, 2
      %s303 = smul.addr %s302, 8
      %s304 = scalar_lea.vmem %s0, %s303
      %p305 = pneg %p46
      %p306 = pneg %p43
      %p307 = pneg %p67
      %p308 = pneg %p64
      %p309 = pneg %p88
      %p310 = pneg %p85
      %p311 = pneg %p109
      %p312 = pneg %p106
      %p313 = pneg %p130
      %p314 = pneg %p127
      %p315 = pneg %p151
      %p316 = pneg %p148
      %p317 = pneg %p172
      %p318 = pneg %p169
      %p319 = pneg %p193
      %p320 = pneg %p190
      %p321 = pneg %p219
      %p322 = pneg %p216
      %p323 = scmp.lt.s32.totalorder %s25, 1
      %s324 = scalar_select %p323, %s25, 1
      %s325 = smul.addr %s324, 2
      %s326 = smul.addr %s325, 8
      %s327 = scalar_lea.vmem %s8, %s326
      %p328 = pneg %p245
      %p329 = pneg %p242
      %p330 = scmp.lt.s32.totalorder %s25, 1
      %s331 = scalar_select %p330, %s25, 1
      %s332 = smul.addr %s331, 2
      %s333 = scalar_lea.vmem %s9, %s332
      %p334 = scmp.lt.s32.totalorder %s25, 1
      %s335 = scalar_select %p334, %s25, 1
      %s336 = smul.addr %s335, 2
      %s337 = smul.addr %s336, 8
      %s338 = scalar_lea.vmem %s0, %s337
      %p339 = scmp.lt.s32.totalorder %s25, 1
      %s340 = scalar_select %p339, %s25, 1
      %s341 = smul.addr %s340, 2
      %s342 = smul.addr %s341, 8
      %s343 = scalar_lea.vmem %s8, %s342
      %p344 = scmp.lt.s32.totalorder %s25, 1
      %s345 = scalar_select %p344, %s25, 1
      %s346 = smul.addr %s345, 2
      %s347 = scalar_lea.vmem %s9, %s346
      %v349 = vld [vmem:[%s338] sm:$0xff]
      %v350 = vld [vmem:[%s338 + $0x8] sm:$0xff]
      %vm351 = vcmask 516096
      %352 = vst.msk [vmem:[#allocation2] sm:$0x1] %vm351, 0.0
      %353 = vst.msk [vmem:[#allocation2 + $0x11] sm:$0x1] %vm351, 0.0
      %vm354 = vcmask 523264
      %355 = vst.msk [vmem:[#allocation2 + $0x1] sm:$0xff] %vm354, %v349
      %356 = vst.msk [vmem:[#allocation2 + $0x9] sm:$0xff] %vm354, %v350
      %v357 = vld [vmem:[#allocation2] sm:$0xff]
      %v358 = vld [vmem:[#allocation2 + $0x8] sm:$0xff]
      %v359 = vpack.c.bf16 %v358, %v357
      %v360 = vld [vmem:[%s4] sm:$0xf]
      %v361 = vld [vmem:[%s4 + $0x4] sm:$0xf]
      %v362 = vld [vmem:[%s4 + $0x8] sm:$0xf]
      %v363 = vld [vmem:[%s4 + $0xc] sm:$0xf]
      %v364 = vld [vmem:[%s4 + $0x10] sm:$0xf]
      %v365 = vld [vmem:[%s4 + $0x14] sm:$0xf]
      %v366 = vld [vmem:[%s4 + $0x18] sm:$0xf]
      %v367 = vld [vmem:[%s4 + $0x1c] sm:$0xf]
      %v368 = vld [vmem:[#allocation2 + $0x1] sm:$0xff]
      %v369 = vld [vmem:[#allocation2 + $0x9] sm:$0xff]
      %v370 = vpack.c.bf16 %v369, %v368
      %v371 = vld [vmem:[%s5] sm:$0xf]
      %v372 = vld [vmem:[%s5 + $0x4] sm:$0xf]
      %v373 = vld [vmem:[%s5 + $0x8] sm:$0xf]
      %v374 = vld [vmem:[%s5 + $0xc] sm:$0xf]
      %v375 = vld [vmem:[%s5 + $0x10] sm:$0xf]
      %v376 = vld [vmem:[%s5 + $0x14] sm:$0xf]
      %v377 = vld [vmem:[%s5 + $0x18] sm:$0xf]
      %v378 = vld [vmem:[%s5 + $0x1c] sm:$0xf]
      %v387 = vunpack.c.l.b16 %v371
      %v388 = vunpack.c.l.b16 %v372
      %v389 = vunpack.c.l.b16 %v373
      %v390 = vunpack.c.l.b16 %v374
      %v391 = vunpack.c.l.b16 %v375
      %v392 = vunpack.c.l.b16 %v376
      %v393 = vunpack.c.l.b16 %v377
      %v394 = vunpack.c.l.b16 %v378
      %v395 = vpack.c.b16 %v388, %v387
      %v396 = vpack.c.b16 %v390, %v389
      %v397 = vpack.c.b16 %v392, %v391
      %v398 = vpack.c.b16 %v394, %v393
      %v404 = vsel %vm354, %v370, 0
      %406 = vmatprep.subr.bf16.mxu0 0
      %407 = vmatpush1.bf16.msra.mxu0 %v395
      %408 = vmatprep.subr.bf16.mxu0 0
      %409 = vmatpush1.bf16.msra.mxu0 %v396
      %410 = vmatprep.subr.bf16.mxu0 0
      %411 = vmatpush1.bf16.msra.mxu0 %v397
      %412 = vmatprep.subr.bf16.mxu0 0
      %413 = vmatpush1.bf16.msra.mxu0 %v398
      %414 = vmatprep.subr.bf16.mxu0 0
      %415 = vmatpush1.bf16.msra.mxu0 0
      %416 = vmatprep.subr.bf16.mxu0 0
      %417 = vmatpush1.bf16.msra.mxu0 0
      %418 = vmatprep.subr.bf16.mxu0 0
      %419 = vmatpush1.bf16.msra.mxu0 0
      %420 = vmatprep.subr.bf16.mxu0 0
      %421 = vmatpush1.bf16.msra.mxu0 0
      %422 = vmatprep.subr.bf16.mxu0 0
      %423 = vmatpush1.bf16.msra.mxu0 0
      %424 = vmatprep.subr.bf16.mxu0 0
      %425 = vmatpush1.bf16.msra.mxu0 0
      %426 = vmatprep.subr.bf16.mxu0 0
      %427 = vmatpush1.bf16.msra.mxu0 0
      %428 = vmatprep.subr.bf16.mxu0 0
      %429 = vmatpush1.bf16.msra.mxu0 0
      %430 = vmatprep.subr.bf16.mxu0 0
      %431 = vmatpush1.bf16.msra.mxu0 0
      %432 = vmatprep.subr.bf16.mxu0 0
      %433 = vmatpush1.bf16.msra.mxu0 0
      %434 = vmatprep.subr.bf16.mxu0 0
      %435 = vmatpush1.bf16.msra.mxu0 0
      %436 = vmatprep.subr.bf16.mxu0 0
      %437 = vmatpush1.bf16.msra.mxu0 0
      %438 = vmatprep.mubr.bf16.mxu0 0
      %439 = vmatmul.mubr.bf16.gmra.mrb[0].mxu0 %v404
      %v440 = vpop.f32.mrb[0].mxu0
      %v441 = vadd.f32 0.0, %v440
      %v442 = vpop.f32.mrb[0].mxu0
      %v443 = vpop.f32.mrb[0].mxu0
      %v444 = vadd.f32 0.0, %v443
      %v445 = vpop.f32.mrb[0].mxu0
      %446 = vdwg.mxu0
      %v455 = vunpack.c.l.b16 %v360
      %v456 = vunpack.c.l.b16 %v361
      %v457 = vunpack.c.l.b16 %v362
      %v458 = vunpack.c.l.b16 %v363
      %v459 = vunpack.c.l.b16 %v364
      %v460 = vunpack.c.l.b16 %v365
      %v461 = vunpack.c.l.b16 %v366
      %v462 = vunpack.c.l.b16 %v367
      %v463 = vpack.c.b16 %v456, %v455
      %v464 = vpack.c.b16 %v458, %v457
      %v465 = vpack.c.b16 %v460, %v459
      %v466 = vpack.c.b16 %v462, %v461
      %v472 = vsel %vm354, %v359, 0
      %474 = vmatprep.subr.bf16.mxu0 0
      %475 = vmatpush1.bf16.msra.mxu0 %v463
      %476 = vmatprep.subr.bf16.mxu0 0
      %477 = vmatpush1.bf16.msra.mxu0 %v464
      %478 = vmatprep.subr.bf16.mxu0 0
      %479 = vmatpush1.bf16.msra.mxu0 %v465
      %480 = vmatprep.subr.bf16.mxu0 0
      %481 = vmatpush1.bf16.msra.mxu0 %v466
      %482 = vmatprep.subr.bf16.mxu0 0
      %483 = vmatpush1.bf16.msra.mxu0 0
      %484 = vmatprep.subr.bf16.mxu0 0
      %485 = vmatpush1.bf16.msra.mxu0 0
      %486 = vmatprep.subr.bf16.mxu0 0
      %487 = vmatpush1.bf16.msra.mxu0 0
      %488 = vmatprep.subr.bf16.mxu0 0
      %489 = vmatpush1.bf16.msra.mxu0 0
      %490 = vmatprep.subr.bf16.mxu0 0
      %491 = vmatpush1.bf16.msra.mxu0 0
      %492 = vmatprep.subr.bf16.mxu0 0
      %493 = vmatpush1.bf16.msra.mxu0 0
      %494 = vmatprep.subr.bf16.mxu0 0
      %495 = vmatpush1.bf16.msra.mxu0 0
      %496 = vmatprep.subr.bf16.mxu0 0
      %497 = vmatpush1.bf16.msra.mxu0 0
      %498 = vmatprep.subr.bf16.mxu0 0
      %499 = vmatpush1.bf16.msra.mxu0 0
      %500 = vmatprep.subr.bf16.mxu0 0
      %501 = vmatpush1.bf16.msra.mxu0 0
      %502 = vmatprep.subr.bf16.mxu0 0
      %503 = vmatpush1.bf16.msra.mxu0 0
      %504 = vmatprep.subr.bf16.mxu0 0
      %505 = vmatpush1.bf16.msra.mxu0 0
      %506 = vmatprep.mubr.bf16.mxu0 0
      %507 = vmatmul.mubr.bf16.gmra.mrb[0].mxu0 %v472
      %v508 = vpop.f32.mrb[0].mxu0
      %v509 = vadd.f32 %v441, %v508
      %v510 = vpop.f32.mrb[0].mxu0
      %v511 = vpop.f32.mrb[0].mxu0
      %v512 = vadd.f32 %v444, %v511
      %v513 = vpop.f32.mrb[0].mxu0
      %514 = vdwg.mxu0
      %v515 = vld [vmem:[#allocation2 + $0x2] sm:$0xff]
      %v516 = vld [vmem:[#allocation2 + $0xa] sm:$0xff]
      %v517 = vpack.c.bf16 %v516, %v515
      %v518 = vld [vmem:[%s6] sm:$0xf]
      %v519 = vld [vmem:[%s6 + $0x4] sm:$0xf]
      %v520 = vld [vmem:[%s6 + $0x8] sm:$0xf]
      %v521 = vld [vmem:[%s6 + $0xc] sm:$0xf]
      %v522 = vld [vmem:[%s6 + $0x10] sm:$0xf]
      %v523 = vld [vmem:[%s6 + $0x14] sm:$0xf]
      %v524 = vld [vmem:[%s6 + $0x18] sm:$0xf]
      %v525 = vld [vmem:[%s6 + $0x1c] sm:$0xf]
      %v534 = vunpack.c.l.b16 %v518
      %v535 = vunpack.c.l.b16 %v519
      %v536 = vunpack.c.l.b16 %v520
      %v537 = vunpack.c.l.b16 %v521
      %v538 = vunpack.c.l.b16 %v522
      %v539 = vunpack.c.l.b16 %v523
      %v540 = vunpack.c.l.b16 %v524
      %v541 = vunpack.c.l.b16 %v525
      %v542 = vpack.c.b16 %v535, %v534
      %v543 = vpack.c.b16 %v537, %v536
      %v544 = vpack.c.b16 %v539, %v538
      %v545 = vpack.c.b16 %v541, %v540
      %v551 = vsel %vm354, %v517, 0
      %553 = vmatprep.subr.bf16.mxu0 0
      %554 = vmatpush1.bf16.msra.mxu0 %v542
      %555 = vmatprep.subr.bf16.mxu0 0
      %556 = vmatpush1.bf16.msra.mxu0 %v543
      %557 = vmatprep.subr.bf16.mxu0 0
      %558 = vmatpush1.bf16.msra.mxu0 %v544
      %559 = vmatprep.subr.bf16.mxu0 0
      %560 = vmatpush1.bf16.msra.mxu0 %v545
      %561 = vmatprep.subr.bf16.mxu0 0
      %562 = vmatpush1.bf16.msra.mxu0 0
      %563 = vmatprep.subr.bf16.mxu0 0
      %564 = vmatpush1.bf16.msra.mxu0 0
      %565 = vmatprep.subr.bf16.mxu0 0
      %566 = vmatpush1.bf16.msra.mxu0 0
      %567 = vmatprep.subr.bf16.mxu0 0
      %568 = vmatpush1.bf16.msra.mxu0 0
      %569 = vmatprep.subr.bf16.mxu0 0
      %570 = vmatpush1.bf16.msra.mxu0 0
      %571 = vmatprep.subr.bf16.mxu0 0
      %572 = vmatpush1.bf16.msra.mxu0 0
      %573 = vmatprep.subr.bf16.mxu0 0
      %574 = vmatpush1.bf16.msra.mxu0 0
      %575 = vmatprep.subr.bf16.mxu0 0
      %576 = vmatpush1.bf16.msra.mxu0 0
      %577 = vmatprep.subr.bf16.mxu0 0
      %578 = vmatpush1.bf16.msra.mxu0 0
      %579 = vmatprep.subr.bf16.mxu0 0
      %580 = vmatpush1.bf16.msra.mxu0 0
      %581 = vmatprep.subr.bf16.mxu0 0
      %582 = vmatpush1.bf16.msra.mxu0 0
      %583 = vmatprep.subr.bf16.mxu0 0
      %584 = vmatpush1.bf16.msra.mxu0 0
      %585 = vmatprep.mubr.bf16.mxu0 0
      %586 = vmatmul.mubr.bf16.gmra.mrb[0].mxu0 %v551
      %v587 = vpop.f32.mrb[0].mxu0
      %v588 = vadd.f32 0.0, %v587
      %v589 = vpop.f32.mrb[0].mxu0
      %v590 = vpop.f32.mrb[0].mxu0
      %v591 = vadd.f32 0.0, %v590
      %v592 = vpop.f32.mrb[0].mxu0
      %593 = vdwg.mxu0
      %v594 = vadd.f32 %v509, %v588
      %v595 = vadd.f32 %v512, %v591
      %v596 = vld [vmem:[%s7] sm:$0x1]
      %v598 = vlaneseq
      %v599 = vshrl.u32 %v598, 7
      %v600 = vsub.s32 0, %v599
      %v601 = vrot.slane %v596, %v600
      %v603 = vadd.f32 %v594, %v601
      %v604 = vadd.f32 %v595, %v601
      %605 = vst.msk [vmem:[%s343] sm:$0xff] %vm354, %v603
      %606 = vst.msk [vmem:[%s343 + $0x8] sm:$0xff] %vm354, %v604
      %v607 = vsel %vm354, %v603, 0.0
      %v608 = vsel %vm354, %v604, 0.0
      %v609 = vadd.f32 %v607, %v608
      %v610 = vrot.slane %v609, 4
      %v611 = vadd.f32 %v609, %v610
      %v612 = vrot.slane %v611, 2
      %v613 = vadd.f32 %v611, %v612
      %v614 = vrot.slane %v613, 1
      %v615 = vadd.f32 %v613, %v614
      %616 = vst.msk [vmem:[%s347] sm:$0x1] %vm351, %v615
      %v617 = vmul.f32 %v603, %v603
      %v618 = vmul.f32 %v604, %v604
      %v619 = vsel %vm354, %v617, 0.0
      %v620 = vsel %vm354, %v618, 0.0
      %v621 = vadd.f32 %v619, %v620
      %v622 = vrot.slane %v621, 4
      %v623 = vadd.f32 %v621, %v622
      %v624 = vrot.slane %v623, 2
      %v625 = vadd.f32 %v623, %v624
      %v626 = vrot.slane %v625, 1
      %v627 = vadd.f32 %v625, %v626
      %628 = vst.msk [vmem:[%s347 + $0x1] sm:$0x1] %vm351, %v627
      %p629 = scmp.lt.s32.totalorder %s25, 1
      %s630 = scalar_select %p629, %s25, 1
      %s631 = smul.addr %s630, 2
      %s632 = smul.addr %s631, 8
      %s633 = scalar_lea.vmem %s8, %s632
      %p634 = scmp.lt.s32.totalorder %s25, 1
      %s635 = scalar_select %p634, %s25, 1
      %s636 = smul.addr %s635, 2
      %s637 = scalar_lea.vmem %s9, %s636
      // Predicated region
      $region53: #{convae_forward.8} parent=51 // pred_check
        %p638 = pneg %p216
      $region54: #{convae_forward.8} parent=51 // pred_check_branch
        %640 = sbr.rel (%p638) target = $region56
      $region55: #{convae_forward.8} parent=51 // pred_region
        _
      $region56: #{convae_forward.8} parent=51 // pred_fallthru
        _
      // Predicated region
      $region57: #{convae_forward.8} parent=51 // pred_check
        %p641 = pneg %p242
      $region58: #{convae_forward.8} parent=51 // pred_check_branch
        %643 = sbr.rel (%p641) target = $region60
      $region59: #{convae_forward.8} parent=51 // pred_region
        _
      $region60: #{convae_forward.8} parent=51 // pred_fallthru
        _
    $region52: #{convae_forward.8} parent=5 // pred_fallthru
      _
    %p644 = scmp.le.s32.totalorder 2, %s20
    // Predicated region
    $region61: #{convae_forward.8} parent=5 // pred_check
      %p645 = pneg %p644
    $region62: #{convae_forward.8} parent=5 // pred_check_branch
      %647 = sbr.rel (%p645) target = $region64
    $region63: #{convae_forward.8} parent=5 // pred_region
      %s648 = ssub.s32 %s20, 2
      // Predicated region
      $region65: #{convae_forward.8} parent=63 // pred_check
        %p649 = pneg %p222
      $region66: #{convae_forward.8} parent=63 // pred_check_branch
        %651 = sbr.rel (%p649) target = $region68
      $region67: #{convae_forward.8} parent=63 // pred_region
        %p652 = scmp.lt.s32.totalorder %s26, 1
        %s653 = scalar_select %p652, %s26, 1
        %s654 = smul.addr %s653, 2
        %s655 = smul.addr %s654, 8
        %s656 = scalar_lea.vmem %s8, %s655
      $region68: #{convae_forward.8} parent=63 // pred_fallthru
        _
      // Predicated region
      $region69: #{convae_forward.8} parent=63 // pred_check
        %p657 = pneg %p248
      $region70: #{convae_forward.8} parent=63 // pred_check_branch
        %659 = sbr.rel (%p657) target = $region72
      $region71: #{convae_forward.8} parent=63 // pred_region
        %p660 = scmp.lt.s32.totalorder %s26, 1
        %s661 = scalar_select %p660, %s26, 1
        %s662 = smul.addr %s661, 2
        %s663 = scalar_lea.vmem %s9, %s662
      $region72: #{convae_forward.8} parent=63 // pred_fallthru
        _
    $region64: #{convae_forward.8} parent=5 // pred_fallthru
      _
  $region6: #{convae_forward.8} parent=0 // loop_footer
    %s24 = sadd.s32 1, %s20
  $region7: #{convae_forward.8} parent=0 // loop_footer_branch
    %19 = sbr.rel target = $region3
  $region8: #{convae_forward.8} parent=0 // loop_exit
    _

// kernel: convae_forward.9
$region0: #{convae_forward.9}
  #allocation0 [shape = 'u32[]', space=smem, size = 0x4, offset = 0x4, fixed_abs, tag = 'smem constant byte address 0x4 - core index']
  #allocation1 [shape = 'u32[144,128]{1,0:T(1,128)}', space=vmem, size = 0x12000, scoped, tag = 'internal scratch']
  %s0 = inlined_call_operand.vmem [shape: f32[2,16,64], index: 0, kind: input, shape index: {}]
  %s1 = inlined_call_operand.vmem [shape: f32[2,2,64], index: 1, kind: input, shape index: {}]
  %s2 = inlined_call_operand.vmem [shape: f32[64,4], index: 2, kind: input, shape index: {}]
  %s3 = inlined_call_operand.vmem [shape: f32[4,32], index: 3, kind: input, shape index: {}]
  %s4 = inlined_call_operand.vmem [shape: f32[8,16], index: 4, kind: input, shape index: {}]
  %s5 = inlined_call_operand.vmem [shape: f32[8,16], index: 5, kind: input, shape index: {}]
  %s6 = inlined_call_operand.vmem [shape: f32[64,32], index: 6, kind: input, shape index: {}]
  %s7 = inlined_call_operand.vmem [shape: f32[64,32], index: 7, kind: input, shape index: {}]
  %s8 = inlined_call_operand.vmem [shape: f32[2,8,32], index: 8, kind: output, shape index: {}]
  %s9 = sld [smem:[#allocation0]]
  $region65: #{convae_forward.9} parent=0
    _
  %s11 = ssub.s32 1, %s9
  %s12 = scalar_select 0, %s11, %s9
  loop: start=0, step=1, limit=4
  $region2: #{convae_forward.9} parent=0 // loop_pre_header
    _
  $region3: #{convae_forward.9} parent=0 // loop_header
    %s14 = sphi 0, %s18
    %p15 = scmp.ge.s32.totalorder %s14, 4
    %s24 = sphi 0, %s26
    %s27 = sphi 0, %s24
    %s28 = sphi 0, %s27
    %s44 = sphi 0, %s28
    %s48 = sphi 0, %s48
    %s50 = sphi 0, %s48
    %s51 = sphi 0, %s50
    %s65 = sphi 0, %s51
    %s69 = sphi 0, %s69
    %s71 = sphi 0, %s69
    %s72 = sphi 0, %s71
    %s86 = sphi 0, %s72
    %s90 = sphi 0, %s90
    %s92 = sphi 0, %s90
    %s93 = sphi 0, %s92
    %s107 = sphi 0, %s93
    %s111 = sphi 0, %s111
    %s113 = sphi 0, %s111
    %s114 = sphi 0, %s113
    %s128 = sphi 0, %s114
    %s132 = sphi 0, %s132
    %s134 = sphi 0, %s132
    %s135 = sphi 0, %s134
    %s149 = sphi 0, %s135
    %s153 = sphi 0, %s153
    %s155 = sphi 0, %s153
    %s156 = sphi 0, %s155
    %s170 = sphi 0, %s156
    %s174 = sphi 0, %s174
    %s176 = sphi 0, %s174
    %s177 = sphi 0, %s176
    %s191 = sphi 0, %s177
    %s197 = sphi 0, %s199
    %s200 = sphi 0, %s197
    %s201 = sphi 0, %s200
    %s217 = sphi 0, %s201
  $region4: #{convae_forward.9} parent=0 // loop_header_branch
    %17 = sbr.rel (%p15) target = $region8
  $region5: #{convae_forward.9} parent=0 // loop_body
    %s19 = ssub.s32 %s14, 1
    %s20 = ssub.s32 %s14, 2
    %s21 = sadd.s32 %s14, 1
    %s22 = ssub.s32 %s14, %s21
    %p23 = scmp.eq.s32.totalorder %s22, 0
    %s25 = sadd.s32 %s24, 1
    %s26 = scalar_select %p23, %s24, %s25
    %p29 = pneg %p23
    %p30 = scmp.eq.s32.totalorder %s14, 1
    %p31 = por %p29, %p30
    %p32 = scmp.ne.s32.totalorder %s24, %s27
    %p33 = scmp.eq.s32.totalorder %s14, 0
    %p34 = por %p32, %p33
    %p35 = scmp.ne.s32.totalorder %s24, %s27
    %p36 = scmp.eq.s32.totalorder %s19, 1
    %p37 = por %p35, %p36
    %p38 = scmp.ne.s32.totalorder %s27, %s28
    %p39 = scmp.eq.s32.totalorder %s19, 0
    %p40 = por %p38, %p39
    %p41 = scmp.ne.s32.totalorder %s27, %s28
    %p42 = scmp.eq.s32.totalorder %s20, 1
    %p43 = por %p41, %p42
    %p45 = scmp.ne.s32.totalorder %s28, %s44
    %p46 = scmp.eq.s32.totalorder %s20, 0
    %p47 = por %p45, %p46
    %s49 = sadd.s32 %s48, 1
    %p52 = scmp.eq.s32.totalorder %s14, 1
    %p53 = scmp.ne.s32.totalorder %s48, %s50
    %p54 = scmp.eq.s32.totalorder %s14, 0
    %p55 = por %p53, %p54
    %p56 = scmp.ne.s32.totalorder %s48, %s50
    %p57 = scmp.eq.s32.totalorder %s19, 1
    %p58 = por %p56, %p57
    %p59 = scmp.ne.s32.totalorder %s50, %s51
    %p60 = scmp.eq.s32.totalorder %s19, 0
    %p61 = por %p59, %p60
    %p62 = scmp.ne.s32.totalorder %s50, %s51
    %p63 = scmp.eq.s32.totalorder %s20, 1
    %p64 = por %p62, %p63
    %p66 = scmp.ne.s32.totalorder %s51, %s65
    %p67 = scmp.eq.s32.totalorder %s20, 0
    %p68 = por %p66, %p67
    %s70 = sadd.s32 %s69, 1
    %p73 = scmp.eq.s32.totalorder %s14, 1
    %p74 = scmp.ne.s32.totalorder %s69, %s71
    %p75 = scmp.eq.s32.totalorder %s14, 0
    %p76 = por %p74, %p75
    %p77 = scmp.ne.s32.totalorder %s69, %s71
    %p78 = scmp.eq.s32.totalorder %s19, 1
    %p79 = por %p77, %p78
    %p80 = scmp.ne.s32.totalorder %s71, %s72
    %p81 = scmp.eq.s32.totalorder %s19, 0
    %p82 = por %p80, %p81
    %p83 = scmp.ne.s32.totalorder %s71, %s72
    %p84 = scmp.eq.s32.totalorder %s20, 1
    %p85 = por %p83, %p84
    %p87 = scmp.ne.s32.totalorder %s72, %s86
    %p88 = scmp.eq.s32.totalorder %s20, 0
    %p89 = por %p87, %p88
    %s91 = sadd.s32 %s90, 1
    %p94 = scmp.eq.s32.totalorder %s14, 1
    %p95 = scmp.ne.s32.totalorder %s90, %s92
    %p96 = scmp.eq.s32.totalorder %s14, 0
    %p97 = por %p95, %p96
    %p98 = scmp.ne.s32.totalorder %s90, %s92
    %p99 = scmp.eq.s32.totalorder %s19, 1
    %p100 = por %p98, %p99
    %p101 = scmp.ne.s32.totalorder %s92, %s93
    %p102 = scmp.eq.s32.totalorder %s19, 0
    %p103 = por %p101, %p102
    %p104 = scmp.ne.s32.totalorder %s92, %s93
    %p105 = scmp.eq.s32.totalorder %s20, 1
    %p106 = por %p104, %p105
    %p108 = scmp.ne.s32.totalorder %s93, %s107
    %p109 = scmp.eq.s32.totalorder %s20, 0
    %p110 = por %p108, %p109
    %s112 = sadd.s32 %s111, 1
    %p115 = scmp.eq.s32.totalorder %s14, 1
    %p116 = scmp.ne.s32.totalorder %s111, %s113
    %p117 = scmp.eq.s32.totalorder %s14, 0
    %p118 = por %p116, %p117
    %p119 = scmp.ne.s32.totalorder %s111, %s113
    %p120 = scmp.eq.s32.totalorder %s19, 1
    %p121 = por %p119, %p120
    %p122 = scmp.ne.s32.totalorder %s113, %s114
    %p123 = scmp.eq.s32.totalorder %s19, 0
    %p124 = por %p122, %p123
    %p125 = scmp.ne.s32.totalorder %s113, %s114
    %p126 = scmp.eq.s32.totalorder %s20, 1
    %p127 = por %p125, %p126
    %p129 = scmp.ne.s32.totalorder %s114, %s128
    %p130 = scmp.eq.s32.totalorder %s20, 0
    %p131 = por %p129, %p130
    %s133 = sadd.s32 %s132, 1
    %p136 = scmp.eq.s32.totalorder %s14, 1
    %p137 = scmp.ne.s32.totalorder %s132, %s134
    %p138 = scmp.eq.s32.totalorder %s14, 0
    %p139 = por %p137, %p138
    %p140 = scmp.ne.s32.totalorder %s132, %s134
    %p141 = scmp.eq.s32.totalorder %s19, 1
    %p142 = por %p140, %p141
    %p143 = scmp.ne.s32.totalorder %s134, %s135
    %p144 = scmp.eq.s32.totalorder %s19, 0
    %p145 = por %p143, %p144
    %p146 = scmp.ne.s32.totalorder %s134, %s135
    %p147 = scmp.eq.s32.totalorder %s20, 1
    %p148 = por %p146, %p147
    %p150 = scmp.ne.s32.totalorder %s135, %s149
    %p151 = scmp.eq.s32.totalorder %s20, 0
    %p152 = por %p150, %p151
    %s154 = sadd.s32 %s153, 1
    %p157 = scmp.eq.s32.totalorder %s14, 1
    %p158 = scmp.ne.s32.totalorder %s153, %s155
    %p159 = scmp.eq.s32.totalorder %s14, 0
    %p160 = por %p158, %p159
    %p161 = scmp.ne.s32.totalorder %s153, %s155
    %p162 = scmp.eq.s32.totalorder %s19, 1
    %p163 = por %p161, %p162
    %p164 = scmp.ne.s32.totalorder %s155, %s156
    %p165 = scmp.eq.s32.totalorder %s19, 0
    %p166 = por %p164, %p165
    %p167 = scmp.ne.s32.totalorder %s155, %s156
    %p168 = scmp.eq.s32.totalorder %s20, 1
    %p169 = por %p167, %p168
    %p171 = scmp.ne.s32.totalorder %s156, %s170
    %p172 = scmp.eq.s32.totalorder %s20, 0
    %p173 = por %p171, %p172
    %s175 = sadd.s32 %s174, 1
    %p178 = scmp.eq.s32.totalorder %s14, 1
    %p179 = scmp.ne.s32.totalorder %s174, %s176
    %p180 = scmp.eq.s32.totalorder %s14, 0
    %p181 = por %p179, %p180
    %p182 = scmp.ne.s32.totalorder %s174, %s176
    %p183 = scmp.eq.s32.totalorder %s19, 1
    %p184 = por %p182, %p183
    %p185 = scmp.ne.s32.totalorder %s176, %s177
    %p186 = scmp.eq.s32.totalorder %s19, 0
    %p187 = por %p185, %p186
    %p188 = scmp.ne.s32.totalorder %s176, %s177
    %p189 = scmp.eq.s32.totalorder %s20, 1
    %p190 = por %p188, %p189
    %p192 = scmp.ne.s32.totalorder %s177, %s191
    %p193 = scmp.eq.s32.totalorder %s20, 0
    %p194 = por %p192, %p193
    %s195 = ssub.s32 %s14, %s21
    %p196 = scmp.eq.s32.totalorder %s195, 0
    %s198 = sadd.s32 %s197, 1
    %s199 = scalar_select %p196, %s197, %s198
    %p202 = pneg %p196
    %p203 = scmp.eq.s32.totalorder %s14, 1
    %p204 = por %p202, %p203
    %p205 = scmp.ne.s32.totalorder %s197, %s200
    %p206 = scmp.eq.s32.totalorder %s14, 0
    %p207 = por %p205, %p206
    %p208 = scmp.ne.s32.totalorder %s197, %s200
    %p209 = scmp.eq.s32.totalorder %s19, 1
    %p210 = por %p208, %p209
    %p211 = scmp.ne.s32.totalorder %s200, %s201
    %p212 = scmp.eq.s32.totalorder %s19, 0
    %p213 = por %p211, %p212
    %p214 = scmp.ne.s32.totalorder %s200, %s201
    %p215 = scmp.eq.s32.totalorder %s20, 1
    %p216 = por %p214, %p215
    %p218 = scmp.ne.s32.totalorder %s201, %s217
    %p219 = scmp.eq.s32.totalorder %s20, 0
    %p220 = por %p218, %p219
    %p221 = scmp.le.s32.totalorder 1, %s14
    %p222 = scmp.lt.s32.totalorder %s14, 3
    %p223 = pnand %p221, %p222
    %p224 = pneg %p223
    // Predicated region
    $region9: #{convae_forward.9} parent=5 // pred_check
      _
    $region10: #{convae_forward.9} parent=5 // pred_check_branch
      %226 = sbr.rel (%p223) target = $region12
    $region11: #{convae_forward.9} parent=5 // pred_region
      %s227 = ssub.s32 %s14, 1
      // Predicated region
      $region13: #{convae_forward.9} parent=11 // pred_check
        %p228 = pneg %p61
      $region14: #{convae_forward.9} parent=11 // pred_check_branch
        %230 = sbr.rel (%p228) target = $region16
      $region15: #{convae_forward.9} parent=11 // pred_region
        _
      $region16: #{convae_forward.9} parent=11 // pred_fallthru
        _
      // Predicated region
      $region17: #{convae_forward.9} parent=11 // pred_check
        %p231 = pneg %p82
      $region18: #{convae_forward.9} parent=11 // pred_check_branch
        %233 = sbr.rel (%p231) target = $region20
      $region19: #{convae_forward.9} parent=11 // pred_region
        _
      $region20: #{convae_forward.9} parent=11 // pred_fallthru
        _
      // Predicated region
      $region21: #{convae_forward.9} parent=11 // pred_check
        %p234 = pneg %p103
      $region22: #{convae_forward.9} parent=11 // pred_check_branch
        %236 = sbr.rel (%p234) target = $region24
      $region23: #{convae_forward.9} parent=11 // pred_region
        _
      $region24: #{convae_forward.9} parent=11 // pred_fallthru
        _
      // Predicated region
      $region25: #{convae_forward.9} parent=11 // pred_check
        %p237 = pneg %p124
      $region26: #{convae_forward.9} parent=11 // pred_check_branch
        %239 = sbr.rel (%p237) target = $region28
      $region27: #{convae_forward.9} parent=11 // pred_region
        _
      $region28: #{convae_forward.9} parent=11 // pred_fallthru
        _
      // Predicated region
      $region29: #{convae_forward.9} parent=11 // pred_check
        %p240 = pneg %p145
      $region30: #{convae_forward.9} parent=11 // pred_check_branch
        %242 = sbr.rel (%p240) target = $region32
      $region31: #{convae_forward.9} parent=11 // pred_region
        _
      $region32: #{convae_forward.9} parent=11 // pred_fallthru
        _
      // Predicated region
      $region33: #{convae_forward.9} parent=11 // pred_check
        %p243 = pneg %p166
      $region34: #{convae_forward.9} parent=11 // pred_check_branch
        %245 = sbr.rel (%p243) target = $region36
      $region35: #{convae_forward.9} parent=11 // pred_region
        _
      $region36: #{convae_forward.9} parent=11 // pred_fallthru
        _
      // Predicated region
      $region37: #{convae_forward.9} parent=11 // pred_check
        %p246 = pneg %p187
      $region38: #{convae_forward.9} parent=11 // pred_check_branch
        %248 = sbr.rel (%p246) target = $region40
      $region39: #{convae_forward.9} parent=11 // pred_region
        _
      $region40: #{convae_forward.9} parent=11 // pred_fallthru
        _
    $region12: #{convae_forward.9} parent=5 // pred_fallthru
      _
    %p249 = scmp.lt.s32.totalorder %s14, 2
    // Predicated region
    $region41: #{convae_forward.9} parent=5 // pred_check
      %p250 = pneg %p249
    $region42: #{convae_forward.9} parent=5 // pred_check_branch
      %252 = sbr.rel (%p250) target = $region44
    $region43: #{convae_forward.9} parent=5 // pred_region
      // Predicated region
      $region45: #{convae_forward.9} parent=43 // pred_check
        %p253 = pneg %p34
      $region46: #{convae_forward.9} parent=43 // pred_check_branch
        %255 = sbr.rel (%p253) target = $region48
      $region47: #{convae_forward.9} parent=43 // pred_region
        %p256 = scmp.lt.s32.totalorder %s14, 1
        %s257 = scalar_select %p256, %s14, 1
        %s258 = smul.addr %s257, 2
        %s259 = smul.addr %s258, 8
        %s260 = scalar_lea.vmem %s0, %s259
      $region48: #{convae_forward.9} parent=43 // pred_fallthru
        _
    $region44: #{convae_forward.9} parent=5 // pred_fallthru
      _
    %p261 = scmp.le.s32.totalorder 1, %s14
    %p262 = scmp.lt.s32.totalorder %s14, 3
    %p263 = pnand %p261, %p262
    %p264 = pneg %p263
    // Predicated region
    $region49: #{convae_forward.9} parent=5 // pred_check
      _
    $region50: #{convae_forward.9} parent=5 // pred_check_branch
      %266 = sbr.rel (%p263) target = $region52
    $region51: #{convae_forward.9} parent=5 // pred_region
      %s267 = ssub.s32 %s14, 1
      %p268 = scmp.lt.s32.totalorder %s19, 1
      %s269 = scalar_select %p268, %s19, 1
      %s270 = smul.addr %s269, 2
      %s271 = smul.addr %s270, 8
      %s272 = scalar_lea.vmem %s0, %s271
      %p273 = pneg %p40
      %p274 = pneg %p37
      %p275 = pneg %p61
      %p276 = pneg %p58
      %p277 = pneg %p82
      %p278 = pneg %p79
      %p279 = pneg %p103
      %p280 = pneg %p100
      %p281 = pneg %p124
      %p282 = pneg %p121
      %p283 = pneg %p145
      %p284 = pneg %p142
      %p285 = pneg %p166
      %p286 = pneg %p163
      %p287 = pneg %p187
      %p288 = pneg %p184
      %p289 = pneg %p213
      %p290 = pneg %p210
      %p291 = scmp.lt.s32.totalorder %s19, 1
      %s292 = scalar_select %p291, %s19, 1
      %s293 = smul.addr %s292, 8
      %s294 = scalar_lea.vmem %s8, %s293
      %p295 = scmp.lt.s32.totalorder %s19, 1
      %s296 = scalar_select %p295, %s19, 1
      %s297 = smul.addr %s296, 2
      %s298 = smul.addr %s297, 8
      %s299 = scalar_lea.vmem %s0, %s298
      %p300 = scmp.lt.s32.totalorder %s19, 1
      %s301 = scalar_select %p300, %s19, 1
      %s302 = smul.addr %s301, 8
      %s303 = scalar_lea.vmem %s8, %s302
      %v304 = vld [vmem:[%s299] sm:$0xff]
      %v305 = vld [vmem:[%s299 + $0x8] sm:$0xff]
      %v306 = vld [vmem:[%s1] sm:$0x3]
      %v307 = vld [vmem:[%s1 + $0x2] sm:$0x3]
      %v308 = vld [vmem:[%s2] sm:$0xff]
      %v309 = vld [vmem:[%s2 + $0x8] sm:$0xff]
      %v310 = vld [vmem:[%s2 + $0x10] sm:$0xff]
      %v311 = vld [vmem:[%s2 + $0x18] sm:$0xff]
      %v312 = vld [vmem:[%s2 + $0x20] sm:$0xff]
      %v313 = vld [vmem:[%s2 + $0x28] sm:$0xff]
      %v314 = vld [vmem:[%s2 + $0x30] sm:$0xff]
      %v315 = vld [vmem:[%s2 + $0x38] sm:$0xff]
      %v316 = vld [vmem:[%s3] sm:$0xf]
      %vm317 = vcmask 517120
      %v318 = vsel %vm317, %v306, 0.0
      %v319 = vsel %vm317, %v307, 0.0
      %v320 = vadd.f32 %v318, %v319
      %vm321 = vcmask 523264
      %v323 = vsel %vm321, %v320, 0
      %325 = vmatprep.subr.mxu0 0.0
      %326 = vmatpush1.msra.mxu0 %v308
      %327 = vmatprep.subr.mxu0 0.0
      %328 = vmatpush1.msra.mxu0 %v309
      %329 = vmatprep.subr.mxu0 0.0
      %330 = vmatpush1.msra.mxu0 %v310
      %331 = vmatprep.subr.mxu0 0.0
      %332 = vmatpush1.msra.mxu0 %v311
      %333 = vmatprep.subr.mxu0 0.0
      %334 = vmatpush1.msra.mxu0 %v312
      %335 = vmatprep.subr.mxu0 0.0
      %336 = vmatpush1.msra.mxu0 %v313
      %337 = vmatprep.subr.mxu0 0.0
      %338 = vmatpush1.msra.mxu0 %v314
      %339 = vmatprep.subr.mxu0 0.0
      %340 = vmatpush1.msra.mxu0 %v315
      %341 = vmatprep.subr.mxu0 0.0
      %342 = vmatpush1.msra.mxu0 0.0
      %343 = vmatprep.subr.mxu0 0.0
      %344 = vmatpush1.msra.mxu0 0.0
      %345 = vmatprep.subr.mxu0 0.0
      %346 = vmatpush1.msra.mxu0 0.0
      %347 = vmatprep.subr.mxu0 0.0
      %348 = vmatpush1.msra.mxu0 0.0
      %349 = vmatprep.subr.mxu0 0.0
      %350 = vmatpush1.msra.mxu0 0.0
      %351 = vmatprep.subr.mxu0 0.0
      %352 = vmatpush1.msra.mxu0 0.0
      %353 = vmatprep.subr.mxu0 0.0
      %354 = vmatpush1.msra.mxu0 0.0
      %355 = vmatprep.subr.mxu0 0.0
      %356 = vmatpush1.msra.mxu0 0.0
      %357 = vmatprep.subr.mxu0 0.0
      %358 = vmatpush1.msra.mxu0 0.0
      %359 = vmatprep.subr.mxu0 0.0
      %360 = vmatpush1.msra.mxu0 0.0
      %361 = vmatprep.subr.mxu0 0.0
      %362 = vmatpush1.msra.mxu0 0.0
      %363 = vmatprep.subr.mxu0 0.0
      %364 = vmatpush1.msra.mxu0 0.0
      %365 = vmatprep.subr.mxu0 0.0
      %366 = vmatpush1.msra.mxu0 0.0
      %367 = vmatprep.subr.mxu0 0.0
      %368 = vmatpush1.msra.mxu0 0.0
      %369 = vmatprep.subr.mxu0 0.0
      %370 = vmatpush1.msra.mxu0 0.0
      %371 = vmatprep.subr.mxu0 0.0
      %372 = vmatpush1.msra.mxu0 0.0
      %373 = vmatprep.subr.mxu0 0.0
      %374 = vmatpush1.msra.mxu0 0.0
      %375 = vmatprep.subr.mxu0 0.0
      %376 = vmatpush1.msra.mxu0 0.0
      %377 = vmatprep.subr.mxu0 0.0
      %378 = vmatpush1.msra.mxu0 0.0
      %379 = vmatprep.subr.mxu0 0.0
      %380 = vmatpush1.msra.mxu0 0.0
      %381 = vmatprep.subr.mxu0 0.0
      %382 = vmatpush1.msra.mxu0 0.0
      %383 = vmatprep.subr.mxu0 0.0
      %384 = vmatpush1.msra.mxu0 0.0
      %385 = vmatprep.subr.mxu0 0.0
      %386 = vmatpush1.msra.mxu0 0.0
      %387 = vmatprep.subr.mxu0 0.0
      %388 = vmatpush1.msra.mxu0 0.0
      %389 = vmatprep.mubr.f32.mxu0 0.0
      %390 = vmatmul.mubr.f32.gmra.mrb[0].mxu0 %v323
      %v391 = vpop.f32.mrb[0].mxu0
      %v392 = vadd.f32 0.0, %v391
      %v393 = vpop.f32.mrb[0].mxu0
      %394 = vdwg.mxu0
      %v395 = vrot.slane %v320, 1
      %v396 = vsel %vm321, %v395, 0
      %398 = vmatprep.subr.mxu0 0.0
      %399 = vmatpush1.msra.mxu0 %v308
      %400 = vmatprep.subr.mxu0 0.0
      %401 = vmatpush1.msra.mxu0 %v309
      %402 = vmatprep.subr.mxu0 0.0
      %403 = vmatpush1.msra.mxu0 %v310
      %404 = vmatprep.subr.mxu0 0.0
      %405 = vmatpush1.msra.mxu0 %v311
      %406 = vmatprep.subr.mxu0 0.0
      %407 = vmatpush1.msra.mxu0 %v312
      %408 = vmatprep.subr.mxu0 0.0
      %409 = vmatpush1.msra.mxu0 %v313
      %410 = vmatprep.subr.mxu0 0.0
      %411 = vmatpush1.msra.mxu0 %v314
      %412 = vmatprep.subr.mxu0 0.0
      %413 = vmatpush1.msra.mxu0 %v315
      %414 = vmatprep.subr.mxu0 0.0
      %415 = vmatpush1.msra.mxu0 0.0
      %416 = vmatprep.subr.mxu0 0.0
      %417 = vmatpush1.msra.mxu0 0.0
      %418 = vmatprep.subr.mxu0 0.0
      %419 = vmatpush1.msra.mxu0 0.0
      %420 = vmatprep.subr.mxu0 0.0
      %421 = vmatpush1.msra.mxu0 0.0
      %422 = vmatprep.subr.mxu0 0.0
      %423 = vmatpush1.msra.mxu0 0.0
      %424 = vmatprep.subr.mxu0 0.0
      %425 = vmatpush1.msra.mxu0 0.0
      %426 = vmatprep.subr.mxu0 0.0
      %427 = vmatpush1.msra.mxu0 0.0
      %428 = vmatprep.subr.mxu0 0.0
      %429 = vmatpush1.msra.mxu0 0.0
      %430 = vmatprep.subr.mxu0 0.0
      %431 = vmatpush1.msra.mxu0 0.0
      %432 = vmatprep.subr.mxu0 0.0
      %433 = vmatpush1.msra.mxu0 0.0
      %434 = vmatprep.subr.mxu0 0.0
      %435 = vmatpush1.msra.mxu0 0.0
      %436 = vmatprep.subr.mxu0 0.0
      %437 = vmatpush1.msra.mxu0 0.0
      %438 = vmatprep.subr.mxu0 0.0
      %439 = vmatpush1.msra.mxu0 0.0
      %440 = vmatprep.subr.mxu0 0.0
      %441 = vmatpush1.msra.mxu0 0.0
      %442 = vmatprep.subr.mxu0 0.0
      %443 = vmatpush1.msra.mxu0 0.0
      %444 = vmatprep.subr.mxu0 0.0
      %445 = vmatpush1.msra.mxu0 0.0
      %446 = vmatprep.subr.mxu0 0.0
      %447 = vmatpush1.msra.mxu0 0.0
      %448 = vmatprep.subr.mxu0 0.0
      %449 = vmatpush1.msra.mxu0 0.0
      %450 = vmatprep.subr.mxu0 0.0
      %451 = vmatpush1.msra.mxu0 0.0
      %452 = vmatprep.subr.mxu0 0.0
      %453 = vmatpush1.msra.mxu0 0.0
      %454 = vmatprep.subr.mxu0 0.0
      %455 = vmatpush1.msra.mxu0 0.0
      %456 = vmatprep.subr.mxu0 0.0
      %457 = vmatpush1.msra.mxu0 0.0
      %458 = vmatprep.subr.mxu0 0.0
      %459 = vmatpush1.msra.mxu0 0.0
      %460 = vmatprep.subr.mxu0 0.0
      %461 = vmatpush1.msra.mxu0 0.0
      %462 = vmatprep.mubr.f32.mxu0 0.0
      %463 = vmatmul.mubr.f32.gmra.mrb[0].mxu0 %v396
      %v464 = vpop.f32.mrb[0].mxu0
      %v465 = vadd.f32 0.0, %v464
      %v466 = vpop.f32.mrb[0].mxu0
      %467 = vdwg.mxu0
      %v468 = vrcp.pop 512.0
      %v469 = vmul.f32 %v392, %v468
      %v470 = vmul.f32 %v465, %v468
      %v471 = vmul.f32 %v469, %v469
      %v472 = vsub.f32 %v470, %v471
      %v473 = vmax.f32 %v472, 0.0
      %v474 = vadd.f32 %v473, 1e-05
      %v475 = vrsqrt.pop %v474
      %vm476 = vcmask 31744
      %v478 = vsel %vm476, %v475, 0
      %vm480 = vcmask 1043456
      %v482 = vsel %vm480, %v316, 0
      %484 = vmatprep.subr.mxu0 0.0
      %485 = vmatpush1.msra.mxu0 %v482
      %486 = vmatprep.subr.mxu0 0.0
      %487 = vmatpush1.msra.mxu0 0.0
      %488 = vmatprep.subr.mxu0 0.0
      %489 = vmatpush1.msra.mxu0 0.0
      %490 = vmatprep.subr.mxu0 0.0
      %491 = vmatpush1.msra.mxu0 0.0
      %492 = vmatprep.subr.mxu0 0.0
      %493 = vmatpush1.msra.mxu0 0.0
      %494 = vmatprep.subr.mxu0 0.0
      %495 = vmatpush1.msra.mxu0 0.0
      %496 = vmatprep.subr.mxu0 0.0
      %497 = vmatpush1.msra.mxu0 0.0
      %498 = vmatprep.subr.mxu0 0.0
      %499 = vmatpush1.msra.mxu0 0.0
      %500 = vmatprep.subr.mxu0 0.0
      %501 = vmatpush1.msra.mxu0 0.0
      %502 = vmatprep.subr.mxu0 0.0
      %503 = vmatpush1.msra.mxu0 0.0
      %504 = vmatprep.subr.mxu0 0.0
      %505 = vmatpush1.msra.mxu0 0.0
      %506 = vmatprep.subr.mxu0 0.0
      %507 = vmatpush1.msra.mxu0 0.0
      %508 = vmatprep.subr.mxu0 0.0
      %509 = vmatpush1.msra.mxu0 0.0
      %510 = vmatprep.subr.mxu0 0.0
      %511 = vmatpush1.msra.mxu0 0.0
      %512 = vmatprep.subr.mxu0 0.0
      %513 = vmatpush1.msra.mxu0 0.0
      %514 = vmatprep.subr.mxu0 0.0
      %515 = vmatpush1.msra.mxu0 0.0
      %516 = vmatprep.subr.mxu0 0.0
      %517 = vmatpush1.msra.mxu0 0.0
      %518 = vmatprep.subr.mxu0 0.0
      %519 = vmatpush1.msra.mxu0 0.0
      %520 = vmatprep.subr.mxu0 0.0
      %521 = vmatpush1.msra.mxu0 0.0
      %522 = vmatprep.subr.mxu0 0.0
      %523 = vmatpush1.msra.mxu0 0.0
      %524 = vmatprep.subr.mxu0 0.0
      %525 = vmatpush1.msra.mxu0 0.0
      %526 = vmatprep.subr.mxu0 0.0
      %527 = vmatpush1.msra.mxu0 0.0
      %528 = vmatprep.subr.mxu0 0.0
      %529 = vmatpush1.msra.mxu0 0.0
      %530 = vmatprep.subr.mxu0 0.0
      %531 = vmatpush1.msra.mxu0 0.0
      %532 = vmatprep.subr.mxu0 0.0
      %533 = vmatpush1.msra.mxu0 0.0
      %534 = vmatprep.subr.mxu0 0.0
      %535 = vmatpush1.msra.mxu0 0.0
      %536 = vmatprep.subr.mxu0 0.0
      %537 = vmatpush1.msra.mxu0 0.0
      %538 = vmatprep.subr.mxu0 0.0
      %539 = vmatpush1.msra.mxu0 0.0
      %540 = vmatprep.subr.mxu0 0.0
      %541 = vmatpush1.msra.mxu0 0.0
      %542 = vmatprep.subr.mxu0 0.0
      %543 = vmatpush1.msra.mxu0 0.0
      %544 = vmatprep.subr.mxu0 0.0
      %545 = vmatpush1.msra.mxu0 0.0
      %546 = vmatprep.subr.mxu0 0.0
      %547 = vmatpush1.msra.mxu0 0.0
      %548 = vmatprep.mubr.f32.mxu0 0.0
      %549 = vmatmul.mubr.f32.gmra.mrb[0].mxu0 %v478
      %v550 = vpop.f32.mrb[0].mxu0
      %v551 = vadd.f32 0.0, %v550
      %v552 = vpop.f32.mrb[0].mxu0
      %553 = vdwg.mxu0
      %v554 = vsub.f32 0.0, %v469
      %v555 = vmul.f32 %v554, %v475
      %v557 = vsel %vm476, %v555, 0
      %559 = vmatprep.subr.mxu0 0.0
      %560 = vmatpush1.msra.mxu0 %v482
      %561 = vmatprep.subr.mxu0 0.0
      %562 = vmatpush1.msra.mxu0 0.0
      %563 = vmatprep.subr.mxu0 0.0
      %564 = vmatpush1.msra.mxu0 0.0
      %565 = vmatprep.subr.mxu0 0.0
      %566 = vmatpush1.msra.mxu0 0.0
      %567 = vmatprep.subr.mxu0 0.0
      %568 = vmatpush1.msra.mxu0 0.0
      %569 = vmatprep.subr.mxu0 0.0
      %570 = vmatpush1.msra.mxu0 0.0
      %571 = vmatprep.subr.mxu0 0.0
      %572 = vmatpush1.msra.mxu0 0.0
      %573 = vmatprep.subr.mxu0 0.0
      %574 = vmatpush1.msra.mxu0 0.0
      %575 = vmatprep.subr.mxu0 0.0
      %576 = vmatpush1.msra.mxu0 0.0
      %577 = vmatprep.subr.mxu0 0.0
      %578 = vmatpush1.msra.mxu0 0.0
      %579 = vmatprep.subr.mxu0 0.0
      %580 = vmatpush1.msra.mxu0 0.0
      %581 = vmatprep.subr.mxu0 0.0
      %582 = vmatpush1.msra.mxu0 0.0
      %583 = vmatprep.subr.mxu0 0.0
      %584 = vmatpush1.msra.mxu0 0.0
      %585 = vmatprep.subr.mxu0 0.0
      %586 = vmatpush1.msra.mxu0 0.0
      %587 = vmatprep.subr.mxu0 0.0
      %588 = vmatpush1.msra.mxu0 0.0
      %589 = vmatprep.subr.mxu0 0.0
      %590 = vmatpush1.msra.mxu0 0.0
      %591 = vmatprep.subr.mxu0 0.0
      %592 = vmatpush1.msra.mxu0 0.0
      %593 = vmatprep.subr.mxu0 0.0
      %594 = vmatpush1.msra.mxu0 0.0
      %595 = vmatprep.subr.mxu0 0.0
      %596 = vmatpush1.msra.mxu0 0.0
      %597 = vmatprep.subr.mxu0 0.0
      %598 = vmatpush1.msra.mxu0 0.0
      %599 = vmatprep.subr.mxu0 0.0
      %600 = vmatpush1.msra.mxu0 0.0
      %601 = vmatprep.subr.mxu0 0.0
      %602 = vmatpush1.msra.mxu0 0.0
      %603 = vmatprep.subr.mxu0 0.0
      %604 = vmatpush1.msra.mxu0 0.0
      %605 = vmatprep.subr.mxu0 0.0
      %606 = vmatpush1.msra.mxu0 0.0
      %607 = vmatprep.subr.mxu0 0.0
      %608 = vmatpush1.msra.mxu0 0.0
      %609 = vmatprep.subr.mxu0 0.0
      %610 = vmatpush1.msra.mxu0 0.0
      %611 = vmatprep.subr.mxu0 0.0
      %612 = vmatpush1.msra.mxu0 0.0
      %613 = vmatprep.subr.mxu0 0.0
      %614 = vmatpush1.msra.mxu0 0.0
      %615 = vmatprep.subr.mxu0 0.0
      %616 = vmatpush1.msra.mxu0 0.0
      %617 = vmatprep.subr.mxu0 0.0
      %618 = vmatpush1.msra.mxu0 0.0
      %619 = vmatprep.subr.mxu0 0.0
      %620 = vmatpush1.msra.mxu0 0.0
      %621 = vmatprep.subr.mxu0 0.0
      %622 = vmatpush1.msra.mxu0 0.0
      %623 = vmatprep.mubr.f32.mxu0 0.0
      %624 = vmatmul.mubr.f32.gmra.mrb[0].mxu0 %v557
      %v625 = vpop.f32.mrb[0].mxu0
      %v626 = vadd.f32 0.0, %v625
      %v627 = vpop.f32.mrb[0].mxu0
      %628 = vdwg.mxu0
      %v629 = vld [vmem:[%s4] sm:$0xff]
      %vm630 = vcmask 130048
      %v632 = vsel %vm630, %v629, 0
      %634 = vmatprep.subr.mxu0 0.0
      %635 = vmatpush1.msra.mxu0 %v304
      %636 = vmatprep.subr.mxu0 0.0
      %637 = vmatpush1.msra.mxu0 %v305
      %638 = vmatprep.subr.mxu0 0.0
      %639 = vmatpush1.msra.mxu0 0.0
      %640 = vmatprep.subr.mxu0 0.0
      %641 = vmatpush1.msra.mxu0 0.0
      %642 = vmatprep.subr.mxu0 0.0
      %643 = vmatpush1.msra.mxu0 0.0
      %644 = vmatprep.subr.mxu0 0.0
      %645 = vmatpush1.msra.mxu0 0.0
      %646 = vmatprep.subr.mxu0 0.0
      %647 = vmatpush1.msra.mxu0 0.0
      %648 = vmatprep.subr.mxu0 0.0
      %649 = vmatpush1.msra.mxu0 0.0
      %650 = vmatprep.subr.mxu0 0.0
      %651 = vmatpush1.msra.mxu0 0.0
      %652 = vmatprep.subr.mxu0 0.0
      %653 = vmatpush1.msra.mxu0 0.0
      %654 = vmatprep.subr.mxu0 0.0
      %655 = vmatpush1.msra.mxu0 0.0
      %656 = vmatprep.subr.mxu0 0.0
      %657 = vmatpush1.msra.mxu0 0.0
      %658 = vmatprep.subr.mxu0 0.0
      %659 = vmatpush1.msra.mxu0 0.0
      %660 = vmatprep.subr.mxu0 0.0
      %661 = vmatpush1.msra.mxu0 0.0
      %662 = vmatprep.subr.mxu0 0.0
      %663 = vmatpush1.msra.mxu0 0.0
      %664 = vmatprep.subr.mxu0 0.0
      %665 = vmatpush1.msra.mxu0 0.0
      %666 = vmatprep.subr.mxu0 0.0
      %667 = vmatpush1.msra.mxu0 0.0
      %668 = vmatprep.subr.mxu0 0.0
      %669 = vmatpush1.msra.mxu0 0.0
      %670 = vmatprep.subr.mxu0 0.0
      %671 = vmatpush1.msra.mxu0 0.0
      %672 = vmatprep.subr.mxu0 0.0
      %673 = vmatpush1.msra.mxu0 0.0
      %674 = vmatprep.subr.mxu0 0.0
      %675 = vmatpush1.msra.mxu0 0.0
      %676 = vmatprep.subr.mxu0 0.0
      %677 = vmatpush1.msra.mxu0 0.0
      %678 = vmatprep.subr.mxu0 0.0
      %679 = vmatpush1.msra.mxu0 0.0
      %680 = vmatprep.subr.mxu0 0.0
      %681 = vmatpush1.msra.mxu0 0.0
      %682 = vmatprep.subr.mxu0 0.0
      %683 = vmatpush1.msra.mxu0 0.0
      %684 = vmatprep.subr.mxu0 0.0
      %685 = vmatpush1.msra.mxu0 0.0
      %686 = vmatprep.subr.mxu0 0.0
      %687 = vmatpush1.msra.mxu0 0.0
      %688 = vmatprep.subr.mxu0 0.0
      %689 = vmatpush1.msra.mxu0 0.0
      %690 = vmatprep.subr.mxu0 0.0
      %691 = vmatpush1.msra.mxu0 0.0
      %692 = vmatprep.subr.mxu0 0.0
      %693 = vmatpush1.msra.mxu0 0.0
      %694 = vmatprep.subr.mxu0 0.0
      %695 = vmatpush1.msra.mxu0 0.0
      %696 = vmatprep.subr.mxu0 0.0
      %697 = vmatpush1.msra.mxu0 0.0
      %698 = vmatprep.mubr.f32.mxu0 0.0
      %699 = vmatmul.mubr.f32.gmra.mrb[0].mxu0 %v632
      %v700 = vpop.f32.mrb[0].mxu0
      %v701 = vadd.f32 0.0, %v700
      %v702 = vpop.f32.mrb[0].mxu0
      %703 = vdwg.mxu0
      %v704 = vld [vmem:[%s5] sm:$0xff]
      %v706 = vsel %vm630, %v704, 0
      %708 = vmatprep.subr.mxu0 0.0
      %709 = vmatpush1.msra.mxu0 %v304
      %710 = vmatprep.subr.mxu0 0.0
      %711 = vmatpush1.msra.mxu0 %v305
      %712 = vmatprep.subr.mxu0 0.0
      %713 = vmatpush1.msra.mxu0 0.0
      %714 = vmatprep.subr.mxu0 0.0
      %715 = vmatpush1.msra.mxu0 0.0
      %716 = vmatprep.subr.mxu0 0.0
      %717 = vmatpush1.msra.mxu0 0.0
      %718 = vmatprep.subr.mxu0 0.0
      %719 = vmatpush1.msra.mxu0 0.0
      %720 = vmatprep.subr.mxu0 0.0
      %721 = vmatpush1.msra.mxu0 0.0
      %722 = vmatprep.subr.mxu0 0.0
      %723 = vmatpush1.msra.mxu0 0.0
      %724 = vmatprep.subr.mxu0 0.0
      %725 = vmatpush1.msra.mxu0 0.0
      %726 = vmatprep.subr.mxu0 0.0
      %727 = vmatpush1.msra.mxu0 0.0
      %728 = vmatprep.subr.mxu0 0.0
      %729 = vmatpush1.msra.mxu0 0.0
      %730 = vmatprep.subr.mxu0 0.0
      %731 = vmatpush1.msra.mxu0 0.0
      %732 = vmatprep.subr.mxu0 0.0
      %733 = vmatpush1.msra.mxu0 0.0
      %734 = vmatprep.subr.mxu0 0.0
      %735 = vmatpush1.msra.mxu0 0.0
      %736 = vmatprep.subr.mxu0 0.0
      %737 = vmatpush1.msra.mxu0 0.0
      %738 = vmatprep.subr.mxu0 0.0
      %739 = vmatpush1.msra.mxu0 0.0
      %740 = vmatprep.subr.mxu0 0.0
      %741 = vmatpush1.msra.mxu0 0.0
      %742 = vmatprep.subr.mxu0 0.0
      %743 = vmatpush1.msra.mxu0 0.0
      %744 = vmatprep.subr.mxu0 0.0
      %745 = vmatpush1.msra.mxu0 0.0
      %746 = vmatprep.subr.mxu0 0.0
      %747 = vmatpush1.msra.mxu0 0.0
      %748 = vmatprep.subr.mxu0 0.0
      %749 = vmatpush1.msra.mxu0 0.0
      %750 = vmatprep.subr.mxu0 0.0
      %751 = vmatpush1.msra.mxu0 0.0
      %752 = vmatprep.subr.mxu0 0.0
      %753 = vmatpush1.msra.mxu0 0.0
      %754 = vmatprep.subr.mxu0 0.0
      %755 = vmatpush1.msra.mxu0 0.0
      %756 = vmatprep.subr.mxu0 0.0
      %757 = vmatpush1.msra.mxu0 0.0
      %758 = vmatprep.subr.mxu0 0.0
      %759 = vmatpush1.msra.mxu0 0.0
      %760 = vmatprep.subr.mxu0 0.0
      %761 = vmatpush1.msra.mxu0 0.0
      %762 = vmatprep.subr.mxu0 0.0
      %763 = vmatpush1.msra.mxu0 0.0
      %764 = vmatprep.subr.mxu0 0.0
      %765 = vmatpush1.msra.mxu0 0.0
      %766 = vmatprep.subr.mxu0 0.0
      %767 = vmatpush1.msra.mxu0 0.0
      %768 = vmatprep.subr.mxu0 0.0
      %769 = vmatpush1.msra.mxu0 0.0
      %770 = vmatprep.subr.mxu0 0.0
      %771 = vmatpush1.msra.mxu0 0.0
      %772 = vmatprep.mubr.f32.mxu0 0.0
      %773 = vmatmul.mubr.f32.gmra.mrb[0].mxu0 %v706
      %v774 = vpop.f32.mrb[0].mxu0
      %v775 = vadd.f32 0.0, %v774
      %v776 = vpop.f32.mrb[0].mxu0
      %777 = vdwg.mxu0
      %v778 = vmax.f32 %v701, %v775
      %v779 = vld [vmem:[%s6] sm:$0xff]
      %v780 = vld [vmem:[%s6 + $0x8] sm:$0xff]
      %v781 = vld [vmem:[%s6 + $0x10] sm:$0xff]
      %v782 = vld [vmem:[%s6 + $0x18] sm:$0xff]
      %v783 = vld [vmem:[%s6 + $0x20] sm:$0xff]
      %v784 = vld [vmem:[%s6 + $0x28] sm:$0xff]
      %v785 = vld [vmem:[%s6 + $0x30] sm:$0xff]
      %v786 = vld [vmem:[%s6 + $0x38] sm:$0xff]
      %v788 = vsel %vm321, %v778, 0
      %790 = vmatprep.subr.mxu0 0.0
      %791 = vmatpush1.msra.mxu0 %v779
      %792 = vmatprep.subr.mxu0 0.0
      %793 = vmatpush1.msra.mxu0 %v780
      %794 = vmatprep.subr.mxu0 0.0
      %795 = vmatpush1.msra.mxu0 %v781
      %796 = vmatprep.subr.mxu0 0.0
      %797 = vmatpush1.msra.mxu0 %v782
      %798 = vmatprep.subr.mxu0 0.0
      %799 = vmatpush1.msra.mxu0 %v783
      %800 = vmatprep.subr.mxu0 0.0
      %801 = vmatpush1.msra.mxu0 %v784
      %802 = vmatprep.subr.mxu0 0.0
      %803 = vmatpush1.msra.mxu0 %v785
      %804 = vmatprep.subr.mxu0 0.0
      %805 = vmatpush1.msra.mxu0 %v786
      %806 = vmatprep.subr.mxu0 0.0
      %807 = vmatpush1.msra.mxu0 0.0
      %808 = vmatprep.subr.mxu0 0.0
      %809 = vmatpush1.msra.mxu0 0.0
      %810 = vmatprep.subr.mxu0 0.0
      %811 = vmatpush1.msra.mxu0 0.0
      %812 = vmatprep.subr.mxu0 0.0
      %813 = vmatpush1.msra.mxu0 0.0
      %814 = vmatprep.subr.mxu0 0.0
      %815 = vmatpush1.msra.mxu0 0.0
      %816 = vmatprep.subr.mxu0 0.0
      %817 = vmatpush1.msra.mxu0 0.0
      %818 = vmatprep.subr.mxu0 0.0
      %819 = vmatpush1.msra.mxu0 0.0
      %820 = vmatprep.subr.mxu0 0.0
      %821 = vmatpush1.msra.mxu0 0.0
      %822 = vmatprep.subr.mxu0 0.0
      %823 = vmatpush1.msra.mxu0 0.0
      %824 = vmatprep.subr.mxu0 0.0
      %825 = vmatpush1.msra.mxu0 0.0
      %826 = vmatprep.subr.mxu0 0.0
      %827 = vmatpush1.msra.mxu0 0.0
      %828 = vmatprep.subr.mxu0 0.0
      %829 = vmatpush1.msra.mxu0 0.0
      %830 = vmatprep.subr.mxu0 0.0
      %831 = vmatpush1.msra.mxu0 0.0
      %832 = vmatprep.subr.mxu0 0.0
      %833 = vmatpush1.msra.mxu0 0.0
      %834 = vmatprep.subr.mxu0 0.0
      %835 = vmatpush1.msra.mxu0 0.0
      %836 = vmatprep.subr.mxu0 0.0
      %837 = vmatpush1.msra.mxu0 0.0
      %838 = vmatprep.subr.mxu0 0.0
      %839 = vmatpush1.msra.mxu0 0.0
      %840 = vmatprep.subr.mxu0 0.0
      %841 = vmatpush1.msra.mxu0 0.0
      %842 = vmatprep.subr.mxu0 0.0
      %843 = vmatpush1.msra.mxu0 0.0
      %844 = vmatprep.subr.mxu0 0.0
      %845 = vmatpush1.msra.mxu0 0.0
      %846 = vmatprep.subr.mxu0 0.0
      %847 = vmatpush1.msra.mxu0 0.0
      %848 = vmatprep.subr.mxu0 0.0
      %849 = vmatpush1.msra.mxu0 0.0
      %850 = vmatprep.subr.mxu0 0.0
      %851 = vmatpush1.msra.mxu0 0.0
      %852 = vmatprep.subr.mxu0 0.0
      %853 = vmatpush1.msra.mxu0 0.0
      %854 = vmatprep.mubr.f32.mxu0 0.0
      %855 = vmatmul.mubr.f32.gmra.mrb[0].mxu0 %v788
      %v856 = vpop.f32.mrb[0].mxu0
      %v857 = vadd.f32 0.0, %v856
      %v858 = vpop.f32.mrb[0].mxu0
      %859 = vdwg.mxu0
      %v860 = vld [vmem:[%s7] sm:$0xff]
      %v861 = vld [vmem:[%s7 + $0x8] sm:$0xff]
      %v862 = vld [vmem:[%s7 + $0x10] sm:$0xff]
      %v863 = vld [vmem:[%s7 + $0x18] sm:$0xff]
      %v864 = vld [vmem:[%s7 + $0x20] sm:$0xff]
      %v865 = vld [vmem:[%s7 + $0x28] sm:$0xff]
      %v866 = vld [vmem:[%s7 + $0x30] sm:$0xff]
      %v867 = vld [vmem:[%s7 + $0x38] sm:$0xff]
      %868 = vmatprep.subr.mxu0 0.0
      %869 = vmatpush1.msra.mxu0 %v860
      %870 = vmatprep.subr.mxu0 0.0
      %871 = vmatpush1.msra.mxu0 %v861
      %872 = vmatprep.subr.mxu0 0.0
      %873 = vmatpush1.msra.mxu0 %v862
      %874 = vmatprep.subr.mxu0 0.0
      %875 = vmatpush1.msra.mxu0 %v863
      %876 = vmatprep.subr.mxu0 0.0
      %877 = vmatpush1.msra.mxu0 %v864
      %878 = vmatprep.subr.mxu0 0.0
      %879 = vmatpush1.msra.mxu0 %v865
      %880 = vmatprep.subr.mxu0 0.0
      %881 = vmatpush1.msra.mxu0 %v866
      %882 = vmatprep.subr.mxu0 0.0
      %883 = vmatpush1.msra.mxu0 %v867
      %884 = vmatprep.subr.mxu0 0.0
      %885 = vmatpush1.msra.mxu0 0.0
      %886 = vmatprep.subr.mxu0 0.0
      %887 = vmatpush1.msra.mxu0 0.0
      %888 = vmatprep.subr.mxu0 0.0
      %889 = vmatpush1.msra.mxu0 0.0
      %890 = vmatprep.subr.mxu0 0.0
      %891 = vmatpush1.msra.mxu0 0.0
      %892 = vmatprep.subr.mxu0 0.0
      %893 = vmatpush1.msra.mxu0 0.0
      %894 = vmatprep.subr.mxu0 0.0
      %895 = vmatpush1.msra.mxu0 0.0
      %896 = vmatprep.subr.mxu0 0.0
      %897 = vmatpush1.msra.mxu0 0.0
      %898 = vmatprep.subr.mxu0 0.0
      %899 = vmatpush1.msra.mxu0 0.0
      %900 = vmatprep.subr.mxu0 0.0
      %901 = vmatpush1.msra.mxu0 0.0
      %902 = vmatprep.subr.mxu0 0.0
      %903 = vmatpush1.msra.mxu0 0.0
      %904 = vmatprep.subr.mxu0 0.0
      %905 = vmatpush1.msra.mxu0 0.0
      %906 = vmatprep.subr.mxu0 0.0
      %907 = vmatpush1.msra.mxu0 0.0
      %908 = vmatprep.subr.mxu0 0.0
      %909 = vmatpush1.msra.mxu0 0.0
      %910 = vmatprep.subr.mxu0 0.0
      %911 = vmatpush1.msra.mxu0 0.0
      %912 = vmatprep.subr.mxu0 0.0
      %913 = vmatpush1.msra.mxu0 0.0
      %914 = vmatprep.subr.mxu0 0.0
      %915 = vmatpush1.msra.mxu0 0.0
      %916 = vmatprep.subr.mxu0 0.0
      %917 = vmatpush1.msra.mxu0 0.0
      %918 = vmatprep.subr.mxu0 0.0
      %919 = vmatpush1.msra.mxu0 0.0
      %920 = vmatprep.subr.mxu0 0.0
      %921 = vmatpush1.msra.mxu0 0.0
      %922 = vmatprep.subr.mxu0 0.0
      %923 = vmatpush1.msra.mxu0 0.0
      %924 = vmatprep.subr.mxu0 0.0
      %925 = vmatpush1.msra.mxu0 0.0
      %926 = vmatprep.subr.mxu0 0.0
      %927 = vmatpush1.msra.mxu0 0.0
      %928 = vmatprep.subr.mxu0 0.0
      %929 = vmatpush1.msra.mxu0 0.0
      %930 = vmatprep.subr.mxu0 0.0
      %931 = vmatpush1.msra.mxu0 0.0
      %932 = vmatprep.mubr.f32.mxu0 0.0
      %933 = vmatmul.mubr.f32.gmra.mrb[0].mxu0 %v788
      %v934 = vpop.f32.mrb[0].mxu0
      %v935 = vadd.f32 0.0, %v934
      %v936 = vpop.f32.mrb[0].mxu0
      %937 = vdwg.mxu0
      %v938 = vmax.f32 %v857, %v935
      %v939 = vlaneseq
      %v940 = vshrl.u32 %v939, 7
      %v941 = vsub.s32 0, %v940
      %v942 = vrot.slane %v551, %v941
      %v943 = vmul.f32 %v938, %v942
      %v944 = vlaneseq
      %v945 = vshrl.u32 %v944, 7
      %v946 = vsub.s32 0, %v945
      %v947 = vrot.slane %v626, %v946
      %v948 = vadd.f32 %v943, %v947
      %v949 = vmax.f32 %v948, 0.0
      %vm950 = vcmask 261120
      %951 = vst.msk [vmem:[%s303] sm:$0xff] %vm950, %v949
      %p952 = scmp.lt.s32.totalorder %s19, 1
      %s953 = scalar_select %p952, %s19, 1
      %s954 = smul.addr %s953, 8
      %s955 = scalar_lea.vmem %s8, %s954
      // Predicated region
      $region53: #{convae_forward.9} parent=51 // pred_check
        %p956 = pneg %p210
      $region54: #{convae_forward.9} parent=51 // pred_check_branch
        %958 = sbr.rel (%p956) target = $region56
      $region55: #{convae_forward.9} parent=51 // pred_region
        _
      $region56: #{convae_forward.9} parent=51 // pred_fallthru
        _
    $region52: #{convae_forward.9} parent=5 // pred_fallthru
      _
    %p959 = scmp.le.s32.totalorder 2, %s14
    // Predicated region
    $region57: #{convae_forward.9} parent=5 // pred_check
      %p960 = pneg %p959
    $region58: #{convae_forward.9} parent=5 // pred_check_branch
      %962 = sbr.rel (%p960) target = $region60
    $region59: #{convae_forward.9} parent=5 // pred_region
      %s963 = ssub.s32 %s14, 2
      // Predicated region
      $region61: #{convae_forward.9} parent=59 // pred_check
        %p964 = pneg %p216
      $region62: #{convae_forward.9} parent=59 // pred_check_branch
        %966 = sbr.rel (%p964) target = $region64
      $region63: #{convae_forward.9} parent=59 // pred_region
        %p967 = scmp.lt.s32.totalorder %s20, 1
        %s968 = scalar_select %p967, %s20, 1
        %s969 = smul.addr %s968, 8
        %s970 = scalar_lea.vmem %s8, %s969
      $region64: #{convae_forward.9} parent=59 // pred_fallthru
        _
    $region60: #{convae_forward.9} parent=5 // pred_fallthru
      _
  $region6: #{convae_forward.9} parent=0 // loop_footer
    %s18 = sadd.s32 1, %s14
  $region7: #{convae_forward.9} parent=0 // loop_footer_branch
    %13 = sbr.rel target = $region3
  $region8: #{convae_forward.9} parent=0 // loop_exit
    _

// kernel: convae_forward.11
$region0: #{convae_forward.11}
  #allocation0 [shape = 'u32[]', space=smem, size = 0x4, offset = 0x4, fixed_abs, tag = 'smem constant byte address 0x4 - core index']
  #allocation1 [shape = 'u32[144,128]{1,0:T(1,128)}', space=vmem, size = 0x12000, scoped, tag = 'internal scratch']
  %s0 = inlined_call_operand.vmem [shape: f32[2,8,64], index: 0, kind: input, shape index: {}]
  %s1 = inlined_call_operand.vmem [shape: f32[2,2,64], index: 1, kind: input, shape index: {}]
  %s2 = inlined_call_operand.vmem [shape: f32[64,8], index: 2, kind: input, shape index: {}]
  %s3 = inlined_call_operand.vmem [shape: f32[8,32], index: 3, kind: input, shape index: {}]
  %s4 = inlined_call_operand.vmem [shape: f32[4,8], index: 4, kind: input, shape index: {}]
  %s5 = inlined_call_operand.vmem [shape: f32[4,8], index: 5, kind: input, shape index: {}]
  %s6 = inlined_call_operand.vmem [shape: f32[64,32], index: 6, kind: input, shape index: {}]
  %s7 = inlined_call_operand.vmem [shape: f32[64,32], index: 7, kind: input, shape index: {}]
  %s8 = inlined_call_operand.vmem [shape: f32[2,4,32], index: 8, kind: output, shape index: {}]
  %s9 = sld [smem:[#allocation0]]
  $region65: #{convae_forward.11} parent=0
    _
  %s11 = ssub.s32 1, %s9
  %s12 = scalar_select 0, %s11, %s9
  loop: start=0, step=1, limit=4
  $region2: #{convae_forward.11} parent=0 // loop_pre_header
    _
  $region3: #{convae_forward.11} parent=0 // loop_header
    %s14 = sphi 0, %s18
    %p15 = scmp.ge.s32.totalorder %s14, 4
    %s24 = sphi 0, %s26
    %s27 = sphi 0, %s24
    %s28 = sphi 0, %s27
    %s44 = sphi 0, %s28
    %s48 = sphi 0, %s48
    %s50 = sphi 0, %s48
    %s51 = sphi 0, %s50
    %s65 = sphi 0, %s51
    %s69 = sphi 0, %s69
    %s71 = sphi 0, %s69
    %s72 = sphi 0, %s71
    %s86 = sphi 0, %s72
    %s90 = sphi 0, %s90
    %s92 = sphi 0, %s90
    %s93 = sphi 0, %s92
    %s107 = sphi 0, %s93
    %s111 = sphi 0, %s111
    %s113 = sphi 0, %s111
    %s114 = sphi 0, %s113
    %s128 = sphi 0, %s114
    %s132 = sphi 0, %s132
    %s134 = sphi 0, %s132
    %s135 = sphi 0, %s134
    %s149 = sphi 0, %s135
    %s153 = sphi 0, %s153
    %s155 = sphi 0, %s153
    %s156 = sphi 0, %s155
    %s170 = sphi 0, %s156
    %s174 = sphi 0, %s174
    %s176 = sphi 0, %s174
    %s177 = sphi 0, %s176
    %s191 = sphi 0, %s177
    %s197 = sphi 0, %s199
    %s200 = sphi 0, %s197
    %s201 = sphi 0, %s200
    %s217 = sphi 0, %s201
  $region4: #{convae_forward.11} parent=0 // loop_header_branch
    %17 = sbr.rel (%p15) target = $region8
  $region5: #{convae_forward.11} parent=0 // loop_body
    %s19 = ssub.s32 %s14, 1
    %s20 = ssub.s32 %s14, 2
    %s21 = sadd.s32 %s14, 1
    %s22 = ssub.s32 %s14, %s21
    %p23 = scmp.eq.s32.totalorder %s22, 0
    %s25 = sadd.s32 %s24, 1
    %s26 = scalar_select %p23, %s24, %s25
    %p29 = pneg %p23
    %p30 = scmp.eq.s32.totalorder %s14, 1
    %p31 = por %p29, %p30
    %p32 = scmp.ne.s32.totalorder %s24, %s27
    %p33 = scmp.eq.s32.totalorder %s14, 0
    %p34 = por %p32, %p33
    %p35 = scmp.ne.s32.totalorder %s24, %s27
    %p36 = scmp.eq.s32.totalorder %s19, 1
    %p37 = por %p35, %p36
    %p38 = scmp.ne.s32.totalorder %s27, %s28
    %p39 = scmp.eq.s32.totalorder %s19, 0
    %p40 = por %p38, %p39
    %p41 = scmp.ne.s32.totalorder %s27, %s28
    %p42 = scmp.eq.s32.totalorder %s20, 1
    %p43 = por %p41, %p42
    %p45 = scmp.ne.s32.totalorder %s28, %s44
    %p46 = scmp.eq.s32.totalorder %s20, 0
    %p47 = por %p45, %p46
    %s49 = sadd.s32 %s48, 1
    %p52 = scmp.eq.s32.totalorder %s14, 1
    %p53 = scmp.ne.s32.totalorder %s48, %s50
    %p54 = scmp.eq.s32.totalorder %s14, 0
    %p55 = por %p53, %p54
    %p56 = scmp.ne.s32.totalorder %s48, %s50
    %p57 = scmp.eq.s32.totalorder %s19, 1
    %p58 = por %p56, %p57
    %p59 = scmp.ne.s32.totalorder %s50, %s51
    %p60 = scmp.eq.s32.totalorder %s19, 0
    %p61 = por %p59, %p60
    %p62 = scmp.ne.s32.totalorder %s50, %s51
    %p63 = scmp.eq.s32.totalorder %s20, 1
    %p64 = por %p62, %p63
    %p66 = scmp.ne.s32.totalorder %s51, %s65
    %p67 = scmp.eq.s32.totalorder %s20, 0
    %p68 = por %p66, %p67
    %s70 = sadd.s32 %s69, 1
    %p73 = scmp.eq.s32.totalorder %s14, 1
    %p74 = scmp.ne.s32.totalorder %s69, %s71
    %p75 = scmp.eq.s32.totalorder %s14, 0
    %p76 = por %p74, %p75
    %p77 = scmp.ne.s32.totalorder %s69, %s71
    %p78 = scmp.eq.s32.totalorder %s19, 1
    %p79 = por %p77, %p78
    %p80 = scmp.ne.s32.totalorder %s71, %s72
    %p81 = scmp.eq.s32.totalorder %s19, 0
    %p82 = por %p80, %p81
    %p83 = scmp.ne.s32.totalorder %s71, %s72
    %p84 = scmp.eq.s32.totalorder %s20, 1
    %p85 = por %p83, %p84
    %p87 = scmp.ne.s32.totalorder %s72, %s86
    %p88 = scmp.eq.s32.totalorder %s20, 0
    %p89 = por %p87, %p88
    %s91 = sadd.s32 %s90, 1
    %p94 = scmp.eq.s32.totalorder %s14, 1
    %p95 = scmp.ne.s32.totalorder %s90, %s92
    %p96 = scmp.eq.s32.totalorder %s14, 0
    %p97 = por %p95, %p96
    %p98 = scmp.ne.s32.totalorder %s90, %s92
    %p99 = scmp.eq.s32.totalorder %s19, 1
    %p100 = por %p98, %p99
    %p101 = scmp.ne.s32.totalorder %s92, %s93
    %p102 = scmp.eq.s32.totalorder %s19, 0
    %p103 = por %p101, %p102
    %p104 = scmp.ne.s32.totalorder %s92, %s93
    %p105 = scmp.eq.s32.totalorder %s20, 1
    %p106 = por %p104, %p105
    %p108 = scmp.ne.s32.totalorder %s93, %s107
    %p109 = scmp.eq.s32.totalorder %s20, 0
    %p110 = por %p108, %p109
    %s112 = sadd.s32 %s111, 1
    %p115 = scmp.eq.s32.totalorder %s14, 1
    %p116 = scmp.ne.s32.totalorder %s111, %s113
    %p117 = scmp.eq.s32.totalorder %s14, 0
    %p118 = por %p116, %p117
    %p119 = scmp.ne.s32.totalorder %s111, %s113
    %p120 = scmp.eq.s32.totalorder %s19, 1
    %p121 = por %p119, %p120
    %p122 = scmp.ne.s32.totalorder %s113, %s114
    %p123 = scmp.eq.s32.totalorder %s19, 0
    %p124 = por %p122, %p123
    %p125 = scmp.ne.s32.totalorder %s113, %s114
    %p126 = scmp.eq.s32.totalorder %s20, 1
    %p127 = por %p125, %p126
    %p129 = scmp.ne.s32.totalorder %s114, %s128
    %p130 = scmp.eq.s32.totalorder %s20, 0
    %p131 = por %p129, %p130
    %s133 = sadd.s32 %s132, 1
    %p136 = scmp.eq.s32.totalorder %s14, 1
    %p137 = scmp.ne.s32.totalorder %s132, %s134
    %p138 = scmp.eq.s32.totalorder %s14, 0
    %p139 = por %p137, %p138
    %p140 = scmp.ne.s32.totalorder %s132, %s134
    %p141 = scmp.eq.s32.totalorder %s19, 1
    %p142 = por %p140, %p141
    %p143 = scmp.ne.s32.totalorder %s134, %s135
    %p144 = scmp.eq.s32.totalorder %s19, 0
    %p145 = por %p143, %p144
    %p146 = scmp.ne.s32.totalorder %s134, %s135
    %p147 = scmp.eq.s32.totalorder %s20, 1
    %p148 = por %p146, %p147
    %p150 = scmp.ne.s32.totalorder %s135, %s149
    %p151 = scmp.eq.s32.totalorder %s20, 0
    %p152 = por %p150, %p151
    %s154 = sadd.s32 %s153, 1
    %p157 = scmp.eq.s32.totalorder %s14, 1
    %p158 = scmp.ne.s32.totalorder %s153, %s155
    %p159 = scmp.eq.s32.totalorder %s14, 0
    %p160 = por %p158, %p159
    %p161 = scmp.ne.s32.totalorder %s153, %s155
    %p162 = scmp.eq.s32.totalorder %s19, 1
    %p163 = por %p161, %p162
    %p164 = scmp.ne.s32.totalorder %s155, %s156
    %p165 = scmp.eq.s32.totalorder %s19, 0
    %p166 = por %p164, %p165
    %p167 = scmp.ne.s32.totalorder %s155, %s156
    %p168 = scmp.eq.s32.totalorder %s20, 1
    %p169 = por %p167, %p168
    %p171 = scmp.ne.s32.totalorder %s156, %s170
    %p172 = scmp.eq.s32.totalorder %s20, 0
    %p173 = por %p171, %p172
    %s175 = sadd.s32 %s174, 1
    %p178 = scmp.eq.s32.totalorder %s14, 1
    %p179 = scmp.ne.s32.totalorder %s174, %s176
    %p180 = scmp.eq.s32.totalorder %s14, 0
    %p181 = por %p179, %p180
    %p182 = scmp.ne.s32.totalorder %s174, %s176
    %p183 = scmp.eq.s32.totalorder %s19, 1
    %p184 = por %p182, %p183
    %p185 = scmp.ne.s32.totalorder %s176, %s177
    %p186 = scmp.eq.s32.totalorder %s19, 0
    %p187 = por %p185, %p186
    %p188 = scmp.ne.s32.totalorder %s176, %s177
    %p189 = scmp.eq.s32.totalorder %s20, 1
    %p190 = por %p188, %p189
    %p192 = scmp.ne.s32.totalorder %s177, %s191
    %p193 = scmp.eq.s32.totalorder %s20, 0
    %p194 = por %p192, %p193
    %s195 = ssub.s32 %s14, %s21
    %p196 = scmp.eq.s32.totalorder %s195, 0
    %s198 = sadd.s32 %s197, 1
    %s199 = scalar_select %p196, %s197, %s198
    %p202 = pneg %p196
    %p203 = scmp.eq.s32.totalorder %s14, 1
    %p204 = por %p202, %p203
    %p205 = scmp.ne.s32.totalorder %s197, %s200
    %p206 = scmp.eq.s32.totalorder %s14, 0
    %p207 = por %p205, %p206
    %p208 = scmp.ne.s32.totalorder %s197, %s200
    %p209 = scmp.eq.s32.totalorder %s19, 1
    %p210 = por %p208, %p209
    %p211 = scmp.ne.s32.totalorder %s200, %s201
    %p212 = scmp.eq.s32.totalorder %s19, 0
    %p213 = por %p211, %p212
    %p214 = scmp.ne.s32.totalorder %s200, %s201
    %p215 = scmp.eq.s32.totalorder %s20, 1
    %p216 = por %p214, %p215
    %p218 = scmp.ne.s32.totalorder %s201, %s217
    %p219 = scmp.eq.s32.totalorder %s20, 0
    %p220 = por %p218, %p219
    %p221 = scmp.le.s32.totalorder 1, %s14
    %p222 = scmp.lt.s32.totalorder %s14, 3
    %p223 = pnand %p221, %p222
    %p224 = pneg %p223
    // Predicated region
    $region9: #{convae_forward.11} parent=5 // pred_check
      _
    $region10: #{convae_forward.11} parent=5 // pred_check_branch
      %226 = sbr.rel (%p223) target = $region12
    $region11: #{convae_forward.11} parent=5 // pred_region
      %s227 = ssub.s32 %s14, 1
      // Predicated region
      $region13: #{convae_forward.11} parent=11 // pred_check
        %p228 = pneg %p61
      $region14: #{convae_forward.11} parent=11 // pred_check_branch
        %230 = sbr.rel (%p228) target = $region16
      $region15: #{convae_forward.11} parent=11 // pred_region
        _
      $region16: #{convae_forward.11} parent=11 // pred_fallthru
        _
      // Predicated region
      $region17: #{convae_forward.11} parent=11 // pred_check
        %p231 = pneg %p82
      $region18: #{convae_forward.11} parent=11 // pred_check_branch
        %233 = sbr.rel (%p231) target = $region20
      $region19: #{convae_forward.11} parent=11 // pred_region
        _
      $region20: #{convae_forward.11} parent=11 // pred_fallthru
        _
      // Predicated region
      $region21: #{convae_forward.11} parent=11 // pred_check
        %p234 = pneg %p103
      $region22: #{convae_forward.11} parent=11 // pred_check_branch
        %236 = sbr.rel (%p234) target = $region24
      $region23: #{convae_forward.11} parent=11 // pred_region
        _
      $region24: #{convae_forward.11} parent=11 // pred_fallthru
        _
      // Predicated region
      $region25: #{convae_forward.11} parent=11 // pred_check
        %p237 = pneg %p124
      $region26: #{convae_forward.11} parent=11 // pred_check_branch
        %239 = sbr.rel (%p237) target = $region28
      $region27: #{convae_forward.11} parent=11 // pred_region
        _
      $region28: #{convae_forward.11} parent=11 // pred_fallthru
        _
      // Predicated region
      $region29: #{convae_forward.11} parent=11 // pred_check
        %p240 = pneg %p145
      $region30: #{convae_forward.11} parent=11 // pred_check_branch
        %242 = sbr.rel (%p240) target = $region32
      $region31: #{convae_forward.11} parent=11 // pred_region
        _
      $region32: #{convae_forward.11} parent=11 // pred_fallthru
        _
      // Predicated region
      $region33: #{convae_forward.11} parent=11 // pred_check
        %p243 = pneg %p166
      $region34: #{convae_forward.11} parent=11 // pred_check_branch
        %245 = sbr.rel (%p243) target = $region36
      $region35: #{convae_forward.11} parent=11 // pred_region
        _
      $region36: #{convae_forward.11} parent=11 // pred_fallthru
        _
      // Predicated region
      $region37: #{convae_forward.11} parent=11 // pred_check
        %p246 = pneg %p187
      $region38: #{convae_forward.11} parent=11 // pred_check_branch
        %248 = sbr.rel (%p246) target = $region40
      $region39: #{convae_forward.11} parent=11 // pred_region
        _
      $region40: #{convae_forward.11} parent=11 // pred_fallthru
        _
    $region12: #{convae_forward.11} parent=5 // pred_fallthru
      _
    %p249 = scmp.lt.s32.totalorder %s14, 2
    // Predicated region
    $region41: #{convae_forward.11} parent=5 // pred_check
      %p250 = pneg %p249
    $region42: #{convae_forward.11} parent=5 // pred_check_branch
      %252 = sbr.rel (%p250) target = $region44
    $region43: #{convae_forward.11} parent=5 // pred_region
      // Predicated region
      $region45: #{convae_forward.11} parent=43 // pred_check
        %p253 = pneg %p34
      $region46: #{convae_forward.11} parent=43 // pred_check_branch
        %255 = sbr.rel (%p253) target = $region48
      $region47: #{convae_forward.11} parent=43 // pred_region
        %p256 = scmp.lt.s32.totalorder %s14, 1
        %s257 = scalar_select %p256, %s14, 1
        %s258 = smul.addr %s257, 8
        %s259 = scalar_lea.vmem %s0, %s258
      $region48: #{convae_forward.11} parent=43 // pred_fallthru
        _
    $region44: #{convae_forward.11} parent=5 // pred_fallthru
      _
    %p260 = scmp.le.s32.totalorder 1, %s14
    %p261 = scmp.lt.s32.totalorder %s14, 3
    %p262 = pnand %p260, %p261
    %p263 = pneg %p262
    // Predicated region
    $region49: #{convae_forward.11} parent=5 // pred_check
      _
    $region50: #{convae_forward.11} parent=5 // pred_check_branch
      %265 = sbr.rel (%p262) target = $region52
    $region51: #{convae_forward.11} parent=5 // pred_region
      %s266 = ssub.s32 %s14, 1
      %p267 = scmp.lt.s32.totalorder %s19, 1
      %s268 = scalar_select %p267, %s19, 1
      %s269 = smul.addr %s268, 8
      %s270 = scalar_lea.vmem %s0, %s269
      %p271 = pneg %p40
      %p272 = pneg %p37
      %p273 = pneg %p61
      %p274 = pneg %p58
      %p275 = pneg %p82
      %p276 = pneg %p79
      %p277 = pneg %p103
      %p278 = pneg %p100
      %p279 = pneg %p124
      %p280 = pneg %p121
      %p281 = pneg %p145
      %p282 = pneg %p142
      %p283 = pneg %p166
      %p284 = pneg %p163
      %p285 = pneg %p187
      %p286 = pneg %p184
      %p287 = pneg %p213
      %p288 = pneg %p210
      %p289 = scmp.lt.s32.totalorder %s19, 1
      %s290 = scalar_select %p289, %s19, 1
      %s291 = smul.addr %s290, 4
      %s292 = scalar_lea.vmem %s8, %s291
      %p293 = scmp.lt.s32.totalorder %s19, 1
      %s294 = scalar_select %p293, %s19, 1
      %s295 = smul.addr %s294, 8
      %s296 = scalar_lea.vmem %s0, %s295
      %p297 = scmp.lt.s32.totalorder %s19, 1
      %s298 = scalar_select %p297, %s19, 1
      %s299 = smul.addr %s298, 4
      %s300 = scalar_lea.vmem %s8, %s299
      %v301 = vld [vmem:[%s296] sm:$0xff]
      %v302 = vld [vmem:[%s1] sm:$0x3]
      %v303 = vld [vmem:[%s1 + $0x2] sm:$0x3]
      %v304 = vld [vmem:[%s2] sm:$0xff]
      %v305 = vld [vmem:[%s2 + $0x8] sm:$0xff]
      %v306 = vld [vmem:[%s2 + $0x10] sm:$0xff]
      %v307 = vld [vmem:[%s2 + $0x18] sm:$0xff]
      %v308 = vld [vmem:[%s2 + $0x20] sm:$0xff]
      %v309 = vld [vmem:[%s2 + $0x28] sm:$0xff]
      %v310 = vld [vmem:[%s2 + $0x30] sm:$0xff]
      %v311 = vld [vmem:[%s2 + $0x38] sm:$0xff]
      %v312 = vld [vmem:[%s3] sm:$0xff]
      %vm313 = vcmask 517120
      %v314 = vsel %vm313, %v302, 0.0
      %v315 = vsel %vm313, %v303, 0.0
      %v316 = vadd.f32 %v314, %v315
      %vm317 = vcmask 523264
      %v319 = vsel %vm317, %v316, 0
      %321 = vmatprep.subr.mxu0 0.0
      %322 = vmatpush1.msra.mxu0 %v304
      %323 = vmatprep.subr.mxu0 0.0
      %324 = vmatpush1.msra.mxu0 %v305
      %325 = vmatprep.subr.mxu0 0.0
      %326 = vmatpush1.msra.mxu0 %v306
      %327 = vmatprep.subr.mxu0 0.0
      %328 = vmatpush1.msra.mxu0 %v307
      %329 = vmatprep.subr.mxu0 0.0
      %330 = vmatpush1.msra.mxu0 %v308
      %331 = vmatprep.subr.mxu0 0.0
      %332 = vmatpush1.msra.mxu0 %v309
      %333 = vmatprep.subr.mxu0 0.0
      %334 = vmatpush1.msra.mxu0 %v310
      %335 = vmatprep.subr.mxu0 0.0
      %336 = vmatpush1.msra.mxu0 %v311
      %337 = vmatprep.subr.mxu0 0.0
      %338 = vmatpush1.msra.mxu0 0.0
      %339 = vmatprep.subr.mxu0 0.0
      %340 = vmatpush1.msra.mxu0 0.0
      %341 = vmatprep.subr.mxu0 0.0
      %342 = vmatpush1.msra.mxu0 0.0
      %343 = vmatprep.subr.mxu0 0.0
      %344 = vmatpush1.msra.mxu0 0.0
      %345 = vmatprep.subr.mxu0 0.0
      %346 = vmatpush1.msra.mxu0 0.0
      %347 = vmatprep.subr.mxu0 0.0
      %348 = vmatpush1.msra.mxu0 0.0
      %349 = vmatprep.subr.mxu0 0.0
      %350 = vmatpush1.msra.mxu0 0.0
      %351 = vmatprep.subr.mxu0 0.0
      %352 = vmatpush1.msra.mxu0 0.0
      %353 = vmatprep.subr.mxu0 0.0
      %354 = vmatpush1.msra.mxu0 0.0
      %355 = vmatprep.subr.mxu0 0.0
      %356 = vmatpush1.msra.mxu0 0.0
      %357 = vmatprep.subr.mxu0 0.0
      %358 = vmatpush1.msra.mxu0 0.0
      %359 = vmatprep.subr.mxu0 0.0
      %360 = vmatpush1.msra.mxu0 0.0
      %361 = vmatprep.subr.mxu0 0.0
      %362 = vmatpush1.msra.mxu0 0.0
      %363 = vmatprep.subr.mxu0 0.0
      %364 = vmatpush1.msra.mxu0 0.0
      %365 = vmatprep.subr.mxu0 0.0
      %366 = vmatpush1.msra.mxu0 0.0
      %367 = vmatprep.subr.mxu0 0.0
      %368 = vmatpush1.msra.mxu0 0.0
      %369 = vmatprep.subr.mxu0 0.0
      %370 = vmatpush1.msra.mxu0 0.0
      %371 = vmatprep.subr.mxu0 0.0
      %372 = vmatpush1.msra.mxu0 0.0
      %373 = vmatprep.subr.mxu0 0.0
      %374 = vmatpush1.msra.mxu0 0.0
      %375 = vmatprep.subr.mxu0 0.0
      %376 = vmatpush1.msra.mxu0 0.0
      %377 = vmatprep.subr.mxu0 0.0
      %378 = vmatpush1.msra.mxu0 0.0
      %379 = vmatprep.subr.mxu0 0.0
      %380 = vmatpush1.msra.mxu0 0.0
      %381 = vmatprep.subr.mxu0 0.0
      %382 = vmatpush1.msra.mxu0 0.0
      %383 = vmatprep.subr.mxu0 0.0
      %384 = vmatpush1.msra.mxu0 0.0
      %385 = vmatprep.mubr.f32.mxu0 0.0
      %386 = vmatmul.mubr.f32.gmra.mrb[0].mxu0 %v319
      %v387 = vpop.f32.mrb[0].mxu0
      %v388 = vadd.f32 0.0, %v387
      %v389 = vpop.f32.mrb[0].mxu0
      %390 = vdwg.mxu0
      %v391 = vrot.slane %v316, 1
      %v392 = vsel %vm317, %v391, 0
      %394 = vmatprep.subr.mxu0 0.0
      %395 = vmatpush1.msra.mxu0 %v304
      %396 = vmatprep.subr.mxu0 0.0
      %397 = vmatpush1.msra.mxu0 %v305
      %398 = vmatprep.subr.mxu0 0.0
      %399 = vmatpush1.msra.mxu0 %v306
      %400 = vmatprep.subr.mxu0 0.0
      %401 = vmatpush1.msra.mxu0 %v307
      %402 = vmatprep.subr.mxu0 0.0
      %403 = vmatpush1.msra.mxu0 %v308
      %404 = vmatprep.subr.mxu0 0.0
      %405 = vmatpush1.msra.mxu0 %v309
      %406 = vmatprep.subr.mxu0 0.0
      %407 = vmatpush1.msra.mxu0 %v310
      %408 = vmatprep.subr.mxu0 0.0
      %409 = vmatpush1.msra.mxu0 %v311
      %410 = vmatprep.subr.mxu0 0.0
      %411 = vmatpush1.msra.mxu0 0.0
      %412 = vmatprep.subr.mxu0 0.0
      %413 = vmatpush1.msra.mxu0 0.0
      %414 = vmatprep.subr.mxu0 0.0
      %415 = vmatpush1.msra.mxu0 0.0
      %416 = vmatprep.subr.mxu0 0.0
      %417 = vmatpush1.msra.mxu0 0.0
      %418 = vmatprep.subr.mxu0 0.0
      %419 = vmatpush1.msra.mxu0 0.0
      %420 = vmatprep.subr.mxu0 0.0
      %421 = vmatpush1.msra.mxu0 0.0
      %422 = vmatprep.subr.mxu0 0.0
      %423 = vmatpush1.msra.mxu0 0.0
      %424 = vmatprep.subr.mxu0 0.0
      %425 = vmatpush1.msra.mxu0 0.0
      %426 = vmatprep.subr.mxu0 0.0
      %427 = vmatpush1.msra.mxu0 0.0
      %428 = vmatprep.subr.mxu0 0.0
      %429 = vmatpush1.msra.mxu0 0.0
      %430 = vmatprep.subr.mxu0 0.0
      %431 = vmatpush1.msra.mxu0 0.0
      %432 = vmatprep.subr.mxu0 0.0
      %433 = vmatpush1.msra.mxu0 0.0
      %434 = vmatprep.subr.mxu0 0.0
      %435 = vmatpush1.msra.mxu0 0.0
      %436 = vmatprep.subr.mxu0 0.0
      %437 = vmatpush1.msra.mxu0 0.0
      %438 = vmatprep.subr.mxu0 0.0
      %439 = vmatpush1.msra.mxu0 0.0
      %440 = vmatprep.subr.mxu0 0.0
      %441 = vmatpush1.msra.mxu0 0.0
      %442 = vmatprep.subr.mxu0 0.0
      %443 = vmatpush1.msra.mxu0 0.0
      %444 = vmatprep.subr.mxu0 0.0
      %445 = vmatpush1.msra.mxu0 0.0
      %446 = vmatprep.subr.mxu0 0.0
      %447 = vmatpush1.msra.mxu0 0.0
      %448 = vmatprep.subr.mxu0 0.0
      %449 = vmatpush1.msra.mxu0 0.0
      %450 = vmatprep.subr.mxu0 0.0
      %451 = vmatpush1.msra.mxu0 0.0
      %452 = vmatprep.subr.mxu0 0.0
      %453 = vmatpush1.msra.mxu0 0.0
      %454 = vmatprep.subr.mxu0 0.0
      %455 = vmatpush1.msra.mxu0 0.0
      %456 = vmatprep.subr.mxu0 0.0
      %457 = vmatpush1.msra.mxu0 0.0
      %458 = vmatprep.mubr.f32.mxu0 0.0
      %459 = vmatmul.mubr.f32.gmra.mrb[0].mxu0 %v392
      %v460 = vpop.f32.mrb[0].mxu0
      %v461 = vadd.f32 0.0, %v460
      %v462 = vpop.f32.mrb[0].mxu0
      %463 = vdwg.mxu0
      %v464 = vrcp.pop 128.0
      %v465 = vmul.f32 %v388, %v464
      %v466 = vmul.f32 %v461, %v464
      %v467 = vmul.f32 %v465, %v465
      %v468 = vsub.f32 %v466, %v467
      %v469 = vmax.f32 %v468, 0.0
      %v470 = vadd.f32 %v469, 1e-05
      %v471 = vrsqrt.pop %v470
      %vm472 = vcmask 64512
      %v474 = vsel %vm472, %v471, 0
      %476 = vmatprep.subr.mxu0 0.0
      %477 = vmatpush1.msra.mxu0 %v312
      %478 = vmatprep.subr.mxu0 0.0
      %479 = vmatpush1.msra.mxu0 0.0
      %480 = vmatprep.subr.mxu0 0.0
      %481 = vmatpush1.msra.mxu0 0.0
      %482 = vmatprep.subr.mxu0 0.0
      %483 = vmatpush1.msra.mxu0 0.0
      %484 = vmatprep.subr.mxu0 0.0
      %485 = vmatpush1.msra.mxu0 0.0
      %486 = vmatprep.subr.mxu0 0.0
      %487 = vmatpush1.msra.mxu0 0.0
      %488 = vmatprep.subr.mxu0 0.0
      %489 = vmatpush1.msra.mxu0 0.0
      %490 = vmatprep.subr.mxu0 0.0
      %491 = vmatpush1.msra.mxu0 0.0
      %492 = vmatprep.subr.mxu0 0.0
      %493 = vmatpush1.msra.mxu0 0.0
      %494 = vmatprep.subr.mxu0 0.0
      %495 = vmatpush1.msra.mxu0 0.0
      %496 = vmatprep.subr.mxu0 0.0
      %497 = vmatpush1.msra.mxu0 0.0
      %498 = vmatprep.subr.mxu0 0.0
      %499 = vmatpush1.msra.mxu0 0.0
      %500 = vmatprep.subr.mxu0 0.0
      %501 = vmatpush1.msra.mxu0 0.0
      %502 = vmatprep.subr.mxu0 0.0
      %503 = vmatpush1.msra.mxu0 0.0
      %504 = vmatprep.subr.mxu0 0.0
      %505 = vmatpush1.msra.mxu0 0.0
      %506 = vmatprep.subr.mxu0 0.0
      %507 = vmatpush1.msra.mxu0 0.0
      %508 = vmatprep.subr.mxu0 0.0
      %509 = vmatpush1.msra.mxu0 0.0
      %510 = vmatprep.subr.mxu0 0.0
      %511 = vmatpush1.msra.mxu0 0.0
      %512 = vmatprep.subr.mxu0 0.0
      %513 = vmatpush1.msra.mxu0 0.0
      %514 = vmatprep.subr.mxu0 0.0
      %515 = vmatpush1.msra.mxu0 0.0
      %516 = vmatprep.subr.mxu0 0.0
      %517 = vmatpush1.msra.mxu0 0.0
      %518 = vmatprep.subr.mxu0 0.0
      %519 = vmatpush1.msra.mxu0 0.0
      %520 = vmatprep.subr.mxu0 0.0
      %521 = vmatpush1.msra.mxu0 0.0
      %522 = vmatprep.subr.mxu0 0.0
      %523 = vmatpush1.msra.mxu0 0.0
      %524 = vmatprep.subr.mxu0 0.0
      %525 = vmatpush1.msra.mxu0 0.0
      %526 = vmatprep.subr.mxu0 0.0
      %527 = vmatpush1.msra.mxu0 0.0
      %528 = vmatprep.subr.mxu0 0.0
      %529 = vmatpush1.msra.mxu0 0.0
      %530 = vmatprep.subr.mxu0 0.0
      %531 = vmatpush1.msra.mxu0 0.0
      %532 = vmatprep.subr.mxu0 0.0
      %533 = vmatpush1.msra.mxu0 0.0
      %534 = vmatprep.subr.mxu0 0.0
      %535 = vmatpush1.msra.mxu0 0.0
      %536 = vmatprep.subr.mxu0 0.0
      %537 = vmatpush1.msra.mxu0 0.0
      %538 = vmatprep.subr.mxu0 0.0
      %539 = vmatpush1.msra.mxu0 0.0
      %540 = vmatprep.mubr.f32.mxu0 0.0
      %541 = vmatmul.mubr.f32.gmra.mrb[0].mxu0 %v474
      %v542 = vpop.f32.mrb[0].mxu0
      %v543 = vadd.f32 0.0, %v542
      %v544 = vpop.f32.mrb[0].mxu0
      %545 = vdwg.mxu0
      %v546 = vsub.f32 0.0, %v465
      %v547 = vmul.f32 %v546, %v471
      %v549 = vsel %vm472, %v547, 0
      %551 = vmatprep.subr.mxu0 0.0
      %552 = vmatpush1.msra.mxu0 %v312
      %553 = vmatprep.subr.mxu0 0.0
      %554 = vmatpush1.msra.mxu0 0.0
      %555 = vmatprep.subr.mxu0 0.0
      %556 = vmatpush1.msra.mxu0 0.0
      %557 = vmatprep.subr.mxu0 0.0
      %558 = vmatpush1.msra.mxu0 0.0
      %559 = vmatprep.subr.mxu0 0.0
      %560 = vmatpush1.msra.mxu0 0.0
      %561 = vmatprep.subr.mxu0 0.0
      %562 = vmatpush1.msra.mxu0 0.0
      %563 = vmatprep.subr.mxu0 0.0
      %564 = vmatpush1.msra.mxu0 0.0
      %565 = vmatprep.subr.mxu0 0.0
      %566 = vmatpush1.msra.mxu0 0.0
      %567 = vmatprep.subr.mxu0 0.0
      %568 = vmatpush1.msra.mxu0 0.0
      %569 = vmatprep.subr.mxu0 0.0
      %570 = vmatpush1.msra.mxu0 0.0
      %571 = vmatprep.subr.mxu0 0.0
      %572 = vmatpush1.msra.mxu0 0.0
      %573 = vmatprep.subr.mxu0 0.0
      %574 = vmatpush1.msra.mxu0 0.0
      %575 = vmatprep.subr.mxu0 0.0
      %576 = vmatpush1.msra.mxu0 0.0
      %577 = vmatprep.subr.mxu0 0.0
      %578 = vmatpush1.msra.mxu0 0.0
      %579 = vmatprep.subr.mxu0 0.0
      %580 = vmatpush1.msra.mxu0 0.0
      %581 = vmatprep.subr.mxu0 0.0
      %582 = vmatpush1.msra.mxu0 0.0
      %583 = vmatprep.subr.mxu0 0.0
      %584 = vmatpush1.msra.mxu0 0.0
      %585 = vmatprep.subr.mxu0 0.0
      %586 = vmatpush1.msra.mxu0 0.0
      %587 = vmatprep.subr.mxu0 0.0
      %588 = vmatpush1.msra.mxu0 0.0
      %589 = vmatprep.subr.mxu0 0.0
      %590 = vmatpush1.msra.mxu0 0.0
      %591 = vmatprep.subr.mxu0 0.0
      %592 = vmatpush1.msra.mxu0 0.0
      %593 = vmatprep.subr.mxu0 0.0
      %594 = vmatpush1.msra.mxu0 0.0
      %595 = vmatprep.subr.mxu0 0.0
      %596 = vmatpush1.msra.mxu0 0.0
      %597 = vmatprep.subr.mxu0 0.0
      %598 = vmatpush1.msra.mxu0 0.0
      %599 = vmatprep.subr.mxu0 0.0
      %600 = vmatpush1.msra.mxu0 0.0
      %601 = vmatprep.subr.mxu0 0.0
      %602 = vmatpush1.msra.mxu0 0.0
      %603 = vmatprep.subr.mxu0 0.0
      %604 = vmatpush1.msra.mxu0 0.0
      %605 = vmatprep.subr.mxu0 0.0
      %606 = vmatpush1.msra.mxu0 0.0
      %607 = vmatprep.subr.mxu0 0.0
      %608 = vmatpush1.msra.mxu0 0.0
      %609 = vmatprep.subr.mxu0 0.0
      %610 = vmatpush1.msra.mxu0 0.0
      %611 = vmatprep.subr.mxu0 0.0
      %612 = vmatpush1.msra.mxu0 0.0
      %613 = vmatprep.subr.mxu0 0.0
      %614 = vmatpush1.msra.mxu0 0.0
      %615 = vmatprep.mubr.f32.mxu0 0.0
      %616 = vmatmul.mubr.f32.gmra.mrb[0].mxu0 %v549
      %v617 = vpop.f32.mrb[0].mxu0
      %v618 = vadd.f32 0.0, %v617
      %v619 = vpop.f32.mrb[0].mxu0
      %620 = vdwg.mxu0
      %v621 = vld [vmem:[%s4] sm:$0xf]
      %v623 = vsel %vm472, %v621, 0
      %625 = vmatprep.subr.mxu0 0.0
      %626 = vmatpush1.msra.mxu0 %v301
      %627 = vmatprep.subr.mxu0 0.0
      %628 = vmatpush1.msra.mxu0 0.0
      %629 = vmatprep.subr.mxu0 0.0
      %630 = vmatpush1.msra.mxu0 0.0
      %631 = vmatprep.subr.mxu0 0.0
      %632 = vmatpush1.msra.mxu0 0.0
      %633 = vmatprep.subr.mxu0 0.0
      %634 = vmatpush1.msra.mxu0 0.0
      %635 = vmatprep.subr.mxu0 0.0
      %636 = vmatpush1.msra.mxu0 0.0
      %637 = vmatprep.subr.mxu0 0.0
      %638 = vmatpush1.msra.mxu0 0.0
      %639 = vmatprep.subr.mxu0 0.0
      %640 = vmatpush1.msra.mxu0 0.0
      %641 = vmatprep.subr.mxu0 0.0
      %642 = vmatpush1.msra.mxu0 0.0
      %643 = vmatprep.subr.mxu0 0.0
      %644 = vmatpush1.msra.mxu0 0.0
      %645 = vmatprep.subr.mxu0 0.0
      %646 = vmatpush1.msra.mxu0 0.0
      %647 = vmatprep.subr.mxu0 0.0
      %648 = vmatpush1.msra.mxu0 0.0
      %649 = vmatprep.subr.mxu0 0.0
      %650 = vmatpush1.msra.mxu0 0.0
      %651 = vmatprep.subr.mxu0 0.0
      %652 = vmatpush1.msra.mxu0 0.0
      %653 = vmatprep.subr.mxu0 0.0
      %654 = vmatpush1.msra.mxu0 0.0
      %655 = vmatprep.subr.mxu0 0.0
      %656 = vmatpush1.msra.mxu0 0.0
      %657 = vmatprep.subr.mxu0 0.0
      %658 = vmatpush1.msra.mxu0 0.0
      %659 = vmatprep.subr.mxu0 0.0
      %660 = vmatpush1.msra.mxu0 0.0
      %661 = vmatprep.subr.mxu0 0.0
      %662 = vmatpush1.msra.mxu0 0.0
      %663 = vmatprep.subr.mxu0 0.0
      %664 = vmatpush1.msra.mxu0 0.0
      %665 = vmatprep.subr.mxu0 0.0
      %666 = vmatpush1.msra.mxu0 0.0
      %667 = vmatprep.subr.mxu0 0.0
      %668 = vmatpush1.msra.mxu0 0.0
      %669 = vmatprep.subr.mxu0 0.0
      %670 = vmatpush1.msra.mxu0 0.0
      %671 = vmatprep.subr.mxu0 0.0
      %672 = vmatpush1.msra.mxu0 0.0
      %673 = vmatprep.subr.mxu0 0.0
      %674 = vmatpush1.msra.mxu0 0.0
      %675 = vmatprep.subr.mxu0 0.0
      %676 = vmatpush1.msra.mxu0 0.0
      %677 = vmatprep.subr.mxu0 0.0
      %678 = vmatpush1.msra.mxu0 0.0
      %679 = vmatprep.subr.mxu0 0.0
      %680 = vmatpush1.msra.mxu0 0.0
      %681 = vmatprep.subr.mxu0 0.0
      %682 = vmatpush1.msra.mxu0 0.0
      %683 = vmatprep.subr.mxu0 0.0
      %684 = vmatpush1.msra.mxu0 0.0
      %685 = vmatprep.subr.mxu0 0.0
      %686 = vmatpush1.msra.mxu0 0.0
      %687 = vmatprep.subr.mxu0 0.0
      %688 = vmatpush1.msra.mxu0 0.0
      %689 = vmatprep.mubr.f32.mxu0 0.0
      %690 = vmatmul.mubr.f32.gmra.mrb[0].mxu0 %v623
      %v691 = vpop.f32.mrb[0].mxu0
      %v692 = vadd.f32 0.0, %v691
      %v693 = vpop.f32.mrb[0].mxu0
      %694 = vdwg.mxu0
      %v695 = vld [vmem:[%s5] sm:$0xf]
      %v697 = vsel %vm472, %v695, 0
      %699 = vmatprep.subr.mxu0 0.0
      %700 = vmatpush1.msra.mxu0 %v301
      %701 = vmatprep.subr.mxu0 0.0
      %702 = vmatpush1.msra.mxu0 0.0
      %703 = vmatprep.subr.mxu0 0.0
      %704 = vmatpush1.msra.mxu0 0.0
      %705 = vmatprep.subr.mxu0 0.0
      %706 = vmatpush1.msra.mxu0 0.0
      %707 = vmatprep.subr.mxu0 0.0
      %708 = vmatpush1.msra.mxu0 0.0
      %709 = vmatprep.subr.mxu0 0.0
      %710 = vmatpush1.msra.mxu0 0.0
      %711 = vmatprep.subr.mxu0 0.0
      %712 = vmatpush1.msra.mxu0 0.0
      %713 = vmatprep.subr.mxu0 0.0
      %714 = vmatpush1.msra.mxu0 0.0
      %715 = vmatprep.subr.mxu0 0.0
      %716 = vmatpush1.msra.mxu0 0.0
      %717 = vmatprep.subr.mxu0 0.0
      %718 = vmatpush1.msra.mxu0 0.0
      %719 = vmatprep.subr.mxu0 0.0
      %720 = vmatpush1.msra.mxu0 0.0
      %721 = vmatprep.subr.mxu0 0.0
      %722 = vmatpush1.msra.mxu0 0.0
      %723 = vmatprep.subr.mxu0 0.0
      %724 = vmatpush1.msra.mxu0 0.0
      %725 = vmatprep.subr.mxu0 0.0
      %726 = vmatpush1.msra.mxu0 0.0
      %727 = vmatprep.subr.mxu0 0.0
      %728 = vmatpush1.msra.mxu0 0.0
      %729 = vmatprep.subr.mxu0 0.0
      %730 = vmatpush1.msra.mxu0 0.0
      %731 = vmatprep.subr.mxu0 0.0
      %732 = vmatpush1.msra.mxu0 0.0
      %733 = vmatprep.subr.mxu0 0.0
      %734 = vmatpush1.msra.mxu0 0.0
      %735 = vmatprep.subr.mxu0 0.0
      %736 = vmatpush1.msra.mxu0 0.0
      %737 = vmatprep.subr.mxu0 0.0
      %738 = vmatpush1.msra.mxu0 0.0
      %739 = vmatprep.subr.mxu0 0.0
      %740 = vmatpush1.msra.mxu0 0.0
      %741 = vmatprep.subr.mxu0 0.0
      %742 = vmatpush1.msra.mxu0 0.0
      %743 = vmatprep.subr.mxu0 0.0
      %744 = vmatpush1.msra.mxu0 0.0
      %745 = vmatprep.subr.mxu0 0.0
      %746 = vmatpush1.msra.mxu0 0.0
      %747 = vmatprep.subr.mxu0 0.0
      %748 = vmatpush1.msra.mxu0 0.0
      %749 = vmatprep.subr.mxu0 0.0
      %750 = vmatpush1.msra.mxu0 0.0
      %751 = vmatprep.subr.mxu0 0.0
      %752 = vmatpush1.msra.mxu0 0.0
      %753 = vmatprep.subr.mxu0 0.0
      %754 = vmatpush1.msra.mxu0 0.0
      %755 = vmatprep.subr.mxu0 0.0
      %756 = vmatpush1.msra.mxu0 0.0
      %757 = vmatprep.subr.mxu0 0.0
      %758 = vmatpush1.msra.mxu0 0.0
      %759 = vmatprep.subr.mxu0 0.0
      %760 = vmatpush1.msra.mxu0 0.0
      %761 = vmatprep.subr.mxu0 0.0
      %762 = vmatpush1.msra.mxu0 0.0
      %763 = vmatprep.mubr.f32.mxu0 0.0
      %764 = vmatmul.mubr.f32.gmra.mrb[0].mxu0 %v697
      %v765 = vpop.f32.mrb[0].mxu0
      %v766 = vadd.f32 0.0, %v765
      %v767 = vpop.f32.mrb[0].mxu0
      %768 = vdwg.mxu0
      %v769 = vmax.f32 %v692, %v766
      %v770 = vld [vmem:[%s6] sm:$0xff]
      %v771 = vld [vmem:[%s6 + $0x8] sm:$0xff]
      %v772 = vld [vmem:[%s6 + $0x10] sm:$0xff]
      %v773 = vld [vmem:[%s6 + $0x18] sm:$0xff]
      %v774 = vld [vmem:[%s6 + $0x20] sm:$0xff]
      %v775 = vld [vmem:[%s6 + $0x28] sm:$0xff]
      %v776 = vld [vmem:[%s6 + $0x30] sm:$0xff]
      %v777 = vld [vmem:[%s6 + $0x38] sm:$0xff]
      %v779 = vsel %vm317, %v769, 0
      %781 = vmatprep.subr.mxu0 0.0
      %782 = vmatpush1.msra.mxu0 %v770
      %783 = vmatprep.subr.mxu0 0.0
      %784 = vmatpush1.msra.mxu0 %v771
      %785 = vmatprep.subr.mxu0 0.0
      %786 = vmatpush1.msra.mxu0 %v772
      %787 = vmatprep.subr.mxu0 0.0
      %788 = vmatpush1.msra.mxu0 %v773
      %789 = vmatprep.subr.mxu0 0.0
      %790 = vmatpush1.msra.mxu0 %v774
      %791 = vmatprep.subr.mxu0 0.0
      %792 = vmatpush1.msra.mxu0 %v775
      %793 = vmatprep.subr.mxu0 0.0
      %794 = vmatpush1.msra.mxu0 %v776
      %795 = vmatprep.subr.mxu0 0.0
      %796 = vmatpush1.msra.mxu0 %v777
      %797 = vmatprep.subr.mxu0 0.0
      %798 = vmatpush1.msra.mxu0 0.0
      %799 = vmatprep.subr.mxu0 0.0
      %800 = vmatpush1.msra.mxu0 0.0
      %801 = vmatprep.subr.mxu0 0.0
      %802 = vmatpush1.msra.mxu0 0.0
      %803 = vmatprep.subr.mxu0 0.0
      %804 = vmatpush1.msra.mxu0 0.0
      %805 = vmatprep.subr.mxu0 0.0
      %806 = vmatpush1.msra.mxu0 0.0
      %807 = vmatprep.subr.mxu0 0.0
      %808 = vmatpush1.msra.mxu0 0.0
      %809 = vmatprep.subr.mxu0 0.0
      %810 = vmatpush1.msra.mxu0 0.0
      %811 = vmatprep.subr.mxu0 0.0
      %812 = vmatpush1.msra.mxu0 0.0
      %813 = vmatprep.subr.mxu0 0.0
      %814 = vmatpush1.msra.mxu0 0.0
      %815 = vmatprep.subr.mxu0 0.0
      %816 = vmatpush1.msra.mxu0 0.0
      %817 = vmatprep.subr.mxu0 0.0
      %818 = vmatpush1.msra.mxu0 0.0
      %819 = vmatprep.subr.mxu0 0.0
      %820 = vmatpush1.msra.mxu0 0.0
      %821 = vmatprep.subr.mxu0 0.0
      %822 = vmatpush1.msra.mxu0 0.0
      %823 = vmatprep.subr.mxu0 0.0
      %824 = vmatpush1.msra.mxu0 0.0
      %825 = vmatprep.subr.mxu0 0.0
      %826 = vmatpush1.msra.mxu0 0.0
      %827 = vmatprep.subr.mxu0 0.0
      %828 = vmatpush1.msra.mxu0 0.0
      %829 = vmatprep.subr.mxu0 0.0
      %830 = vmatpush1.msra.mxu0 0.0
      %831 = vmatprep.subr.mxu0 0.0
      %832 = vmatpush1.msra.mxu0 0.0
      %833 = vmatprep.subr.mxu0 0.0
      %834 = vmatpush1.msra.mxu0 0.0
      %835 = vmatprep.subr.mxu0 0.0
      %836 = vmatpush1.msra.mxu0 0.0
      %837 = vmatprep.subr.mxu0 0.0
      %838 = vmatpush1.msra.mxu0 0.0
      %839 = vmatprep.subr.mxu0 0.0
      %840 = vmatpush1.msra.mxu0 0.0
      %841 = vmatprep.subr.mxu0 0.0
      %842 = vmatpush1.msra.mxu0 0.0
      %843 = vmatprep.subr.mxu0 0.0
      %844 = vmatpush1.msra.mxu0 0.0
      %845 = vmatprep.mubr.f32.mxu0 0.0
      %846 = vmatmul.mubr.f32.gmra.mrb[0].mxu0 %v779
      %v847 = vpop.f32.mrb[0].mxu0
      %v848 = vadd.f32 0.0, %v847
      %v849 = vpop.f32.mrb[0].mxu0
      %850 = vdwg.mxu0
      %v851 = vld [vmem:[%s7] sm:$0xff]
      %v852 = vld [vmem:[%s7 + $0x8] sm:$0xff]
      %v853 = vld [vmem:[%s7 + $0x10] sm:$0xff]
      %v854 = vld [vmem:[%s7 + $0x18] sm:$0xff]
      %v855 = vld [vmem:[%s7 + $0x20] sm:$0xff]
      %v856 = vld [vmem:[%s7 + $0x28] sm:$0xff]
      %v857 = vld [vmem:[%s7 + $0x30] sm:$0xff]
      %v858 = vld [vmem:[%s7 + $0x38] sm:$0xff]
      %859 = vmatprep.subr.mxu0 0.0
      %860 = vmatpush1.msra.mxu0 %v851
      %861 = vmatprep.subr.mxu0 0.0
      %862 = vmatpush1.msra.mxu0 %v852
      %863 = vmatprep.subr.mxu0 0.0
      %864 = vmatpush1.msra.mxu0 %v853
      %865 = vmatprep.subr.mxu0 0.0
      %866 = vmatpush1.msra.mxu0 %v854
      %867 = vmatprep.subr.mxu0 0.0
      %868 = vmatpush1.msra.mxu0 %v855
      %869 = vmatprep.subr.mxu0 0.0
      %870 = vmatpush1.msra.mxu0 %v856
      %871 = vmatprep.subr.mxu0 0.0
      %872 = vmatpush1.msra.mxu0 %v857
      %873 = vmatprep.subr.mxu0 0.0
      %874 = vmatpush1.msra.mxu0 %v858
      %875 = vmatprep.subr.mxu0 0.0
      %876 = vmatpush1.msra.mxu0 0.0
      %877 = vmatprep.subr.mxu0 0.0
      %878 = vmatpush1.msra.mxu0 0.0
      %879 = vmatprep.subr.mxu0 0.0
      %880 = vmatpush1.msra.mxu0 0.0
      %881 = vmatprep.subr.mxu0 0.0
      %882 = vmatpush1.msra.mxu0 0.0
      %883 = vmatprep.subr.mxu0 0.0
      %884 = vmatpush1.msra.mxu0 0.0
      %885 = vmatprep.subr.mxu0 0.0
      %886 = vmatpush1.msra.mxu0 0.0
      %887 = vmatprep.subr.mxu0 0.0
      %888 = vmatpush1.msra.mxu0 0.0
      %889 = vmatprep.subr.mxu0 0.0
      %890 = vmatpush1.msra.mxu0 0.0
      %891 = vmatprep.subr.mxu0 0.0
      %892 = vmatpush1.msra.mxu0 0.0
      %893 = vmatprep.subr.mxu0 0.0
      %894 = vmatpush1.msra.mxu0 0.0
      %895 = vmatprep.subr.mxu0 0.0
      %896 = vmatpush1.msra.mxu0 0.0
      %897 = vmatprep.subr.mxu0 0.0
      %898 = vmatpush1.msra.mxu0 0.0
      %899 = vmatprep.subr.mxu0 0.0
      %900 = vmatpush1.msra.mxu0 0.0
      %901 = vmatprep.subr.mxu0 0.0
      %902 = vmatpush1.msra.mxu0 0.0
      %903 = vmatprep.subr.mxu0 0.0
      %904 = vmatpush1.msra.mxu0 0.0
      %905 = vmatprep.subr.mxu0 0.0
      %906 = vmatpush1.msra.mxu0 0.0
      %907 = vmatprep.subr.mxu0 0.0
      %908 = vmatpush1.msra.mxu0 0.0
      %909 = vmatprep.subr.mxu0 0.0
      %910 = vmatpush1.msra.mxu0 0.0
      %911 = vmatprep.subr.mxu0 0.0
      %912 = vmatpush1.msra.mxu0 0.0
      %913 = vmatprep.subr.mxu0 0.0
      %914 = vmatpush1.msra.mxu0 0.0
      %915 = vmatprep.subr.mxu0 0.0
      %916 = vmatpush1.msra.mxu0 0.0
      %917 = vmatprep.subr.mxu0 0.0
      %918 = vmatpush1.msra.mxu0 0.0
      %919 = vmatprep.subr.mxu0 0.0
      %920 = vmatpush1.msra.mxu0 0.0
      %921 = vmatprep.subr.mxu0 0.0
      %922 = vmatpush1.msra.mxu0 0.0
      %923 = vmatprep.mubr.f32.mxu0 0.0
      %924 = vmatmul.mubr.f32.gmra.mrb[0].mxu0 %v779
      %v925 = vpop.f32.mrb[0].mxu0
      %v926 = vadd.f32 0.0, %v925
      %v927 = vpop.f32.mrb[0].mxu0
      %928 = vdwg.mxu0
      %v929 = vmax.f32 %v848, %v926
      %v930 = vlaneseq
      %v931 = vshrl.u32 %v930, 7
      %v932 = vsub.s32 0, %v931
      %v933 = vrot.slane %v543, %v932
      %v934 = vmul.f32 %v929, %v933
      %v935 = vlaneseq
      %v936 = vshrl.u32 %v935, 7
      %v937 = vsub.s32 0, %v936
      %v938 = vrot.slane %v618, %v937
      %v939 = vadd.f32 %v934, %v938
      %v940 = vmax.f32 %v939, 0.0
      %vm941 = vcmask 257024
      %942 = vst.msk [vmem:[%s300] sm:$0xf] %vm941, %v940
      %p943 = scmp.lt.s32.totalorder %s19, 1
      %s944 = scalar_select %p943, %s19, 1
      %s945 = smul.addr %s944, 4
      %s946 = scalar_lea.vmem %s8, %s945
      // Predicated region
      $region53: #{convae_forward.11} parent=51 // pred_check
        %p947 = pneg %p210
      $region54: #{convae_forward.11} parent=51 // pred_check_branch
        %949 = sbr.rel (%p947) target = $region56
      $region55: #{convae_forward.11} parent=51 // pred_region
        _
      $region56: #{convae_forward.11} parent=51 // pred_fallthru
        _
    $region52: #{convae_forward.11} parent=5 // pred_fallthru
      _
    %p950 = scmp.le.s32.totalorder 2, %s14
    // Predicated region
    $region57: #{convae_forward.11} parent=5 // pred_check
      %p951 = pneg %p950
    $region58: #{convae_forward.11} parent=5 // pred_check_branch
      %953 = sbr.rel (%p951) target = $region60
    $region59: #{convae_forward.11} parent=5 // pred_region
      %s954 = ssub.s32 %s14, 2
      // Predicated region
      $region61: #{convae_forward.11} parent=59 // pred_check
        %p955 = pneg %p216
      $region62: #{convae_forward.11} parent=59 // pred_check_branch
        %957 = sbr.rel (%p955) target = $region64
      $region63: #{convae_forward.11} parent=59 // pred_region
        %p958 = scmp.lt.s32.totalorder %s20, 1
        %s959 = scalar_select %p958, %s20, 1
        %s960 = smul.addr %s959, 4
        %s961 = scalar_lea.vmem %s8, %s960
      $region64: #{convae_forward.11} parent=59 // pred_fallthru
        _
    $region60: #{convae_forward.11} parent=5 // pred_fallthru
      _
  $region6: #{convae_forward.11} parent=0 // loop_footer
    %s18 = sadd.s32 1, %s14
  $region7: #{convae_forward.11} parent=0 // loop_footer_branch
    %13 = sbr.rel target = $region3
  $region8: #{convae_forward.11} parent=0 // loop_exit
    _

// kernel: convae_forward.12
$region0: #{convae_forward.12}
  #allocation0 [shape = 'u32[]', space=smem, size = 0x4, offset = 0x4, fixed_abs, tag = 'smem constant byte address 0x4 - core index']
  #allocation1 [shape = 'u32[144,128]{1,0:T(1,128)}', space=vmem, size = 0x12000, scoped, tag = 'internal scratch']
  %s0 = inlined_call_operand.vmem [shape: f32[2,128], index: 0, kind: input, shape index: {}]
  %s1 = inlined_call_operand.vmem [shape: bf16[128,64], index: 1, kind: input, shape index: {}]
  %s2 = inlined_call_operand.vmem [shape: f32[1,64], index: 2, kind: input, shape index: {}]
  %s3 = inlined_call_operand.vmem [shape: bf16[64,8], index: 3, kind: input, shape index: {}]
  %s4 = inlined_call_operand.vmem [shape: f32[1,8], index: 4, kind: input, shape index: {}]
  %s5 = inlined_call_operand.vmem [shape: bf16[8,64], index: 5, kind: input, shape index: {}]
  %s6 = inlined_call_operand.vmem [shape: f32[1,64], index: 6, kind: input, shape index: {}]
  %s7 = inlined_call_operand.vmem [shape: bf16[64,128], index: 7, kind: input, shape index: {}]
  %s8 = inlined_call_operand.vmem [shape: f32[1,128], index: 8, kind: input, shape index: {}]
  %s9 = inlined_call_operand.vmem [shape: f32[128,8], index: 9, kind: input, shape index: {}]
  %s10 = inlined_call_operand.vmem [shape: f32[8,128], index: 10, kind: input, shape index: {}]
  %s11 = inlined_call_operand.vmem [shape: f32[2,128], index: 11, kind: output, shape index: {}]
  %s12 = sld [smem:[#allocation0]]
  $region54: #{convae_forward.12} parent=0
    _
  %s14 = ssub.s32 1, %s12
  %s15 = scalar_select 0, %s14, %s12
  // Predicated region
  $region2: #{convae_forward.12} parent=0 // pred_check
    _
  $region3: #{convae_forward.12} parent=0 // pred_check_branch
    %17 = sbr.rel (0) target = $region5
  $region4: #{convae_forward.12} parent=0 // pred_region
    _
  $region5: #{convae_forward.12} parent=0 // pred_fallthru
    _
  // Predicated region
  $region6: #{convae_forward.12} parent=0 // pred_check
    _
  $region7: #{convae_forward.12} parent=0 // pred_check_branch
    %19 = sbr.rel (0) target = $region9
  $region8: #{convae_forward.12} parent=0 // pred_region
    _
  $region9: #{convae_forward.12} parent=0 // pred_fallthru
    _
  // Predicated region
  $region10: #{convae_forward.12} parent=0 // pred_check
    _
  $region11: #{convae_forward.12} parent=0 // pred_check_branch
    %21 = sbr.rel (0) target = $region13
  $region12: #{convae_forward.12} parent=0 // pred_region
    _
  $region13: #{convae_forward.12} parent=0 // pred_fallthru
    _
  // Predicated region
  $region14: #{convae_forward.12} parent=0 // pred_check
    _
  $region15: #{convae_forward.12} parent=0 // pred_check_branch
    %23 = sbr.rel (0) target = $region17
  $region16: #{convae_forward.12} parent=0 // pred_region
    _
  $region17: #{convae_forward.12} parent=0 // pred_fallthru
    _
  // Predicated region
  $region18: #{convae_forward.12} parent=0 // pred_check
    _
  $region19: #{convae_forward.12} parent=0 // pred_check_branch
    %25 = sbr.rel (0) target = $region21
  $region20: #{convae_forward.12} parent=0 // pred_region
    _
  $region21: #{convae_forward.12} parent=0 // pred_fallthru
    _
  // Predicated region
  $region22: #{convae_forward.12} parent=0 // pred_check
    _
  $region23: #{convae_forward.12} parent=0 // pred_check_branch
    %27 = sbr.rel (0) target = $region25
  $region24: #{convae_forward.12} parent=0 // pred_region
    _
  $region25: #{convae_forward.12} parent=0 // pred_fallthru
    _
  // Predicated region
  $region26: #{convae_forward.12} parent=0 // pred_check
    _
  $region27: #{convae_forward.12} parent=0 // pred_check_branch
    %29 = sbr.rel (0) target = $region29
  $region28: #{convae_forward.12} parent=0 // pred_region
    _
  $region29: #{convae_forward.12} parent=0 // pred_fallthru
    _
  // Predicated region
  $region30: #{convae_forward.12} parent=0 // pred_check
    _
  $region31: #{convae_forward.12} parent=0 // pred_check_branch
    %31 = sbr.rel (0) target = $region33
  $region32: #{convae_forward.12} parent=0 // pred_region
    _
  $region33: #{convae_forward.12} parent=0 // pred_fallthru
    _
  // Predicated region
  $region34: #{convae_forward.12} parent=0 // pred_check
    _
  $region35: #{convae_forward.12} parent=0 // pred_check_branch
    %33 = sbr.rel (0) target = $region37
  $region36: #{convae_forward.12} parent=0 // pred_region
    _
  $region37: #{convae_forward.12} parent=0 // pred_fallthru
    _
  // Predicated region
  $region38: #{convae_forward.12} parent=0 // pred_check
    _
  $region39: #{convae_forward.12} parent=0 // pred_check_branch
    %35 = sbr.rel (0) target = $region41
  $region40: #{convae_forward.12} parent=0 // pred_region
    _
  $region41: #{convae_forward.12} parent=0 // pred_fallthru
    _
  // Predicated region
  $region42: #{convae_forward.12} parent=0 // pred_check
    _
  $region43: #{convae_forward.12} parent=0 // pred_check_branch
    %37 = sbr.rel (0) target = $region45
  $region44: #{convae_forward.12} parent=0 // pred_region
    _
  $region45: #{convae_forward.12} parent=0 // pred_fallthru
    _
  %v39 = vld [vmem:[%s0] sm:$0x3]
  %v40 = vpack.c.bf16 %v39, %v39
  %v41 = vld [vmem:[%s1] sm:$0xf]
  %v42 = vld [vmem:[%s1 + $0x4] sm:$0xf]
  %v43 = vld [vmem:[%s1 + $0x8] sm:$0xf]
  %v44 = vld [vmem:[%s1 + $0xc] sm:$0xf]
  %v45 = vld [vmem:[%s1 + $0x10] sm:$0xf]
  %v46 = vld [vmem:[%s1 + $0x14] sm:$0xf]
  %v47 = vld [vmem:[%s1 + $0x18] sm:$0xf]
  %v48 = vld [vmem:[%s1 + $0x1c] sm:$0xf]
  %v49 = vld [vmem:[%s1 + $0x20] sm:$0xf]
  %v50 = vld [vmem:[%s1 + $0x24] sm:$0xf]
  %v51 = vld [vmem:[%s1 + $0x28] sm:$0xf]
  %v52 = vld [vmem:[%s1 + $0x2c] sm:$0xf]
  %v53 = vld [vmem:[%s1 + $0x30] sm:$0xf]
  %v54 = vld [vmem:[%s1 + $0x34] sm:$0xf]
  %v55 = vld [vmem:[%s1 + $0x38] sm:$0xf]
  %v56 = vld [vmem:[%s1 + $0x3c] sm:$0xf]
  %v57 = vld [vmem:[%s2] sm:$0x1]
  %v59 = vlaneseq
  %v60 = vshrl.u32 %v59, 7
  %v61 = vsub.s32 0, %v60
  %v62 = vrot.slane %v57, %v61
  %v80 = vunpack.c.l.b16 %v41
  %v81 = vunpack.c.l.b16 %v42
  %v82 = vunpack.c.l.b16 %v43
  %v83 = vunpack.c.l.b16 %v44
  %v84 = vunpack.c.l.b16 %v45
  %v85 = vunpack.c.l.b16 %v46
  %v86 = vunpack.c.l.b16 %v47
  %v87 = vunpack.c.l.b16 %v48
  %v88 = vunpack.c.l.b16 %v49
  %v89 = vunpack.c.l.b16 %v50
  %v90 = vunpack.c.l.b16 %v51
  %v91 = vunpack.c.l.b16 %v52
  %v92 = vunpack.c.l.b16 %v53
  %v93 = vunpack.c.l.b16 %v54
  %v94 = vunpack.c.l.b16 %v55
  %v95 = vunpack.c.l.b16 %v56
  %v96 = vpack.c.b16 %v81, %v80
  %v97 = vpack.c.b16 %v83, %v82
  %v98 = vpack.c.b16 %v85, %v84
  %v99 = vpack.c.b16 %v87, %v86
  %v100 = vpack.c.b16 %v89, %v88
  %v101 = vpack.c.b16 %v91, %v90
  %v102 = vpack.c.b16 %v93, %v92
  %v103 = vpack.c.b16 %v95, %v94
  %112 = vmatprep.subr.bf16.mxu0 0
  %113 = vmatpush1.bf16.msra.mxu0 %v96
  %114 = vmatprep.subr.bf16.mxu0 0
  %115 = vmatpush1.bf16.msra.mxu0 %v97
  %116 = vmatprep.subr.bf16.mxu0 0
  %117 = vmatpush1.bf16.msra.mxu0 %v98
  %118 = vmatprep.subr.bf16.mxu0 0
  %119 = vmatpush1.bf16.msra.mxu0 %v99
  %120 = vmatprep.subr.bf16.mxu0 0
  %121 = vmatpush1.bf16.msra.mxu0 %v100
  %122 = vmatprep.subr.bf16.mxu0 0
  %123 = vmatpush1.bf16.msra.mxu0 %v101
  %124 = vmatprep.subr.bf16.mxu0 0
  %125 = vmatpush1.bf16.msra.mxu0 %v102
  %126 = vmatprep.subr.bf16.mxu0 0
  %127 = vmatpush1.bf16.msra.mxu0 %v103
  %128 = vmatprep.subr.bf16.mxu0 0
  %129 = vmatpush1.bf16.msra.mxu0 0
  %130 = vmatprep.subr.bf16.mxu0 0
  %131 = vmatpush1.bf16.msra.mxu0 0
  %132 = vmatprep.subr.bf16.mxu0 0
  %133 = vmatpush1.bf16.msra.mxu0 0
  %134 = vmatprep.subr.bf16.mxu0 0
  %135 = vmatpush1.bf16.msra.mxu0 0
  %136 = vmatprep.subr.bf16.mxu0 0
  %137 = vmatpush1.bf16.msra.mxu0 0
  %138 = vmatprep.subr.bf16.mxu0 0
  %139 = vmatpush1.bf16.msra.mxu0 0
  %140 = vmatprep.subr.bf16.mxu0 0
  %141 = vmatpush1.bf16.msra.mxu0 0
  %142 = vmatprep.subr.bf16.mxu0 0
  %143 = vmatpush1.bf16.msra.mxu0 0
  %144 = vmatprep.mubr.bf16.mxu0 0
  %145 = vmatmul.mubr.bf16.gmra.mrb[0].mxu0 %v40
  %v146 = vpop.f32.mrb[0].mxu0
  %v147 = vadd.f32 %v62, %v146
  %v148 = vpop.f32.mrb[0].mxu0
  %v149 = vpop.f32.mrb[0].mxu0
  %v150 = vpop.f32.mrb[0].mxu0
  %151 = vdwg.mxu0
  %vm152 = vcmask 517120
  %v153 = vsel %vm152, %v147, 0.0
  %v154 = vrot.slane %v153, 4
  %v155 = vadd.f32 %v153, %v154
  %v156 = vrot.slane %v155, 2
  %v157 = vadd.f32 %v155, %v156
  %v158 = vrot.slane %v157, 1
  %v159 = vadd.f32 %v157, %v158
  %v160 = vrcp.pop 2.0
  %v161 = vmul.f32 %v159, %v160
  %v162 = vmul.f32 %v147, %v147
  %v163 = vsel %vm152, %v162, 0.0
  %v164 = vrot.slane %v163, 4
  %v165 = vadd.f32 %v163, %v164
  %v166 = vrot.slane %v165, 2
  %v167 = vadd.f32 %v165, %v166
  %v168 = vrot.slane %v167, 1
  %v169 = vadd.f32 %v167, %v168
  %v170 = vmul.f32 %v169, %v160
  %v171 = vmul.f32 %v161, %v161
  %v172 = vsub.f32 %v170, %v171
  %v173 = vmax.f32 %v172, 0.0
  %v174 = vadd.f32 %v173, 1e-05
  %v175 = vrsqrt.pop %v174
  %v176 = vsub.f32 %v147, %v161
  %v177 = vmul.f32 %v176, %v175
  %v178 = vmax.f32 %v177, 0.0
  %v179 = vpack.c.bf16 %v178, %v178
  %v180 = vld [vmem:[%s3] sm:$0xf]
  %v181 = vld [vmem:[%s3 + $0x4] sm:$0xf]
  %v182 = vld [vmem:[%s3 + $0x8] sm:$0xf]
  %v183 = vld [vmem:[%s3 + $0xc] sm:$0xf]
  %v184 = vld [vmem:[%s3 + $0x10] sm:$0xf]
  %v185 = vld [vmem:[%s3 + $0x14] sm:$0xf]
  %v186 = vld [vmem:[%s3 + $0x18] sm:$0xf]
  %v187 = vld [vmem:[%s3 + $0x1c] sm:$0xf]
  %v188 = vld [vmem:[%s4] sm:$0x1]
  %v190 = vlaneseq
  %v191 = vshrl.u32 %v190, 7
  %v192 = vsub.s32 0, %v191
  %v193 = vrot.slane %v188, %v192
  %v203 = vunpack.c.l.b16 %v180
  %v204 = vunpack.c.l.b16 %v181
  %v205 = vunpack.c.l.b16 %v182
  %v206 = vunpack.c.l.b16 %v183
  %v207 = vunpack.c.l.b16 %v184
  %v208 = vunpack.c.l.b16 %v185
  %v209 = vunpack.c.l.b16 %v186
  %v210 = vunpack.c.l.b16 %v187
  %v211 = vpack.c.b16 %v204, %v203
  %v212 = vpack.c.b16 %v206, %v205
  %v213 = vpack.c.b16 %v208, %v207
  %v214 = vpack.c.b16 %v210, %v209
  %vm219 = vcmask 523264
  %v221 = vsel %vm219, %v179, 0
  %223 = vmatprep.subr.bf16.mxu0 0
  %224 = vmatpush1.bf16.msra.mxu0 %v211
  %225 = vmatprep.subr.bf16.mxu0 0
  %226 = vmatpush1.bf16.msra.mxu0 %v212
  %227 = vmatprep.subr.bf16.mxu0 0
  %228 = vmatpush1.bf16.msra.mxu0 %v213
  %229 = vmatprep.subr.bf16.mxu0 0
  %230 = vmatpush1.bf16.msra.mxu0 %v214
  %231 = vmatprep.subr.bf16.mxu0 0
  %232 = vmatpush1.bf16.msra.mxu0 0
  %233 = vmatprep.subr.bf16.mxu0 0
  %234 = vmatpush1.bf16.msra.mxu0 0
  %235 = vmatprep.subr.bf16.mxu0 0
  %236 = vmatpush1.bf16.msra.mxu0 0
  %237 = vmatprep.subr.bf16.mxu0 0
  %238 = vmatpush1.bf16.msra.mxu0 0
  %239 = vmatprep.subr.bf16.mxu0 0
  %240 = vmatpush1.bf16.msra.mxu0 0
  %241 = vmatprep.subr.bf16.mxu0 0
  %242 = vmatpush1.bf16.msra.mxu0 0
  %243 = vmatprep.subr.bf16.mxu0 0
  %244 = vmatpush1.bf16.msra.mxu0 0
  %245 = vmatprep.subr.bf16.mxu0 0
  %246 = vmatpush1.bf16.msra.mxu0 0
  %247 = vmatprep.subr.bf16.mxu0 0
  %248 = vmatpush1.bf16.msra.mxu0 0
  %249 = vmatprep.subr.bf16.mxu0 0
  %250 = vmatpush1.bf16.msra.mxu0 0
  %251 = vmatprep.subr.bf16.mxu0 0
  %252 = vmatpush1.bf16.msra.mxu0 0
  %253 = vmatprep.subr.bf16.mxu0 0
  %254 = vmatpush1.bf16.msra.mxu0 0
  %255 = vmatprep.mubr.bf16.mxu0 0
  %256 = vmatmul.mubr.bf16.gmra.mrb[0].mxu0 %v221
  %v257 = vpop.f32.mrb[0].mxu0
  %v258 = vadd.f32 %v193, %v257
  %v259 = vpop.f32.mrb[0].mxu0
  %v260 = vpop.f32.mrb[0].mxu0
  %v261 = vpop.f32.mrb[0].mxu0
  %262 = vdwg.mxu0
  %vm263 = vcmask 58368
  %v264 = vsel %vm263, %v258, 0.0
  %v265 = vrot.slane %v264, 4
  %v266 = vadd.f32 %v264, %v265
  %v267 = vrot.slane %v266, 2
  %v268 = vadd.f32 %v266, %v267
  %v269 = vrot.slane %v268, 1
  %v270 = vadd.f32 %v268, %v269
  %v271 = vmul.f32 %v270, %v160
  %v272 = vmul.f32 %v258, %v258
  %v273 = vsel %vm263, %v272, 0.0
  %v274 = vrot.slane %v273, 4
  %v275 = vadd.f32 %v273, %v274
  %v276 = vrot.slane %v275, 2
  %v277 = vadd.f32 %v275, %v276
  %v278 = vrot.slane %v277, 1
  %v279 = vadd.f32 %v277, %v278
  %v280 = vmul.f32 %v279, %v160
  %v281 = vmul.f32 %v271, %v271
  %v282 = vsub.f32 %v280, %v281
  %v283 = vmax.f32 %v282, 0.0
  %v284 = vadd.f32 %v283, 1e-05
  %v285 = vrsqrt.pop %v284
  %v286 = vsub.f32 %v258, %v271
  %v287 = vmul.f32 %v286, %v285
  %v288 = vmax.f32 %v287, 0.0
  %v289 = vpack.c.bf16 %v288, %v288
  %v290 = vld [vmem:[%s5] sm:$0xf]
  %v291 = vld [vmem:[%s6] sm:$0x1]
  %v293 = vlaneseq
  %v294 = vshrl.u32 %v293, 7
  %v295 = vsub.s32 0, %v294
  %v296 = vrot.slane %v291, %v295
  %vm298 = vcmask 64512
  %v300 = vsel %vm298, %v289, 0
  %vm302 = vcmask 1043456
  %v304 = vsel %vm302, %v290, 0
  %306 = vmatprep.subr.bf16.mxu0 0
  %307 = vmatpush1.bf16.msra.mxu0 %v304
  %308 = vmatprep.subr.bf16.mxu0 0
  %309 = vmatpush1.bf16.msra.mxu0 0
  %310 = vmatprep.subr.bf16.mxu0 0
  %311 = vmatpush1.bf16.msra.mxu0 0
  %312 = vmatprep.subr.bf16.mxu0 0
  %313 = vmatpush1.bf16.msra.mxu0 0
  %314 = vmatprep.subr.bf16.mxu0 0
  %315 = vmatpush1.bf16.msra.mxu0 0
  %316 = vmatprep.subr.bf16.mxu0 0
  %317 = vmatpush1.bf16.msra.mxu0 0
  %318 = vmatprep.subr.bf16.mxu0 0
  %319 = vmatpush1.bf16.msra.mxu0 0
  %320 = vmatprep.subr.bf16.mxu0 0
  %321 = vmatpush1.bf16.msra.mxu0 0
  %322 = vmatprep.subr.bf16.mxu0 0
  %323 = vmatpush1.bf16.msra.mxu0 0
  %324 = vmatprep.subr.bf16.mxu0 0
  %325 = vmatpush1.bf16.msra.mxu0 0
  %326 = vmatprep.subr.bf16.mxu0 0
  %327 = vmatpush1.bf16.msra.mxu0 0
  %328 = vmatprep.subr.bf16.mxu0 0
  %329 = vmatpush1.bf16.msra.mxu0 0
  %330 = vmatprep.subr.bf16.mxu0 0
  %331 = vmatpush1.bf16.msra.mxu0 0
  %332 = vmatprep.subr.bf16.mxu0 0
  %333 = vmatpush1.bf16.msra.mxu0 0
  %334 = vmatprep.subr.bf16.mxu0 0
  %335 = vmatpush1.bf16.msra.mxu0 0
  %336 = vmatprep.subr.bf16.mxu0 0
  %337 = vmatpush1.bf16.msra.mxu0 0
  %338 = vmatprep.mubr.bf16.mxu0 0
  %339 = vmatmul.mubr.bf16.gmra.mrb[0].mxu0 %v300
  %v340 = vpop.f32.mrb[0].mxu0
  %v341 = vadd.f32 %v296, %v340
  %v342 = vpop.f32.mrb[0].mxu0
  %v343 = vpop.f32.mrb[0].mxu0
  %v344 = vpop.f32.mrb[0].mxu0
  %345 = vdwg.mxu0
  %v346 = vsel %vm152, %v341, 0.0
  %v347 = vrot.slane %v346, 4
  %v348 = vadd.f32 %v346, %v347
  %v349 = vrot.slane %v348, 2
  %v350 = vadd.f32 %v348, %v349
  %v351 = vrot.slane %v350, 1
  %v352 = vadd.f32 %v350, %v351
  %v353 = vmul.f32 %v352, %v160
  %v354 = vmul.f32 %v341, %v341
  %v355 = vsel %vm152, %v354, 0.0
  %v356 = vrot.slane %v355, 4
  %v357 = vadd.f32 %v355, %v356
  %v358 = vrot.slane %v357, 2
  %v359 = vadd.f32 %v357, %v358
  %v360 = vrot.slane %v359, 1
  %v361 = vadd.f32 %v359, %v360
  %v362 = vmul.f32 %v361, %v160
  %v363 = vmul.f32 %v353, %v353
  %v364 = vsub.f32 %v362, %v363
  %v365 = vmax.f32 %v364, 0.0
  %v366 = vadd.f32 %v365, 1e-05
  %v367 = vrsqrt.pop %v366
  %v368 = vsub.f32 %v341, %v353
  %v369 = vmul.f32 %v368, %v367
  %v370 = vmax.f32 %v369, 0.0
  %v371 = vpack.c.bf16 %v370, %v370
  %v372 = vld [vmem:[%s7] sm:$0xf]
  %v373 = vld [vmem:[%s7 + $0x4] sm:$0xf]
  %v374 = vld [vmem:[%s7 + $0x8] sm:$0xf]
  %v375 = vld [vmem:[%s7 + $0xc] sm:$0xf]
  %v376 = vld [vmem:[%s7 + $0x10] sm:$0xf]
  %v377 = vld [vmem:[%s7 + $0x14] sm:$0xf]
  %v378 = vld [vmem:[%s7 + $0x18] sm:$0xf]
  %v379 = vld [vmem:[%s7 + $0x1c] sm:$0xf]
  %v380 = vld [vmem:[%s8] sm:$0x1]
  %v382 = vlaneseq
  %v383 = vshrl.u32 %v382, 7
  %v384 = vsub.s32 0, %v383
  %v385 = vrot.slane %v380, %v384
  %v395 = vunpack.c.l.b16 %v372
  %v396 = vunpack.c.l.b16 %v373
  %v397 = vunpack.c.l.b16 %v374
  %v398 = vunpack.c.l.b16 %v375
  %v399 = vunpack.c.l.b16 %v376
  %v400 = vunpack.c.l.b16 %v377
  %v401 = vunpack.c.l.b16 %v378
  %v402 = vunpack.c.l.b16 %v379
  %v403 = vpack.c.b16 %v396, %v395
  %v404 = vpack.c.b16 %v398, %v397
  %v405 = vpack.c.b16 %v400, %v399
  %v406 = vpack.c.b16 %v402, %v401
  %v412 = vsel %vm219, %v371, 0
  %414 = vmatprep.subr.bf16.mxu0 0
  %415 = vmatpush1.bf16.msra.mxu0 %v403
  %416 = vmatprep.subr.bf16.mxu0 0
  %417 = vmatpush1.bf16.msra.mxu0 %v404
  %418 = vmatprep.subr.bf16.mxu0 0
  %419 = vmatpush1.bf16.msra.mxu0 %v405
  %420 = vmatprep.subr.bf16.mxu0 0
  %421 = vmatpush1.bf16.msra.mxu0 %v406
  %422 = vmatprep.subr.bf16.mxu0 0
  %423 = vmatpush1.bf16.msra.mxu0 0
  %424 = vmatprep.subr.bf16.mxu0 0
  %425 = vmatpush1.bf16.msra.mxu0 0
  %426 = vmatprep.subr.bf16.mxu0 0
  %427 = vmatpush1.bf16.msra.mxu0 0
  %428 = vmatprep.subr.bf16.mxu0 0
  %429 = vmatpush1.bf16.msra.mxu0 0
  %430 = vmatprep.subr.bf16.mxu0 0
  %431 = vmatpush1.bf16.msra.mxu0 0
  %432 = vmatprep.subr.bf16.mxu0 0
  %433 = vmatpush1.bf16.msra.mxu0 0
  %434 = vmatprep.subr.bf16.mxu0 0
  %435 = vmatpush1.bf16.msra.mxu0 0
  %436 = vmatprep.subr.bf16.mxu0 0
  %437 = vmatpush1.bf16.msra.mxu0 0
  %438 = vmatprep.subr.bf16.mxu0 0
  %439 = vmatpush1.bf16.msra.mxu0 0
  %440 = vmatprep.subr.bf16.mxu0 0
  %441 = vmatpush1.bf16.msra.mxu0 0
  %442 = vmatprep.subr.bf16.mxu0 0
  %443 = vmatpush1.bf16.msra.mxu0 0
  %444 = vmatprep.subr.bf16.mxu0 0
  %445 = vmatpush1.bf16.msra.mxu0 0
  %446 = vmatprep.mubr.bf16.mxu0 0
  %447 = vmatmul.mubr.bf16.gmra.mrb[0].mxu0 %v412
  %v448 = vpop.f32.mrb[0].mxu0
  %v449 = vadd.f32 %v385, %v448
  %v450 = vpop.f32.mrb[0].mxu0
  %v451 = vpop.f32.mrb[0].mxu0
  %v452 = vpop.f32.mrb[0].mxu0
  %453 = vdwg.mxu0
  %vm454 = vcmask 1041408
  %v455 = vsel %vm454, %v449, 0.0
  %v456 = vrot.slane %v455, 4
  %v457 = vadd.f32 %v455, %v456
  %v458 = vrot.slane %v457, 2
  %v459 = vadd.f32 %v457, %v458
  %v460 = vrot.slane %v459, 1
  %v461 = vadd.f32 %v459, %v460
  %v462 = vmul.f32 %v449, %v449
  %v463 = vsel %vm454, %v462, 0.0
  %v464 = vrot.slane %v463, 4
  %v465 = vadd.f32 %v463, %v464
  %v466 = vrot.slane %v465, 2
  %v467 = vadd.f32 %v465, %v466
  %v468 = vrot.slane %v467, 1
  %v469 = vadd.f32 %v467, %v468
  %v470 = vld [vmem:[%s9] sm:$0xff]
  %v471 = vld [vmem:[%s9 + $0x8] sm:$0xff]
  %v472 = vld [vmem:[%s9 + $0x10] sm:$0xff]
  %v473 = vld [vmem:[%s9 + $0x18] sm:$0xff]
  %v474 = vld [vmem:[%s9 + $0x20] sm:$0xff]
  %v475 = vld [vmem:[%s9 + $0x28] sm:$0xff]
  %v476 = vld [vmem:[%s9 + $0x30] sm:$0xff]
  %v477 = vld [vmem:[%s9 + $0x38] sm:$0xff]
  %v478 = vld [vmem:[%s9 + $0x40] sm:$0xff]
  %v479 = vld [vmem:[%s9 + $0x48] sm:$0xff]
  %v480 = vld [vmem:[%s9 + $0x50] sm:$0xff]
  %v481 = vld [vmem:[%s9 + $0x58] sm:$0xff]
  %v482 = vld [vmem:[%s9 + $0x60] sm:$0xff]
  %v483 = vld [vmem:[%s9 + $0x68] sm:$0xff]
  %v484 = vld [vmem:[%s9 + $0x70] sm:$0xff]
  %v485 = vld [vmem:[%s9 + $0x78] sm:$0xff]
  %486 = vmatprep.subr.mxu0 0.0
  %487 = vmatpush1.msra.mxu0 %v470
  %488 = vmatprep.subr.mxu0 0.0
  %489 = vmatpush1.msra.mxu0 %v471
  %490 = vmatprep.subr.mxu0 0.0
  %491 = vmatpush1.msra.mxu0 %v472
  %492 = vmatprep.subr.mxu0 0.0
  %493 = vmatpush1.msra.mxu0 %v473
  %494 = vmatprep.subr.mxu0 0.0
  %495 = vmatpush1.msra.mxu0 %v474
  %496 = vmatprep.subr.mxu0 0.0
  %497 = vmatpush1.msra.mxu0 %v475
  %498 = vmatprep.subr.mxu0 0.0
  %499 = vmatpush1.msra.mxu0 %v476
  %500 = vmatprep.subr.mxu0 0.0
  %501 = vmatpush1.msra.mxu0 %v477
  %502 = vmatprep.subr.mxu0 0.0
  %503 = vmatpush1.msra.mxu0 %v478
  %504 = vmatprep.subr.mxu0 0.0
  %505 = vmatpush1.msra.mxu0 %v479
  %506 = vmatprep.subr.mxu0 0.0
  %507 = vmatpush1.msra.mxu0 %v480
  %508 = vmatprep.subr.mxu0 0.0
  %509 = vmatpush1.msra.mxu0 %v481
  %510 = vmatprep.subr.mxu0 0.0
  %511 = vmatpush1.msra.mxu0 %v482
  %512 = vmatprep.subr.mxu0 0.0
  %513 = vmatpush1.msra.mxu0 %v483
  %514 = vmatprep.subr.mxu0 0.0
  %515 = vmatpush1.msra.mxu0 %v484
  %516 = vmatprep.subr.mxu0 0.0
  %517 = vmatpush1.msra.mxu0 %v485
  %518 = vmatprep.subr.mxu0 0.0
  %519 = vmatpush1.msra.mxu0 0.0
  %520 = vmatprep.subr.mxu0 0.0
  %521 = vmatpush1.msra.mxu0 0.0
  %522 = vmatprep.subr.mxu0 0.0
  %523 = vmatpush1.msra.mxu0 0.0
  %524 = vmatprep.subr.mxu0 0.0
  %525 = vmatpush1.msra.mxu0 0.0
  %526 = vmatprep.subr.mxu0 0.0
  %527 = vmatpush1.msra.mxu0 0.0
  %528 = vmatprep.subr.mxu0 0.0
  %529 = vmatpush1.msra.mxu0 0.0
  %530 = vmatprep.subr.mxu0 0.0
  %531 = vmatpush1.msra.mxu0 0.0
  %532 = vmatprep.subr.mxu0 0.0
  %533 = vmatpush1.msra.mxu0 0.0
  %534 = vmatprep.subr.mxu0 0.0
  %535 = vmatpush1.msra.mxu0 0.0
  %536 = vmatprep.subr.mxu0 0.0
  %537 = vmatpush1.msra.mxu0 0.0
  %538 = vmatprep.subr.mxu0 0.0
  %539 = vmatpush1.msra.mxu0 0.0
  %540 = vmatprep.subr.mxu0 0.0
  %541 = vmatpush1.msra.mxu0 0.0
  %542 = vmatprep.subr.mxu0 0.0
  %543 = vmatpush1.msra.mxu0 0.0
  %544 = vmatprep.subr.mxu0 0.0
  %545 = vmatpush1.msra.mxu0 0.0
  %546 = vmatprep.subr.mxu0 0.0
  %547 = vmatpush1.msra.mxu0 0.0
  %548 = vmatprep.subr.mxu0 0.0
  %549 = vmatpush1.msra.mxu0 0.0
  %550 = vmatprep.mubr.f32.mxu0 0.0
  %551 = vmatmul.mubr.f32.gmra.mrb[0].mxu0 %v461
  %v552 = vpop.f32.mrb[0].mxu0
  %v553 = vadd.f32 0.0, %v552
  %v554 = vpop.f32.mrb[0].mxu0
  %555 = vdwg.mxu0
  %556 = vmatprep.subr.mxu0 0.0
  %557 = vmatpush1.msra.mxu0 %v470
  %558 = vmatprep.subr.mxu0 0.0
  %559 = vmatpush1.msra.mxu0 %v471
  %560 = vmatprep.subr.mxu0 0.0
  %561 = vmatpush1.msra.mxu0 %v472
  %562 = vmatprep.subr.mxu0 0.0
  %563 = vmatpush1.msra.mxu0 %v473
  %564 = vmatprep.subr.mxu0 0.0
  %565 = vmatpush1.msra.mxu0 %v474
  %566 = vmatprep.subr.mxu0 0.0
  %567 = vmatpush1.msra.mxu0 %v475
  %568 = vmatprep.subr.mxu0 0.0
  %569 = vmatpush1.msra.mxu0 %v476
  %570 = vmatprep.subr.mxu0 0.0
  %571 = vmatpush1.msra.mxu0 %v477
  %572 = vmatprep.subr.mxu0 0.0
  %573 = vmatpush1.msra.mxu0 %v478
  %574 = vmatprep.subr.mxu0 0.0
  %575 = vmatpush1.msra.mxu0 %v479
  %576 = vmatprep.subr.mxu0 0.0
  %577 = vmatpush1.msra.mxu0 %v480
  %578 = vmatprep.subr.mxu0 0.0
  %579 = vmatpush1.msra.mxu0 %v481
  %580 = vmatprep.subr.mxu0 0.0
  %581 = vmatpush1.msra.mxu0 %v482
  %582 = vmatprep.subr.mxu0 0.0
  %583 = vmatpush1.msra.mxu0 %v483
  %584 = vmatprep.subr.mxu0 0.0
  %585 = vmatpush1.msra.mxu0 %v484
  %586 = vmatprep.subr.mxu0 0.0
  %587 = vmatpush1.msra.mxu0 %v485
  %588 = vmatprep.subr.mxu0 0.0
  %589 = vmatpush1.msra.mxu0 0.0
  %590 = vmatprep.subr.mxu0 0.0
  %591 = vmatpush1.msra.mxu0 0.0
  %592 = vmatprep.subr.mxu0 0.0
  %593 = vmatpush1.msra.mxu0 0.0
  %594 = vmatprep.subr.mxu0 0.0
  %595 = vmatpush1.msra.mxu0 0.0
  %596 = vmatprep.subr.mxu0 0.0
  %597 = vmatpush1.msra.mxu0 0.0
  %598 = vmatprep.subr.mxu0 0.0
  %599 = vmatpush1.msra.mxu0 0.0
  %600 = vmatprep.subr.mxu0 0.0
  %601 = vmatpush1.msra.mxu0 0.0
  %602 = vmatprep.subr.mxu0 0.0
  %603 = vmatpush1.msra.mxu0 0.0
  %604 = vmatprep.subr.mxu0 0.0
  %605 = vmatpush1.msra.mxu0 0.0
  %606 = vmatprep.subr.mxu0 0.0
  %607 = vmatpush1.msra.mxu0 0.0
  %608 = vmatprep.subr.mxu0 0.0
  %609 = vmatpush1.msra.mxu0 0.0
  %610 = vmatprep.subr.mxu0 0.0
  %611 = vmatpush1.msra.mxu0 0.0
  %612 = vmatprep.subr.mxu0 0.0
  %613 = vmatpush1.msra.mxu0 0.0
  %614 = vmatprep.subr.mxu0 0.0
  %615 = vmatpush1.msra.mxu0 0.0
  %616 = vmatprep.subr.mxu0 0.0
  %617 = vmatpush1.msra.mxu0 0.0
  %618 = vmatprep.subr.mxu0 0.0
  %619 = vmatpush1.msra.mxu0 0.0
  %620 = vmatprep.mubr.f32.mxu0 0.0
  %621 = vmatmul.mubr.f32.gmra.mrb[0].mxu0 %v469
  %v622 = vpop.f32.mrb[0].mxu0
  %v623 = vadd.f32 0.0, %v622
  %v624 = vpop.f32.mrb[0].mxu0
  %625 = vdwg.mxu0
  %v626 = vrcp.pop 32.0
  %v627 = vmul.f32 %v553, %v626
  %v628 = vmul.f32 %v623, %v626
  %v629 = vmul.f32 %v627, %v627
  %v630 = vsub.f32 %v628, %v629
  %v631 = vmax.f32 %v630, 0.0
  %v632 = vadd.f32 %v631, 1e-05
  %v633 = vrsqrt.pop %v632
  %v634 = vld [vmem:[%s10] sm:$0xff]
  %v636 = vsel %vm298, %v633, 0
  %638 = vmatprep.subr.mxu0 0.0
  %639 = vmatpush1.msra.mxu0 %v634
  %640 = vmatprep.subr.mxu0 0.0
  %641 = vmatpush1.msra.mxu0 0.0
  %642 = vmatprep.subr.mxu0 0.0
  %643 = vmatpush1.msra.mxu0 0.0
  %644 = vmatprep.subr.mxu0 0.0
  %645 = vmatpush1.msra.mxu0 0.0
  %646 = vmatprep.subr.mxu0 0.0
  %647 = vmatpush1.msra.mxu0 0.0
  %648 = vmatprep.subr.mxu0 0.0
  %649 = vmatpush1.msra.mxu0 0.0
  %650 = vmatprep.subr.mxu0 0.0
  %651 = vmatpush1.msra.mxu0 0.0
  %652 = vmatprep.subr.mxu0 0.0
  %653 = vmatpush1.msra.mxu0 0.0
  %654 = vmatprep.subr.mxu0 0.0
  %655 = vmatpush1.msra.mxu0 0.0
  %656 = vmatprep.subr.mxu0 0.0
  %657 = vmatpush1.msra.mxu0 0.0
  %658 = vmatprep.subr.mxu0 0.0
  %659 = vmatpush1.msra.mxu0 0.0
  %660 = vmatprep.subr.mxu0 0.0
  %661 = vmatpush1.msra.mxu0 0.0
  %662 = vmatprep.subr.mxu0 0.0
  %663 = vmatpush1.msra.mxu0 0.0
  %664 = vmatprep.subr.mxu0 0.0
  %665 = vmatpush1.msra.mxu0 0.0
  %666 = vmatprep.subr.mxu0 0.0
  %667 = vmatpush1.msra.mxu0 0.0
  %668 = vmatprep.subr.mxu0 0.0
  %669 = vmatpush1.msra.mxu0 0.0
  %670 = vmatprep.subr.mxu0 0.0
  %671 = vmatpush1.msra.mxu0 0.0
  %672 = vmatprep.subr.mxu0 0.0
  %673 = vmatpush1.msra.mxu0 0.0
  %674 = vmatprep.subr.mxu0 0.0
  %675 = vmatpush1.msra.mxu0 0.0
  %676 = vmatprep.subr.mxu0 0.0
  %677 = vmatpush1.msra.mxu0 0.0
  %678 = vmatprep.subr.mxu0 0.0
  %679 = vmatpush1.msra.mxu0 0.0
  %680 = vmatprep.subr.mxu0 0.0
  %681 = vmatpush1.msra.mxu0 0.0
  %682 = vmatprep.subr.mxu0 0.0
  %683 = vmatpush1.msra.mxu0 0.0
  %684 = vmatprep.subr.mxu0 0.0
  %685 = vmatpush1.msra.mxu0 0.0
  %686 = vmatprep.subr.mxu0 0.0
  %687 = vmatpush1.msra.mxu0 0.0
  %688 = vmatprep.subr.mxu0 0.0
  %689 = vmatpush1.msra.mxu0 0.0
  %690 = vmatprep.subr.mxu0 0.0
  %691 = vmatpush1.msra.mxu0 0.0
  %692 = vmatprep.subr.mxu0 0.0
  %693 = vmatpush1.msra.mxu0 0.0
  %694 = vmatprep.subr.mxu0 0.0
  %695 = vmatpush1.msra.mxu0 0.0
  %696 = vmatprep.subr.mxu0 0.0
  %697 = vmatpush1.msra.mxu0 0.0
  %698 = vmatprep.subr.mxu0 0.0
  %699 = vmatpush1.msra.mxu0 0.0
  %700 = vmatprep.subr.mxu0 0.0
  %701 = vmatpush1.msra.mxu0 0.0
  %702 = vmatprep.mubr.f32.mxu0 0.0
  %703 = vmatmul.mubr.f32.gmra.mrb[0].mxu0 %v636
  %v704 = vpop.f32.mrb[0].mxu0
  %v705 = vadd.f32 0.0, %v704
  %v706 = vpop.f32.mrb[0].mxu0
  %707 = vdwg.mxu0
  %v708 = vsub.f32 0.0, %v627
  %v709 = vmul.f32 %v708, %v633
  %v711 = vsel %vm298, %v709, 0
  %713 = vmatprep.subr.mxu0 0.0
  %714 = vmatpush1.msra.mxu0 %v634
  %715 = vmatprep.subr.mxu0 0.0
  %716 = vmatpush1.msra.mxu0 0.0
  %717 = vmatprep.subr.mxu0 0.0
  %718 = vmatpush1.msra.mxu0 0.0
  %719 = vmatprep.subr.mxu0 0.0
  %720 = vmatpush1.msra.mxu0 0.0
  %721 = vmatprep.subr.mxu0 0.0
  %722 = vmatpush1.msra.mxu0 0.0
  %723 = vmatprep.subr.mxu0 0.0
  %724 = vmatpush1.msra.mxu0 0.0
  %725 = vmatprep.subr.mxu0 0.0
  %726 = vmatpush1.msra.mxu0 0.0
  %727 = vmatprep.subr.mxu0 0.0
  %728 = vmatpush1.msra.mxu0 0.0
  %729 = vmatprep.subr.mxu0 0.0
  %730 = vmatpush1.msra.mxu0 0.0
  %731 = vmatprep.subr.mxu0 0.0
  %732 = vmatpush1.msra.mxu0 0.0
  %733 = vmatprep.subr.mxu0 0.0
  %734 = vmatpush1.msra.mxu0 0.0
  %735 = vmatprep.subr.mxu0 0.0
  %736 = vmatpush1.msra.mxu0 0.0
  %737 = vmatprep.subr.mxu0 0.0
  %738 = vmatpush1.msra.mxu0 0.0
  %739 = vmatprep.subr.mxu0 0.0
  %740 = vmatpush1.msra.mxu0 0.0
  %741 = vmatprep.subr.mxu0 0.0
  %742 = vmatpush1.msra.mxu0 0.0
  %743 = vmatprep.subr.mxu0 0.0
  %744 = vmatpush1.msra.mxu0 0.0
  %745 = vmatprep.subr.mxu0 0.0
  %746 = vmatpush1.msra.mxu0 0.0
  %747 = vmatprep.subr.mxu0 0.0
  %748 = vmatpush1.msra.mxu0 0.0
  %749 = vmatprep.subr.mxu0 0.0
  %750 = vmatpush1.msra.mxu0 0.0
  %751 = vmatprep.subr.mxu0 0.0
  %752 = vmatpush1.msra.mxu0 0.0
  %753 = vmatprep.subr.mxu0 0.0
  %754 = vmatpush1.msra.mxu0 0.0
  %755 = vmatprep.subr.mxu0 0.0
  %756 = vmatpush1.msra.mxu0 0.0
  %757 = vmatprep.subr.mxu0 0.0
  %758 = vmatpush1.msra.mxu0 0.0
  %759 = vmatprep.subr.mxu0 0.0
  %760 = vmatpush1.msra.mxu0 0.0
  %761 = vmatprep.subr.mxu0 0.0
  %762 = vmatpush1.msra.mxu0 0.0
  %763 = vmatprep.subr.mxu0 0.0
  %764 = vmatpush1.msra.mxu0 0.0
  %765 = vmatprep.subr.mxu0 0.0
  %766 = vmatpush1.msra.mxu0 0.0
  %767 = vmatprep.subr.mxu0 0.0
  %768 = vmatpush1.msra.mxu0 0.0
  %769 = vmatprep.subr.mxu0 0.0
  %770 = vmatpush1.msra.mxu0 0.0
  %771 = vmatprep.subr.mxu0 0.0
  %772 = vmatpush1.msra.mxu0 0.0
  %773 = vmatprep.subr.mxu0 0.0
  %774 = vmatpush1.msra.mxu0 0.0
  %775 = vmatprep.subr.mxu0 0.0
  %776 = vmatpush1.msra.mxu0 0.0
  %777 = vmatprep.mubr.f32.mxu0 0.0
  %778 = vmatmul.mubr.f32.gmra.mrb[0].mxu0 %v711
  %v779 = vpop.f32.mrb[0].mxu0
  %v780 = vadd.f32 0.0, %v779
  %v781 = vpop.f32.mrb[0].mxu0
  %782 = vdwg.mxu0
  %v783 = vlaneseq
  %v784 = vshrl.u32 %v783, 7
  %v785 = vsub.s32 0, %v784
  %v786 = vrot.slane %v705, %v785
  %v787 = vmul.f32 %v449, %v786
  %v788 = vlaneseq
  %v789 = vshrl.u32 %v788, 7
  %v790 = vsub.s32 0, %v789
  %v791 = vrot.slane %v780, %v790
  %v792 = vadd.f32 %v787, %v791
  %v793 = vmax.f32 %v792, 0.0
  %794 = vst [vmem:[%s11] sm:$0x3] %v793
  // Predicated region
  $region46: #{convae_forward.12} parent=0 // pred_check
    _
  $region47: #{convae_forward.12} parent=0 // pred_check_branch
    %796 = sbr.rel (0) target = $region49
  $region48: #{convae_forward.12} parent=0 // pred_region
    _
  $region49: #{convae_forward.12} parent=0 // pred_fallthru
    _
  // Predicated region
  $region50: #{convae_forward.12} parent=0 // pred_check
    _
  $region51: #{convae_forward.12} parent=0 // pred_check_branch
    %798 = sbr.rel (0) target = $region53
  $region52: #{convae_forward.12} parent=0 // pred_region
    _
  $region53: #{convae_forward.12} parent=0 // pred_fallthru
    _

// kernel: convae_forward.14
$region0: #{convae_forward.14}
  #allocation0 [shape = 'u32[]', space=smem, size = 0x4, offset = 0x4, fixed_abs, tag = 'smem constant byte address 0x4 - core index']
  #allocation1 [shape = 'u32[144,128]{1,0:T(1,128)}', space=vmem, size = 0x12000, scoped, tag = 'internal scratch']
  #allocation2 [shape = 'f32[9,64]{1,0:T(8,128)}', space=vmem, size = 0x2000, scoped, tag = 'scratch operand']
  %s0 = inlined_call_operand.vmem [shape: f32[2,8,64], index: 0, kind: input, shape index: {}]
  %s1 = inlined_call_operand.vmem [shape: f32[2,2,64], index: 1, kind: input, shape index: {}]
  %s2 = inlined_call_operand.vmem [shape: f32[64,8], index: 2, kind: input, shape index: {}]
  %s3 = inlined_call_operand.vmem [shape: f32[8,64], index: 3, kind: input, shape index: {}]
  %s4 = inlined_call_operand.vmem [shape: bf16[64,64], index: 4, kind: input, shape index: {}]
  %s5 = inlined_call_operand.vmem [shape: bf16[64,64], index: 5, kind: input, shape index: {}]
  %s6 = inlined_call_operand.vmem [shape: bf16[64,64], index: 6, kind: input, shape index: {}]
  %s7 = inlined_call_operand.vmem [shape: f32[1,64], index: 7, kind: input, shape index: {}]
  %s8 = inlined_call_operand.vmem [shape: f32[16,8], index: 8, kind: input, shape index: {}]
  %s9 = inlined_call_operand.vmem [shape: f32[16,8], index: 9, kind: input, shape index: {}]
  %s10 = inlined_call_operand.vmem [shape: f32[2,16,64], index: 10, kind: output, shape index: {0}]
  %s11 = inlined_call_operand.vmem [shape: f32[2,2,64], index: 11, kind: output, shape index: {1}]
  %12 = xla_tuple %s10, %s11
  %s13 = sld [smem:[#allocation0]]
  $region81: #{convae_forward.14} parent=0
    _
  %s15 = ssub.s32 1, %s13
  %s16 = scalar_select 0, %s15, %s13
  loop: start=0, step=1, limit=4
  $region2: #{convae_forward.14} parent=0 // loop_pre_header
    _
  $region3: #{convae_forward.14} parent=0 // loop_header
    %s18 = sphi 0, %s22
    %p19 = scmp.ge.s32.totalorder %s18, 4
    %s28 = sphi 0, %s30
    %s31 = sphi 0, %s28
    %s32 = sphi 0, %s31
    %s48 = sphi 0, %s32
    %s52 = sphi 0, %s52
    %s54 = sphi 0, %s52
    %s55 = sphi 0, %s54
    %s69 = sphi 0, %s55
    %s73 = sphi 0, %s73
    %s75 = sphi 0, %s73
    %s76 = sphi 0, %s75
    %s90 = sphi 0, %s76
    %s94 = sphi 0, %s94
    %s96 = sphi 0, %s94
    %s97 = sphi 0, %s96
    %s111 = sphi 0, %s97
    %s115 = sphi 0, %s115
    %s117 = sphi 0, %s115
    %s118 = sphi 0, %s117
    %s132 = sphi 0, %s118
    %s136 = sphi 0, %s136
    %s138 = sphi 0, %s136
    %s139 = sphi 0, %s138
    %s153 = sphi 0, %s139
    %s157 = sphi 0, %s157
    %s159 = sphi 0, %s157
    %s160 = sphi 0, %s159
    %s174 = sphi 0, %s160
    %s178 = sphi 0, %s178
    %s180 = sphi 0, %s178
    %s181 = sphi 0, %s180
    %s195 = sphi 0, %s181
    %s199 = sphi 0, %s199
    %s201 = sphi 0, %s199
    %s202 = sphi 0, %s201
    %s216 = sphi 0, %s202
    %s220 = sphi 0, %s220
    %s222 = sphi 0, %s220
    %s223 = sphi 0, %s222
    %s237 = sphi 0, %s223
    %s243 = sphi 0, %s245
    %s246 = sphi 0, %s243
    %s247 = sphi 0, %s246
    %s263 = sphi 0, %s247
    %s269 = sphi 0, %s271
    %s272 = sphi 0, %s269
    %s273 = sphi 0, %s272
    %s289 = sphi 0, %s273
  $region4: #{convae_forward.14} parent=0 // loop_header_branch
    %21 = sbr.rel (%p19) target = $region8
  $region5: #{convae_forward.14} parent=0 // loop_body
    %s23 = ssub.s32 %s18, 1
    %s24 = ssub.s32 %s18, 2
    %s25 = sadd.s32 %s18, 1
    %s26 = ssub.s32 %s18, %s25
    %p27 = scmp.eq.s32.totalorder %s26, 0
    %s29 = sadd.s32 %s28, 1
    %s30 = scalar_select %p27, %s28, %s29
    %p33 = pneg %p27
    %p34 = scmp.eq.s32.totalorder %s18, 1
    %p35 = por %p33, %p34
    %p36 = scmp.ne.s32.totalorder %s28, %s31
    %p37 = scmp.eq.s32.totalorder %s18, 0
    %p38 = por %p36, %p37
    %p39 = scmp.ne.s32.totalorder %s28, %s31
    %p40 = scmp.eq.s32.totalorder %s23, 1
    %p41 = por %p39, %p40
    %p42 = scmp.ne.s32.totalorder %s31, %s32
    %p43 = scmp.eq.s32.totalorder %s23, 0
    %p44 = por %p42, %p43
    %p45 = scmp.ne.s32.totalorder %s31, %s32
    %p46 = scmp.eq.s32.totalorder %s24, 1
    %p47 = por %p45, %p46
    %p49 = scmp.ne.s32.totalorder %s32, %s48
    %p50 = scmp.eq.s32.totalorder %s24, 0
    %p51 = por %p49, %p50
    %s53 = sadd.s32 %s52, 1
    %p56 = scmp.eq.s32.totalorder %s18, 1
    %p57 = scmp.ne.s32.totalorder %s52, %s54
    %p58 = scmp.eq.s32.totalorder %s18, 0
    %p59 = por %p57, %p58
    %p60 = scmp.ne.s32.totalorder %s52, %s54
    %p61 = scmp.eq.s32.totalorder %s23, 1
    %p62 = por %p60, %p61
    %p63 = scmp.ne.s32.totalorder %s54, %s55
    %p64 = scmp.eq.s32.totalorder %s23, 0
    %p65 = por %p63, %p64
    %p66 = scmp.ne.s32.totalorder %s54, %s55
    %p67 = scmp.eq.s32.totalorder %s24, 1
    %p68 = por %p66, %p67
    %p70 = scmp.ne.s32.totalorder %s55, %s69
    %p71 = scmp.eq.s32.totalorder %s24, 0
    %p72 = por %p70, %p71
    %s74 = sadd.s32 %s73, 1
    %p77 = scmp.eq.s32.totalorder %s18, 1
    %p78 = scmp.ne.s32.totalorder %s73, %s75
    %p79 = scmp.eq.s32.totalorder %s18, 0
    %p80 = por %p78, %p79
    %p81 = scmp.ne.s32.totalorder %s73, %s75
    %p82 = scmp.eq.s32.totalorder %s23, 1
    %p83 = por %p81, %p82
    %p84 = scmp.ne.s32.totalorder %s75, %s76
    %p85 = scmp.eq.s32.totalorder %s23, 0
    %p86 = por %p84, %p85
    %p87 = scmp.ne.s32.totalorder %s75, %s76
    %p88 = scmp.eq.s32.totalorder %s24, 1
    %p89 = por %p87, %p88
    %p91 = scmp.ne.s32.totalorder %s76, %s90
    %p92 = scmp.eq.s32.totalorder %s24, 0
    %p93 = por %p91, %p92
    %s95 = sadd.s32 %s94, 1
    %p98 = scmp.eq.s32.totalorder %s18, 1
    %p99 = scmp.ne.s32.totalorder %s94, %s96
    %p100 = scmp.eq.s32.totalorder %s18, 0
    %p101 = por %p99, %p100
    %p102 = scmp.ne.s32.totalorder %s94, %s96
    %p103 = scmp.eq.s32.totalorder %s23, 1
    %p104 = por %p102, %p103
    %p105 = scmp.ne.s32.totalorder %s96, %s97
    %p106 = scmp.eq.s32.totalorder %s23, 0
    %p107 = por %p105, %p106
    %p108 = scmp.ne.s32.totalorder %s96, %s97
    %p109 = scmp.eq.s32.totalorder %s24, 1
    %p110 = por %p108, %p109
    %p112 = scmp.ne.s32.totalorder %s97, %s111
    %p113 = scmp.eq.s32.totalorder %s24, 0
    %p114 = por %p112, %p113
    %s116 = sadd.s32 %s115, 1
    %p119 = scmp.eq.s32.totalorder %s18, 1
    %p120 = scmp.ne.s32.totalorder %s115, %s117
    %p121 = scmp.eq.s32.totalorder %s18, 0
    %p122 = por %p120, %p121
    %p123 = scmp.ne.s32.totalorder %s115, %s117
    %p124 = scmp.eq.s32.totalorder %s23, 1
    %p125 = por %p123, %p124
    %p126 = scmp.ne.s32.totalorder %s117, %s118
    %p127 = scmp.eq.s32.totalorder %s23, 0
    %p128 = por %p126, %p127
    %p129 = scmp.ne.s32.totalorder %s117, %s118
    %p130 = scmp.eq.s32.totalorder %s24, 1
    %p131 = por %p129, %p130
    %p133 = scmp.ne.s32.totalorder %s118, %s132
    %p134 = scmp.eq.s32.totalorder %s24, 0
    %p135 = por %p133, %p134
    %s137 = sadd.s32 %s136, 1
    %p140 = scmp.eq.s32.totalorder %s18, 1
    %p141 = scmp.ne.s32.totalorder %s136, %s138
    %p142 = scmp.eq.s32.totalorder %s18, 0
    %p143 = por %p141, %p142
    %p144 = scmp.ne.s32.totalorder %s136, %s138
    %p145 = scmp.eq.s32.totalorder %s23, 1
    %p146 = por %p144, %p145
    %p147 = scmp.ne.s32.totalorder %s138, %s139
    %p148 = scmp.eq.s32.totalorder %s23, 0
    %p149 = por %p147, %p148
    %p150 = scmp.ne.s32.totalorder %s138, %s139
    %p151 = scmp.eq.s32.totalorder %s24, 1
    %p152 = por %p150, %p151
    %p154 = scmp.ne.s32.totalorder %s139, %s153
    %p155 = scmp.eq.s32.totalorder %s24, 0
    %p156 = por %p154, %p155
    %s158 = sadd.s32 %s157, 1
    %p161 = scmp.eq.s32.totalorder %s18, 1
    %p162 = scmp.ne.s32.totalorder %s157, %s159
    %p163 = scmp.eq.s32.totalorder %s18, 0
    %p164 = por %p162, %p163
    %p165 = scmp.ne.s32.totalorder %s157, %s159
    %p166 = scmp.eq.s32.totalorder %s23, 1
    %p167 = por %p165, %p166
    %p168 = scmp.ne.s32.totalorder %s159, %s160
    %p169 = scmp.eq.s32.totalorder %s23, 0
    %p170 = por %p168, %p169
    %p171 = scmp.ne.s32.totalorder %s159, %s160
    %p172 = scmp.eq.s32.totalorder %s24, 1
    %p173 = por %p171, %p172
    %p175 = scmp.ne.s32.totalorder %s160, %s174
    %p176 = scmp.eq.s32.totalorder %s24, 0
    %p177 = por %p175, %p176
    %s179 = sadd.s32 %s178, 1
    %p182 = scmp.eq.s32.totalorder %s18, 1
    %p183 = scmp.ne.s32.totalorder %s178, %s180
    %p184 = scmp.eq.s32.totalorder %s18, 0
    %p185 = por %p183, %p184
    %p186 = scmp.ne.s32.totalorder %s178, %s180
    %p187 = scmp.eq.s32.totalorder %s23, 1
    %p188 = por %p186, %p187
    %p189 = scmp.ne.s32.totalorder %s180, %s181
    %p190 = scmp.eq.s32.totalorder %s23, 0
    %p191 = por %p189, %p190
    %p192 = scmp.ne.s32.totalorder %s180, %s181
    %p193 = scmp.eq.s32.totalorder %s24, 1
    %p194 = por %p192, %p193
    %p196 = scmp.ne.s32.totalorder %s181, %s195
    %p197 = scmp.eq.s32.totalorder %s24, 0
    %p198 = por %p196, %p197
    %s200 = sadd.s32 %s199, 1
    %p203 = scmp.eq.s32.totalorder %s18, 1
    %p204 = scmp.ne.s32.totalorder %s199, %s201
    %p205 = scmp.eq.s32.totalorder %s18, 0
    %p206 = por %p204, %p205
    %p207 = scmp.ne.s32.totalorder %s199, %s201
    %p208 = scmp.eq.s32.totalorder %s23, 1
    %p209 = por %p207, %p208
    %p210 = scmp.ne.s32.totalorder %s201, %s202
    %p211 = scmp.eq.s32.totalorder %s23, 0
    %p212 = por %p210, %p211
    %p213 = scmp.ne.s32.totalorder %s201, %s202
    %p214 = scmp.eq.s32.totalorder %s24, 1
    %p215 = por %p213, %p214
    %p217 = scmp.ne.s32.totalorder %s202, %s216
    %p218 = scmp.eq.s32.totalorder %s24, 0
    %p219 = por %p217, %p218
    %s221 = sadd.s32 %s220, 1
    %p224 = scmp.eq.s32.totalorder %s18, 1
    %p225 = scmp.ne.s32.totalorder %s220, %s222
    %p226 = scmp.eq.s32.totalorder %s18, 0
    %p227 = por %p225, %p226
    %p228 = scmp.ne.s32.totalorder %s220, %s222
    %p229 = scmp.eq.s32.totalorder %s23, 1
    %p230 = por %p228, %p229
    %p231 = scmp.ne.s32.totalorder %s222, %s223
    %p232 = scmp.eq.s32.totalorder %s23, 0
    %p233 = por %p231, %p232
    %p234 = scmp.ne.s32.totalorder %s222, %s223
    %p235 = scmp.eq.s32.totalorder %s24, 1
    %p236 = por %p234, %p235
    %p238 = scmp.ne.s32.totalorder %s223, %s237
    %p239 = scmp.eq.s32.totalorder %s24, 0
    %p240 = por %p238, %p239
    %s241 = ssub.s32 %s18, %s25
    %p242 = scmp.eq.s32.totalorder %s241, 0
    %s244 = sadd.s32 %s243, 1
    %s245 = scalar_select %p242, %s243, %s244
    %p248 = pneg %p242
    %p249 = scmp.eq.s32.totalorder %s18, 1
    %p250 = por %p248, %p249
    %p251 = scmp.ne.s32.totalorder %s243, %s246
    %p252 = scmp.eq.s32.totalorder %s18, 0
    %p253 = por %p251, %p252
    %p254 = scmp.ne.s32.totalorder %s243, %s246
    %p255 = scmp.eq.s32.totalorder %s23, 1
    %p256 = por %p254, %p255
    %p257 = scmp.ne.s32.totalorder %s246, %s247
    %p258 = scmp.eq.s32.totalorder %s23, 0
    %p259 = por %p257, %p258
    %p260 = scmp.ne.s32.totalorder %s246, %s247
    %p261 = scmp.eq.s32.totalorder %s24, 1
    %p262 = por %p260, %p261
    %p264 = scmp.ne.s32.totalorder %s247, %s263
    %p265 = scmp.eq.s32.totalorder %s24, 0
    %p266 = por %p264, %p265
    %s267 = ssub.s32 %s18, %s25
    %p268 = scmp.eq.s32.totalorder %s267, 0
    %s270 = sadd.s32 %s269, 1
    %s271 = scalar_select %p268, %s269, %s270
    %p274 = pneg %p268
    %p275 = scmp.eq.s32.totalorder %s18, 1
    %p276 = por %p274, %p275
    %p277 = scmp.ne.s32.totalorder %s269, %s272
    %p278 = scmp.eq.s32.totalorder %s18, 0
    %p279 = por %p277, %p278
    %p280 = scmp.ne.s32.totalorder %s269, %s272
    %p281 = scmp.eq.s32.totalorder %s23, 1
    %p282 = por %p280, %p281
    %p283 = scmp.ne.s32.totalorder %s272, %s273
    %p284 = scmp.eq.s32.totalorder %s23, 0
    %p285 = por %p283, %p284
    %p286 = scmp.ne.s32.totalorder %s272, %s273
    %p287 = scmp.eq.s32.totalorder %s24, 1
    %p288 = por %p286, %p287
    %p290 = scmp.ne.s32.totalorder %s273, %s289
    %p291 = scmp.eq.s32.totalorder %s24, 0
    %p292 = por %p290, %p291
    %p293 = scmp.le.s32.totalorder 1, %s18
    %p294 = scmp.lt.s32.totalorder %s18, 3
    %p295 = pnand %p293, %p294
    %p296 = pneg %p295
    // Predicated region
    $region9: #{convae_forward.14} parent=5 // pred_check
      _
    $region10: #{convae_forward.14} parent=5 // pred_check_branch
      %298 = sbr.rel (%p295) target = $region12
    $region11: #{convae_forward.14} parent=5 // pred_region
      %s299 = ssub.s32 %s18, 1
      // Predicated region
      $region13: #{convae_forward.14} parent=11 // pred_check
        %p300 = pneg %p65
      $region14: #{convae_forward.14} parent=11 // pred_check_branch
        %302 = sbr.rel (%p300) target = $region16
      $region15: #{convae_forward.14} parent=11 // pred_region
        _
      $region16: #{convae_forward.14} parent=11 // pred_fallthru
        _
      // Predicated region
      $region17: #{convae_forward.14} parent=11 // pred_check
        %p303 = pneg %p86
      $region18: #{convae_forward.14} parent=11 // pred_check_branch
        %305 = sbr.rel (%p303) target = $region20
      $region19: #{convae_forward.14} parent=11 // pred_region
        _
      $region20: #{convae_forward.14} parent=11 // pred_fallthru
        _
      // Predicated region
      $region21: #{convae_forward.14} parent=11 // pred_check
        %p306 = pneg %p107
      $region22: #{convae_forward.14} parent=11 // pred_check_branch
        %308 = sbr.rel (%p306) target = $region24
      $region23: #{convae_forward.14} parent=11 // pred_region
        _
      $region24: #{convae_forward.14} parent=11 // pred_fallthru
        _
      // Predicated region
      $region25: #{convae_forward.14} parent=11 // pred_check
        %p309 = pneg %p128
      $region26: #{convae_forward.14} parent=11 // pred_check_branch
        %311 = sbr.rel (%p309) target = $region28
      $region27: #{convae_forward.14} parent=11 // pred_region
        _
      $region28: #{convae_forward.14} parent=11 // pred_fallthru
        _
      // Predicated region
      $region29: #{convae_forward.14} parent=11 // pred_check
        %p312 = pneg %p149
      $region30: #{convae_forward.14} parent=11 // pred_check_branch
        %314 = sbr.rel (%p312) target = $region32
      $region31: #{convae_forward.14} parent=11 // pred_region
        _
      $region32: #{convae_forward.14} parent=11 // pred_fallthru
        _
      // Predicated region
      $region33: #{convae_forward.14} parent=11 // pred_check
        %p315 = pneg %p170
      $region34: #{convae_forward.14} parent=11 // pred_check_branch
        %317 = sbr.rel (%p315) target = $region36
      $region35: #{convae_forward.14} parent=11 // pred_region
        _
      $region36: #{convae_forward.14} parent=11 // pred_fallthru
        _
      // Predicated region
      $region37: #{convae_forward.14} parent=11 // pred_check
        %p318 = pneg %p191
      $region38: #{convae_forward.14} parent=11 // pred_check_branch
        %320 = sbr.rel (%p318) target = $region40
      $region39: #{convae_forward.14} parent=11 // pred_region
        _
      $region40: #{convae_forward.14} parent=11 // pred_fallthru
        _
      // Predicated region
      $region41: #{convae_forward.14} parent=11 // pred_check
        %p321 = pneg %p212
      $region42: #{convae_forward.14} parent=11 // pred_check_branch
        %323 = sbr.rel (%p321) target = $region44
      $region43: #{convae_forward.14} parent=11 // pred_region
        _
      $region44: #{convae_forward.14} parent=11 // pred_fallthru
        _
      // Predicated region
      $region45: #{convae_forward.14} parent=11 // pred_check
        %p324 = pneg %p233
      $region46: #{convae_forward.14} parent=11 // pred_check_branch
        %326 = sbr.rel (%p324) target = $region48
      $region47: #{convae_forward.14} parent=11 // pred_region
        _
      $region48: #{convae_forward.14} parent=11 // pred_fallthru
        _
    $region12: #{convae_forward.14} parent=5 // pred_fallthru
      _
    %p327 = scmp.lt.s32.totalorder %s18, 2
    // Predicated region
    $region49: #{convae_forward.14} parent=5 // pred_check
      %p328 = pneg %p327
    $region50: #{convae_forward.14} parent=5 // pred_check_branch
      %330 = sbr.rel (%p328) target = $region52
    $region51: #{convae_forward.14} parent=5 // pred_region
      // Predicated region
      $region53: #{convae_forward.14} parent=51 // pred_check
        %p331 = pneg %p38
      $region54: #{convae_forward.14} parent=51 // pred_check_branch
        %333 = sbr.rel (%p331) target = $region56
      $region55: #{convae_forward.14} parent=51 // pred_region
        %p334 = scmp.lt.s32.totalorder %s18, 1
        %s335 = scalar_select %p334, %s18, 1
        %s336 = smul.addr %s335, 8
        %s337 = scalar_lea.vmem %s0, %s336
      $region56: #{convae_forward.14} parent=51 // pred_fallthru
        _
    $region52: #{convae_forward.14} parent=5 // pred_fallthru
      _
    %p338 = scmp.le.s32.totalorder 1, %s18
    %p339 = scmp.lt.s32.totalorder %s18, 3
    %p340 = pnand %p338, %p339
    %p341 = pneg %p340
    // Predicated region
    $region57: #{convae_forward.14} parent=5 // pred_check
      _
    $region58: #{convae_forward.14} parent=5 // pred_check_branch
      %343 = sbr.rel (%p340) target = $region60
    $region59: #{convae_forward.14} parent=5 // pred_region
      %s344 = ssub.s32 %s18, 1
      %p345 = scmp.lt.s32.totalorder %s23, 1
      %s346 = scalar_select %p345, %s23, 1
      %s347 = smul.addr %s346, 8
      %s348 = scalar_lea.vmem %s0, %s347
      %p349 = pneg %p44
      %p350 = pneg %p41
      %p351 = pneg %p65
      %p352 = pneg %p62
      %p353 = pneg %p86
      %p354 = pneg %p83
      %p355 = pneg %p107
      %p356 = pneg %p104
      %p357 = pneg %p128
      %p358 = pneg %p125
      %p359 = pneg %p149
      %p360 = pneg %p146
      %p361 = pneg %p170
      %p362 = pneg %p167
      %p363 = pneg %p191
      %p364 = pneg %p188
      %p365 = pneg %p212
      %p366 = pneg %p209
      %p367 = pneg %p233
      %p368 = pneg %p230
      %p369 = pneg %p259
      %p370 = pneg %p256
      %p371 = scmp.lt.s32.totalorder %s23, 1
      %s372 = scalar_select %p371, %s23, 1
      %s373 = smul.addr %s372, 2
      %s374 = smul.addr %s373, 8
      %s375 = scalar_lea.vmem %s10, %s374
      %p376 = pneg %p285
      %p377 = pneg %p282
      %p378 = scmp.lt.s32.totalorder %s23, 1
      %s379 = scalar_select %p378, %s23, 1
      %s380 = smul.addr %s379, 2
      %s381 = scalar_lea.vmem %s11, %s380
      %p382 = scmp.lt.s32.totalorder %s23, 1
      %s383 = scalar_select %p382, %s23, 1
      %s384 = smul.addr %s383, 8
      %s385 = scalar_lea.vmem %s0, %s384
      %p386 = scmp.lt.s32.totalorder %s23, 1
      %s387 = scalar_select %p386, %s23, 1
      %s388 = smul.addr %s387, 2
      %s389 = smul.addr %s388, 8
      %s390 = scalar_lea.vmem %s10, %s389
      %p391 = scmp.lt.s32.totalorder %s23, 1
      %s392 = scalar_select %p391, %s23, 1
      %s393 = smul.addr %s392, 2
      %s394 = scalar_lea.vmem %s11, %s393
      %v396 = vld [vmem:[%s385] sm:$0xff]
      %v397 = vld [vmem:[%s1] sm:$0x3]
      %v398 = vld [vmem:[%s1 + $0x2] sm:$0x3]
      %v399 = vld [vmem:[%s2] sm:$0xff]
      %v400 = vld [vmem:[%s2 + $0x8] sm:$0xff]
      %v401 = vld [vmem:[%s2 + $0x10] sm:$0xff]
      %v402 = vld [vmem:[%s2 + $0x18] sm:$0xff]
      %v403 = vld [vmem:[%s2 + $0x20] sm:$0xff]
      %v404 = vld [vmem:[%s2 + $0x28] sm:$0xff]
      %v405 = vld [vmem:[%s2 + $0x30] sm:$0xff]
      %v406 = vld [vmem:[%s2 + $0x38] sm:$0xff]
      %v407 = vld [vmem:[%s3] sm:$0xff]
      %vm408 = vcmask 517120
      %v409 = vsel %vm408, %v397, 0.0
      %v410 = vsel %vm408, %v398, 0.0
      %v411 = vadd.f32 %v409, %v410
      %vm412 = vcmask 523264
      %v414 = vsel %vm412, %v411, 0
      %416 = vmatprep.subr.mxu0 0.0
      %417 = vmatpush1.msra.mxu0 %v399
      %418 = vmatprep.subr.mxu0 0.0
      %419 = vmatpush1.msra.mxu0 %v400
      %420 = vmatprep.subr.mxu0 0.0
      %421 = vmatpush1.msra.mxu0 %v401
      %422 = vmatprep.subr.mxu0 0.0
      %423 = vmatpush1.msra.mxu0 %v402
      %424 = vmatprep.subr.mxu0 0.0
      %425 = vmatpush1.msra.mxu0 %v403
      %426 = vmatprep.subr.mxu0 0.0
      %427 = vmatpush1.msra.mxu0 %v404
      %428 = vmatprep.subr.mxu0 0.0
      %429 = vmatpush1.msra.mxu0 %v405
      %430 = vmatprep.subr.mxu0 0.0
      %431 = vmatpush1.msra.mxu0 %v406
      %432 = vmatprep.subr.mxu0 0.0
      %433 = vmatpush1.msra.mxu0 0.0
      %434 = vmatprep.subr.mxu0 0.0
      %435 = vmatpush1.msra.mxu0 0.0
      %436 = vmatprep.subr.mxu0 0.0
      %437 = vmatpush1.msra.mxu0 0.0
      %438 = vmatprep.subr.mxu0 0.0
      %439 = vmatpush1.msra.mxu0 0.0
      %440 = vmatprep.subr.mxu0 0.0
      %441 = vmatpush1.msra.mxu0 0.0
      %442 = vmatprep.subr.mxu0 0.0
      %443 = vmatpush1.msra.mxu0 0.0
      %444 = vmatprep.subr.mxu0 0.0
      %445 = vmatpush1.msra.mxu0 0.0
      %446 = vmatprep.subr.mxu0 0.0
      %447 = vmatpush1.msra.mxu0 0.0
      %448 = vmatprep.subr.mxu0 0.0
      %449 = vmatpush1.msra.mxu0 0.0
      %450 = vmatprep.subr.mxu0 0.0
      %451 = vmatpush1.msra.mxu0 0.0
      %452 = vmatprep.subr.mxu0 0.0
      %453 = vmatpush1.msra.mxu0 0.0
      %454 = vmatprep.subr.mxu0 0.0
      %455 = vmatpush1.msra.mxu0 0.0
      %456 = vmatprep.subr.mxu0 0.0
      %457 = vmatpush1.msra.mxu0 0.0
      %458 = vmatprep.subr.mxu0 0.0
      %459 = vmatpush1.msra.mxu0 0.0
      %460 = vmatprep.subr.mxu0 0.0
      %461 = vmatpush1.msra.mxu0 0.0
      %462 = vmatprep.subr.mxu0 0.0
      %463 = vmatpush1.msra.mxu0 0.0
      %464 = vmatprep.subr.mxu0 0.0
      %465 = vmatpush1.msra.mxu0 0.0
      %466 = vmatprep.subr.mxu0 0.0
      %467 = vmatpush1.msra.mxu0 0.0
      %468 = vmatprep.subr.mxu0 0.0
      %469 = vmatpush1.msra.mxu0 0.0
      %470 = vmatprep.subr.mxu0 0.0
      %471 = vmatpush1.msra.mxu0 0.0
      %472 = vmatprep.subr.mxu0 0.0
      %473 = vmatpush1.msra.mxu0 0.0
      %474 = vmatprep.subr.mxu0 0.0
      %475 = vmatpush1.msra.mxu0 0.0
      %476 = vmatprep.subr.mxu0 0.0
      %477 = vmatpush1.msra.mxu0 0.0
      %478 = vmatprep.subr.mxu0 0.0
      %479 = vmatpush1.msra.mxu0 0.0
      %480 = vmatprep.mubr.f32.mxu0 0.0
      %481 = vmatmul.mubr.f32.gmra.mrb[0].mxu0 %v414
      %v482 = vpop.f32.mrb[0].mxu0
      %v483 = vadd.f32 0.0, %v482
      %v484 = vpop.f32.mrb[0].mxu0
      %485 = vdwg.mxu0
      %v486 = vrot.slane %v411, 1
      %v487 = vsel %vm412, %v486, 0
      %489 = vmatprep.subr.mxu0 0.0
      %490 = vmatpush1.msra.mxu0 %v399
      %491 = vmatprep.subr.mxu0 0.0
      %492 = vmatpush1.msra.mxu0 %v400
      %493 = vmatprep.subr.mxu0 0.0
      %494 = vmatpush1.msra.mxu0 %v401
      %495 = vmatprep.subr.mxu0 0.0
      %496 = vmatpush1.msra.mxu0 %v402
      %497 = vmatprep.subr.mxu0 0.0
      %498 = vmatpush1.msra.mxu0 %v403
      %499 = vmatprep.subr.mxu0 0.0
      %500 = vmatpush1.msra.mxu0 %v404
      %501 = vmatprep.subr.mxu0 0.0
      %502 = vmatpush1.msra.mxu0 %v405
      %503 = vmatprep.subr.mxu0 0.0
      %504 = vmatpush1.msra.mxu0 %v406
      %505 = vmatprep.subr.mxu0 0.0
      %506 = vmatpush1.msra.mxu0 0.0
      %507 = vmatprep.subr.mxu0 0.0
      %508 = vmatpush1.msra.mxu0 0.0
      %509 = vmatprep.subr.mxu0 0.0
      %510 = vmatpush1.msra.mxu0 0.0
      %511 = vmatprep.subr.mxu0 0.0
      %512 = vmatpush1.msra.mxu0 0.0
      %513 = vmatprep.subr.mxu0 0.0
      %514 = vmatpush1.msra.mxu0 0.0
      %515 = vmatprep.subr.mxu0 0.0
      %516 = vmatpush1.msra.mxu0 0.0
      %517 = vmatprep.subr.mxu0 0.0
      %518 = vmatpush1.msra.mxu0 0.0
      %519 = vmatprep.subr.mxu0 0.0
      %520 = vmatpush1.msra.mxu0 0.0
      %521 = vmatprep.subr.mxu0 0.0
      %522 = vmatpush1.msra.mxu0 0.0
      %523 = vmatprep.subr.mxu0 0.0
      %524 = vmatpush1.msra.mxu0 0.0
      %525 = vmatprep.subr.mxu0 0.0
      %526 = vmatpush1.msra.mxu0 0.0
      %527 = vmatprep.subr.mxu0 0.0
      %528 = vmatpush1.msra.mxu0 0.0
      %529 = vmatprep.subr.mxu0 0.0
      %530 = vmatpush1.msra.mxu0 0.0
      %531 = vmatprep.subr.mxu0 0.0
      %532 = vmatpush1.msra.mxu0 0.0
      %533 = vmatprep.subr.mxu0 0.0
      %534 = vmatpush1.msra.mxu0 0.0
      %535 = vmatprep.subr.mxu0 0.0
      %536 = vmatpush1.msra.mxu0 0.0
      %537 = vmatprep.subr.mxu0 0.0
      %538 = vmatpush1.msra.mxu0 0.0
      %539 = vmatprep.subr.mxu0 0.0
      %540 = vmatpush1.msra.mxu0 0.0
      %541 = vmatprep.subr.mxu0 0.0
      %542 = vmatpush1.msra.mxu0 0.0
      %543 = vmatprep.subr.mxu0 0.0
      %544 = vmatpush1.msra.mxu0 0.0
      %545 = vmatprep.subr.mxu0 0.0
      %546 = vmatpush1.msra.mxu0 0.0
      %547 = vmatprep.subr.mxu0 0.0
      %548 = vmatpush1.msra.mxu0 0.0
      %549 = vmatprep.subr.mxu0 0.0
      %550 = vmatpush1.msra.mxu0 0.0
      %551 = vmatprep.subr.mxu0 0.0
      %552 = vmatpush1.msra.mxu0 0.0
      %553 = vmatprep.mubr.f32.mxu0 0.0
      %554 = vmatmul.mubr.f32.gmra.mrb[0].mxu0 %v487
      %v555 = vpop.f32.mrb[0].mxu0
      %v556 = vadd.f32 0.0, %v555
      %v557 = vpop.f32.mrb[0].mxu0
      %558 = vdwg.mxu0
      %v559 = vrcp.pop 128.0
      %v560 = vmul.f32 %v483, %v559
      %v561 = vmul.f32 %v556, %v559
      %v562 = vmul.f32 %v560, %v560
      %v563 = vsub.f32 %v561, %v562
      %v564 = vmax.f32 %v563, 0.0
      %v565 = vadd.f32 %v564, 1e-05
      %v566 = vrsqrt.pop %v565
      %vm567 = vcmask 64512
      %v569 = vsel %vm567, %v566, 0
      %571 = vmatprep.subr.mxu0 0.0
      %572 = vmatpush1.msra.mxu0 %v407
      %573 = vmatprep.subr.mxu0 0.0
      %574 = vmatpush1.msra.mxu0 0.0
      %575 = vmatprep.subr.mxu0 0.0
      %576 = vmatpush1.msra.mxu0 0.0
      %577 = vmatprep.subr.mxu0 0.0
      %578 = vmatpush1.msra.mxu0 0.0
      %579 = vmatprep.subr.mxu0 0.0
      %580 = vmatpush1.msra.mxu0 0.0
      %581 = vmatprep.subr.mxu0 0.0
      %582 = vmatpush1.msra.mxu0 0.0
      %583 = vmatprep.subr.mxu0 0.0
      %584 = vmatpush1.msra.mxu0 0.0
      %585 = vmatprep.subr.mxu0 0.0
      %586 = vmatpush1.msra.mxu0 0.0
      %587 = vmatprep.subr.mxu0 0.0
      %588 = vmatpush1.msra.mxu0 0.0
      %589 = vmatprep.subr.mxu0 0.0
      %590 = vmatpush1.msra.mxu0 0.0
      %591 = vmatprep.subr.mxu0 0.0
      %592 = vmatpush1.msra.mxu0 0.0
      %593 = vmatprep.subr.mxu0 0.0
      %594 = vmatpush1.msra.mxu0 0.0
      %595 = vmatprep.subr.mxu0 0.0
      %596 = vmatpush1.msra.mxu0 0.0
      %597 = vmatprep.subr.mxu0 0.0
      %598 = vmatpush1.msra.mxu0 0.0
      %599 = vmatprep.subr.mxu0 0.0
      %600 = vmatpush1.msra.mxu0 0.0
      %601 = vmatprep.subr.mxu0 0.0
      %602 = vmatpush1.msra.mxu0 0.0
      %603 = vmatprep.subr.mxu0 0.0
      %604 = vmatpush1.msra.mxu0 0.0
      %605 = vmatprep.subr.mxu0 0.0
      %606 = vmatpush1.msra.mxu0 0.0
      %607 = vmatprep.subr.mxu0 0.0
      %608 = vmatpush1.msra.mxu0 0.0
      %609 = vmatprep.subr.mxu0 0.0
      %610 = vmatpush1.msra.mxu0 0.0
      %611 = vmatprep.subr.mxu0 0.0
      %612 = vmatpush1.msra.mxu0 0.0
      %613 = vmatprep.subr.mxu0 0.0
      %614 = vmatpush1.msra.mxu0 0.0
      %615 = vmatprep.subr.mxu0 0.0
      %616 = vmatpush1.msra.mxu0 0.0
      %617 = vmatprep.subr.mxu0 0.0
      %618 = vmatpush1.msra.mxu0 0.0
      %619 = vmatprep.subr.mxu0 0.0
      %620 = vmatpush1.msra.mxu0 0.0
      %621 = vmatprep.subr.mxu0 0.0
      %622 = vmatpush1.msra.mxu0 0.0
      %623 = vmatprep.subr.mxu0 0.0
      %624 = vmatpush1.msra.mxu0 0.0
      %625 = vmatprep.subr.mxu0 0.0
      %626 = vmatpush1.msra.mxu0 0.0
      %627 = vmatprep.subr.mxu0 0.0
      %628 = vmatpush1.msra.mxu0 0.0
      %629 = vmatprep.subr.mxu0 0.0
      %630 = vmatpush1.msra.mxu0 0.0
      %631 = vmatprep.subr.mxu0 0.0
      %632 = vmatpush1.msra.mxu0 0.0
      %633 = vmatprep.subr.mxu0 0.0
      %634 = vmatpush1.msra.mxu0 0.0
      %635 = vmatprep.mubr.f32.mxu0 0.0
      %636 = vmatmul.mubr.f32.gmra.mrb[0].mxu0 %v569
      %v637 = vpop.f32.mrb[0].mxu0
      %v638 = vadd.f32 0.0, %v637
      %v639 = vpop.f32.mrb[0].mxu0
      %640 = vdwg.mxu0
      %v641 = vsub.f32 0.0, %v560
      %v642 = vmul.f32 %v641, %v566
      %v644 = vsel %vm567, %v642, 0
      %646 = vmatprep.subr.mxu0 0.0
      %647 = vmatpush1.msra.mxu0 %v407
      %648 = vmatprep.subr.mxu0 0.0
      %649 = vmatpush1.msra.mxu0 0.0
      %650 = vmatprep.subr.mxu0 0.0
      %651 = vmatpush1.msra.mxu0 0.0
      %652 = vmatprep.subr.mxu0 0.0
      %653 = vmatpush1.msra.mxu0 0.0
      %654 = vmatprep.subr.mxu0 0.0
      %655 = vmatpush1.msra.mxu0 0.0
      %656 = vmatprep.subr.mxu0 0.0
      %657 = vmatpush1.msra.mxu0 0.0
      %658 = vmatprep.subr.mxu0 0.0
      %659 = vmatpush1.msra.mxu0 0.0
      %660 = vmatprep.subr.mxu0 0.0
      %661 = vmatpush1.msra.mxu0 0.0
      %662 = vmatprep.subr.mxu0 0.0
      %663 = vmatpush1.msra.mxu0 0.0
      %664 = vmatprep.subr.mxu0 0.0
      %665 = vmatpush1.msra.mxu0 0.0
      %666 = vmatprep.subr.mxu0 0.0
      %667 = vmatpush1.msra.mxu0 0.0
      %668 = vmatprep.subr.mxu0 0.0
      %669 = vmatpush1.msra.mxu0 0.0
      %670 = vmatprep.subr.mxu0 0.0
      %671 = vmatpush1.msra.mxu0 0.0
      %672 = vmatprep.subr.mxu0 0.0
      %673 = vmatpush1.msra.mxu0 0.0
      %674 = vmatprep.subr.mxu0 0.0
      %675 = vmatpush1.msra.mxu0 0.0
      %676 = vmatprep.subr.mxu0 0.0
      %677 = vmatpush1.msra.mxu0 0.0
      %678 = vmatprep.subr.mxu0 0.0
      %679 = vmatpush1.msra.mxu0 0.0
      %680 = vmatprep.subr.mxu0 0.0
      %681 = vmatpush1.msra.mxu0 0.0
      %682 = vmatprep.subr.mxu0 0.0
      %683 = vmatpush1.msra.mxu0 0.0
      %684 = vmatprep.subr.mxu0 0.0
      %685 = vmatpush1.msra.mxu0 0.0
      %686 = vmatprep.subr.mxu0 0.0
      %687 = vmatpush1.msra.mxu0 0.0
      %688 = vmatprep.subr.mxu0 0.0
      %689 = vmatpush1.msra.mxu0 0.0
      %690 = vmatprep.subr.mxu0 0.0
      %691 = vmatpush1.msra.mxu0 0.0
      %692 = vmatprep.subr.mxu0 0.0
      %693 = vmatpush1.msra.mxu0 0.0
      %694 = vmatprep.subr.mxu0 0.0
      %695 = vmatpush1.msra.mxu0 0.0
      %696 = vmatprep.subr.mxu0 0.0
      %697 = vmatpush1.msra.mxu0 0.0
      %698 = vmatprep.subr.mxu0 0.0
      %699 = vmatpush1.msra.mxu0 0.0
      %700 = vmatprep.subr.mxu0 0.0
      %701 = vmatpush1.msra.mxu0 0.0
      %702 = vmatprep.subr.mxu0 0.0
      %703 = vmatpush1.msra.mxu0 0.0
      %704 = vmatprep.subr.mxu0 0.0
      %705 = vmatpush1.msra.mxu0 0.0
      %706 = vmatprep.subr.mxu0 0.0
      %707 = vmatpush1.msra.mxu0 0.0
      %708 = vmatprep.subr.mxu0 0.0
      %709 = vmatpush1.msra.mxu0 0.0
      %710 = vmatprep.mubr.f32.mxu0 0.0
      %711 = vmatmul.mubr.f32.gmra.mrb[0].mxu0 %v644
      %v712 = vpop.f32.mrb[0].mxu0
      %v713 = vadd.f32 0.0, %v712
      %v714 = vpop.f32.mrb[0].mxu0
      %715 = vdwg.mxu0
      %v716 = vlaneseq
      %v717 = vshrl.u32 %v716, 7
      %v718 = vsub.s32 0, %v717
      %v719 = vrot.slane %v638, %v718
      %v720 = vmul.f32 %v396, %v719
      %v721 = vlaneseq
      %v722 = vshrl.u32 %v721, 7
      %v723 = vsub.s32 0, %v722
      %v724 = vrot.slane %v713, %v723
      %v725 = vadd.f32 %v720, %v724
      %v726 = vmax.f32 %v725, 0.0
      %727 = vst.msk [vmem:[#allocation2] sm:$0xff] %vm412, %v726
      %vm728 = vcmask 516096
      %729 = vst.msk [vmem:[#allocation2 + $0x8] sm:$0x1] %vm728, 0.0
      %v730 = vld [vmem:[#allocation2] sm:$0xff]
      %v731 = vpack.c.bf16 %v730, %v730
      %v732 = vld [vmem:[#allocation2 + $0x1] sm:$0xff]
      %v733 = vpack.c.bf16 %v732, %v732
      %v734 = vld [vmem:[%s4] sm:$0xf]
      %v735 = vld [vmem:[%s4 + $0x4] sm:$0xf]
      %v736 = vld [vmem:[%s4 + $0x8] sm:$0xf]
      %v737 = vld [vmem:[%s4 + $0xc] sm:$0xf]
      %v738 = vld [vmem:[%s4 + $0x10] sm:$0xf]
      %v739 = vld [vmem:[%s4 + $0x14] sm:$0xf]
      %v740 = vld [vmem:[%s4 + $0x18] sm:$0xf]
      %v741 = vld [vmem:[%s4 + $0x1c] sm:$0xf]
      %v742 = vld [vmem:[%s7] sm:$0x1]
      %v744 = vlaneseq
      %v745 = vshrl.u32 %v744, 7
      %v746 = vsub.s32 0, %v745
      %v747 = vrot.slane %v742, %v746
      %v757 = vunpack.c.l.b16 %v734
      %v758 = vunpack.c.l.b16 %v735
      %v759 = vunpack.c.l.b16 %v736
      %v760 = vunpack.c.l.b16 %v737
      %v761 = vunpack.c.l.b16 %v738
      %v762 = vunpack.c.l.b16 %v739
      %v763 = vunpack.c.l.b16 %v740
      %v764 = vunpack.c.l.b16 %v741
      %v765 = vpack.c.b16 %v758, %v757
      %v766 = vpack.c.b16 %v760, %v759
      %v767 = vpack.c.b16 %v762, %v761
      %v768 = vpack.c.b16 %v764, %v763
      %v774 = vsel %vm412, %v731, 0
      %776 = vmatprep.subr.bf16.mxu0 0
      %777 = vmatpush1.bf16.msra.mxu0 %v765
      %778 = vmatprep.subr.bf16.mxu0 0
      %779 = vmatpush1.bf16.msra.mxu0 %v766
      %780 = vmatprep.subr.bf16.mxu0 0
      %781 = vmatpush1.bf16.msra.mxu0 %v767
      %782 = vmatprep.subr.bf16.mxu0 0
      %783 = vmatpush1.bf16.msra.mxu0 %v768
      %784 = vmatprep.subr.bf16.mxu0 0
      %785 = vmatpush1.bf16.msra.mxu0 0
      %786 = vmatprep.subr.bf16.mxu0 0
      %787 = vmatpush1.bf16.msra.mxu0 0
      %788 = vmatprep.subr.bf16.mxu0 0
      %789 = vmatpush1.bf16.msra.mxu0 0
      %790 = vmatprep.subr.bf16.mxu0 0
      %791 = vmatpush1.bf16.msra.mxu0 0
      %792 = vmatprep.subr.bf16.mxu0 0
      %793 = vmatpush1.bf16.msra.mxu0 0
      %794 = vmatprep.subr.bf16.mxu0 0
      %795 = vmatpush1.bf16.msra.mxu0 0
      %796 = vmatprep.subr.bf16.mxu0 0
      %797 = vmatpush1.bf16.msra.mxu0 0
      %798 = vmatprep.subr.bf16.mxu0 0
      %799 = vmatpush1.bf16.msra.mxu0 0
      %800 = vmatprep.subr.bf16.mxu0 0
      %801 = vmatpush1.bf16.msra.mxu0 0
      %802 = vmatprep.subr.bf16.mxu0 0
      %803 = vmatpush1.bf16.msra.mxu0 0
      %804 = vmatprep.subr.bf16.mxu0 0
      %805 = vmatpush1.bf16.msra.mxu0 0
      %806 = vmatprep.subr.bf16.mxu0 0
      %807 = vmatpush1.bf16.msra.mxu0 0
      %808 = vmatprep.mubr.bf16.mxu0 0
      %809 = vmatmul.mubr.bf16.gmra.mrb[0].mxu0 %v774
      %v810 = vpop.f32.mrb[0].mxu0
      %v811 = vadd.f32 %v747, %v810
      %v812 = vpop.f32.mrb[0].mxu0
      %v813 = vpop.f32.mrb[0].mxu0
      %v814 = vpop.f32.mrb[0].mxu0
      %815 = vdwg.mxu0
      %v816 = vld [vmem:[%s5] sm:$0xf]
      %v817 = vld [vmem:[%s5 + $0x4] sm:$0xf]
      %v818 = vld [vmem:[%s5 + $0x8] sm:$0xf]
      %v819 = vld [vmem:[%s5 + $0xc] sm:$0xf]
      %v820 = vld [vmem:[%s5 + $0x10] sm:$0xf]
      %v821 = vld [vmem:[%s5 + $0x14] sm:$0xf]
      %v822 = vld [vmem:[%s5 + $0x18] sm:$0xf]
      %v823 = vld [vmem:[%s5 + $0x1c] sm:$0xf]
      %v824 = vld [vmem:[%s6] sm:$0xf]
      %v825 = vld [vmem:[%s6 + $0x4] sm:$0xf]
      %v826 = vld [vmem:[%s6 + $0x8] sm:$0xf]
      %v827 = vld [vmem:[%s6 + $0xc] sm:$0xf]
      %v828 = vld [vmem:[%s6 + $0x10] sm:$0xf]
      %v829 = vld [vmem:[%s6 + $0x14] sm:$0xf]
      %v830 = vld [vmem:[%s6 + $0x18] sm:$0xf]
      %v831 = vld [vmem:[%s6 + $0x1c] sm:$0xf]
      %v840 = vunpack.c.l.b16 %v824
      %v841 = vunpack.c.l.b16 %v825
      %v842 = vunpack.c.l.b16 %v826
      %v843 = vunpack.c.l.b16 %v827
      %v844 = vunpack.c.l.b16 %v828
      %v845 = vunpack.c.l.b16 %v829
      %v846 = vunpack.c.l.b16 %v830
      %v847 = vunpack.c.l.b16 %v831
      %v848 = vpack.c.b16 %v841, %v840
      %v849 = vpack.c.b16 %v843, %v842
      %v850 = vpack.c.b16 %v845, %v844
      %v851 = vpack.c.b16 %v847, %v846
      %v857 = vsel %vm412, %v733, 0
      %859 = vmatprep.subr.bf16.mxu0 0
      %860 = vmatpush1.bf16.msra.mxu0 %v848
      %861 = vmatprep.subr.bf16.mxu0 0
      %862 = vmatpush1.bf16.msra.mxu0 %v849
      %863 = vmatprep.subr.bf16.mxu0 0
      %864 = vmatpush1.bf16.msra.mxu0 %v850
      %865 = vmatprep.subr.bf16.mxu0 0
      %866 = vmatpush1.bf16.msra.mxu0 %v851
      %867 = vmatprep.subr.bf16.mxu0 0
      %868 = vmatpush1.bf16.msra.mxu0 0
      %869 = vmatprep.subr.bf16.mxu0 0
      %870 = vmatpush1.bf16.msra.mxu0 0
      %871 = vmatprep.subr.bf16.mxu0 0
      %872 = vmatpush1.bf16.msra.mxu0 0
      %873 = vmatprep.subr.bf16.mxu0 0
      %874 = vmatpush1.bf16.msra.mxu0 0
      %875 = vmatprep.subr.bf16.mxu0 0
      %876 = vmatpush1.bf16.msra.mxu0 0
      %877 = vmatprep.subr.bf16.mxu0 0
      %878 = vmatpush1.bf16.msra.mxu0 0
      %879 = vmatprep.subr.bf16.mxu0 0
      %880 = vmatpush1.bf16.msra.mxu0 0
      %881 = vmatprep.subr.bf16.mxu0 0
      %882 = vmatpush1.bf16.msra.mxu0 0
      %883 = vmatprep.subr.bf16.mxu0 0
      %884 = vmatpush1.bf16.msra.mxu0 0
      %885 = vmatprep.subr.bf16.mxu0 0
      %886 = vmatpush1.bf16.msra.mxu0 0
      %887 = vmatprep.subr.bf16.mxu0 0
      %888 = vmatpush1.bf16.msra.mxu0 0
      %889 = vmatprep.subr.bf16.mxu0 0
      %890 = vmatpush1.bf16.msra.mxu0 0
      %891 = vmatprep.mubr.bf16.mxu0 0
      %892 = vmatmul.mubr.bf16.gmra.mrb[0].mxu0 %v857
      %v893 = vpop.f32.mrb[0].mxu0
      %v894 = vadd.f32 0.0, %v893
      %v895 = vpop.f32.mrb[0].mxu0
      %v896 = vpop.f32.mrb[0].mxu0
      %v897 = vpop.f32.mrb[0].mxu0
      %898 = vdwg.mxu0
      %v907 = vunpack.c.l.b16 %v816
      %v908 = vunpack.c.l.b16 %v817
      %v909 = vunpack.c.l.b16 %v818
      %v910 = vunpack.c.l.b16 %v819
      %v911 = vunpack.c.l.b16 %v820
      %v912 = vunpack.c.l.b16 %v821
      %v913 = vunpack.c.l.b16 %v822
      %v914 = vunpack.c.l.b16 %v823
      %v915 = vpack.c.b16 %v908, %v907
      %v916 = vpack.c.b16 %v910, %v909
      %v917 = vpack.c.b16 %v912, %v911
      %v918 = vpack.c.b16 %v914, %v913
      %923 = vmatprep.subr.bf16.mxu0 0
      %924 = vmatpush1.bf16.msra.mxu0 %v915
      %925 = vmatprep.subr.bf16.mxu0 0
      %926 = vmatpush1.bf16.msra.mxu0 %v916
      %927 = vmatprep.subr.bf16.mxu0 0
      %928 = vmatpush1.bf16.msra.mxu0 %v917
      %929 = vmatprep.subr.bf16.mxu0 0
      %930 = vmatpush1.bf16.msra.mxu0 %v918
      %931 = vmatprep.subr.bf16.mxu0 0
      %932 = vmatpush1.bf16.msra.mxu0 0
      %933 = vmatprep.subr.bf16.mxu0 0
      %934 = vmatpush1.bf16.msra.mxu0 0
      %935 = vmatprep.subr.bf16.mxu0 0
      %936 = vmatpush1.bf16.msra.mxu0 0
      %937 = vmatprep.subr.bf16.mxu0 0
      %938 = vmatpush1.bf16.msra.mxu0 0
      %939 = vmatprep.subr.bf16.mxu0 0
      %940 = vmatpush1.bf16.msra.mxu0 0
      %941 = vmatprep.subr.bf16.mxu0 0
      %942 = vmatpush1.bf16.msra.mxu0 0
      %943 = vmatprep.subr.bf16.mxu0 0
      %944 = vmatpush1.bf16.msra.mxu0 0
      %945 = vmatprep.subr.bf16.mxu0 0
      %946 = vmatpush1.bf16.msra.mxu0 0
      %947 = vmatprep.subr.bf16.mxu0 0
      %948 = vmatpush1.bf16.msra.mxu0 0
      %949 = vmatprep.subr.bf16.mxu0 0
      %950 = vmatpush1.bf16.msra.mxu0 0
      %951 = vmatprep.subr.bf16.mxu0 0
      %952 = vmatpush1.bf16.msra.mxu0 0
      %953 = vmatprep.subr.bf16.mxu0 0
      %954 = vmatpush1.bf16.msra.mxu0 0
      %955 = vmatprep.mubr.bf16.mxu0 0
      %956 = vmatmul.mubr.bf16.gmra.mrb[0].mxu0 %v774
      %v957 = vpop.f32.mrb[0].mxu0
      %v958 = vadd.f32 %v894, %v957
      %v959 = vpop.f32.mrb[0].mxu0
      %v960 = vpop.f32.mrb[0].mxu0
      %v961 = vpop.f32.mrb[0].mxu0
      %962 = vdwg.mxu0
      %v963 = vadd.f32 %v958, %v747
      %v964 = vld [vmem:[%s8] sm:$0xff]
      %v965 = vld [vmem:[%s8 + $0x8] sm:$0xff]
      %v966 = vld [vmem:[%s9] sm:$0xff]
      %v967 = vld [vmem:[%s9 + $0x8] sm:$0xff]
      %v969 = vsel %vm567, %v966, 0
      %v972 = vsel %vm567, %v967, 0
      %974 = vmatprep.subr.mxu0 0.0
      %975 = vmatpush1.msra.mxu0 %v963
      %976 = vmatprep.subr.mxu0 0.0
      %977 = vmatpush1.msra.mxu0 0.0
      %978 = vmatprep.subr.mxu0 0.0
      %979 = vmatpush1.msra.mxu0 0.0
      %980 = vmatprep.subr.mxu0 0.0
      %981 = vmatpush1.msra.mxu0 0.0
      %982 = vmatprep.subr.mxu0 0.0
      %983 = vmatpush1.msra.mxu0 0.0
      %984 = vmatprep.subr.mxu0 0.0
      %985 = vmatpush1.msra.mxu0 0.0
      %986 = vmatprep.subr.mxu0 0.0
      %987 = vmatpush1.msra.mxu0 0.0
      %988 = vmatprep.subr.mxu0 0.0
      %989 = vmatpush1.msra.mxu0 0.0
      %990 = vmatprep.subr.mxu0 0.0
      %991 = vmatpush1.msra.mxu0 0.0
      %992 = vmatprep.subr.mxu0 0.0
      %993 = vmatpush1.msra.mxu0 0.0
      %994 = vmatprep.subr.mxu0 0.0
      %995 = vmatpush1.msra.mxu0 0.0
      %996 = vmatprep.subr.mxu0 0.0
      %997 = vmatpush1.msra.mxu0 0.0
      %998 = vmatprep.subr.mxu0 0.0
      %999 = vmatpush1.msra.mxu0 0.0
      %1000 = vmatprep.subr.mxu0 0.0
      %1001 = vmatpush1.msra.mxu0 0.0
      %1002 = vmatprep.subr.mxu0 0.0
      %1003 = vmatpush1.msra.mxu0 0.0
      %1004 = vmatprep.subr.mxu0 0.0
      %1005 = vmatpush1.msra.mxu0 0.0
      %1006 = vmatprep.subr.mxu0 0.0
      %1007 = vmatpush1.msra.mxu0 0.0
      %1008 = vmatprep.subr.mxu0 0.0
      %1009 = vmatpush1.msra.mxu0 0.0
      %1010 = vmatprep.subr.mxu0 0.0
      %1011 = vmatpush1.msra.mxu0 0.0
      %1012 = vmatprep.subr.mxu0 0.0
      %1013 = vmatpush1.msra.mxu0 0.0
      %1014 = vmatprep.subr.mxu0 0.0
      %1015 = vmatpush1.msra.mxu0 0.0
      %1016 = vmatprep.subr.mxu0 0.0
      %1017 = vmatpush1.msra.mxu0 0.0
      %1018 = vmatprep.subr.mxu0 0.0
      %1019 = vmatpush1.msra.mxu0 0.0
      %1020 = vmatprep.subr.mxu0 0.0
      %1021 = vmatpush1.msra.mxu0 0.0
      %1022 = vmatprep.subr.mxu0 0.0
      %1023 = vmatpush1.msra.mxu0 0.0
      %1024 = vmatprep.subr.mxu0 0.0
      %1025 = vmatpush1.msra.mxu0 0.0
      %1026 = vmatprep.subr.mxu0 0.0
      %1027 = vmatpush1.msra.mxu0 0.0
      %1028 = vmatprep.subr.mxu0 0.0
      %1029 = vmatpush1.msra.mxu0 0.0
      %1030 = vmatprep.subr.mxu0 0.0
      %1031 = vmatpush1.msra.mxu0 0.0
      %1032 = vmatprep.subr.mxu0 0.0
      %1033 = vmatpush1.msra.mxu0 0.0
      %1034 = vmatprep.subr.mxu0 0.0
      %1035 = vmatpush1.msra.mxu0 0.0
      %1036 = vmatprep.subr.mxu0 0.0
      %1037 = vmatpush1.msra.mxu0 0.0
      %1038 = vmatprep.mubr.f32.mxu0 0.0
      %1039 = vmatmul.mubr.f32.gmra.mrb[0].mxu0 %v969
      %v1040 = vpop.f32.mrb[0].mxu0
      %v1041 = vadd.f32 0.0, %v1040
      %v1042 = vpop.f32.mrb[0].mxu0
      %1043 = vmatprep.mubr.f32.mxu0 0.0
      %1044 = vmatmul.mubr.f32.gmra.mrb[0].mxu0 %v972
      %v1045 = vpop.f32.mrb[0].mxu0
      %v1046 = vadd.f32 0.0, %v1045
      %v1047 = vpop.f32.mrb[0].mxu0
      %1048 = vdwg.mxu0
      %v1050 = vsel %vm567, %v964, 0
      %v1053 = vsel %vm567, %v965, 0
      %1055 = vmatprep.subr.mxu0 0.0
      %1056 = vmatpush1.msra.mxu0 %v811
      %1057 = vmatprep.subr.mxu0 0.0
      %1058 = vmatpush1.msra.mxu0 0.0
      %1059 = vmatprep.subr.mxu0 0.0
      %1060 = vmatpush1.msra.mxu0 0.0
      %1061 = vmatprep.subr.mxu0 0.0
      %1062 = vmatpush1.msra.mxu0 0.0
      %1063 = vmatprep.subr.mxu0 0.0
      %1064 = vmatpush1.msra.mxu0 0.0
      %1065 = vmatprep.subr.mxu0 0.0
      %1066 = vmatpush1.msra.mxu0 0.0
      %1067 = vmatprep.subr.mxu0 0.0
      %1068 = vmatpush1.msra.mxu0 0.0
      %1069 = vmatprep.subr.mxu0 0.0
      %1070 = vmatpush1.msra.mxu0 0.0
      %1071 = vmatprep.subr.mxu0 0.0
      %1072 = vmatpush1.msra.mxu0 0.0
      %1073 = vmatprep.subr.mxu0 0.0
      %1074 = vmatpush1.msra.mxu0 0.0
      %1075 = vmatprep.subr.mxu0 0.0
      %1076 = vmatpush1.msra.mxu0 0.0
      %1077 = vmatprep.subr.mxu0 0.0
      %1078 = vmatpush1.msra.mxu0 0.0
      %1079 = vmatprep.subr.mxu0 0.0
      %1080 = vmatpush1.msra.mxu0 0.0
      %1081 = vmatprep.subr.mxu0 0.0
      %1082 = vmatpush1.msra.mxu0 0.0
      %1083 = vmatprep.subr.mxu0 0.0
      %1084 = vmatpush1.msra.mxu0 0.0
      %1085 = vmatprep.subr.mxu0 0.0
      %1086 = vmatpush1.msra.mxu0 0.0
      %1087 = vmatprep.subr.mxu0 0.0
      %1088 = vmatpush1.msra.mxu0 0.0
      %1089 = vmatprep.subr.mxu0 0.0
      %1090 = vmatpush1.msra.mxu0 0.0
      %1091 = vmatprep.subr.mxu0 0.0
      %1092 = vmatpush1.msra.mxu0 0.0
      %1093 = vmatprep.subr.mxu0 0.0
      %1094 = vmatpush1.msra.mxu0 0.0
      %1095 = vmatprep.subr.mxu0 0.0
      %1096 = vmatpush1.msra.mxu0 0.0
      %1097 = vmatprep.subr.mxu0 0.0
      %1098 = vmatpush1.msra.mxu0 0.0
      %1099 = vmatprep.subr.mxu0 0.0
      %1100 = vmatpush1.msra.mxu0 0.0
      %1101 = vmatprep.subr.mxu0 0.0
      %1102 = vmatpush1.msra.mxu0 0.0
      %1103 = vmatprep.subr.mxu0 0.0
      %1104 = vmatpush1.msra.mxu0 0.0
      %1105 = vmatprep.subr.mxu0 0.0
      %1106 = vmatpush1.msra.mxu0 0.0
      %1107 = vmatprep.subr.mxu0 0.0
      %1108 = vmatpush1.msra.mxu0 0.0
      %1109 = vmatprep.subr.mxu0 0.0
      %1110 = vmatpush1.msra.mxu0 0.0
      %1111 = vmatprep.subr.mxu0 0.0
      %1112 = vmatpush1.msra.mxu0 0.0
      %1113 = vmatprep.subr.mxu0 0.0
      %1114 = vmatpush1.msra.mxu0 0.0
      %1115 = vmatprep.subr.mxu0 0.0
      %1116 = vmatpush1.msra.mxu0 0.0
      %1117 = vmatprep.subr.mxu0 0.0
      %1118 = vmatpush1.msra.mxu0 0.0
      %1119 = vmatprep.mubr.f32.mxu0 0.0
      %1120 = vmatmul.mubr.f32.gmra.mrb[0].mxu0 %v1050
      %v1121 = vpop.f32.mrb[0].mxu0
      %v1122 = vadd.f32 %v1041, %v1121
      %v1123 = vpop.f32.mrb[0].mxu0
      %1124 = vmatprep.mubr.f32.mxu0 0.0
      %1125 = vmatmul.mubr.f32.gmra.mrb[0].mxu0 %v1053
      %v1126 = vpop.f32.mrb[0].mxu0
      %v1127 = vadd.f32 %v1046, %v1126
      %v1128 = vpop.f32.mrb[0].mxu0
      %1129 = vdwg.mxu0
      %1130 = vst.msk [vmem:[%s390] sm:$0xff] %vm412, %v1122
      %1131 = vst.msk [vmem:[%s390 + $0x8] sm:$0xff] %vm412, %v1127
      %v1132 = vsel %vm412, %v1122, 0.0
      %v1133 = vsel %vm412, %v1127, 0.0
      %v1134 = vadd.f32 %v1132, %v1133
      %v1135 = vrot.slane %v1134, 4
      %v1136 = vadd.f32 %v1134, %v1135
      %v1137 = vrot.slane %v1136, 2
      %v1138 = vadd.f32 %v1136, %v1137
      %v1139 = vrot.slane %v1138, 1
      %v1140 = vadd.f32 %v1138, %v1139
      %1141 = vst.msk [vmem:[%s394] sm:$0x1] %vm728, %v1140
      %v1142 = vmul.f32 %v1122, %v1122
      %v1143 = vmul.f32 %v1127, %v1127
      %v1144 = vsel %vm412, %v1142, 0.0
      %v1145 = vsel %vm412, %v1143, 0.0
      %v1146 = vadd.f32 %v1144, %v1145
      %v1147 = vrot.slane %v1146, 4
      %v1148 = vadd.f32 %v1146, %v1147
      %v1149 = vrot.slane %v1148, 2
      %v1150 = vadd.f32 %v1148, %v1149
      %v1151 = vrot.slane %v1150, 1
      %v1152 = vadd.f32 %v1150, %v1151
      %1153 = vst.msk [vmem:[%s394 + $0x1] sm:$0x1] %vm728, %v1152
      %p1154 = scmp.lt.s32.totalorder %s23, 1
      %s1155 = scalar_select %p1154, %s23, 1
      %s1156 = smul.addr %s1155, 2
      %s1157 = smul.addr %s1156, 8
      %s1158 = scalar_lea.vmem %s10, %s1157
      %p1159 = scmp.lt.s32.totalorder %s23, 1
      %s1160 = scalar_select %p1159, %s23, 1
      %s1161 = smul.addr %s1160, 2
      %s1162 = scalar_lea.vmem %s11, %s1161
      // Predicated region
      $region61: #{convae_forward.14} parent=59 // pred_check
        %p1163 = pneg %p256
      $region62: #{convae_forward.14} parent=59 // pred_check_branch
        %1165 = sbr.rel (%p1163) target = $region64
      $region63: #{convae_forward.14} parent=59 // pred_region
        _
      $region64: #{convae_forward.14} parent=59 // pred_fallthru
        _
      // Predicated region
      $region65: #{convae_forward.14} parent=59 // pred_check
        %p1166 = pneg %p282
      $region66: #{convae_forward.14} parent=59 // pred_check_branch
        %1168 = sbr.rel (%p1166) target = $region68
      $region67: #{convae_forward.14} parent=59 // pred_region
        _
      $region68: #{convae_forward.14} parent=59 // pred_fallthru
        _
    $region60: #{convae_forward.14} parent=5 // pred_fallthru
      _
    %p1169 = scmp.le.s32.totalorder 2, %s18
    // Predicated region
    $region69: #{convae_forward.14} parent=5 // pred_check
      %p1170 = pneg %p1169
    $region70: #{convae_forward.14} parent=5 // pred_check_branch
      %1172 = sbr.rel (%p1170) target = $region72
    $region71: #{convae_forward.14} parent=5 // pred_region
      %s1173 = ssub.s32 %s18, 2
      // Predicated region
      $region73: #{convae_forward.14} parent=71 // pred_check
        %p1174 = pneg %p262
      $region74: #{convae_forward.14} parent=71 // pred_check_branch
        %1176 = sbr.rel (%p1174) target = $region76
      $region75: #{convae_forward.14} parent=71 // pred_region
        %p1177 = scmp.lt.s32.totalorder %s24, 1
        %s1178 = scalar_select %p1177, %s24, 1
        %s1179 = smul.addr %s1178, 2
        %s1180 = smul.addr %s1179, 8
        %s1181 = scalar_lea.vmem %s10, %s1180
      $region76: #{convae_forward.14} parent=71 // pred_fallthru
        _
      // Predicated region
      $region77: #{convae_forward.14} parent=71 // pred_check
        %p1182 = pneg %p288
      $region78: #{convae_forward.14} parent=71 // pred_check_branch
        %1184 = sbr.rel (%p1182) target = $region80
      $region79: #{convae_forward.14} parent=71 // pred_region
        %p1185 = scmp.lt.s32.totalorder %s24, 1
        %s1186 = scalar_select %p1185, %s24, 1
        %s1187 = smul.addr %s1186, 2
        %s1188 = scalar_lea.vmem %s11, %s1187
      $region80: #{convae_forward.14} parent=71 // pred_fallthru
        _
    $region72: #{convae_forward.14} parent=5 // pred_fallthru
      _
  $region6: #{convae_forward.14} parent=0 // loop_footer
    %s22 = sadd.s32 1, %s18
  $region7: #{convae_forward.14} parent=0 // loop_footer_branch
    %17 = sbr.rel target = $region3
  $region8: #{convae_forward.14} parent=0 // loop_exit
    _

// kernel: convae_forward.15
$region0: #{convae_forward.15}
  #allocation0 [shape = 'u32[]', space=smem, size = 0x4, offset = 0x4, fixed_abs, tag = 'smem constant byte address 0x4 - core index']
  #allocation1 [shape = 'u32[144,128]{1,0:T(1,128)}', space=vmem, size = 0x12000, scoped, tag = 'internal scratch']
  #allocation2 [shape = 'f32[18,64]{1,0:T(8,128)}', space=vmem, size = 0x3000, scoped, tag = 'scratch operand']
  %s0 = inlined_call_operand.vmem [shape: f32[2,16,64], index: 0, kind: input, shape index: {}]
  %s1 = inlined_call_operand.vmem [shape: f32[2,2,64], index: 1, kind: input, shape index: {}]
  %s2 = inlined_call_operand.vmem [shape: f32[64,4], index: 2, kind: input, shape index: {}]
  %s3 = inlined_call_operand.vmem [shape: f32[4,64], index: 3, kind: input, shape index: {}]
  %s4 = inlined_call_operand.vmem [shape: bf16[64,64], index: 4, kind: input, shape index: {}]
  %s5 = inlined_call_operand.vmem [shape: bf16[64,64], index: 5, kind: input, shape index: {}]
  %s6 = inlined_call_operand.vmem [shape: bf16[64,64], index: 6, kind: input, shape index: {}]
  %s7 = inlined_call_operand.vmem [shape: f32[1,64], index: 7, kind: input, shape index: {}]
  %s8 = inlined_call_operand.vmem [shape: f32[2,16,64], index: 8, kind: output, shape index: {}]
  %s9 = sld [smem:[#allocation0]]
  $region65: #{convae_forward.15} parent=0
    _
  %s11 = ssub.s32 1, %s9
  %s12 = scalar_select 0, %s11, %s9
  loop: start=0, step=1, limit=4
  $region2: #{convae_forward.15} parent=0 // loop_pre_header
    _
  $region3: #{convae_forward.15} parent=0 // loop_header
    %s14 = sphi 0, %s18
    %p15 = scmp.ge.s32.totalorder %s14, 4
    %s24 = sphi 0, %s26
    %s27 = sphi 0, %s24
    %s28 = sphi 0, %s27
    %s44 = sphi 0, %s28
    %s48 = sphi 0, %s48
    %s50 = sphi 0, %s48
    %s51 = sphi 0, %s50
    %s65 = sphi 0, %s51
    %s69 = sphi 0, %s69
    %s71 = sphi 0, %s69
    %s72 = sphi 0, %s71
    %s86 = sphi 0, %s72
    %s90 = sphi 0, %s90
    %s92 = sphi 0, %s90
    %s93 = sphi 0, %s92
    %s107 = sphi 0, %s93
    %s111 = sphi 0, %s111
    %s113 = sphi 0, %s111
    %s114 = sphi 0, %s113
    %s128 = sphi 0, %s114
    %s132 = sphi 0, %s132
    %s134 = sphi 0, %s132
    %s135 = sphi 0, %s134
    %s149 = sphi 0, %s135
    %s153 = sphi 0, %s153
    %s155 = sphi 0, %s153
    %s156 = sphi 0, %s155
    %s170 = sphi 0, %s156
    %s174 = sphi 0, %s174
    %s176 = sphi 0, %s174
    %s177 = sphi 0, %s176
    %s191 = sphi 0, %s177
    %s197 = sphi 0, %s199
    %s200 = sphi 0, %s197
    %s201 = sphi 0, %s200
    %s217 = sphi 0, %s201
  $region4: #{convae_forward.15} parent=0 // loop_header_branch
    %17 = sbr.rel (%p15) target = $region8
  $region5: #{convae_forward.15} parent=0 // loop_body
    %s19 = ssub.s32 %s14, 1
    %s20 = ssub.s32 %s14, 2
    %s21 = sadd.s32 %s14, 1
    %s22 = ssub.s32 %s14, %s21
    %p23 = scmp.eq.s32.totalorder %s22, 0
    %s25 = sadd.s32 %s24, 1
    %s26 = scalar_select %p23, %s24, %s25
    %p29 = pneg %p23
    %p30 = scmp.eq.s32.totalorder %s14, 1
    %p31 = por %p29, %p30
    %p32 = scmp.ne.s32.totalorder %s24, %s27
    %p33 = scmp.eq.s32.totalorder %s14, 0
    %p34 = por %p32, %p33
    %p35 = scmp.ne.s32.totalorder %s24, %s27
    %p36 = scmp.eq.s32.totalorder %s19, 1
    %p37 = por %p35, %p36
    %p38 = scmp.ne.s32.totalorder %s27, %s28
    %p39 = scmp.eq.s32.totalorder %s19, 0
    %p40 = por %p38, %p39
    %p41 = scmp.ne.s32.totalorder %s27, %s28
    %p42 = scmp.eq.s32.totalorder %s20, 1
    %p43 = por %p41, %p42
    %p45 = scmp.ne.s32.totalorder %s28, %s44
    %p46 = scmp.eq.s32.totalorder %s20, 0
    %p47 = por %p45, %p46
    %s49 = sadd.s32 %s48, 1
    %p52 = scmp.eq.s32.totalorder %s14, 1
    %p53 = scmp.ne.s32.totalorder %s48, %s50
    %p54 = scmp.eq.s32.totalorder %s14, 0
    %p55 = por %p53, %p54
    %p56 = scmp.ne.s32.totalorder %s48, %s50
    %p57 = scmp.eq.s32.totalorder %s19, 1
    %p58 = por %p56, %p57
    %p59 = scmp.ne.s32.totalorder %s50, %s51
    %p60 = scmp.eq.s32.totalorder %s19, 0
    %p61 = por %p59, %p60
    %p62 = scmp.ne.s32.totalorder %s50, %s51
    %p63 = scmp.eq.s32.totalorder %s20, 1
    %p64 = por %p62, %p63
    %p66 = scmp.ne.s32.totalorder %s51, %s65
    %p67 = scmp.eq.s32.totalorder %s20, 0
    %p68 = por %p66, %p67
    %s70 = sadd.s32 %s69, 1
    %p73 = scmp.eq.s32.totalorder %s14, 1
    %p74 = scmp.ne.s32.totalorder %s69, %s71
    %p75 = scmp.eq.s32.totalorder %s14, 0
    %p76 = por %p74, %p75
    %p77 = scmp.ne.s32.totalorder %s69, %s71
    %p78 = scmp.eq.s32.totalorder %s19, 1
    %p79 = por %p77, %p78
    %p80 = scmp.ne.s32.totalorder %s71, %s72
    %p81 = scmp.eq.s32.totalorder %s19, 0
    %p82 = por %p80, %p81
    %p83 = scmp.ne.s32.totalorder %s71, %s72
    %p84 = scmp.eq.s32.totalorder %s20, 1
    %p85 = por %p83, %p84
    %p87 = scmp.ne.s32.totalorder %s72, %s86
    %p88 = scmp.eq.s32.totalorder %s20, 0
    %p89 = por %p87, %p88
    %s91 = sadd.s32 %s90, 1
    %p94 = scmp.eq.s32.totalorder %s14, 1
    %p95 = scmp.ne.s32.totalorder %s90, %s92
    %p96 = scmp.eq.s32.totalorder %s14, 0
    %p97 = por %p95, %p96
    %p98 = scmp.ne.s32.totalorder %s90, %s92
    %p99 = scmp.eq.s32.totalorder %s19, 1
    %p100 = por %p98, %p99
    %p101 = scmp.ne.s32.totalorder %s92, %s93
    %p102 = scmp.eq.s32.totalorder %s19, 0
    %p103 = por %p101, %p102
    %p104 = scmp.ne.s32.totalorder %s92, %s93
    %p105 = scmp.eq.s32.totalorder %s20, 1
    %p106 = por %p104, %p105
    %p108 = scmp.ne.s32.totalorder %s93, %s107
    %p109 = scmp.eq.s32.totalorder %s20, 0
    %p110 = por %p108, %p109
    %s112 = sadd.s32 %s111, 1
    %p115 = scmp.eq.s32.totalorder %s14, 1
    %p116 = scmp.ne.s32.totalorder %s111, %s113
    %p117 = scmp.eq.s32.totalorder %s14, 0
    %p118 = por %p116, %p117
    %p119 = scmp.ne.s32.totalorder %s111, %s113
    %p120 = scmp.eq.s32.totalorder %s19, 1
    %p121 = por %p119, %p120
    %p122 = scmp.ne.s32.totalorder %s113, %s114
    %p123 = scmp.eq.s32.totalorder %s19, 0
    %p124 = por %p122, %p123
    %p125 = scmp.ne.s32.totalorder %s113, %s114
    %p126 = scmp.eq.s32.totalorder %s20, 1
    %p127 = por %p125, %p126
    %p129 = scmp.ne.s32.totalorder %s114, %s128
    %p130 = scmp.eq.s32.totalorder %s20, 0
    %p131 = por %p129, %p130
    %s133 = sadd.s32 %s132, 1
    %p136 = scmp.eq.s32.totalorder %s14, 1
    %p137 = scmp.ne.s32.totalorder %s132, %s134
    %p138 = scmp.eq.s32.totalorder %s14, 0
    %p139 = por %p137, %p138
    %p140 = scmp.ne.s32.totalorder %s132, %s134
    %p141 = scmp.eq.s32.totalorder %s19, 1
    %p142 = por %p140, %p141
    %p143 = scmp.ne.s32.totalorder %s134, %s135
    %p144 = scmp.eq.s32.totalorder %s19, 0
    %p145 = por %p143, %p144
    %p146 = scmp.ne.s32.totalorder %s134, %s135
    %p147 = scmp.eq.s32.totalorder %s20, 1
    %p148 = por %p146, %p147
    %p150 = scmp.ne.s32.totalorder %s135, %s149
    %p151 = scmp.eq.s32.totalorder %s20, 0
    %p152 = por %p150, %p151
    %s154 = sadd.s32 %s153, 1
    %p157 = scmp.eq.s32.totalorder %s14, 1
    %p158 = scmp.ne.s32.totalorder %s153, %s155
    %p159 = scmp.eq.s32.totalorder %s14, 0
    %p160 = por %p158, %p159
    %p161 = scmp.ne.s32.totalorder %s153, %s155
    %p162 = scmp.eq.s32.totalorder %s19, 1
    %p163 = por %p161, %p162
    %p164 = scmp.ne.s32.totalorder %s155, %s156
    %p165 = scmp.eq.s32.totalorder %s19, 0
    %p166 = por %p164, %p165
    %p167 = scmp.ne.s32.totalorder %s155, %s156
    %p168 = scmp.eq.s32.totalorder %s20, 1
    %p169 = por %p167, %p168
    %p171 = scmp.ne.s32.totalorder %s156, %s170
    %p172 = scmp.eq.s32.totalorder %s20, 0
    %p173 = por %p171, %p172
    %s175 = sadd.s32 %s174, 1
    %p178 = scmp.eq.s32.totalorder %s14, 1
    %p179 = scmp.ne.s32.totalorder %s174, %s176
    %p180 = scmp.eq.s32.totalorder %s14, 0
    %p181 = por %p179, %p180
    %p182 = scmp.ne.s32.totalorder %s174, %s176
    %p183 = scmp.eq.s32.totalorder %s19, 1
    %p184 = por %p182, %p183
    %p185 = scmp.ne.s32.totalorder %s176, %s177
    %p186 = scmp.eq.s32.totalorder %s19, 0
    %p187 = por %p185, %p186
    %p188 = scmp.ne.s32.totalorder %s176, %s177
    %p189 = scmp.eq.s32.totalorder %s20, 1
    %p190 = por %p188, %p189
    %p192 = scmp.ne.s32.totalorder %s177, %s191
    %p193 = scmp.eq.s32.totalorder %s20, 0
    %p194 = por %p192, %p193
    %s195 = ssub.s32 %s14, %s21
    %p196 = scmp.eq.s32.totalorder %s195, 0
    %s198 = sadd.s32 %s197, 1
    %s199 = scalar_select %p196, %s197, %s198
    %p202 = pneg %p196
    %p203 = scmp.eq.s32.totalorder %s14, 1
    %p204 = por %p202, %p203
    %p205 = scmp.ne.s32.totalorder %s197, %s200
    %p206 = scmp.eq.s32.totalorder %s14, 0
    %p207 = por %p205, %p206
    %p208 = scmp.ne.s32.totalorder %s197, %s200
    %p209 = scmp.eq.s32.totalorder %s19, 1
    %p210 = por %p208, %p209
    %p211 = scmp.ne.s32.totalorder %s200, %s201
    %p212 = scmp.eq.s32.totalorder %s19, 0
    %p213 = por %p211, %p212
    %p214 = scmp.ne.s32.totalorder %s200, %s201
    %p215 = scmp.eq.s32.totalorder %s20, 1
    %p216 = por %p214, %p215
    %p218 = scmp.ne.s32.totalorder %s201, %s217
    %p219 = scmp.eq.s32.totalorder %s20, 0
    %p220 = por %p218, %p219
    %p221 = scmp.le.s32.totalorder 1, %s14
    %p222 = scmp.lt.s32.totalorder %s14, 3
    %p223 = pnand %p221, %p222
    %p224 = pneg %p223
    // Predicated region
    $region9: #{convae_forward.15} parent=5 // pred_check
      _
    $region10: #{convae_forward.15} parent=5 // pred_check_branch
      %226 = sbr.rel (%p223) target = $region12
    $region11: #{convae_forward.15} parent=5 // pred_region
      %s227 = ssub.s32 %s14, 1
      // Predicated region
      $region13: #{convae_forward.15} parent=11 // pred_check
        %p228 = pneg %p61
      $region14: #{convae_forward.15} parent=11 // pred_check_branch
        %230 = sbr.rel (%p228) target = $region16
      $region15: #{convae_forward.15} parent=11 // pred_region
        _
      $region16: #{convae_forward.15} parent=11 // pred_fallthru
        _
      // Predicated region
      $region17: #{convae_forward.15} parent=11 // pred_check
        %p231 = pneg %p82
      $region18: #{convae_forward.15} parent=11 // pred_check_branch
        %233 = sbr.rel (%p231) target = $region20
      $region19: #{convae_forward.15} parent=11 // pred_region
        _
      $region20: #{convae_forward.15} parent=11 // pred_fallthru
        _
      // Predicated region
      $region21: #{convae_forward.15} parent=11 // pred_check
        %p234 = pneg %p103
      $region22: #{convae_forward.15} parent=11 // pred_check_branch
        %236 = sbr.rel (%p234) target = $region24
      $region23: #{convae_forward.15} parent=11 // pred_region
        _
      $region24: #{convae_forward.15} parent=11 // pred_fallthru
        _
      // Predicated region
      $region25: #{convae_forward.15} parent=11 // pred_check
        %p237 = pneg %p124
      $region26: #{convae_forward.15} parent=11 // pred_check_branch
        %239 = sbr.rel (%p237) target = $region28
      $region27: #{convae_forward.15} parent=11 // pred_region
        _
      $region28: #{convae_forward.15} parent=11 // pred_fallthru
        _
      // Predicated region
      $region29: #{convae_forward.15} parent=11 // pred_check
        %p240 = pneg %p145
      $region30: #{convae_forward.15} parent=11 // pred_check_branch
        %242 = sbr.rel (%p240) target = $region32
      $region31: #{convae_forward.15} parent=11 // pred_region
        _
      $region32: #{convae_forward.15} parent=11 // pred_fallthru
        _
      // Predicated region
      $region33: #{convae_forward.15} parent=11 // pred_check
        %p243 = pneg %p166
      $region34: #{convae_forward.15} parent=11 // pred_check_branch
        %245 = sbr.rel (%p243) target = $region36
      $region35: #{convae_forward.15} parent=11 // pred_region
        _
      $region36: #{convae_forward.15} parent=11 // pred_fallthru
        _
      // Predicated region
      $region37: #{convae_forward.15} parent=11 // pred_check
        %p246 = pneg %p187
      $region38: #{convae_forward.15} parent=11 // pred_check_branch
        %248 = sbr.rel (%p246) target = $region40
      $region39: #{convae_forward.15} parent=11 // pred_region
        _
      $region40: #{convae_forward.15} parent=11 // pred_fallthru
        _
    $region12: #{convae_forward.15} parent=5 // pred_fallthru
      _
    %p249 = scmp.lt.s32.totalorder %s14, 2
    // Predicated region
    $region41: #{convae_forward.15} parent=5 // pred_check
      %p250 = pneg %p249
    $region42: #{convae_forward.15} parent=5 // pred_check_branch
      %252 = sbr.rel (%p250) target = $region44
    $region43: #{convae_forward.15} parent=5 // pred_region
      // Predicated region
      $region45: #{convae_forward.15} parent=43 // pred_check
        %p253 = pneg %p34
      $region46: #{convae_forward.15} parent=43 // pred_check_branch
        %255 = sbr.rel (%p253) target = $region48
      $region47: #{convae_forward.15} parent=43 // pred_region
        %p256 = scmp.lt.s32.totalorder %s14, 1
        %s257 = scalar_select %p256, %s14, 1
        %s258 = smul.addr %s257, 2
        %s259 = smul.addr %s258, 8
        %s260 = scalar_lea.vmem %s0, %s259
      $region48: #{convae_forward.15} parent=43 // pred_fallthru
        _
    $region44: #{convae_forward.15} parent=5 // pred_fallthru
      _
    %p261 = scmp.le.s32.totalorder 1, %s14
    %p262 = scmp.lt.s32.totalorder %s14, 3
    %p263 = pnand %p261, %p262
    %p264 = pneg %p263
    // Predicated region
    $region49: #{convae_forward.15} parent=5 // pred_check
      _
    $region50: #{convae_forward.15} parent=5 // pred_check_branch
      %266 = sbr.rel (%p263) target = $region52
    $region51: #{convae_forward.15} parent=5 // pred_region
      %s267 = ssub.s32 %s14, 1
      %p268 = scmp.lt.s32.totalorder %s19, 1
      %s269 = scalar_select %p268, %s19, 1
      %s270 = smul.addr %s269, 2
      %s271 = smul.addr %s270, 8
      %s272 = scalar_lea.vmem %s0, %s271
      %p273 = pneg %p40
      %p274 = pneg %p37
      %p275 = pneg %p61
      %p276 = pneg %p58
      %p277 = pneg %p82
      %p278 = pneg %p79
      %p279 = pneg %p103
      %p280 = pneg %p100
      %p281 = pneg %p124
      %p282 = pneg %p121
      %p283 = pneg %p145
      %p284 = pneg %p142
      %p285 = pneg %p166
      %p286 = pneg %p163
      %p287 = pneg %p187
      %p288 = pneg %p184
      %p289 = pneg %p213
      %p290 = pneg %p210
      %p291 = scmp.lt.s32.totalorder %s19, 1
      %s292 = scalar_select %p291, %s19, 1
      %s293 = smul.addr %s292, 2
      %s294 = smul.addr %s293, 8
      %s295 = scalar_lea.vmem %s8, %s294
      %p296 = scmp.lt.s32.totalorder %s19, 1
      %s297 = scalar_select %p296, %s19, 1
      %s298 = smul.addr %s297, 2
      %s299 = smul.addr %s298, 8
      %s300 = scalar_lea.vmem %s0, %s299
      %p301 = scmp.lt.s32.totalorder %s19, 1
      %s302 = scalar_select %p301, %s19, 1
      %s303 = smul.addr %s302, 2
      %s304 = smul.addr %s303, 8
      %s305 = scalar_lea.vmem %s8, %s304
      %v307 = vld [vmem:[%s300] sm:$0xff]
      %v308 = vld [vmem:[%s300 + $0x8] sm:$0xff]
      %v309 = vld [vmem:[%s1] sm:$0x3]
      %v310 = vld [vmem:[%s1 + $0x2] sm:$0x3]
      %v311 = vld [vmem:[%s2] sm:$0xff]
      %v312 = vld [vmem:[%s2 + $0x8] sm:$0xff]
      %v313 = vld [vmem:[%s2 + $0x10] sm:$0xff]
      %v314 = vld [vmem:[%s2 + $0x18] sm:$0xff]
      %v315 = vld [vmem:[%s2 + $0x20] sm:$0xff]
      %v316 = vld [vmem:[%s2 + $0x28] sm:$0xff]
      %v317 = vld [vmem:[%s2 + $0x30] sm:$0xff]
      %v318 = vld [vmem:[%s2 + $0x38] sm:$0xff]
      %v319 = vld [vmem:[%s3] sm:$0xf]
      %vm320 = vcmask 517120
      %v321 = vsel %vm320, %v309, 0.0
      %v322 = vsel %vm320, %v310, 0.0
      %v323 = vadd.f32 %v321, %v322
      %vm324 = vcmask 523264
      %v326 = vsel %vm324, %v323, 0
      %328 = vmatprep.subr.mxu0 0.0
      %329 = vmatpush1.msra.mxu0 %v311
      %330 = vmatprep.subr.mxu0 0.0
      %331 = vmatpush1.msra.mxu0 %v312
      %332 = vmatprep.subr.mxu0 0.0
      %333 = vmatpush1.msra.mxu0 %v313
      %334 = vmatprep.subr.mxu0 0.0
      %335 = vmatpush1.msra.mxu0 %v314
      %336 = vmatprep.subr.mxu0 0.0
      %337 = vmatpush1.msra.mxu0 %v315
      %338 = vmatprep.subr.mxu0 0.0
      %339 = vmatpush1.msra.mxu0 %v316
      %340 = vmatprep.subr.mxu0 0.0
      %341 = vmatpush1.msra.mxu0 %v317
      %342 = vmatprep.subr.mxu0 0.0
      %343 = vmatpush1.msra.mxu0 %v318
      %344 = vmatprep.subr.mxu0 0.0
      %345 = vmatpush1.msra.mxu0 0.0
      %346 = vmatprep.subr.mxu0 0.0
      %347 = vmatpush1.msra.mxu0 0.0
      %348 = vmatprep.subr.mxu0 0.0
      %349 = vmatpush1.msra.mxu0 0.0
      %350 = vmatprep.subr.mxu0 0.0
      %351 = vmatpush1.msra.mxu0 0.0
      %352 = vmatprep.subr.mxu0 0.0
      %353 = vmatpush1.msra.mxu0 0.0
      %354 = vmatprep.subr.mxu0 0.0
      %355 = vmatpush1.msra.mxu0 0.0
      %356 = vmatprep.subr.mxu0 0.0
      %357 = vmatpush1.msra.mxu0 0.0
      %358 = vmatprep.subr.mxu0 0.0
      %359 = vmatpush1.msra.mxu0 0.0
      %360 = vmatprep.subr.mxu0 0.0
      %361 = vmatpush1.msra.mxu0 0.0
      %362 = vmatprep.subr.mxu0 0.0
      %363 = vmatpush1.msra.mxu0 0.0
      %364 = vmatprep.subr.mxu0 0.0
      %365 = vmatpush1.msra.mxu0 0.0
      %366 = vmatprep.subr.mxu0 0.0
      %367 = vmatpush1.msra.mxu0 0.0
      %368 = vmatprep.subr.mxu0 0.0
      %369 = vmatpush1.msra.mxu0 0.0
      %370 = vmatprep.subr.mxu0 0.0
      %371 = vmatpush1.msra.mxu0 0.0
      %372 = vmatprep.subr.mxu0 0.0
      %373 = vmatpush1.msra.mxu0 0.0
      %374 = vmatprep.subr.mxu0 0.0
      %375 = vmatpush1.msra.mxu0 0.0
      %376 = vmatprep.subr.mxu0 0.0
      %377 = vmatpush1.msra.mxu0 0.0
      %378 = vmatprep.subr.mxu0 0.0
      %379 = vmatpush1.msra.mxu0 0.0
      %380 = vmatprep.subr.mxu0 0.0
      %381 = vmatpush1.msra.mxu0 0.0
      %382 = vmatprep.subr.mxu0 0.0
      %383 = vmatpush1.msra.mxu0 0.0
      %384 = vmatprep.subr.mxu0 0.0
      %385 = vmatpush1.msra.mxu0 0.0
      %386 = vmatprep.subr.mxu0 0.0
      %387 = vmatpush1.msra.mxu0 0.0
      %388 = vmatprep.subr.mxu0 0.0
      %389 = vmatpush1.msra.mxu0 0.0
      %390 = vmatprep.subr.mxu0 0.0
      %391 = vmatpush1.msra.mxu0 0.0
      %392 = vmatprep.mubr.f32.mxu0 0.0
      %393 = vmatmul.mubr.f32.gmra.mrb[0].mxu0 %v326
      %v394 = vpop.f32.mrb[0].mxu0
      %v395 = vadd.f32 0.0, %v394
      %v396 = vpop.f32.mrb[0].mxu0
      %397 = vdwg.mxu0
      %v398 = vrot.slane %v323, 1
      %v399 = vsel %vm324, %v398, 0
      %401 = vmatprep.subr.mxu0 0.0
      %402 = vmatpush1.msra.mxu0 %v311
      %403 = vmatprep.subr.mxu0 0.0
      %404 = vmatpush1.msra.mxu0 %v312
      %405 = vmatprep.subr.mxu0 0.0
      %406 = vmatpush1.msra.mxu0 %v313
      %407 = vmatprep.subr.mxu0 0.0
      %408 = vmatpush1.msra.mxu0 %v314
      %409 = vmatprep.subr.mxu0 0.0
      %410 = vmatpush1.msra.mxu0 %v315
      %411 = vmatprep.subr.mxu0 0.0
      %412 = vmatpush1.msra.mxu0 %v316
      %413 = vmatprep.subr.mxu0 0.0
      %414 = vmatpush1.msra.mxu0 %v317
      %415 = vmatprep.subr.mxu0 0.0
      %416 = vmatpush1.msra.mxu0 %v318
      %417 = vmatprep.subr.mxu0 0.0
      %418 = vmatpush1.msra.mxu0 0.0
      %419 = vmatprep.subr.mxu0 0.0
      %420 = vmatpush1.msra.mxu0 0.0
      %421 = vmatprep.subr.mxu0 0.0
      %422 = vmatpush1.msra.mxu0 0.0
      %423 = vmatprep.subr.mxu0 0.0
      %424 = vmatpush1.msra.mxu0 0.0
      %425 = vmatprep.subr.mxu0 0.0
      %426 = vmatpush1.msra.mxu0 0.0
      %427 = vmatprep.subr.mxu0 0.0
      %428 = vmatpush1.msra.mxu0 0.0
      %429 = vmatprep.subr.mxu0 0.0
      %430 = vmatpush1.msra.mxu0 0.0
      %431 = vmatprep.subr.mxu0 0.0
      %432 = vmatpush1.msra.mxu0 0.0
      %433 = vmatprep.subr.mxu0 0.0
      %434 = vmatpush1.msra.mxu0 0.0
      %435 = vmatprep.subr.mxu0 0.0
      %436 = vmatpush1.msra.mxu0 0.0
      %437 = vmatprep.subr.mxu0 0.0
      %438 = vmatpush1.msra.mxu0 0.0
      %439 = vmatprep.subr.mxu0 0.0
      %440 = vmatpush1.msra.mxu0 0.0
      %441 = vmatprep.subr.mxu0 0.0
      %442 = vmatpush1.msra.mxu0 0.0
      %443 = vmatprep.subr.mxu0 0.0
      %444 = vmatpush1.msra.mxu0 0.0
      %445 = vmatprep.subr.mxu0 0.0
      %446 = vmatpush1.msra.mxu0 0.0
      %447 = vmatprep.subr.mxu0 0.0
      %448 = vmatpush1.msra.mxu0 0.0
      %449 = vmatprep.subr.mxu0 0.0
      %450 = vmatpush1.msra.mxu0 0.0
      %451 = vmatprep.subr.mxu0 0.0
      %452 = vmatpush1.msra.mxu0 0.0
      %453 = vmatprep.subr.mxu0 0.0
      %454 = vmatpush1.msra.mxu0 0.0
      %455 = vmatprep.subr.mxu0 0.0
      %456 = vmatpush1.msra.mxu0 0.0
      %457 = vmatprep.subr.mxu0 0.0
      %458 = vmatpush1.msra.mxu0 0.0
      %459 = vmatprep.subr.mxu0 0.0
      %460 = vmatpush1.msra.mxu0 0.0
      %461 = vmatprep.subr.mxu0 0.0
      %462 = vmatpush1.msra.mxu0 0.0
      %463 = vmatprep.subr.mxu0 0.0
      %464 = vmatpush1.msra.mxu0 0.0
      %465 = vmatprep.mubr.f32.mxu0 0.0
      %466 = vmatmul.mubr.f32.gmra.mrb[0].mxu0 %v399
      %v467 = vpop.f32.mrb[0].mxu0
      %v468 = vadd.f32 0.0, %v467
      %v469 = vpop.f32.mrb[0].mxu0
      %470 = vdwg.mxu0
      %v471 = vrcp.pop 512.0
      %v472 = vmul.f32 %v395, %v471
      %v473 = vmul.f32 %v468, %v471
      %v474 = vmul.f32 %v472, %v472
      %v475 = vsub.f32 %v473, %v474
      %v476 = vmax.f32 %v475, 0.0
      %v477 = vadd.f32 %v476, 1e-05
      %v478 = vrsqrt.pop %v477
      %vm479 = vcmask 31744
      %v481 = vsel %vm479, %v478, 0
      %vm483 = vcmask 1043456
      %v485 = vsel %vm483, %v319, 0
      %487 = vmatprep.subr.mxu0 0.0
      %488 = vmatpush1.msra.mxu0 %v485
      %489 = vmatprep.subr.mxu0 0.0
      %490 = vmatpush1.msra.mxu0 0.0
      %491 = vmatprep.subr.mxu0 0.0
      %492 = vmatpush1.msra.mxu0 0.0
      %493 = vmatprep.subr.mxu0 0.0
      %494 = vmatpush1.msra.mxu0 0.0
      %495 = vmatprep.subr.mxu0 0.0
      %496 = vmatpush1.msra.mxu0 0.0
      %497 = vmatprep.subr.mxu0 0.0
      %498 = vmatpush1.msra.mxu0 0.0
      %499 = vmatprep.subr.mxu0 0.0
      %500 = vmatpush1.msra.mxu0 0.0
      %501 = vmatprep.subr.mxu0 0.0
      %502 = vmatpush1.msra.mxu0 0.0
      %503 = vmatprep.subr.mxu0 0.0
      %504 = vmatpush1.msra.mxu0 0.0
      %505 = vmatprep.subr.mxu0 0.0
      %506 = vmatpush1.msra.mxu0 0.0
      %507 = vmatprep.subr.mxu0 0.0
      %508 = vmatpush1.msra.mxu0 0.0
      %509 = vmatprep.subr.mxu0 0.0
      %510 = vmatpush1.msra.mxu0 0.0
      %511 = vmatprep.subr.mxu0 0.0
      %512 = vmatpush1.msra.mxu0 0.0
      %513 = vmatprep.subr.mxu0 0.0
      %514 = vmatpush1.msra.mxu0 0.0
      %515 = vmatprep.subr.mxu0 0.0
      %516 = vmatpush1.msra.mxu0 0.0
      %517 = vmatprep.subr.mxu0 0.0
      %518 = vmatpush1.msra.mxu0 0.0
      %519 = vmatprep.subr.mxu0 0.0
      %520 = vmatpush1.msra.mxu0 0.0
      %521 = vmatprep.subr.mxu0 0.0
      %522 = vmatpush1.msra.mxu0 0.0
      %523 = vmatprep.subr.mxu0 0.0
      %524 = vmatpush1.msra.mxu0 0.0
      %525 = vmatprep.subr.mxu0 0.0
      %526 = vmatpush1.msra.mxu0 0.0
      %527 = vmatprep.subr.mxu0 0.0
      %528 = vmatpush1.msra.mxu0 0.0
      %529 = vmatprep.subr.mxu0 0.0
      %530 = vmatpush1.msra.mxu0 0.0
      %531 = vmatprep.subr.mxu0 0.0
      %532 = vmatpush1.msra.mxu0 0.0
      %533 = vmatprep.subr.mxu0 0.0
      %534 = vmatpush1.msra.mxu0 0.0
      %535 = vmatprep.subr.mxu0 0.0
      %536 = vmatpush1.msra.mxu0 0.0
      %537 = vmatprep.subr.mxu0 0.0
      %538 = vmatpush1.msra.mxu0 0.0
      %539 = vmatprep.subr.mxu0 0.0
      %540 = vmatpush1.msra.mxu0 0.0
      %541 = vmatprep.subr.mxu0 0.0
      %542 = vmatpush1.msra.mxu0 0.0
      %543 = vmatprep.subr.mxu0 0.0
      %544 = vmatpush1.msra.mxu0 0.0
      %545 = vmatprep.subr.mxu0 0.0
      %546 = vmatpush1.msra.mxu0 0.0
      %547 = vmatprep.subr.mxu0 0.0
      %548 = vmatpush1.msra.mxu0 0.0
      %549 = vmatprep.subr.mxu0 0.0
      %550 = vmatpush1.msra.mxu0 0.0
      %551 = vmatprep.mubr.f32.mxu0 0.0
      %552 = vmatmul.mubr.f32.gmra.mrb[0].mxu0 %v481
      %v553 = vpop.f32.mrb[0].mxu0
      %v554 = vadd.f32 0.0, %v553
      %v555 = vpop.f32.mrb[0].mxu0
      %556 = vdwg.mxu0
      %v557 = vsub.f32 0.0, %v472
      %v558 = vmul.f32 %v557, %v478
      %v560 = vsel %vm479, %v558, 0
      %562 = vmatprep.subr.mxu0 0.0
      %563 = vmatpush1.msra.mxu0 %v485
      %564 = vmatprep.subr.mxu0 0.0
      %565 = vmatpush1.msra.mxu0 0.0
      %566 = vmatprep.subr.mxu0 0.0
      %567 = vmatpush1.msra.mxu0 0.0
      %568 = vmatprep.subr.mxu0 0.0
      %569 = vmatpush1.msra.mxu0 0.0
      %570 = vmatprep.subr.mxu0 0.0
      %571 = vmatpush1.msra.mxu0 0.0
      %572 = vmatprep.subr.mxu0 0.0
      %573 = vmatpush1.msra.mxu0 0.0
      %574 = vmatprep.subr.mxu0 0.0
      %575 = vmatpush1.msra.mxu0 0.0
      %576 = vmatprep.subr.mxu0 0.0
      %577 = vmatpush1.msra.mxu0 0.0
      %578 = vmatprep.subr.mxu0 0.0
      %579 = vmatpush1.msra.mxu0 0.0
      %580 = vmatprep.subr.mxu0 0.0
      %581 = vmatpush1.msra.mxu0 0.0
      %582 = vmatprep.subr.mxu0 0.0
      %583 = vmatpush1.msra.mxu0 0.0
      %584 = vmatprep.subr.mxu0 0.0
      %585 = vmatpush1.msra.mxu0 0.0
      %586 = vmatprep.subr.mxu0 0.0
      %587 = vmatpush1.msra.mxu0 0.0
      %588 = vmatprep.subr.mxu0 0.0
      %589 = vmatpush1.msra.mxu0 0.0
      %590 = vmatprep.subr.mxu0 0.0
      %591 = vmatpush1.msra.mxu0 0.0
      %592 = vmatprep.subr.mxu0 0.0
      %593 = vmatpush1.msra.mxu0 0.0
      %594 = vmatprep.subr.mxu0 0.0
      %595 = vmatpush1.msra.mxu0 0.0
      %596 = vmatprep.subr.mxu0 0.0
      %597 = vmatpush1.msra.mxu0 0.0
      %598 = vmatprep.subr.mxu0 0.0
      %599 = vmatpush1.msra.mxu0 0.0
      %600 = vmatprep.subr.mxu0 0.0
      %601 = vmatpush1.msra.mxu0 0.0
      %602 = vmatprep.subr.mxu0 0.0
      %603 = vmatpush1.msra.mxu0 0.0
      %604 = vmatprep.subr.mxu0 0.0
      %605 = vmatpush1.msra.mxu0 0.0
      %606 = vmatprep.subr.mxu0 0.0
      %607 = vmatpush1.msra.mxu0 0.0
      %608 = vmatprep.subr.mxu0 0.0
      %609 = vmatpush1.msra.mxu0 0.0
      %610 = vmatprep.subr.mxu0 0.0
      %611 = vmatpush1.msra.mxu0 0.0
      %612 = vmatprep.subr.mxu0 0.0
      %613 = vmatpush1.msra.mxu0 0.0
      %614 = vmatprep.subr.mxu0 0.0
      %615 = vmatpush1.msra.mxu0 0.0
      %616 = vmatprep.subr.mxu0 0.0
      %617 = vmatpush1.msra.mxu0 0.0
      %618 = vmatprep.subr.mxu0 0.0
      %619 = vmatpush1.msra.mxu0 0.0
      %620 = vmatprep.subr.mxu0 0.0
      %621 = vmatpush1.msra.mxu0 0.0
      %622 = vmatprep.subr.mxu0 0.0
      %623 = vmatpush1.msra.mxu0 0.0
      %624 = vmatprep.subr.mxu0 0.0
      %625 = vmatpush1.msra.mxu0 0.0
      %626 = vmatprep.mubr.f32.mxu0 0.0
      %627 = vmatmul.mubr.f32.gmra.mrb[0].mxu0 %v560
      %v628 = vpop.f32.mrb[0].mxu0
      %v629 = vadd.f32 0.0, %v628
      %v630 = vpop.f32.mrb[0].mxu0
      %631 = vdwg.mxu0
      %v632 = vlaneseq
      %v633 = vshrl.u32 %v632, 7
      %v634 = vsub.s32 0, %v633
      %v635 = vrot.slane %v554, %v634
      %v636 = vmul.f32 %v307, %v635
      %v637 = vmul.f32 %v308, %v635
      %v638 = vlaneseq
      %v639 = vshrl.u32 %v638, 7
      %v640 = vsub.s32 0, %v639
      %v641 = vrot.slane %v629, %v640
      %v642 = vadd.f32 %v636, %v641
      %v643 = vadd.f32 %v637, %v641
      %v644 = vmax.f32 %v642, 0.0
      %v645 = vmax.f32 %v643, 0.0
      %vm646 = vcmask 516096
      %647 = vst.msk [vmem:[#allocation2] sm:$0x1] %vm646, 0.0
      %648 = vst.msk [vmem:[#allocation2 + $0x11] sm:$0x1] %vm646, 0.0
      %649 = vst.msk [vmem:[#allocation2 + $0x1] sm:$0xff] %vm324, %v644
      %650 = vst.msk [vmem:[#allocation2 + $0x9] sm:$0xff] %vm324, %v645
      %v651 = vld [vmem:[#allocation2] sm:$0xff]
      %v652 = vld [vmem:[#allocation2 + $0x8] sm:$0xff]
      %v653 = vpack.c.bf16 %v652, %v651
      %v654 = vld [vmem:[%s4] sm:$0xf]
      %v655 = vld [vmem:[%s4 + $0x4] sm:$0xf]
      %v656 = vld [vmem:[%s4 + $0x8] sm:$0xf]
      %v657 = vld [vmem:[%s4 + $0xc] sm:$0xf]
      %v658 = vld [vmem:[%s4 + $0x10] sm:$0xf]
      %v659 = vld [vmem:[%s4 + $0x14] sm:$0xf]
      %v660 = vld [vmem:[%s4 + $0x18] sm:$0xf]
      %v661 = vld [vmem:[%s4 + $0x1c] sm:$0xf]
      %v662 = vld [vmem:[#allocation2 + $0x1] sm:$0xff]
      %v663 = vld [vmem:[#allocation2 + $0x9] sm:$0xff]
      %v664 = vpack.c.bf16 %v663, %v662
      %v665 = vld [vmem:[%s5] sm:$0xf]
      %v666 = vld [vmem:[%s5 + $0x4] sm:$0xf]
      %v667 = vld [vmem:[%s5 + $0x8] sm:$0xf]
      %v668 = vld [vmem:[%s5 + $0xc] sm:$0xf]
      %v669 = vld [vmem:[%s5 + $0x10] sm:$0xf]
      %v670 = vld [vmem:[%s5 + $0x14] sm:$0xf]
      %v671 = vld [vmem:[%s5 + $0x18] sm:$0xf]
      %v672 = vld [vmem:[%s5 + $0x1c] sm:$0xf]
      %v681 = vunpack.c.l.b16 %v665
      %v682 = vunpack.c.l.b16 %v666
      %v683 = vunpack.c.l.b16 %v667
      %v684 = vunpack.c.l.b16 %v668
      %v685 = vunpack.c.l.b16 %v669
      %v686 = vunpack.c.l.b16 %v670
      %v687 = vunpack.c.l.b16 %v671
      %v688 = vunpack.c.l.b16 %v672
      %v689 = vpack.c.b16 %v682, %v681
      %v690 = vpack.c.b16 %v684, %v683
      %v691 = vpack.c.b16 %v686, %v685
      %v692 = vpack.c.b16 %v688, %v687
      %v698 = vsel %vm324, %v664, 0
      %700 = vmatprep.subr.bf16.mxu0 0
      %701 = vmatpush1.bf16.msra.mxu0 %v689
      %702 = vmatprep.subr.bf16.mxu0 0
      %703 = vmatpush1.bf16.msra.mxu0 %v690
      %704 = vmatprep.subr.bf16.mxu0 0
      %705 = vmatpush1.bf16.msra.mxu0 %v691
      %706 = vmatprep.subr.bf16.mxu0 0
      %707 = vmatpush1.bf16.msra.mxu0 %v692
      %708 = vmatprep.subr.bf16.mxu0 0
      %709 = vmatpush1.bf16.msra.mxu0 0
      %710 = vmatprep.subr.bf16.mxu0 0
      %711 = vmatpush1.bf16.msra.mxu0 0
      %712 = vmatprep.subr.bf16.mxu0 0
      %713 = vmatpush1.bf16.msra.mxu0 0
      %714 = vmatprep.subr.bf16.mxu0 0
      %715 = vmatpush1.bf16.msra.mxu0 0
      %716 = vmatprep.subr.bf16.mxu0 0
      %717 = vmatpush1.bf16.msra.mxu0 0
      %718 = vmatprep.subr.bf16.mxu0 0
      %719 = vmatpush1.bf16.msra.mxu0 0
      %720 = vmatprep.subr.bf16.mxu0 0
      %721 = vmatpush1.bf16.msra.mxu0 0
      %722 = vmatprep.subr.bf16.mxu0 0
      %723 = vmatpush1.bf16.msra.mxu0 0
      %724 = vmatprep.subr.bf16.mxu0 0
      %725 = vmatpush1.bf16.msra.mxu0 0
      %726 = vmatprep.subr.bf16.mxu0 0
      %727 = vmatpush1.bf16.msra.mxu0 0
      %728 = vmatprep.subr.bf16.mxu0 0
      %729 = vmatpush1.bf16.msra.mxu0 0
      %730 = vmatprep.subr.bf16.mxu0 0
      %731 = vmatpush1.bf16.msra.mxu0 0
      %732 = vmatprep.mubr.bf16.mxu0 0
      %733 = vmatmul.mubr.bf16.gmra.mrb[0].mxu0 %v698
      %v734 = vpop.f32.mrb[0].mxu0
      %v735 = vadd.f32 0.0, %v734
      %v736 = vpop.f32.mrb[0].mxu0
      %v737 = vpop.f32.mrb[0].mxu0
      %v738 = vadd.f32 0.0, %v737
      %v739 = vpop.f32.mrb[0].mxu0
      %740 = vdwg.mxu0
      %v749 = vunpack.c.l.b16 %v654
      %v750 = vunpack.c.l.b16 %v655
      %v751 = vunpack.c.l.b16 %v656
      %v752 = vunpack.c.l.b16 %v657
      %v753 = vunpack.c.l.b16 %v658
      %v754 = vunpack.c.l.b16 %v659
      %v755 = vunpack.c.l.b16 %v660
      %v756 = vunpack.c.l.b16 %v661
      %v757 = vpack.c.b16 %v750, %v749
      %v758 = vpack.c.b16 %v752, %v751
      %v759 = vpack.c.b16 %v754, %v753
      %v760 = vpack.c.b16 %v756, %v755
      %v766 = vsel %vm324, %v653, 0
      %768 = vmatprep.subr.bf16.mxu0 0
      %769 = vmatpush1.bf16.msra.mxu0 %v757
      %770 = vmatprep.subr.bf16.mxu0 0
      %771 = vmatpush1.bf16.msra.mxu0 %v758
      %772 = vmatprep.subr.bf16.mxu0 0
      %773 = vmatpush1.bf16.msra.mxu0 %v759
      %774 = vmatprep.subr.bf16.mxu0 0
      %775 = vmatpush1.bf16.msra.mxu0 %v760
      %776 = vmatprep.subr.bf16.mxu0 0
      %777 = vmatpush1.bf16.msra.mxu0 0
      %778 = vmatprep.subr.bf16.mxu0 0
      %779 = vmatpush1.bf16.msra.mxu0 0
      %780 = vmatprep.subr.bf16.mxu0 0
      %781 = vmatpush1.bf16.msra.mxu0 0
      %782 = vmatprep.subr.bf16.mxu0 0
      %783 = vmatpush1.bf16.msra.mxu0 0
      %784 = vmatprep.subr.bf16.mxu0 0
      %785 = vmatpush1.bf16.msra.mxu0 0
      %786 = vmatprep.subr.bf16.mxu0 0
      %787 = vmatpush1.bf16.msra.mxu0 0
      %788 = vmatprep.subr.bf16.mxu0 0
      %789 = vmatpush1.bf16.msra.mxu0 0
      %790 = vmatprep.subr.bf16.mxu0 0
      %791 = vmatpush1.bf16.msra.mxu0 0
      %792 = vmatprep.subr.bf16.mxu0 0
      %793 = vmatpush1.bf16.msra.mxu0 0
      %794 = vmatprep.subr.bf16.mxu0 0
      %795 = vmatpush1.bf16.msra.mxu0 0
      %796 = vmatprep.subr.bf16.mxu0 0
      %797 = vmatpush1.bf16.msra.mxu0 0
      %798 = vmatprep.subr.bf16.mxu0 0
      %799 = vmatpush1.bf16.msra.mxu0 0
      %800 = vmatprep.mubr.bf16.mxu0 0
      %801 = vmatmul.mubr.bf16.gmra.mrb[0].mxu0 %v766
      %v802 = vpop.f32.mrb[0].mxu0
      %v803 = vadd.f32 %v735, %v802
      %v804 = vpop.f32.mrb[0].mxu0
      %v805 = vpop.f32.mrb[0].mxu0
      %v806 = vadd.f32 %v738, %v805
      %v807 = vpop.f32.mrb[0].mxu0
      %808 = vdwg.mxu0
      %v809 = vld [vmem:[#allocation2 + $0x2] sm:$0xff]
      %v810 = vld [vmem:[#allocation2 + $0xa] sm:$0xff]
      %v811 = vpack.c.bf16 %v810, %v809
      %v812 = vld [vmem:[%s6] sm:$0xf]
      %v813 = vld [vmem:[%s6 + $0x4] sm:$0xf]
      %v814 = vld [vmem:[%s6 + $0x8] sm:$0xf]
      %v815 = vld [vmem:[%s6 + $0xc] sm:$0xf]
      %v816 = vld [vmem:[%s6 + $0x10] sm:$0xf]
      %v817 = vld [vmem:[%s6 + $0x14] sm:$0xf]
      %v818 = vld [vmem:[%s6 + $0x18] sm:$0xf]
      %v819 = vld [vmem:[%s6 + $0x1c] sm:$0xf]
      %v828 = vunpack.c.l.b16 %v812
      %v829 = vunpack.c.l.b16 %v813
      %v830 = vunpack.c.l.b16 %v814
      %v831 = vunpack.c.l.b16 %v815
      %v832 = vunpack.c.l.b16 %v816
      %v833 = vunpack.c.l.b16 %v817
      %v834 = vunpack.c.l.b16 %v818
      %v835 = vunpack.c.l.b16 %v819
      %v836 = vpack.c.b16 %v829, %v828
      %v837 = vpack.c.b16 %v831, %v830
      %v838 = vpack.c.b16 %v833, %v832
      %v839 = vpack.c.b16 %v835, %v834
      %v845 = vsel %vm324, %v811, 0
      %847 = vmatprep.subr.bf16.mxu0 0
      %848 = vmatpush1.bf16.msra.mxu0 %v836
      %849 = vmatprep.subr.bf16.mxu0 0
      %850 = vmatpush1.bf16.msra.mxu0 %v837
      %851 = vmatprep.subr.bf16.mxu0 0
      %852 = vmatpush1.bf16.msra.mxu0 %v838
      %853 = vmatprep.subr.bf16.mxu0 0
      %854 = vmatpush1.bf16.msra.mxu0 %v839
      %855 = vmatprep.subr.bf16.mxu0 0
      %856 = vmatpush1.bf16.msra.mxu0 0
      %857 = vmatprep.subr.bf16.mxu0 0
      %858 = vmatpush1.bf16.msra.mxu0 0
      %859 = vmatprep.subr.bf16.mxu0 0
      %860 = vmatpush1.bf16.msra.mxu0 0
      %861 = vmatprep.subr.bf16.mxu0 0
      %862 = vmatpush1.bf16.msra.mxu0 0
      %863 = vmatprep.subr.bf16.mxu0 0
      %864 = vmatpush1.bf16.msra.mxu0 0
      %865 = vmatprep.subr.bf16.mxu0 0
      %866 = vmatpush1.bf16.msra.mxu0 0
      %867 = vmatprep.subr.bf16.mxu0 0
      %868 = vmatpush1.bf16.msra.mxu0 0
      %869 = vmatprep.subr.bf16.mxu0 0
      %870 = vmatpush1.bf16.msra.mxu0 0
      %871 = vmatprep.subr.bf16.mxu0 0
      %872 = vmatpush1.bf16.msra.mxu0 0
      %873 = vmatprep.subr.bf16.mxu0 0
      %874 = vmatpush1.bf16.msra.mxu0 0
      %875 = vmatprep.subr.bf16.mxu0 0
      %876 = vmatpush1.bf16.msra.mxu0 0
      %877 = vmatprep.subr.bf16.mxu0 0
      %878 = vmatpush1.bf16.msra.mxu0 0
      %879 = vmatprep.mubr.bf16.mxu0 0
      %880 = vmatmul.mubr.bf16.gmra.mrb[0].mxu0 %v845
      %v881 = vpop.f32.mrb[0].mxu0
      %v882 = vadd.f32 0.0, %v881
      %v883 = vpop.f32.mrb[0].mxu0
      %v884 = vpop.f32.mrb[0].mxu0
      %v885 = vadd.f32 0.0, %v884
      %v886 = vpop.f32.mrb[0].mxu0
      %887 = vdwg.mxu0
      %v888 = vadd.f32 %v803, %v882
      %v889 = vadd.f32 %v806, %v885
      %v890 = vld [vmem:[%s7] sm:$0x1]
      %v892 = vlaneseq
      %v893 = vshrl.u32 %v892, 7
      %v894 = vsub.s32 0, %v893
      %v895 = vrot.slane %v890, %v894
      %v897 = vadd.f32 %v888, %v895
      %v898 = vadd.f32 %v889, %v895
      %899 = vst.msk [vmem:[%s305] sm:$0xff] %vm324, %v897
      %900 = vst.msk [vmem:[%s305 + $0x8] sm:$0xff] %vm324, %v898
      %p901 = scmp.lt.s32.totalorder %s19, 1
      %s902 = scalar_select %p901, %s19, 1
      %s903 = smul.addr %s902, 2
      %s904 = smul.addr %s903, 8
      %s905 = scalar_lea.vmem %s8, %s904
      // Predicated region
      $region53: #{convae_forward.15} parent=51 // pred_check
        %p906 = pneg %p210
      $region54: #{convae_forward.15} parent=51 // pred_check_branch
        %908 = sbr.rel (%p906) target = $region56
      $region55: #{convae_forward.15} parent=51 // pred_region
        _
      $region56: #{convae_forward.15} parent=51 // pred_fallthru
        _
    $region52: #{convae_forward.15} parent=5 // pred_fallthru
      _
    %p909 = scmp.le.s32.totalorder 2, %s14
    // Predicated region
    $region57: #{convae_forward.15} parent=5 // pred_check
      %p910 = pneg %p909
    $region58: #{convae_forward.15} parent=5 // pred_check_branch
      %912 = sbr.rel (%p910) target = $region60
    $region59: #{convae_forward.15} parent=5 // pred_region
      %s913 = ssub.s32 %s14, 2
      // Predicated region
      $region61: #{convae_forward.15} parent=59 // pred_check
        %p914 = pneg %p216
      $region62: #{convae_forward.15} parent=59 // pred_check_branch
        %916 = sbr.rel (%p914) target = $region64
      $region63: #{convae_forward.15} parent=59 // pred_region
        %p917 = scmp.lt.s32.totalorder %s20, 1
        %s918 = scalar_select %p917, %s20, 1
        %s919 = smul.addr %s918, 2
        %s920 = smul.addr %s919, 8
        %s921 = scalar_lea.vmem %s8, %s920
      $region64: #{convae_forward.15} parent=59 // pred_fallthru
        _
    $region60: #{convae_forward.15} parent=5 // pred_fallthru
      _
  $region6: #{convae_forward.15} parent=0 // loop_footer
    %s18 = sadd.s32 1, %s14
  $region7: #{convae_forward.15} parent=0 // loop_footer_branch
    %13 = sbr.rel target = $region3
  $region8: #{convae_forward.15} parent=0 // loop_exit
    _

// kernel: convae_forward.13
$region0: #{convae_forward.13}
  #allocation0 [shape = 'u32[]', space=smem, size = 0x4, offset = 0x4, fixed_abs, tag = 'smem constant byte address 0x4 - core index']
  #allocation1 [shape = 'u32[144,128]{1,0:T(1,128)}', space=vmem, size = 0x12000, scoped, tag = 'internal scratch']
  #allocation2 [shape = 'f32[5,32]{1,0:T(8,128)}', space=vmem, size = 0x1000, scoped, tag = 'scratch operand']
  #allocation3 [shape = 'f32[1,1]{1,0:T(1,128)S(1)}', space=vmem, size = 0x200, scoped, tag = 'scoped memory for convae_forward.13']
  #allocation4 [shape = 'f32[1,1]{1,0:T(1,128)S(1)}', space=vmem, size = 0x200, scoped, tag = 'scoped memory for convae_forward.13']
  %s0 = inlined_call_operand.vmem [shape: f32[2,4,32], index: 0, kind: input, shape index: {}]
  %s1 = inlined_call_operand.vmem [shape: f32[1,2,1], index: 1, kind: input, shape index: {}]
  %s2 = inlined_call_operand.<no memory space> [shape: f32[1,1], index: 2, kind: input, shape index: {}, may-alias: {2,3}]
  %s3 = inlined_call_operand.<no memory space> [shape: f32[1,1], index: 3, kind: input, shape index: {}, may-alias: {2,3}]
  %s4 = inlined_call_operand.vmem [shape: bf16[32,64], index: 4, kind: input, shape index: {}]
  %s5 = inlined_call_operand.vmem [shape: bf16[32,64], index: 5, kind: input, shape index: {}]
  %s6 = inlined_call_operand.vmem [shape: bf16[32,64], index: 6, kind: input, shape index: {}]
  %s7 = inlined_call_operand.vmem [shape: f32[1,64], index: 7, kind: input, shape index: {}]
  %s8 = inlined_call_operand.vmem [shape: f32[8,4], index: 8, kind: input, shape index: {}]
  %s9 = inlined_call_operand.vmem [shape: f32[8,4], index: 9, kind: input, shape index: {}]
  %s10 = inlined_call_operand.vmem [shape: f32[2,8,64], index: 10, kind: output, shape index: {0}]
  %s11 = inlined_call_operand.vmem [shape: f32[2,2,64], index: 11, kind: output, shape index: {1}]
  %12 = xla_tuple %s10, %s11
  %s13 = sld [smem:[#allocation0]]
  $region81: #{convae_forward.13} parent=0
    _
  %s15 = ssub.s32 1, %s13
  %s16 = scalar_select 0, %s15, %s13
  %v17 = vstv %s2
  %18 = vst [vmem:[#allocation3] sm:$0x1] %v17
  %v19 = vstv %s3
  %20 = vst [vmem:[#allocation4] sm:$0x1] %v19
  loop: start=0, step=1, limit=4
  $region2: #{convae_forward.13} parent=0 // loop_pre_header
    _
  $region3: #{convae_forward.13} parent=0 // loop_header
    %s22 = sphi 0, %s26
    %p23 = scmp.ge.s32.totalorder %s22, 4
    %s32 = sphi 0, %s34
    %s35 = sphi 0, %s32
    %s36 = sphi 0, %s35
    %s52 = sphi 0, %s36
    %s56 = sphi 0, %s56
    %s58 = sphi 0, %s56
    %s59 = sphi 0, %s58
    %s73 = sphi 0, %s59
    %s77 = sphi 0, %s77
    %s79 = sphi 0, %s77
    %s80 = sphi 0, %s79
    %s94 = sphi 0, %s80
    %s98 = sphi 0, %s98
    %s100 = sphi 0, %s98
    %s101 = sphi 0, %s100
    %s115 = sphi 0, %s101
    %s119 = sphi 0, %s119
    %s121 = sphi 0, %s119
    %s122 = sphi 0, %s121
    %s136 = sphi 0, %s122
    %s140 = sphi 0, %s140
    %s142 = sphi 0, %s140
    %s143 = sphi 0, %s142
    %s157 = sphi 0, %s143
    %s161 = sphi 0, %s161
    %s163 = sphi 0, %s161
    %s164 = sphi 0, %s163
    %s178 = sphi 0, %s164
    %s182 = sphi 0, %s182
    %s184 = sphi 0, %s182
    %s185 = sphi 0, %s184
    %s199 = sphi 0, %s185
    %s203 = sphi 0, %s203
    %s205 = sphi 0, %s203
    %s206 = sphi 0, %s205
    %s220 = sphi 0, %s206
    %s224 = sphi 0, %s224
    %s226 = sphi 0, %s224
    %s227 = sphi 0, %s226
    %s241 = sphi 0, %s227
    %s247 = sphi 0, %s249
    %s250 = sphi 0, %s247
    %s251 = sphi 0, %s250
    %s267 = sphi 0, %s251
    %s273 = sphi 0, %s275
    %s276 = sphi 0, %s273
    %s277 = sphi 0, %s276
    %s293 = sphi 0, %s277
  $region4: #{convae_forward.13} parent=0 // loop_header_branch
    %25 = sbr.rel (%p23) target = $region8
  $region5: #{convae_forward.13} parent=0 // loop_body
    %s27 = ssub.s32 %s22, 1
    %s28 = ssub.s32 %s22, 2
    %s29 = sadd.s32 %s22, 1
    %s30 = ssub.s32 %s22, %s29
    %p31 = scmp.eq.s32.totalorder %s30, 0
    %s33 = sadd.s32 %s32, 1
    %s34 = scalar_select %p31, %s32, %s33
    %p37 = pneg %p31
    %p38 = scmp.eq.s32.totalorder %s22, 1
    %p39 = por %p37, %p38
    %p40 = scmp.ne.s32.totalorder %s32, %s35
    %p41 = scmp.eq.s32.totalorder %s22, 0
    %p42 = por %p40, %p41
    %p43 = scmp.ne.s32.totalorder %s32, %s35
    %p44 = scmp.eq.s32.totalorder %s27, 1
    %p45 = por %p43, %p44
    %p46 = scmp.ne.s32.totalorder %s35, %s36
    %p47 = scmp.eq.s32.totalorder %s27, 0
    %p48 = por %p46, %p47
    %p49 = scmp.ne.s32.totalorder %s35, %s36
    %p50 = scmp.eq.s32.totalorder %s28, 1
    %p51 = por %p49, %p50
    %p53 = scmp.ne.s32.totalorder %s36, %s52
    %p54 = scmp.eq.s32.totalorder %s28, 0
    %p55 = por %p53, %p54
    %s57 = sadd.s32 %s56, 1
    %p60 = scmp.eq.s32.totalorder %s22, 1
    %p61 = scmp.ne.s32.totalorder %s56, %s58
    %p62 = scmp.eq.s32.totalorder %s22, 0
    %p63 = por %p61, %p62
    %p64 = scmp.ne.s32.totalorder %s56, %s58
    %p65 = scmp.eq.s32.totalorder %s27, 1
    %p66 = por %p64, %p65
    %p67 = scmp.ne.s32.totalorder %s58, %s59
    %p68 = scmp.eq.s32.totalorder %s27, 0
    %p69 = por %p67, %p68
    %p70 = scmp.ne.s32.totalorder %s58, %s59
    %p71 = scmp.eq.s32.totalorder %s28, 1
    %p72 = por %p70, %p71
    %p74 = scmp.ne.s32.totalorder %s59, %s73
    %p75 = scmp.eq.s32.totalorder %s28, 0
    %p76 = por %p74, %p75
    %s78 = sadd.s32 %s77, 1
    %p81 = scmp.eq.s32.totalorder %s22, 1
    %p82 = scmp.ne.s32.totalorder %s77, %s79
    %p83 = scmp.eq.s32.totalorder %s22, 0
    %p84 = por %p82, %p83
    %p85 = scmp.ne.s32.totalorder %s77, %s79
    %p86 = scmp.eq.s32.totalorder %s27, 1
    %p87 = por %p85, %p86
    %p88 = scmp.ne.s32.totalorder %s79, %s80
    %p89 = scmp.eq.s32.totalorder %s27, 0
    %p90 = por %p88, %p89
    %p91 = scmp.ne.s32.totalorder %s79, %s80
    %p92 = scmp.eq.s32.totalorder %s28, 1
    %p93 = por %p91, %p92
    %p95 = scmp.ne.s32.totalorder %s80, %s94
    %p96 = scmp.eq.s32.totalorder %s28, 0
    %p97 = por %p95, %p96
    %s99 = sadd.s32 %s98, 1
    %p102 = scmp.eq.s32.totalorder %s22, 1
    %p103 = scmp.ne.s32.totalorder %s98, %s100
    %p104 = scmp.eq.s32.totalorder %s22, 0
    %p105 = por %p103, %p104
    %p106 = scmp.ne.s32.totalorder %s98, %s100
    %p107 = scmp.eq.s32.totalorder %s27, 1
    %p108 = por %p106, %p107
    %p109 = scmp.ne.s32.totalorder %s100, %s101
    %p110 = scmp.eq.s32.totalorder %s27, 0
    %p111 = por %p109, %p110
    %p112 = scmp.ne.s32.totalorder %s100, %s101
    %p113 = scmp.eq.s32.totalorder %s28, 1
    %p114 = por %p112, %p113
    %p116 = scmp.ne.s32.totalorder %s101, %s115
    %p117 = scmp.eq.s32.totalorder %s28, 0
    %p118 = por %p116, %p117
    %s120 = sadd.s32 %s119, 1
    %p123 = scmp.eq.s32.totalorder %s22, 1
    %p124 = scmp.ne.s32.totalorder %s119, %s121
    %p125 = scmp.eq.s32.totalorder %s22, 0
    %p126 = por %p124, %p125
    %p127 = scmp.ne.s32.totalorder %s119, %s121
    %p128 = scmp.eq.s32.totalorder %s27, 1
    %p129 = por %p127, %p128
    %p130 = scmp.ne.s32.totalorder %s121, %s122
    %p131 = scmp.eq.s32.totalorder %s27, 0
    %p132 = por %p130, %p131
    %p133 = scmp.ne.s32.totalorder %s121, %s122
    %p134 = scmp.eq.s32.totalorder %s28, 1
    %p135 = por %p133, %p134
    %p137 = scmp.ne.s32.totalorder %s122, %s136
    %p138 = scmp.eq.s32.totalorder %s28, 0
    %p139 = por %p137, %p138
    %s141 = sadd.s32 %s140, 1
    %p144 = scmp.eq.s32.totalorder %s22, 1
    %p145 = scmp.ne.s32.totalorder %s140, %s142
    %p146 = scmp.eq.s32.totalorder %s22, 0
    %p147 = por %p145, %p146
    %p148 = scmp.ne.s32.totalorder %s140, %s142
    %p149 = scmp.eq.s32.totalorder %s27, 1
    %p150 = por %p148, %p149
    %p151 = scmp.ne.s32.totalorder %s142, %s143
    %p152 = scmp.eq.s32.totalorder %s27, 0
    %p153 = por %p151, %p152
    %p154 = scmp.ne.s32.totalorder %s142, %s143
    %p155 = scmp.eq.s32.totalorder %s28, 1
    %p156 = por %p154, %p155
    %p158 = scmp.ne.s32.totalorder %s143, %s157
    %p159 = scmp.eq.s32.totalorder %s28, 0
    %p160 = por %p158, %p159
    %s162 = sadd.s32 %s161, 1
    %p165 = scmp.eq.s32.totalorder %s22, 1
    %p166 = scmp.ne.s32.totalorder %s161, %s163
    %p167 = scmp.eq.s32.totalorder %s22, 0
    %p168 = por %p166, %p167
    %p169 = scmp.ne.s32.totalorder %s161, %s163
    %p170 = scmp.eq.s32.totalorder %s27, 1
    %p171 = por %p169, %p170
    %p172 = scmp.ne.s32.totalorder %s163, %s164
    %p173 = scmp.eq.s32.totalorder %s27, 0
    %p174 = por %p172, %p173
    %p175 = scmp.ne.s32.totalorder %s163, %s164
    %p176 = scmp.eq.s32.totalorder %s28, 1
    %p177 = por %p175, %p176
    %p179 = scmp.ne.s32.totalorder %s164, %s178
    %p180 = scmp.eq.s32.totalorder %s28, 0
    %p181 = por %p179, %p180
    %s183 = sadd.s32 %s182, 1
    %p186 = scmp.eq.s32.totalorder %s22, 1
    %p187 = scmp.ne.s32.totalorder %s182, %s184
    %p188 = scmp.eq.s32.totalorder %s22, 0
    %p189 = por %p187, %p188
    %p190 = scmp.ne.s32.totalorder %s182, %s184
    %p191 = scmp.eq.s32.totalorder %s27, 1
    %p192 = por %p190, %p191
    %p193 = scmp.ne.s32.totalorder %s184, %s185
    %p194 = scmp.eq.s32.totalorder %s27, 0
    %p195 = por %p193, %p194
    %p196 = scmp.ne.s32.totalorder %s184, %s185
    %p197 = scmp.eq.s32.totalorder %s28, 1
    %p198 = por %p196, %p197
    %p200 = scmp.ne.s32.totalorder %s185, %s199
    %p201 = scmp.eq.s32.totalorder %s28, 0
    %p202 = por %p200, %p201
    %s204 = sadd.s32 %s203, 1
    %p207 = scmp.eq.s32.totalorder %s22, 1
    %p208 = scmp.ne.s32.totalorder %s203, %s205
    %p209 = scmp.eq.s32.totalorder %s22, 0
    %p210 = por %p208, %p209
    %p211 = scmp.ne.s32.totalorder %s203, %s205
    %p212 = scmp.eq.s32.totalorder %s27, 1
    %p213 = por %p211, %p212
    %p214 = scmp.ne.s32.totalorder %s205, %s206
    %p215 = scmp.eq.s32.totalorder %s27, 0
    %p216 = por %p214, %p215
    %p217 = scmp.ne.s32.totalorder %s205, %s206
    %p218 = scmp.eq.s32.totalorder %s28, 1
    %p219 = por %p217, %p218
    %p221 = scmp.ne.s32.totalorder %s206, %s220
    %p222 = scmp.eq.s32.totalorder %s28, 0
    %p223 = por %p221, %p222
    %s225 = sadd.s32 %s224, 1
    %p228 = scmp.eq.s32.totalorder %s22, 1
    %p229 = scmp.ne.s32.totalorder %s224, %s226
    %p230 = scmp.eq.s32.totalorder %s22, 0
    %p231 = por %p229, %p230
    %p232 = scmp.ne.s32.totalorder %s224, %s226
    %p233 = scmp.eq.s32.totalorder %s27, 1
    %p234 = por %p232, %p233
    %p235 = scmp.ne.s32.totalorder %s226, %s227
    %p236 = scmp.eq.s32.totalorder %s27, 0
    %p237 = por %p235, %p236
    %p238 = scmp.ne.s32.totalorder %s226, %s227
    %p239 = scmp.eq.s32.totalorder %s28, 1
    %p240 = por %p238, %p239
    %p242 = scmp.ne.s32.totalorder %s227, %s241
    %p243 = scmp.eq.s32.totalorder %s28, 0
    %p244 = por %p242, %p243
    %s245 = ssub.s32 %s22, %s29
    %p246 = scmp.eq.s32.totalorder %s245, 0
    %s248 = sadd.s32 %s247, 1
    %s249 = scalar_select %p246, %s247, %s248
    %p252 = pneg %p246
    %p253 = scmp.eq.s32.totalorder %s22, 1
    %p254 = por %p252, %p253
    %p255 = scmp.ne.s32.totalorder %s247, %s250
    %p256 = scmp.eq.s32.totalorder %s22, 0
    %p257 = por %p255, %p256
    %p258 = scmp.ne.s32.totalorder %s247, %s250
    %p259 = scmp.eq.s32.totalorder %s27, 1
    %p260 = por %p258, %p259
    %p261 = scmp.ne.s32.totalorder %s250, %s251
    %p262 = scmp.eq.s32.totalorder %s27, 0
    %p263 = por %p261, %p262
    %p264 = scmp.ne.s32.totalorder %s250, %s251
    %p265 = scmp.eq.s32.totalorder %s28, 1
    %p266 = por %p264, %p265
    %p268 = scmp.ne.s32.totalorder %s251, %s267
    %p269 = scmp.eq.s32.totalorder %s28, 0
    %p270 = por %p268, %p269
    %s271 = ssub.s32 %s22, %s29
    %p272 = scmp.eq.s32.totalorder %s271, 0
    %s274 = sadd.s32 %s273, 1
    %s275 = scalar_select %p272, %s273, %s274
    %p278 = pneg %p272
    %p279 = scmp.eq.s32.totalorder %s22, 1
    %p280 = por %p278, %p279
    %p281 = scmp.ne.s32.totalorder %s273, %s276
    %p282 = scmp.eq.s32.totalorder %s22, 0
    %p283 = por %p281, %p282
    %p284 = scmp.ne.s32.totalorder %s273, %s276
    %p285 = scmp.eq.s32.totalorder %s27, 1
    %p286 = por %p284, %p285
    %p287 = scmp.ne.s32.totalorder %s276, %s277
    %p288 = scmp.eq.s32.totalorder %s27, 0
    %p289 = por %p287, %p288
    %p290 = scmp.ne.s32.totalorder %s276, %s277
    %p291 = scmp.eq.s32.totalorder %s28, 1
    %p292 = por %p290, %p291
    %p294 = scmp.ne.s32.totalorder %s277, %s293
    %p295 = scmp.eq.s32.totalorder %s28, 0
    %p296 = por %p294, %p295
    %p297 = scmp.le.s32.totalorder 1, %s22
    %p298 = scmp.lt.s32.totalorder %s22, 3
    %p299 = pnand %p297, %p298
    %p300 = pneg %p299
    // Predicated region
    $region9: #{convae_forward.13} parent=5 // pred_check
      _
    $region10: #{convae_forward.13} parent=5 // pred_check_branch
      %302 = sbr.rel (%p299) target = $region12
    $region11: #{convae_forward.13} parent=5 // pred_region
      %s303 = ssub.s32 %s22, 1
      // Predicated region
      $region13: #{convae_forward.13} parent=11 // pred_check
        %p304 = pneg %p69
      $region14: #{convae_forward.13} parent=11 // pred_check_branch
        %306 = sbr.rel (%p304) target = $region16
      $region15: #{convae_forward.13} parent=11 // pred_region
        _
      $region16: #{convae_forward.13} parent=11 // pred_fallthru
        _
      // Predicated region
      $region17: #{convae_forward.13} parent=11 // pred_check
        %p307 = pneg %p90
      $region18: #{convae_forward.13} parent=11 // pred_check_branch
        %309 = sbr.rel (%p307) target = $region20
      $region19: #{convae_forward.13} parent=11 // pred_region
        _
      $region20: #{convae_forward.13} parent=11 // pred_fallthru
        _
      // Predicated region
      $region21: #{convae_forward.13} parent=11 // pred_check
        %p310 = pneg %p111
      $region22: #{convae_forward.13} parent=11 // pred_check_branch
        %312 = sbr.rel (%p310) target = $region24
      $region23: #{convae_forward.13} parent=11 // pred_region
        _
      $region24: #{convae_forward.13} parent=11 // pred_fallthru
        _
      // Predicated region
      $region25: #{convae_forward.13} parent=11 // pred_check
        %p313 = pneg %p132
      $region26: #{convae_forward.13} parent=11 // pred_check_branch
        %315 = sbr.rel (%p313) target = $region28
      $region27: #{convae_forward.13} parent=11 // pred_region
        _
      $region28: #{convae_forward.13} parent=11 // pred_fallthru
        _
      // Predicated region
      $region29: #{convae_forward.13} parent=11 // pred_check
        %p316 = pneg %p153
      $region30: #{convae_forward.13} parent=11 // pred_check_branch
        %318 = sbr.rel (%p316) target = $region32
      $region31: #{convae_forward.13} parent=11 // pred_region
        _
      $region32: #{convae_forward.13} parent=11 // pred_fallthru
        _
      // Predicated region
      $region33: #{convae_forward.13} parent=11 // pred_check
        %p319 = pneg %p174
      $region34: #{convae_forward.13} parent=11 // pred_check_branch
        %321 = sbr.rel (%p319) target = $region36
      $region35: #{convae_forward.13} parent=11 // pred_region
        _
      $region36: #{convae_forward.13} parent=11 // pred_fallthru
        _
      // Predicated region
      $region37: #{convae_forward.13} parent=11 // pred_check
        %p322 = pneg %p195
      $region38: #{convae_forward.13} parent=11 // pred_check_branch
        %324 = sbr.rel (%p322) target = $region40
      $region39: #{convae_forward.13} parent=11 // pred_region
        _
      $region40: #{convae_forward.13} parent=11 // pred_fallthru
        _
      // Predicated region
      $region41: #{convae_forward.13} parent=11 // pred_check
        %p325 = pneg %p216
      $region42: #{convae_forward.13} parent=11 // pred_check_branch
        %327 = sbr.rel (%p325) target = $region44
      $region43: #{convae_forward.13} parent=11 // pred_region
        _
      $region44: #{convae_forward.13} parent=11 // pred_fallthru
        _
      // Predicated region
      $region45: #{convae_forward.13} parent=11 // pred_check
        %p328 = pneg %p237
      $region46: #{convae_forward.13} parent=11 // pred_check_branch
        %330 = sbr.rel (%p328) target = $region48
      $region47: #{convae_forward.13} parent=11 // pred_region
        _
      $region48: #{convae_forward.13} parent=11 // pred_fallthru
        _
    $region12: #{convae_forward.13} parent=5 // pred_fallthru
      _
    %p331 = scmp.lt.s32.totalorder %s22, 2
    // Predicated region
    $region49: #{convae_forward.13} parent=5 // pred_check
      %p332 = pneg %p331
    $region50: #{convae_forward.13} parent=5 // pred_check_branch
      %334 = sbr.rel (%p332) target = $region52
    $region51: #{convae_forward.13} parent=5 // pred_region
      // Predicated region
      $region53: #{convae_forward.13} parent=51 // pred_check
        %p335 = pneg %p42
      $region54: #{convae_forward.13} parent=51 // pred_check_branch
        %337 = sbr.rel (%p335) target = $region56
      $region55: #{convae_forward.13} parent=51 // pred_region
        %p338 = scmp.lt.s32.totalorder %s22, 1
        %s339 = scalar_select %p338, %s22, 1
        %s340 = smul.addr %s339, 4
        %s341 = scalar_lea.vmem %s0, %s340
      $region56: #{convae_forward.13} parent=51 // pred_fallthru
        _
    $region52: #{convae_forward.13} parent=5 // pred_fallthru
      _
    %p342 = scmp.le.s32.totalorder 1, %s22
    %p343 = scmp.lt.s32.totalorder %s22, 3
    %p344 = pnand %p342, %p343
    %p345 = pneg %p344
    // Predicated region
    $region57: #{convae_forward.13} parent=5 // pred_check
      _
    $region58: #{convae_forward.13} parent=5 // pred_check_branch
      %347 = sbr.rel (%p344) target = $region60
    $region59: #{convae_forward.13} parent=5 // pred_region
      %s348 = ssub.s32 %s22, 1
      %p349 = scmp.lt.s32.totalorder %s27, 1
      %s350 = scalar_select %p349, %s27, 1
      %s351 = smul.addr %s350, 4
      %s352 = scalar_lea.vmem %s0, %s351
      %p353 = pneg %p48
      %p354 = pneg %p45
      %p355 = pneg %p69
      %p356 = pneg %p66
      %p357 = pneg %p90
      %p358 = pneg %p87
      %p359 = pneg %p111
      %p360 = pneg %p108
      %p361 = pneg %p132
      %p362 = pneg %p129
      %p363 = pneg %p153
      %p364 = pneg %p150
      %p365 = pneg %p174
      %p366 = pneg %p171
      %p367 = pneg %p195
      %p368 = pneg %p192
      %p369 = pneg %p216
      %p370 = pneg %p213
      %p371 = pneg %p237
      %p372 = pneg %p234
      %p373 = pneg %p263
      %p374 = pneg %p260
      %p375 = scmp.lt.s32.totalorder %s27, 1
      %s376 = scalar_select %p375, %s27, 1
      %s377 = smul.addr %s376, 8
      %s378 = scalar_lea.vmem %s10, %s377
      %p379 = pneg %p289
      %p380 = pneg %p286
      %p381 = scmp.lt.s32.totalorder %s27, 1
      %s382 = scalar_select %p381, %s27, 1
      %s383 = smul.addr %s382, 2
      %s384 = scalar_lea.vmem %s11, %s383
      %p385 = scmp.lt.s32.totalorder %s27, 1
      %s386 = scalar_select %p385, %s27, 1
      %s387 = smul.addr %s386, 4
      %s388 = scalar_lea.vmem %s0, %s387
      %p389 = scmp.lt.s32.totalorder %s27, 1
      %s390 = scalar_select %p389, %s27, 1
      %s391 = smul.addr %s390, 8
      %s392 = scalar_lea.vmem %s10, %s391
      %p393 = scmp.lt.s32.totalorder %s27, 1
      %s394 = scalar_select %p393, %s27, 1
      %s395 = smul.addr %s394, 2
      %s396 = scalar_lea.vmem %s11, %s395
      %v398 = vld [vmem:[%s388] sm:$0xf]
      %vm399 = vcmask 257024
      %400 = vst.msk [vmem:[#allocation2] sm:$0xf] %vm399, %v398
      %vm401 = vcmask 253952
      %402 = vst.msk [vmem:[#allocation2 + $0x4] sm:$0x1] %vm401, 0.0
      %v403 = vld [vmem:[#allocation2] sm:$0xf]
      %v404 = vpack.c.bf16 %v403, %v403
      %v405 = vld [vmem:[#allocation2 + $0x1] sm:$0xf]
      %v406 = vpack.c.bf16 %v405, %v405
      %v407 = vld [vmem:[%s4] sm:$0xf]
      %v408 = vld [vmem:[%s4 + $0x4] sm:$0xf]
      %v409 = vld [vmem:[%s4 + $0x8] sm:$0xf]
      %v410 = vld [vmem:[%s4 + $0xc] sm:$0xf]
      %v411 = vld [vmem:[%s7] sm:$0x1]
      %v413 = vlaneseq
      %v414 = vshrl.u32 %v413, 7
      %v415 = vsub.s32 0, %v414
      %v416 = vrot.slane %v411, %v415
      %v422 = vunpack.c.l.b16 %v407
      %v423 = vunpack.c.l.b16 %v408
      %v424 = vunpack.c.l.b16 %v409
      %v425 = vunpack.c.l.b16 %v410
      %v426 = vpack.c.b16 %v423, %v422
      %v427 = vpack.c.b16 %v425, %v424
      %vm430 = vcmask 261120
      %v432 = vsel %vm430, %v404, 0
      %434 = vmatprep.subr.bf16.mxu0 0
      %435 = vmatpush1.bf16.msra.mxu0 %v426
      %436 = vmatprep.subr.bf16.mxu0 0
      %437 = vmatpush1.bf16.msra.mxu0 %v427
      %438 = vmatprep.subr.bf16.mxu0 0
      %439 = vmatpush1.bf16.msra.mxu0 0
      %440 = vmatprep.subr.bf16.mxu0 0
      %441 = vmatpush1.bf16.msra.mxu0 0
      %442 = vmatprep.subr.bf16.mxu0 0
      %443 = vmatpush1.bf16.msra.mxu0 0
      %444 = vmatprep.subr.bf16.mxu0 0
      %445 = vmatpush1.bf16.msra.mxu0 0
      %446 = vmatprep.subr.bf16.mxu0 0
      %447 = vmatpush1.bf16.msra.mxu0 0
      %448 = vmatprep.subr.bf16.mxu0 0
      %449 = vmatpush1.bf16.msra.mxu0 0
      %450 = vmatprep.subr.bf16.mxu0 0
      %451 = vmatpush1.bf16.msra.mxu0 0
      %452 = vmatprep.subr.bf16.mxu0 0
      %453 = vmatpush1.bf16.msra.mxu0 0
      %454 = vmatprep.subr.bf16.mxu0 0
      %455 = vmatpush1.bf16.msra.mxu0 0
      %456 = vmatprep.subr.bf16.mxu0 0
      %457 = vmatpush1.bf16.msra.mxu0 0
      %458 = vmatprep.subr.bf16.mxu0 0
      %459 = vmatpush1.bf16.msra.mxu0 0
      %460 = vmatprep.subr.bf16.mxu0 0
      %461 = vmatpush1.bf16.msra.mxu0 0
      %462 = vmatprep.subr.bf16.mxu0 0
      %463 = vmatpush1.bf16.msra.mxu0 0
      %464 = vmatprep.subr.bf16.mxu0 0
      %465 = vmatpush1.bf16.msra.mxu0 0
      %466 = vmatprep.mubr.bf16.mxu0 0
      %467 = vmatmul.mubr.bf16.gmra.mrb[0].mxu0 %v432
      %v468 = vpop.f32.mrb[0].mxu0
      %v469 = vadd.f32 %v416, %v468
      %v470 = vpop.f32.mrb[0].mxu0
      %v471 = vpop.f32.mrb[0].mxu0
      %v472 = vpop.f32.mrb[0].mxu0
      %473 = vdwg.mxu0
      %v474 = vld [vmem:[%s5] sm:$0xf]
      %v475 = vld [vmem:[%s5 + $0x4] sm:$0xf]
      %v476 = vld [vmem:[%s5 + $0x8] sm:$0xf]
      %v477 = vld [vmem:[%s5 + $0xc] sm:$0xf]
      %v478 = vld [vmem:[%s6] sm:$0xf]
      %v479 = vld [vmem:[%s6 + $0x4] sm:$0xf]
      %v480 = vld [vmem:[%s6 + $0x8] sm:$0xf]
      %v481 = vld [vmem:[%s6 + $0xc] sm:$0xf]
      %v486 = vunpack.c.l.b16 %v478
      %v487 = vunpack.c.l.b16 %v479
      %v488 = vunpack.c.l.b16 %v480
      %v489 = vunpack.c.l.b16 %v481
      %v490 = vpack.c.b16 %v487, %v486
      %v491 = vpack.c.b16 %v489, %v488
      %v495 = vsel %vm430, %v406, 0
      %497 = vmatprep.subr.bf16.mxu0 0
      %498 = vmatpush1.bf16.msra.mxu0 %v490
      %499 = vmatprep.subr.bf16.mxu0 0
      %500 = vmatpush1.bf16.msra.mxu0 %v491
      %501 = vmatprep.subr.bf16.mxu0 0
      %502 = vmatpush1.bf16.msra.mxu0 0
      %503 = vmatprep.subr.bf16.mxu0 0
      %504 = vmatpush1.bf16.msra.mxu0 0
      %505 = vmatprep.subr.bf16.mxu0 0
      %506 = vmatpush1.bf16.msra.mxu0 0
      %507 = vmatprep.subr.bf16.mxu0 0
      %508 = vmatpush1.bf16.msra.mxu0 0
      %509 = vmatprep.subr.bf16.mxu0 0
      %510 = vmatpush1.bf16.msra.mxu0 0
      %511 = vmatprep.subr.bf16.mxu0 0
      %512 = vmatpush1.bf16.msra.mxu0 0
      %513 = vmatprep.subr.bf16.mxu0 0
      %514 = vmatpush1.bf16.msra.mxu0 0
      %515 = vmatprep.subr.bf16.mxu0 0
      %516 = vmatpush1.bf16.msra.mxu0 0
      %517 = vmatprep.subr.bf16.mxu0 0
      %518 = vmatpush1.bf16.msra.mxu0 0
      %519 = vmatprep.subr.bf16.mxu0 0
      %520 = vmatpush1.bf16.msra.mxu0 0
      %521 = vmatprep.subr.bf16.mxu0 0
      %522 = vmatpush1.bf16.msra.mxu0 0
      %523 = vmatprep.subr.bf16.mxu0 0
      %524 = vmatpush1.bf16.msra.mxu0 0
      %525 = vmatprep.subr.bf16.mxu0 0
      %526 = vmatpush1.bf16.msra.mxu0 0
      %527 = vmatprep.subr.bf16.mxu0 0
      %528 = vmatpush1.bf16.msra.mxu0 0
      %529 = vmatprep.mubr.bf16.mxu0 0
      %530 = vmatmul.mubr.bf16.gmra.mrb[0].mxu0 %v495
      %v531 = vpop.f32.mrb[0].mxu0
      %v532 = vadd.f32 0.0, %v531
      %v533 = vpop.f32.mrb[0].mxu0
      %v534 = vpop.f32.mrb[0].mxu0
      %v535 = vpop.f32.mrb[0].mxu0
      %536 = vdwg.mxu0
      %v541 = vunpack.c.l.b16 %v474
      %v542 = vunpack.c.l.b16 %v475
      %v543 = vunpack.c.l.b16 %v476
      %v544 = vunpack.c.l.b16 %v477
      %v545 = vpack.c.b16 %v542, %v541
      %v546 = vpack.c.b16 %v544, %v543
      %549 = vmatprep.subr.bf16.mxu0 0
      %550 = vmatpush1.bf16.msra.mxu0 %v545
      %551 = vmatprep.subr.bf16.mxu0 0
      %552 = vmatpush1.bf16.msra.mxu0 %v546
      %553 = vmatprep.subr.bf16.mxu0 0
      %554 = vmatpush1.bf16.msra.mxu0 0
      %555 = vmatprep.subr.bf16.mxu0 0
      %556 = vmatpush1.bf16.msra.mxu0 0
      %557 = vmatprep.subr.bf16.mxu0 0
      %558 = vmatpush1.bf16.msra.mxu0 0
      %559 = vmatprep.subr.bf16.mxu0 0
      %560 = vmatpush1.bf16.msra.mxu0 0
      %561 = vmatprep.subr.bf16.mxu0 0
      %562 = vmatpush1.bf16.msra.mxu0 0
      %563 = vmatprep.subr.bf16.mxu0 0
      %564 = vmatpush1.bf16.msra.mxu0 0
      %565 = vmatprep.subr.bf16.mxu0 0
      %566 = vmatpush1.bf16.msra.mxu0 0
      %567 = vmatprep.subr.bf16.mxu0 0
      %568 = vmatpush1.bf16.msra.mxu0 0
      %569 = vmatprep.subr.bf16.mxu0 0
      %570 = vmatpush1.bf16.msra.mxu0 0
      %571 = vmatprep.subr.bf16.mxu0 0
      %572 = vmatpush1.bf16.msra.mxu0 0
      %573 = vmatprep.subr.bf16.mxu0 0
      %574 = vmatpush1.bf16.msra.mxu0 0
      %575 = vmatprep.subr.bf16.mxu0 0
      %576 = vmatpush1.bf16.msra.mxu0 0
      %577 = vmatprep.subr.bf16.mxu0 0
      %578 = vmatpush1.bf16.msra.mxu0 0
      %579 = vmatprep.subr.bf16.mxu0 0
      %580 = vmatpush1.bf16.msra.mxu0 0
      %581 = vmatprep.mubr.bf16.mxu0 0
      %582 = vmatmul.mubr.bf16.gmra.mrb[0].mxu0 %v432
      %v583 = vpop.f32.mrb[0].mxu0
      %v584 = vadd.f32 %v532, %v583
      %v585 = vpop.f32.mrb[0].mxu0
      %v586 = vpop.f32.mrb[0].mxu0
      %v587 = vpop.f32.mrb[0].mxu0
      %588 = vdwg.mxu0
      %v589 = vadd.f32 %v584, %v416
      %v590 = vld [vmem:[%s8] sm:$0xff]
      %v591 = vld [vmem:[%s9] sm:$0xff]
      %vm592 = vcmask 31744
      %v594 = vsel %vm592, %v591, 0
      %vm596 = vcmask 1043456
      %v598 = vsel %vm596, %v589, 0
      %600 = vmatprep.subr.mxu0 0.0
      %601 = vmatpush1.msra.mxu0 %v598
      %602 = vmatprep.subr.mxu0 0.0
      %603 = vmatpush1.msra.mxu0 0.0
      %604 = vmatprep.subr.mxu0 0.0
      %605 = vmatpush1.msra.mxu0 0.0
      %606 = vmatprep.subr.mxu0 0.0
      %607 = vmatpush1.msra.mxu0 0.0
      %608 = vmatprep.subr.mxu0 0.0
      %609 = vmatpush1.msra.mxu0 0.0
      %610 = vmatprep.subr.mxu0 0.0
      %611 = vmatpush1.msra.mxu0 0.0
      %612 = vmatprep.subr.mxu0 0.0
      %613 = vmatpush1.msra.mxu0 0.0
      %614 = vmatprep.subr.mxu0 0.0
      %615 = vmatpush1.msra.mxu0 0.0
      %616 = vmatprep.subr.mxu0 0.0
      %617 = vmatpush1.msra.mxu0 0.0
      %618 = vmatprep.subr.mxu0 0.0
      %619 = vmatpush1.msra.mxu0 0.0
      %620 = vmatprep.subr.mxu0 0.0
      %621 = vmatpush1.msra.mxu0 0.0
      %622 = vmatprep.subr.mxu0 0.0
      %623 = vmatpush1.msra.mxu0 0.0
      %624 = vmatprep.subr.mxu0 0.0
      %625 = vmatpush1.msra.mxu0 0.0
      %626 = vmatprep.subr.mxu0 0.0
      %627 = vmatpush1.msra.mxu0 0.0
      %628 = vmatprep.subr.mxu0 0.0
      %629 = vmatpush1.msra.mxu0 0.0
      %630 = vmatprep.subr.mxu0 0.0
      %631 = vmatpush1.msra.mxu0 0.0
      %632 = vmatprep.subr.mxu0 0.0
      %633 = vmatpush1.msra.mxu0 0.0
      %634 = vmatprep.subr.mxu0 0.0
      %635 = vmatpush1.msra.mxu0 0.0
      %636 = vmatprep.subr.mxu0 0.0
      %637 = vmatpush1.msra.mxu0 0.0
      %638 = vmatprep.subr.mxu0 0.0
      %639 = vmatpush1.msra.mxu0 0.0
      %640 = vmatprep.subr.mxu0 0.0
      %641 = vmatpush1.msra.mxu0 0.0
      %642 = vmatprep.subr.mxu0 0.0
      %643 = vmatpush1.msra.mxu0 0.0
      %644 = vmatprep.subr.mxu0 0.0
      %645 = vmatpush1.msra.mxu0 0.0
      %646 = vmatprep.subr.mxu0 0.0
      %647 = vmatpush1.msra.mxu0 0.0
      %648 = vmatprep.subr.mxu0 0.0
      %649 = vmatpush1.msra.mxu0 0.0
      %650 = vmatprep.subr.mxu0 0.0
      %651 = vmatpush1.msra.mxu0 0.0
      %652 = vmatprep.subr.mxu0 0.0
      %653 = vmatpush1.msra.mxu0 0.0
      %654 = vmatprep.subr.mxu0 0.0
      %655 = vmatpush1.msra.mxu0 0.0
      %656 = vmatprep.subr.mxu0 0.0
      %657 = vmatpush1.msra.mxu0 0.0
      %658 = vmatprep.subr.mxu0 0.0
      %659 = vmatpush1.msra.mxu0 0.0
      %660 = vmatprep.subr.mxu0 0.0
      %661 = vmatpush1.msra.mxu0 0.0
      %662 = vmatprep.subr.mxu0 0.0
      %663 = vmatpush1.msra.mxu0 0.0
      %664 = vmatprep.mubr.f32.mxu0 0.0
      %665 = vmatmul.mubr.f32.gmra.mrb[0].mxu0 %v594
      %v666 = vpop.f32.mrb[0].mxu0
      %v667 = vadd.f32 0.0, %v666
      %v668 = vpop.f32.mrb[0].mxu0
      %669 = vdwg.mxu0
      %v671 = vsel %vm592, %v590, 0
      %v674 = vsel %vm596, %v469, 0
      %676 = vmatprep.subr.mxu0 0.0
      %677 = vmatpush1.msra.mxu0 %v674
      %678 = vmatprep.subr.mxu0 0.0
      %679 = vmatpush1.msra.mxu0 0.0
      %680 = vmatprep.subr.mxu0 0.0
      %681 = vmatpush1.msra.mxu0 0.0
      %682 = vmatprep.subr.mxu0 0.0
      %683 = vmatpush1.msra.mxu0 0.0
      %684 = vmatprep.subr.mxu0 0.0
      %685 = vmatpush1.msra.mxu0 0.0
      %686 = vmatprep.subr.mxu0 0.0
      %687 = vmatpush1.msra.mxu0 0.0
      %688 = vmatprep.subr.mxu0 0.0
      %689 = vmatpush1.msra.mxu0 0.0
      %690 = vmatprep.subr.mxu0 0.0
      %691 = vmatpush1.msra.mxu0 0.0
      %692 = vmatprep.subr.mxu0 0.0
      %693 = vmatpush1.msra.mxu0 0.0
      %694 = vmatprep.subr.mxu0 0.0
      %695 = vmatpush1.msra.mxu0 0.0
      %696 = vmatprep.subr.mxu0 0.0
      %697 = vmatpush1.msra.mxu0 0.0
      %698 = vmatprep.subr.mxu0 0.0
      %699 = vmatpush1.msra.mxu0 0.0
      %700 = vmatprep.subr.mxu0 0.0
      %701 = vmatpush1.msra.mxu0 0.0
      %702 = vmatprep.subr.mxu0 0.0
      %703 = vmatpush1.msra.mxu0 0.0
      %704 = vmatprep.subr.mxu0 0.0
      %705 = vmatpush1.msra.mxu0 0.0
      %706 = vmatprep.subr.mxu0 0.0
      %707 = vmatpush1.msra.mxu0 0.0
      %708 = vmatprep.subr.mxu0 0.0
      %709 = vmatpush1.msra.mxu0 0.0
      %710 = vmatprep.subr.mxu0 0.0
      %711 = vmatpush1.msra.mxu0 0.0
      %712 = vmatprep.subr.mxu0 0.0
      %713 = vmatpush1.msra.mxu0 0.0
      %714 = vmatprep.subr.mxu0 0.0
      %715 = vmatpush1.msra.mxu0 0.0
      %716 = vmatprep.subr.mxu0 0.0
      %717 = vmatpush1.msra.mxu0 0.0
      %718 = vmatprep.subr.mxu0 0.0
      %719 = vmatpush1.msra.mxu0 0.0
      %720 = vmatprep.subr.mxu0 0.0
      %721 = vmatpush1.msra.mxu0 0.0
      %722 = vmatprep.subr.mxu0 0.0
      %723 = vmatpush1.msra.mxu0 0.0
      %724 = vmatprep.subr.mxu0 0.0
      %725 = vmatpush1.msra.mxu0 0.0
      %726 = vmatprep.subr.mxu0 0.0
      %727 = vmatpush1.msra.mxu0 0.0
      %728 = vmatprep.subr.mxu0 0.0
      %729 = vmatpush1.msra.mxu0 0.0
      %730 = vmatprep.subr.mxu0 0.0
      %731 = vmatpush1.msra.mxu0 0.0
      %732 = vmatprep.subr.mxu0 0.0
      %733 = vmatpush1.msra.mxu0 0.0
      %734 = vmatprep.subr.mxu0 0.0
      %735 = vmatpush1.msra.mxu0 0.0
      %736 = vmatprep.subr.mxu0 0.0
      %737 = vmatpush1.msra.mxu0 0.0
      %738 = vmatprep.subr.mxu0 0.0
      %739 = vmatpush1.msra.mxu0 0.0
      %740 = vmatprep.mubr.f32.mxu0 0.0
      %741 = vmatmul.mubr.f32.gmra.mrb[0].mxu0 %v671
      %v742 = vpop.f32.mrb[0].mxu0
      %v743 = vadd.f32 %v667, %v742
      %v744 = vpop.f32.mrb[0].mxu0
      %745 = vdwg.mxu0
      %vm746 = vcmask 523264
      %747 = vst.msk [vmem:[%s392] sm:$0xff] %vm746, %v743
      %v748 = vsel %vm746, %v743, 0.0
      %v749 = vrot.slane %v748, 4
      %v750 = vadd.f32 %v748, %v749
      %v751 = vrot.slane %v750, 2
      %v752 = vadd.f32 %v750, %v751
      %v753 = vrot.slane %v752, 1
      %v754 = vadd.f32 %v752, %v753
      %vm755 = vcmask 516096
      %756 = vst.msk [vmem:[%s396] sm:$0x1] %vm755, %v754
      %v757 = vmul.f32 %v743, %v743
      %v758 = vsel %vm746, %v757, 0.0
      %v759 = vrot.slane %v758, 4
      %v760 = vadd.f32 %v758, %v759
      %v761 = vrot.slane %v760, 2
      %v762 = vadd.f32 %v760, %v761
      %v763 = vrot.slane %v762, 1
      %v764 = vadd.f32 %v762, %v763
      %765 = vst.msk [vmem:[%s396 + $0x1] sm:$0x1] %vm755, %v764
      %p766 = scmp.lt.s32.totalorder %s27, 1
      %s767 = scalar_select %p766, %s27, 1
      %s768 = smul.addr %s767, 8
      %s769 = scalar_lea.vmem %s10, %s768
      %p770 = scmp.lt.s32.totalorder %s27, 1
      %s771 = scalar_select %p770, %s27, 1
      %s772 = smul.addr %s771, 2
      %s773 = scalar_lea.vmem %s11, %s772
      // Predicated region
      $region61: #{convae_forward.13} parent=59 // pred_check
        %p774 = pneg %p260
      $region62: #{convae_forward.13} parent=59 // pred_check_branch
        %776 = sbr.rel (%p774) target = $region64
      $region63: #{convae_forward.13} parent=59 // pred_region
        _
      $region64: #{convae_forward.13} parent=59 // pred_fallthru
        _
      // Predicated region
      $region65: #{convae_forward.13} parent=59 // pred_check
        %p777 = pneg %p286
      $region66: #{convae_forward.13} parent=59 // pred_check_branch
        %779 = sbr.rel (%p777) target = $region68
      $region67: #{convae_forward.13} parent=59 // pred_region
        _
      $region68: #{convae_forward.13} parent=59 // pred_fallthru
        _
    $region60: #{convae_forward.13} parent=5 // pred_fallthru
      _
    %p780 = scmp.le.s32.totalorder 2, %s22
    // Predicated region
    $region69: #{convae_forward.13} parent=5 // pred_check
      %p781 = pneg %p780
    $region70: #{convae_forward.13} parent=5 // pred_check_branch
      %783 = sbr.rel (%p781) target = $region72
    $region71: #{convae_forward.13} parent=5 // pred_region
      %s784 = ssub.s32 %s22, 2
      // Predicated region
      $region73: #{convae_forward.13} parent=71 // pred_check
        %p785 = pneg %p266
      $region74: #{convae_forward.13} parent=71 // pred_check_branch
        %787 = sbr.rel (%p785) target = $region76
      $region75: #{convae_forward.13} parent=71 // pred_region
        %p788 = scmp.lt.s32.totalorder %s28, 1
        %s789 = scalar_select %p788, %s28, 1
        %s790 = smul.addr %s789, 8
        %s791 = scalar_lea.vmem %s10, %s790
      $region76: #{convae_forward.13} parent=71 // pred_fallthru
        _
      // Predicated region
      $region77: #{convae_forward.13} parent=71 // pred_check
        %p792 = pneg %p292
      $region78: #{convae_forward.13} parent=71 // pred_check_branch
        %794 = sbr.rel (%p792) target = $region80
      $region79: #{convae_forward.13} parent=71 // pred_region
        %p795 = scmp.lt.s32.totalorder %s28, 1
        %s796 = scalar_select %p795, %s28, 1
        %s797 = smul.addr %s796, 2
        %s798 = scalar_lea.vmem %s11, %s797
      $region80: #{convae_forward.13} parent=71 // pred_fallthru
        _
    $region72: #{convae_forward.13} parent=5 // pred_fallthru
      _
  $region6: #{convae_forward.13} parent=0 // loop_footer
    %s26 = sadd.s32 1, %s22
  $region7: #{convae_forward.13} parent=0 // loop_footer_branch
    %21 = sbr.rel target = $region3
  $region8: #{convae_forward.13} parent=0 // loop_exit
    _

</llo_original>
